<compile_context>
chip_gen: v7x
topology: tpu7x:2x2x1
jax: 0.10.0
libtpu: 0.0.40
codegen_flags: <defaults>
</compile_context>

<pallas_src>
import functools

import jax
import jax.numpy as jnp
from jax import lax
from jax.experimental import pallas as pl
from jax.experimental.pallas import tpu as pltpu


# ----------------------------- configuration --------------------------------
KERNELS = 32          # number of channels ("kernels" in SpliceAI terminology)
WINDOW = 5            # conv kernel width
DILATION = 2          # conv dilation
SEQ_LEN = 64          # sequence length
BATCH = 2
NBLOCKS = 4           # MegaBlock default block_count
BN_EPS = 1e-5

TOTAL_PAD = DILATION * (WINDOW - 1)
PAD_LEFT = TOTAL_PAD // 2
PAD_RIGHT = TOTAL_PAD - PAD_LEFT


# ------------------------------ Pallas kernel --------------------------------
def _megablock_kernel(x_ref, vecs_ref, w1_ref, w2_ref, o_ref, pad_ref, *,
                      bchunk, seq_len, channels, window, dilation,
                      halo, seg, off, nblocks):
    """Whole MegaBlock for one batch chunk.

    x_ref    : (bchunk, L, C)      input block (f32)
    vecs_ref : (nb, 4, C)          packed per-block vectors (f32):
                                   row 0 = BN1 scale, 1 = BN1 shift,
                                   row 2 = conv1 bias*s2 + BN2 shift,
                                   row 3 = conv2 bias
    w1_ref   : (nb*W, C, C)        conv1 per-tap weights, BN2 scale folded
    w2_ref   : (nb*W, C, C)        conv2 per-tap weights
    o_ref    : (bchunk, L, C)      output block
    pad_ref  : (bchunk, seg, C)    persistent VMEM zero-padded activation buffer
    """
    C = channels
    L = seq_len
    M = bchunk * L

    # Zero only the halo rows (no full-buffer zero fills); interior rows are
    # fully overwritten before every conv.  Done unconditionally every grid
    # step (2 tiny aligned stores) rather than under pl.when(pid == 0) so it
    # stays correct if the "parallel" batch axis is ever split across
    # TensorCores (a non-zero core never sees program_id 0).
    zeros = jnp.zeros((bchunk, halo, C), dtype=pad_ref.dtype)
    pad_ref[:, 0:halo, :] = zeros
    pad_ref[:, halo + L:seg, :] = zeros

    def conv(act, w_ref, blk, bias_row):
        """'same'-padded dilated conv of act (bchunk, L, C) f32 -> (bchunk, L, C) f32."""
        # Aligned interior store (cast to the MXU dtype here, VPU math stays f32).
        pad_ref[:, halo:halo + L, :] = act.astype(pad_ref.dtype)
        # Per-tap accumulating matmuls: W small (M, C)x(C, C) MXU matmuls into a
        # single f32 accumulator (~M*C*4 bytes, a handful of vregs).  Halo rows
        # are zero, so out-of-range taps contribute nothing -- exactly zero pad.
        acc = None
        for t in range(window):
            r0 = off + t * dilation                       # static sublane shift
            lhs = pad_ref[:, r0:r0 + L, :].reshape(M, C)  # shifted *loads*, no shifted stores
            d = jnp.dot(lhs, w_ref[blk * window + t],
                        preferred_element_type=jnp.float32)
            # TODO(synk): on v7x drive this chain explicitly into one MRB acc_addr
            #             (matmul_push_rhs / matmul_acc_lhs / matmul_pop) to drop
            #             4 of 5 result pops; not applicable on v5e/v6e (MRF FIFO).
            acc = d if acc is None else acc + d
        return acc.reshape(bchunk, L, C) + bias_row

    x = x_ref[...].astype(jnp.float32)                     # (bchunk, L, C)
    for blk in range(nblocks):
        vec = vecs_ref[blk]                                # (4, C) f32
        # BN1 + ReLU (f32 VPU; TODO(synk): bf16 pointwise on v6e/v7x only)
        a1 = jnp.maximum(x * vec[0:1] + vec[1:2], 0.0)
        # conv1 (+ folded BN2 scale) + folded shift, then ReLU
        a2 = jnp.maximum(conv(a1, w1_ref, blk, vec[2:3]), 0.0)
        # conv2 + bias + residual (residual carry stays f32)
        x = x + conv(a2, w2_ref, blk, vec[3:4])
    o_ref[...] = x.astype(o_ref.dtype)


# ------------------------------ wrapper --------------------------------------
def megablock(x_ncl, block_params, *, mxu_dtype=jnp.bfloat16):
    """x_ncl: (B, C, L) float32, PyTorch layout.  Returns (B, C, L)."""
    B, C, L = x_ncl.shape
    nb = len(block_params)
    assert C == KERNELS

    # --- fold eval-mode BN + conv1 bias into per-tap weights / shifts --------
    f32 = jnp.float32
    vec_rows, w1_l, w2_l = [], [], []
    for p in block_params:
        s1 = p["bn1_gamma"] * lax.rsqrt(p["bn1_var"] + BN_EPS)
        b1 = p["bn1_beta"] - p["bn1_mean"] * s1
        s2 = p["bn2_gamma"] * lax.rsqrt(p["bn2_var"] + BN_EPS)
        b2 = p["bn2_beta"] - p["bn2_mean"] * s2
        # PyTorch Conv1d weight (C_out, C_in, W) -> per-tap (W, C_in, C_out)
        w1 = jnp.transpose(p["conv1_w"], (2, 1, 0)) * s2[None, None, :]  # BN2 scale folded
        w2 = jnp.transpose(p["conv2_w"], (2, 1, 0))
        vec_rows.append(jnp.stack([s1, b1,
                                   p["conv1_b"] * s2 + b2,   # conv1 bias + BN2 shift folded
                                   p["conv2_b"]]))
        w1_l.append(w1)
        w2_l.append(w2)

    vecs = jnp.stack(vec_rows).astype(f32)                   # (nb, 4, C) -- one DMA
    w1c = jnp.concatenate(w1_l, axis=0).astype(mxu_dtype)    # (nb*W, C, C), idx = blk*W + t
    w2c = jnp.concatenate(w2_l, axis=0).astype(mxu_dtype)

    # --- grid: one "parallel" axis over batch chunks -------------------------
    # Chunk sized so M = bchunk*L >= 128; prefer >=2 grid steps (v7x has 2
    # TensorCores and a 1-step grid gives the software pipeline nothing to
    # overlap) whenever splitting still keeps M >= 128 per step.
    bchunk = min(B, max(1, -(-128 // L)))
    while B % bchunk:
        bchunk -= 1
    if (B // bchunk < 2 and bchunk > 1 and (bchunk // 2) * L >= 128
            and B % (bchunk // 2) == 0):
        bchunk //= 2
    grid = (B // bchunk,)

    # Padded-segment geometry: halos rounded up to a full sublane tile of the
    # MXU dtype (f32: 8 rows, bf16: 16 rows) so interior stores are plain
    # aligned vst; tap reads stay (cheap) sublane-shifted loads.
    packing = 4 // jnp.dtype(mxu_dtype).itemsize
    halo = 8 * packing
    assert halo >= PAD_LEFT and halo >= PAD_RIGHT
    assert L % (8 * packing) == 0
    seg = halo + L + halo
    off = halo - PAD_LEFT

    kern = functools.partial(
        _megablock_kernel, bchunk=bchunk, seq_len=L, channels=C, window=WINDOW,
        dilation=DILATION, halo=halo, seg=seg, off=off, nblocks=nb)

    # TODO(synk): fold this (B,C,L)<->(B,L,C) relayout into the kernel (in-VMEM
    #             swapaxes / lane-dense packing) once validated on all targets;
    #             at deployment L it removes ~2x extra HBM passes.
    x_nlc = jnp.transpose(x_ncl, (0, 2, 1))                  # (B, L, C)

    out_nlc = pl.pallas_call(
        kern,
        out_shape=jax.ShapeDtypeStruct((B, L, C), x_ncl.dtype),
        grid_spec=pltpu.PrefetchScalarGridSpec(
            num_scalar_prefetch=0,
            grid=grid,
            in_specs=[
                pl.BlockSpec((bchunk, L, C), lambda i: (i, 0, 0)),       # x
                pl.BlockSpec((nb, 4, C), lambda i: (0, 0, 0)),           # packed vectors
                pl.BlockSpec((nb * WINDOW, C, C), lambda i: (0, 0, 0)),  # conv1 taps
                pl.BlockSpec((nb * WINDOW, C, C), lambda i: (0, 0, 0)),  # conv2 taps
            ],
            out_specs=pl.BlockSpec((bchunk, L, C), lambda i: (i, 0, 0)),
            scratch_shapes=[pltpu.VMEM((bchunk, seg, C), mxu_dtype)],
        ),
        compiler_params=pltpu.CompilerParams(
            dimension_semantics=("parallel",)),
    )(x_nlc, vecs, w1c, w2c)

    return jnp.transpose(out_nlc, (0, 2, 1))                 # back to (B, C, L)


# --------------------------- pure-JAX reference -------------------------------
def megablock_ref(x_ncl, block_params):
    def bn(x, g, be, m, v):
        return (x - m[None, :, None]) * lax.rsqrt(v[None, :, None] + BN_EPS) \
               * g[None, :, None] + be[None, :, None]

    def conv_same(a, w, b):
        a_pad = jnp.pad(a, ((0, 0), (0, 0), (PAD_LEFT, PAD_RIGHT)))
        y = lax.conv_general_dilated(
            a_pad, w, window_strides=(1,), padding="VALID",
            rhs_dilation=(DILATION,),
            dimension_numbers=("NCH", "OIH", "NCH"))
        return y + b[None, :, None]

    y = x_ncl
    for p in block_params:
        h = jax.nn.relu(bn(y, p["bn1_gamma"], p["bn1_beta"],
                           p["bn1_mean"], p["bn1_var"]))
        h = conv_same(h, p["conv1_w"], p["conv1_b"])
        h = jax.nn.relu(bn(h, p["bn2_gamma"], p["bn2_beta"],
                           p["bn2_mean"], p["bn2_var"]))
        h = conv_same(h, p["conv2_w"], p["conv2_b"])
        y = y + h
    return y


# ---------------------------------- main --------------------------------------
if __name__ == "__main__":
    C = KERNELS
    root = jax.random.PRNGKey(0)
    root, xkey = jax.random.split(root)

    block_params = []
    for _ in range(NBLOCKS):
        root, *ks = jax.random.split(root, 13)
        block_params.append({
            "bn1_gamma": 1.0 + 0.1 * jax.random.normal(ks[0], (C,), jnp.float32),
            "bn1_beta": 0.1 * jax.random.normal(ks[1], (C,), jnp.float32),
            "bn1_mean": 0.1 * jax.random.normal(ks[2], (C,), jnp.float32),
            "bn1_var": jnp.abs(jax.random.normal(ks[3], (C,), jnp.float32)) + 0.5,
            "conv1_w": 0.1 * jax.random.normal(ks[4], (C, C, WINDOW), jnp.float32),
            "conv1_b": 0.1 * jax.random.normal(ks[5], (C,), jnp.float32),
            "bn2_gamma": 1.0 + 0.1 * jax.random.normal(ks[6], (C,), jnp.float32),
            "bn2_beta": 0.1 * jax.random.normal(ks[7], (C,), jnp.float32),
            "bn2_mean": 0.1 * jax.random.normal(ks[8], (C,), jnp.float32),
            "bn2_var": jnp.abs(jax.random.normal(ks[9], (C,), jnp.float32)) + 0.5,
            "conv2_w": 0.1 * jax.random.normal(ks[10], (C, C, WINDOW), jnp.float32),
            "conv2_b": 0.1 * jax.random.normal(ks[11], (C,), jnp.float32),
        })

    x = jax.random.normal(xkey, (BATCH, KERNELS, SEQ_LEN), jnp.float32)

    ref = jax.block_until_ready(megablock_ref(x, block_params))

    # f32 MXU inputs: tight numerical check against the pure-JAX reference.
    out_f32 = jax.block_until_ready(
        megablock(x, block_params, mxu_dtype=jnp.float32))
    assert out_f32.shape == x.shape
    err_f32 = float(jnp.max(jnp.abs(out_f32 - ref)))
    assert jnp.allclose(out_f32, ref, rtol=5e-3, atol=5e-3), \
        f"f32 max err {err_f32}"

    # bf16 MXU inputs (the performance default for v5e/v6e/v7x): looser
    # tolerance reflects bf16 rounding of the conv inputs across 8 chained
    # convolutions; all elementwise math and accumulation stays f32.
    out_bf16 = jax.block_until_ready(
        megablock(x, block_params, mxu_dtype=jnp.bfloat16))
    err_bf16 = float(jnp.max(jnp.abs(out_bf16 - ref)))
    assert jnp.allclose(out_bf16, ref, rtol=5e-2, atol=2e-1), \
        f"bf16 max err {err_bf16}"

    print("KERNEL_OK")
</pallas_src>

<mosaic_0001>
module attributes {stable_mosaic.version = 11 : i64} {
  func.func @_megablock_kernel(%arg0: i32, %arg1: memref<2x64x32xf32, #tpu.memory_space<vmem>>, %arg2: memref<4x4x32xf32, #tpu.memory_space<vmem>>, %arg3: memref<20x32x32xf32, #tpu.memory_space<vmem>>, %arg4: memref<20x32x32xf32, #tpu.memory_space<vmem>>, %arg5: memref<2x64x32xf32, #tpu.memory_space<vmem>>, %arg6: memref<2x80x32xf32, #tpu.memory_space<vmem>>) attributes {dimension_semantics = [#tpu.dimension_semantics<parallel>], iteration_bounds = array<i64: 1>, scalar_prefetch = 0 : i64, scratch_operands = 1 : i64, tpu.core_type = #tpu.core_type<tc>, window_params = [{transform_indices = @transform_0, window_bounds = array<i64: 2, 64, 32>}, {pipeline_mode = #tpu.pipeline_mode<synchronous>, transform_indices = @transform_1, window_bounds = array<i64: 4, 4, 32>}, {pipeline_mode = #tpu.pipeline_mode<synchronous>, transform_indices = @transform_2, window_bounds = array<i64: 20, 32, 32>}, {pipeline_mode = #tpu.pipeline_mode<synchronous>, transform_indices = @transform_3, window_bounds = array<i64: 20, 32, 32>}, {transform_indices = @transform_4, window_bounds = array<i64: 2, 64, 32>}]} {
    %cst = arith.constant 0.000000e+00 : f32
    %0 = vector.broadcast %cst : f32 to vector<2x8x32xf32>
    %c0 = arith.constant 0 : index
    %c0_0 = arith.constant 0 : index
    %c0_1 = arith.constant 0 : index
    %1 = vector.load %arg6[%c0, %c0_0, %c0_1] : memref<2x80x32xf32, #tpu.memory_space<vmem>>, vector<2x8x32xf32>
    tpu.vector_store %arg6[%c0, %c0_0, %c0_1], %0 {strides = array<i32>} : memref<2x80x32xf32, #tpu.memory_space<vmem>>, vector<2x8x32xf32>,
    %c0_2 = arith.constant 0 : index
    %c72 = arith.constant 72 : index
    %c0_3 = arith.constant 0 : index
    %2 = vector.load %arg6[%c0_2, %c72, %c0_3] : memref<2x80x32xf32, #tpu.memory_space<vmem>>, vector<2x8x32xf32>
    tpu.vector_store %arg6[%c0_2, %c72, %c0_3], %0 {strides = array<i32>} : memref<2x80x32xf32, #tpu.memory_space<vmem>>, vector<2x8x32xf32>,
    %c0_4 = arith.constant 0 : index
    %c0_5 = arith.constant 0 : index
    %c0_6 = arith.constant 0 : index
    %3 = vector.load %arg1[%c0_4, %c0_5, %c0_6] : memref<2x64x32xf32, #tpu.memory_space<vmem>>, vector<2x64x32xf32>
    %c0_7 = arith.constant 0 : index
    %c0_8 = arith.constant 0 : index
    %c0_9 = arith.constant 0 : index
    %4 = vector.load %arg2[%c0_7, %c0_8, %c0_9] : memref<4x4x32xf32, #tpu.memory_space<vmem>>, vector<1x4x32xf32>
    %5 = vector.shape_cast %4 : vector<1x4x32xf32> to vector<4x32xf32>
    %6 = vector.extract_strided_slice %5 {offsets = [0, 0], sizes = [1, 32], strides = [1, 1]} : vector<4x32xf32> to vector<1x32xf32>
    %7 = vector.shape_cast %6 : vector<1x32xf32> to vector<1x1x32xf32>
    %8 = vector.broadcast %7 : vector<1x1x32xf32> to vector<2x64x32xf32>
    %9 = arith.mulf %3, %8 : vector<2x64x32xf32>
    %10 = vector.extract_strided_slice %5 {offsets = [1, 0], sizes = [1, 32], strides = [1, 1]} : vector<4x32xf32> to vector<1x32xf32>
    %11 = vector.shape_cast %10 : vector<1x32xf32> to vector<1x1x32xf32>
    %12 = vector.broadcast %11 : vector<1x1x32xf32> to vector<2x64x32xf32>
    %13 = arith.addf %9, %12 : vector<2x64x32xf32>
    %cst_10 = arith.constant 0.000000e+00 : f32
    %14 = vector.broadcast %cst_10 : f32 to vector<2x64x32xf32>
    %15 = arith.maximumf %13, %14 : vector<2x64x32xf32>
    %16 = vector.extract_strided_slice %5 {offsets = [2, 0], sizes = [1, 32], strides = [1, 1]} : vector<4x32xf32> to vector<1x32xf32>
    %c0_11 = arith.constant 0 : index
    %c8 = arith.constant 8 : index
    %c0_12 = arith.constant 0 : index
    %17 = vector.load %arg6[%c0_11, %c8, %c0_12] : memref<2x80x32xf32, #tpu.memory_space<vmem>>, vector<2x64x32xf32>
    tpu.vector_store %arg6[%c0_11, %c8, %c0_12], %15 {strides = array<i32>} : memref<2x80x32xf32, #tpu.memory_space<vmem>>, vector<2x64x32xf32>,
    %c0_13 = arith.constant 0 : index
    %c4 = arith.constant 4 : index
    %c0_14 = arith.constant 0 : index
    %18 = vector.load %arg6[%c0_13, %c4, %c0_14] : memref<2x80x32xf32, #tpu.memory_space<vmem>>, vector<2x64x32xf32>
    %19 = vector.shape_cast %18 : vector<2x64x32xf32> to vector<128x32xf32>
    %c0_15 = arith.constant 0 : index
    %c0_16 = arith.constant 0 : index
    %c0_17 = arith.constant 0 : index
    %20 = vector.load %arg3[%c0_15, %c0_16, %c0_17] : memref<20x32x32xf32, #tpu.memory_space<vmem>>, vector<1x32x32xf32>
    %21 = vector.shape_cast %20 : vector<1x32x32xf32> to vector<32x32xf32>
    %cst_18 = arith.constant dense<0.000000e+00> : vector<128x32xf32>
    %22 = tpu.matmul %19, %21, %cst_18 {dimension_numbers = #tpu.dot_dimension_numbers<[1], [0], [0], [1], [0, 0, 1, 1], [], []>} : vector<128x32xf32>, vector<32x32xf32>, vector<128x32xf32> -> vector<128x32xf32>
    %c0_19 = arith.constant 0 : index
    %c6 = arith.constant 6 : index
    %c0_20 = arith.constant 0 : index
    %23 = vector.load %arg6[%c0_19, %c6, %c0_20] : memref<2x80x32xf32, #tpu.memory_space<vmem>>, vector<2x64x32xf32>
    %24 = vector.shape_cast %23 : vector<2x64x32xf32> to vector<128x32xf32>
    %c1 = arith.constant 1 : index
    %c0_21 = arith.constant 0 : index
    %c0_22 = arith.constant 0 : index
    %25 = vector.load %arg3[%c1, %c0_21, %c0_22] : memref<20x32x32xf32, #tpu.memory_space<vmem>>, vector<1x32x32xf32>
    %26 = vector.shape_cast %25 : vector<1x32x32xf32> to vector<32x32xf32>
    %cst_23 = arith.constant dense<0.000000e+00> : vector<128x32xf32>
    %27 = tpu.matmul %24, %26, %cst_23 {dimension_numbers = #tpu.dot_dimension_numbers<[1], [0], [0], [1], [0, 0, 1, 1], [], []>} : vector<128x32xf32>, vector<32x32xf32>, vector<128x32xf32> -> vector<128x32xf32>
    %28 = arith.addf %22, %27 : vector<128x32xf32>
    %c0_24 = arith.constant 0 : index
    %c8_25 = arith.constant 8 : index
    %c0_26 = arith.constant 0 : index
    %29 = vector.load %arg6[%c0_24, %c8_25, %c0_26] : memref<2x80x32xf32, #tpu.memory_space<vmem>>, vector<2x64x32xf32>
    %30 = vector.shape_cast %29 : vector<2x64x32xf32> to vector<128x32xf32>
    %c2 = arith.constant 2 : index
    %c0_27 = arith.constant 0 : index
    %c0_28 = arith.constant 0 : index
    %31 = vector.load %arg3[%c2, %c0_27, %c0_28] : memref<20x32x32xf32, #tpu.memory_space<vmem>>, vector<1x32x32xf32>
    %32 = vector.shape_cast %31 : vector<1x32x32xf32> to vector<32x32xf32>
    %cst_29 = arith.constant dense<0.000000e+00> : vector<128x32xf32>
    %33 = tpu.matmul %30, %32, %cst_29 {dimension_numbers = #tpu.dot_dimension_numbers<[1], [0], [0], [1], [0, 0, 1, 1], [], []>} : vector<128x32xf32>, vector<32x32xf32>, vector<128x32xf32> -> vector<128x32xf32>
    %34 = arith.addf %28, %33 : vector<128x32xf32>
    %c0_30 = arith.constant 0 : index
    %c10 = arith.constant 10 : index
    %c0_31 = arith.constant 0 : index
    %35 = vector.load %arg6[%c0_30, %c10, %c0_31] : memref<2x80x32xf32, #tpu.memory_space<vmem>>, vector<2x64x32xf32>
    %36 = vector.shape_cast %35 : vector<2x64x32xf32> to vector<128x32xf32>
    %c3 = arith.constant 3 : index
    %c0_32 = arith.constant 0 : index
    %c0_33 = arith.constant 0 : index
    %37 = vector.load %arg3[%c3, %c0_32, %c0_33] : memref<20x32x32xf32, #tpu.memory_space<vmem>>, vector<1x32x32xf32>
    %38 = vector.shape_cast %37 : vector<1x32x32xf32> to vector<32x32xf32>
    %cst_34 = arith.constant dense<0.000000e+00> : vector<128x32xf32>
    %39 = tpu.matmul %36, %38, %cst_34 {dimension_numbers = #tpu.dot_dimension_numbers<[1], [0], [0], [1], [0, 0, 1, 1], [], []>} : vector<128x32xf32>, vector<32x32xf32>, vector<128x32xf32> -> vector<128x32xf32>
    %40 = arith.addf %34, %39 : vector<128x32xf32>
    %c0_35 = arith.constant 0 : index
    %c12 = arith.constant 12 : index
    %c0_36 = arith.constant 0 : index
    %41 = vector.load %arg6[%c0_35, %c12, %c0_36] : memref<2x80x32xf32, #tpu.memory_space<vmem>>, vector<2x64x32xf32>
    %42 = vector.shape_cast %41 : vector<2x64x32xf32> to vector<128x32xf32>
    %c4_37 = arith.constant 4 : index
    %c0_38 = arith.constant 0 : index
    %c0_39 = arith.constant 0 : index
    %43 = vector.load %arg3[%c4_37, %c0_38, %c0_39] : memref<20x32x32xf32, #tpu.memory_space<vmem>>, vector<1x32x32xf32>
    %44 = vector.shape_cast %43 : vector<1x32x32xf32> to vector<32x32xf32>
    %cst_40 = arith.constant dense<0.000000e+00> : vector<128x32xf32>
    %45 = tpu.matmul %42, %44, %cst_40 {dimension_numbers = #tpu.dot_dimension_numbers<[1], [0], [0], [1], [0, 0, 1, 1], [], []>} : vector<128x32xf32>, vector<32x32xf32>, vector<128x32xf32> -> vector<128x32xf32>
    %46 = arith.addf %40, %45 : vector<128x32xf32>
    %47 = vector.shape_cast %46 : vector<128x32xf32> to vector<2x64x32xf32>
    %48 = vector.shape_cast %16 : vector<1x32xf32> to vector<1x1x32xf32>
    %49 = vector.broadcast %48 : vector<1x1x32xf32> to vector<2x64x32xf32>
    %50 = arith.addf %47, %49 : vector<2x64x32xf32>
    %cst_41 = arith.constant 0.000000e+00 : f32
    %51 = vector.broadcast %cst_41 : f32 to vector<2x64x32xf32>
    %52 = arith.maximumf %50, %51 : vector<2x64x32xf32>
    %53 = vector.extract_strided_slice %5 {offsets = [3, 0], sizes = [1, 32], strides = [1, 1]} : vector<4x32xf32> to vector<1x32xf32>
    %c0_42 = arith.constant 0 : index
    %c8_43 = arith.constant 8 : index
    %c0_44 = arith.constant 0 : index
    %54 = vector.load %arg6[%c0_42, %c8_43, %c0_44] : memref<2x80x32xf32, #tpu.memory_space<vmem>>, vector<2x64x32xf32>
    tpu.vector_store %arg6[%c0_42, %c8_43, %c0_44], %52 {strides = array<i32>} : memref<2x80x32xf32, #tpu.memory_space<vmem>>, vector<2x64x32xf32>,
    %c0_45 = arith.constant 0 : index
    %c4_46 = arith.constant 4 : index
    %c0_47 = arith.constant 0 : index
    %55 = vector.load %arg6[%c0_45, %c4_46, %c0_47] : memref<2x80x32xf32, #tpu.memory_space<vmem>>, vector<2x64x32xf32>
    %56 = vector.shape_cast %55 : vector<2x64x32xf32> to vector<128x32xf32>
    %c0_48 = arith.constant 0 : index
    %c0_49 = arith.constant 0 : index
    %c0_50 = arith.constant 0 : index
    %57 = vector.load %arg4[%c0_48, %c0_49, %c0_50] : memref<20x32x32xf32, #tpu.memory_space<vmem>>, vector<1x32x32xf32>
    %58 = vector.shape_cast %57 : vector<1x32x32xf32> to vector<32x32xf32>
    %cst_51 = arith.constant dense<0.000000e+00> : vector<128x32xf32>
    %59 = tpu.matmul %56, %58, %cst_51 {dimension_numbers = #tpu.dot_dimension_numbers<[1], [0], [0], [1], [0, 0, 1, 1], [], []>} : vector<128x32xf32>, vector<32x32xf32>, vector<128x32xf32> -> vector<128x32xf32>
    %c0_52 = arith.constant 0 : index
    %c6_53 = arith.constant 6 : index
    %c0_54 = arith.constant 0 : index
    %60 = vector.load %arg6[%c0_52, %c6_53, %c0_54] : memref<2x80x32xf32, #tpu.memory_space<vmem>>, vector<2x64x32xf32>
    %61 = vector.shape_cast %60 : vector<2x64x32xf32> to vector<128x32xf32>
    %c1_55 = arith.constant 1 : index
    %c0_56 = arith.constant 0 : index
    %c0_57 = arith.constant 0 : index
    %62 = vector.load %arg4[%c1_55, %c0_56, %c0_57] : memref<20x32x32xf32, #tpu.memory_space<vmem>>, vector<1x32x32xf32>
    %63 = vector.shape_cast %62 : vector<1x32x32xf32> to vector<32x32xf32>
    %cst_58 = arith.constant dense<0.000000e+00> : vector<128x32xf32>
    %64 = tpu.matmul %61, %63, %cst_58 {dimension_numbers = #tpu.dot_dimension_numbers<[1], [0], [0], [1], [0, 0, 1, 1], [], []>} : vector<128x32xf32>, vector<32x32xf32>, vector<128x32xf32> -> vector<128x32xf32>
    %65 = arith.addf %59, %64 : vector<128x32xf32>
    %c0_59 = arith.constant 0 : index
    %c8_60 = arith.constant 8 : index
    %c0_61 = arith.constant 0 : index
    %66 = vector.load %arg6[%c0_59, %c8_60, %c0_61] : memref<2x80x32xf32, #tpu.memory_space<vmem>>, vector<2x64x32xf32>
    %67 = vector.shape_cast %66 : vector<2x64x32xf32> to vector<128x32xf32>
    %c2_62 = arith.constant 2 : index
    %c0_63 = arith.constant 0 : index
    %c0_64 = arith.constant 0 : index
    %68 = vector.load %arg4[%c2_62, %c0_63, %c0_64] : memref<20x32x32xf32, #tpu.memory_space<vmem>>, vector<1x32x32xf32>
    %69 = vector.shape_cast %68 : vector<1x32x32xf32> to vector<32x32xf32>
    %cst_65 = arith.constant dense<0.000000e+00> : vector<128x32xf32>
    %70 = tpu.matmul %67, %69, %cst_65 {dimension_numbers = #tpu.dot_dimension_numbers<[1], [0], [0], [1], [0, 0, 1, 1], [], []>} : vector<128x32xf32>, vector<32x32xf32>, vector<128x32xf32> -> vector<128x32xf32>
    %71 = arith.addf %65, %70 : vector<128x32xf32>
    %c0_66 = arith.constant 0 : index
    %c10_67 = arith.constant 10 : index
    %c0_68 = arith.constant 0 : index
    %72 = vector.load %arg6[%c0_66, %c10_67, %c0_68] : memref<2x80x32xf32, #tpu.memory_space<vmem>>, vector<2x64x32xf32>
    %73 = vector.shape_cast %72 : vector<2x64x32xf32> to vector<128x32xf32>
    %c3_69 = arith.constant 3 : index
    %c0_70 = arith.constant 0 : index
    %c0_71 = arith.constant 0 : index
    %74 = vector.load %arg4[%c3_69, %c0_70, %c0_71] : memref<20x32x32xf32, #tpu.memory_space<vmem>>, vector<1x32x32xf32>
    %75 = vector.shape_cast %74 : vector<1x32x32xf32> to vector<32x32xf32>
    %cst_72 = arith.constant dense<0.000000e+00> : vector<128x32xf32>
    %76 = tpu.matmul %73, %75, %cst_72 {dimension_numbers = #tpu.dot_dimension_numbers<[1], [0], [0], [1], [0, 0, 1, 1], [], []>} : vector<128x32xf32>, vector<32x32xf32>, vector<128x32xf32> -> vector<128x32xf32>
    %77 = arith.addf %71, %76 : vector<128x32xf32>
    %c0_73 = arith.constant 0 : index
    %c12_74 = arith.constant 12 : index
    %c0_75 = arith.constant 0 : index
    %78 = vector.load %arg6[%c0_73, %c12_74, %c0_75] : memref<2x80x32xf32, #tpu.memory_space<vmem>>, vector<2x64x32xf32>
    %79 = vector.shape_cast %78 : vector<2x64x32xf32> to vector<128x32xf32>
    %c4_76 = arith.constant 4 : index
    %c0_77 = arith.constant 0 : index
    %c0_78 = arith.constant 0 : index
    %80 = vector.load %arg4[%c4_76, %c0_77, %c0_78] : memref<20x32x32xf32, #tpu.memory_space<vmem>>, vector<1x32x32xf32>
    %81 = vector.shape_cast %80 : vector<1x32x32xf32> to vector<32x32xf32>
    %cst_79 = arith.constant dense<0.000000e+00> : vector<128x32xf32>
    %82 = tpu.matmul %79, %81, %cst_79 {dimension_numbers = #tpu.dot_dimension_numbers<[1], [0], [0], [1], [0, 0, 1, 1], [], []>} : vector<128x32xf32>, vector<32x32xf32>, vector<128x32xf32> -> vector<128x32xf32>
    %83 = arith.addf %77, %82 : vector<128x32xf32>
    %84 = vector.shape_cast %83 : vector<128x32xf32> to vector<2x64x32xf32>
    %85 = vector.shape_cast %53 : vector<1x32xf32> to vector<1x1x32xf32>
    %86 = vector.broadcast %85 : vector<1x1x32xf32> to vector<2x64x32xf32>
    %87 = arith.addf %84, %86 : vector<2x64x32xf32>
    %88 = arith.addf %3, %87 : vector<2x64x32xf32>
    %c1_80 = arith.constant 1 : index
    %c0_81 = arith.constant 0 : index
    %c0_82 = arith.constant 0 : index
    %89 = vector.load %arg2[%c1_80, %c0_81, %c0_82] : memref<4x4x32xf32, #tpu.memory_space<vmem>>, vector<1x4x32xf32>
    %90 = vector.shape_cast %89 : vector<1x4x32xf32> to vector<4x32xf32>
    %91 = vector.extract_strided_slice %90 {offsets = [0, 0], sizes = [1, 32], strides = [1, 1]} : vector<4x32xf32> to vector<1x32xf32>
    %92 = vector.shape_cast %91 : vector<1x32xf32> to vector<1x1x32xf32>
    %93 = vector.broadcast %92 : vector<1x1x32xf32> to vector<2x64x32xf32>
    %94 = arith.mulf %88, %93 : vector<2x64x32xf32>
    %95 = vector.extract_strided_slice %90 {offsets = [1, 0], sizes = [1, 32], strides = [1, 1]} : vector<4x32xf32> to vector<1x32xf32>
    %96 = vector.shape_cast %95 : vector<1x32xf32> to vector<1x1x32xf32>
    %97 = vector.broadcast %96 : vector<1x1x32xf32> to vector<2x64x32xf32>
    %98 = arith.addf %94, %97 : vector<2x64x32xf32>
    %cst_83 = arith.constant 0.000000e+00 : f32
    %99 = vector.broadcast %cst_83 : f32 to vector<2x64x32xf32>
    %100 = arith.maximumf %98, %99 : vector<2x64x32xf32>
    %101 = vector.extract_strided_slice %90 {offsets = [2, 0], sizes = [1, 32], strides = [1, 1]} : vector<4x32xf32> to vector<1x32xf32>
    %c0_84 = arith.constant 0 : index
    %c8_85 = arith.constant 8 : index
    %c0_86 = arith.constant 0 : index
    %102 = vector.load %arg6[%c0_84, %c8_85, %c0_86] : memref<2x80x32xf32, #tpu.memory_space<vmem>>, vector<2x64x32xf32>
    tpu.vector_store %arg6[%c0_84, %c8_85, %c0_86], %100 {strides = array<i32>} : memref<2x80x32xf32, #tpu.memory_space<vmem>>, vector<2x64x32xf32>,
    %c0_87 = arith.constant 0 : index
    %c4_88 = arith.constant 4 : index
    %c0_89 = arith.constant 0 : index
    %103 = vector.load %arg6[%c0_87, %c4_88, %c0_89] : memref<2x80x32xf32, #tpu.memory_space<vmem>>, vector<2x64x32xf32>
    %104 = vector.shape_cast %103 : vector<2x64x32xf32> to vector<128x32xf32>
    %c5 = arith.constant 5 : index
    %c0_90 = arith.constant 0 : index
    %c0_91 = arith.constant 0 : index
    %105 = vector.load %arg3[%c5, %c0_90, %c0_91] : memref<20x32x32xf32, #tpu.memory_space<vmem>>, vector<1x32x32xf32>
    %106 = vector.shape_cast %105 : vector<1x32x32xf32> to vector<32x32xf32>
    %cst_92 = arith.constant dense<0.000000e+00> : vector<128x32xf32>
    %107 = tpu.matmul %104, %106, %cst_92 {dimension_numbers = #tpu.dot_dimension_numbers<[1], [0], [0], [1], [0, 0, 1, 1], [], []>} : vector<128x32xf32>, vector<32x32xf32>, vector<128x32xf32> -> vector<128x32xf32>
    %c0_93 = arith.constant 0 : index
    %c6_94 = arith.constant 6 : index
    %c0_95 = arith.constant 0 : index
    %108 = vector.load %arg6[%c0_93, %c6_94, %c0_95] : memref<2x80x32xf32, #tpu.memory_space<vmem>>, vector<2x64x32xf32>
    %109 = vector.shape_cast %108 : vector<2x64x32xf32> to vector<128x32xf32>
    %c6_96 = arith.constant 6 : index
    %c0_97 = arith.constant 0 : index
    %c0_98 = arith.constant 0 : index
    %110 = vector.load %arg3[%c6_96, %c0_97, %c0_98] : memref<20x32x32xf32, #tpu.memory_space<vmem>>, vector<1x32x32xf32>
    %111 = vector.shape_cast %110 : vector<1x32x32xf32> to vector<32x32xf32>
    %cst_99 = arith.constant dense<0.000000e+00> : vector<128x32xf32>
    %112 = tpu.matmul %109, %111, %cst_99 {dimension_numbers = #tpu.dot_dimension_numbers<[1], [0], [0], [1], [0, 0, 1, 1], [], []>} : vector<128x32xf32>, vector<32x32xf32>, vector<128x32xf32> -> vector<128x32xf32>
    %113 = arith.addf %107, %112 : vector<128x32xf32>
    %c0_100 = arith.constant 0 : index
    %c8_101 = arith.constant 8 : index
    %c0_102 = arith.constant 0 : index
    %114 = vector.load %arg6[%c0_100, %c8_101, %c0_102] : memref<2x80x32xf32, #tpu.memory_space<vmem>>, vector<2x64x32xf32>
    %115 = vector.shape_cast %114 : vector<2x64x32xf32> to vector<128x32xf32>
    %c7 = arith.constant 7 : index
    %c0_103 = arith.constant 0 : index
    %c0_104 = arith.constant 0 : index
    %116 = vector.load %arg3[%c7, %c0_103, %c0_104] : memref<20x32x32xf32, #tpu.memory_space<vmem>>, vector<1x32x32xf32>
    %117 = vector.shape_cast %116 : vector<1x32x32xf32> to vector<32x32xf32>
    %cst_105 = arith.constant dense<0.000000e+00> : vector<128x32xf32>
    %118 = tpu.matmul %115, %117, %cst_105 {dimension_numbers = #tpu.dot_dimension_numbers<[1], [0], [0], [1], [0, 0, 1, 1], [], []>} : vector<128x32xf32>, vector<32x32xf32>, vector<128x32xf32> -> vector<128x32xf32>
    %119 = arith.addf %113, %118 : vector<128x32xf32>
    %c0_106 = arith.constant 0 : index
    %c10_107 = arith.constant 10 : index
    %c0_108 = arith.constant 0 : index
    %120 = vector.load %arg6[%c0_106, %c10_107, %c0_108] : memref<2x80x32xf32, #tpu.memory_space<vmem>>, vector<2x64x32xf32>
    %121 = vector.shape_cast %120 : vector<2x64x32xf32> to vector<128x32xf32>
    %c8_109 = arith.constant 8 : index
    %c0_110 = arith.constant 0 : index
    %c0_111 = arith.constant 0 : index
    %122 = vector.load %arg3[%c8_109, %c0_110, %c0_111] : memref<20x32x32xf32, #tpu.memory_space<vmem>>, vector<1x32x32xf32>
    %123 = vector.shape_cast %122 : vector<1x32x32xf32> to vector<32x32xf32>
    %cst_112 = arith.constant dense<0.000000e+00> : vector<128x32xf32>
    %124 = tpu.matmul %121, %123, %cst_112 {dimension_numbers = #tpu.dot_dimension_numbers<[1], [0], [0], [1], [0, 0, 1, 1], [], []>} : vector<128x32xf32>, vector<32x32xf32>, vector<128x32xf32> -> vector<128x32xf32>
    %125 = arith.addf %119, %124 : vector<128x32xf32>
    %c0_113 = arith.constant 0 : index
    %c12_114 = arith.constant 12 : index
    %c0_115 = arith.constant 0 : index
    %126 = vector.load %arg6[%c0_113, %c12_114, %c0_115] : memref<2x80x32xf32, #tpu.memory_space<vmem>>, vector<2x64x32xf32>
    %127 = vector.shape_cast %126 : vector<2x64x32xf32> to vector<128x32xf32>
    %c9 = arith.constant 9 : index
    %c0_116 = arith.constant 0 : index
    %c0_117 = arith.constant 0 : index
    %128 = vector.load %arg3[%c9, %c0_116, %c0_117] : memref<20x32x32xf32, #tpu.memory_space<vmem>>, vector<1x32x32xf32>
    %129 = vector.shape_cast %128 : vector<1x32x32xf32> to vector<32x32xf32>
    %cst_118 = arith.constant dense<0.000000e+00> : vector<128x32xf32>
    %130 = tpu.matmul %127, %129, %cst_118 {dimension_numbers = #tpu.dot_dimension_numbers<[1], [0], [0], [1], [0, 0, 1, 1], [], []>} : vector<128x32xf32>, vector<32x32xf32>, vector<128x32xf32> -> vector<128x32xf32>
    %131 = arith.addf %125, %130 : vector<128x32xf32>
    %132 = vector.shape_cast %131 : vector<128x32xf32> to vector<2x64x32xf32>
    %133 = vector.shape_cast %101 : vector<1x32xf32> to vector<1x1x32xf32>
    %134 = vector.broadcast %133 : vector<1x1x32xf32> to vector<2x64x32xf32>
    %135 = arith.addf %132, %134 : vector<2x64x32xf32>
    %cst_119 = arith.constant 0.000000e+00 : f32
    %136 = vector.broadcast %cst_119 : f32 to vector<2x64x32xf32>
    %137 = arith.maximumf %135, %136 : vector<2x64x32xf32>
    %138 = vector.extract_strided_slice %90 {offsets = [3, 0], sizes = [1, 32], strides = [1, 1]} : vector<4x32xf32> to vector<1x32xf32>
    %c0_120 = arith.constant 0 : index
    %c8_121 = arith.constant 8 : index
    %c0_122 = arith.constant 0 : index
    %139 = vector.load %arg6[%c0_120, %c8_121, %c0_122] : memref<2x80x32xf32, #tpu.memory_space<vmem>>, vector<2x64x32xf32>
    tpu.vector_store %arg6[%c0_120, %c8_121, %c0_122], %137 {strides = array<i32>} : memref<2x80x32xf32, #tpu.memory_space<vmem>>, vector<2x64x32xf32>,
    %c0_123 = arith.constant 0 : index
    %c4_124 = arith.constant 4 : index
    %c0_125 = arith.constant 0 : index
    %140 = vector.load %arg6[%c0_123, %c4_124, %c0_125] : memref<2x80x32xf32, #tpu.memory_space<vmem>>, vector<2x64x32xf32>
    %141 = vector.shape_cast %140 : vector<2x64x32xf32> to vector<128x32xf32>
    %c5_126 = arith.constant 5 : index
    %c0_127 = arith.constant 0 : index
    %c0_128 = arith.constant 0 : index
    %142 = vector.load %arg4[%c5_126, %c0_127, %c0_128] : memref<20x32x32xf32, #tpu.memory_space<vmem>>, vector<1x32x32xf32>
    %143 = vector.shape_cast %142 : vector<1x32x32xf32> to vector<32x32xf32>
    %cst_129 = arith.constant dense<0.000000e+00> : vector<128x32xf32>
    %144 = tpu.matmul %141, %143, %cst_129 {dimension_numbers = #tpu.dot_dimension_numbers<[1], [0], [0], [1], [0, 0, 1, 1], [], []>} : vector<128x32xf32>, vector<32x32xf32>, vector<128x32xf32> -> vector<128x32xf32>
    %c0_130 = arith.constant 0 : index
    %c6_131 = arith.constant 6 : index
    %c0_132 = arith.constant 0 : index
    %145 = vector.load %arg6[%c0_130, %c6_131, %c0_132] : memref<2x80x32xf32, #tpu.memory_space<vmem>>, vector<2x64x32xf32>
    %146 = vector.shape_cast %145 : vector<2x64x32xf32> to vector<128x32xf32>
    %c6_133 = arith.constant 6 : index
    %c0_134 = arith.constant 0 : index
    %c0_135 = arith.constant 0 : index
    %147 = vector.load %arg4[%c6_133, %c0_134, %c0_135] : memref<20x32x32xf32, #tpu.memory_space<vmem>>, vector<1x32x32xf32>
    %148 = vector.shape_cast %147 : vector<1x32x32xf32> to vector<32x32xf32>
    %cst_136 = arith.constant dense<0.000000e+00> : vector<128x32xf32>
    %149 = tpu.matmul %146, %148, %cst_136 {dimension_numbers = #tpu.dot_dimension_numbers<[1], [0], [0], [1], [0, 0, 1, 1], [], []>} : vector<128x32xf32>, vector<32x32xf32>, vector<128x32xf32> -> vector<128x32xf32>
    %150 = arith.addf %144, %149 : vector<128x32xf32>
    %c0_137 = arith.constant 0 : index
    %c8_138 = arith.constant 8 : index
    %c0_139 = arith.constant 0 : index
    %151 = vector.load %arg6[%c0_137, %c8_138, %c0_139] : memref<2x80x32xf32, #tpu.memory_space<vmem>>, vector<2x64x32xf32>
    %152 = vector.shape_cast %151 : vector<2x64x32xf32> to vector<128x32xf32>
    %c7_140 = arith.constant 7 : index
    %c0_141 = arith.constant 0 : index
    %c0_142 = arith.constant 0 : index
    %153 = vector.load %arg4[%c7_140, %c0_141, %c0_142] : memref<20x32x32xf32, #tpu.memory_space<vmem>>, vector<1x32x32xf32>
    %154 = vector.shape_cast %153 : vector<1x32x32xf32> to vector<32x32xf32>
    %cst_143 = arith.constant dense<0.000000e+00> : vector<128x32xf32>
    %155 = tpu.matmul %152, %154, %cst_143 {dimension_numbers = #tpu.dot_dimension_numbers<[1], [0], [0], [1], [0, 0, 1, 1], [], []>} : vector<128x32xf32>, vector<32x32xf32>, vector<128x32xf32> -> vector<128x32xf32>
    %156 = arith.addf %150, %155 : vector<128x32xf32>
    %c0_144 = arith.constant 0 : index
    %c10_145 = arith.constant 10 : index
    %c0_146 = arith.constant 0 : index
    %157 = vector.load %arg6[%c0_144, %c10_145, %c0_146] : memref<2x80x32xf32, #tpu.memory_space<vmem>>, vector<2x64x32xf32>
    %158 = vector.shape_cast %157 : vector<2x64x32xf32> to vector<128x32xf32>
    %c8_147 = arith.constant 8 : index
    %c0_148 = arith.constant 0 : index
    %c0_149 = arith.constant 0 : index
    %159 = vector.load %arg4[%c8_147, %c0_148, %c0_149] : memref<20x32x32xf32, #tpu.memory_space<vmem>>, vector<1x32x32xf32>
    %160 = vector.shape_cast %159 : vector<1x32x32xf32> to vector<32x32xf32>
    %cst_150 = arith.constant dense<0.000000e+00> : vector<128x32xf32>
    %161 = tpu.matmul %158, %160, %cst_150 {dimension_numbers = #tpu.dot_dimension_numbers<[1], [0], [0], [1], [0, 0, 1, 1], [], []>} : vector<128x32xf32>, vector<32x32xf32>, vector<128x32xf32> -> vector<128x32xf32>
    %162 = arith.addf %156, %161 : vector<128x32xf32>
    %c0_151 = arith.constant 0 : index
    %c12_152 = arith.constant 12 : index
    %c0_153 = arith.constant 0 : index
    %163 = vector.load %arg6[%c0_151, %c12_152, %c0_153] : memref<2x80x32xf32, #tpu.memory_space<vmem>>, vector<2x64x32xf32>
    %164 = vector.shape_cast %163 : vector<2x64x32xf32> to vector<128x32xf32>
    %c9_154 = arith.constant 9 : index
    %c0_155 = arith.constant 0 : index
    %c0_156 = arith.constant 0 : index
    %165 = vector.load %arg4[%c9_154, %c0_155, %c0_156] : memref<20x32x32xf32, #tpu.memory_space<vmem>>, vector<1x32x32xf32>
    %166 = vector.shape_cast %165 : vector<1x32x32xf32> to vector<32x32xf32>
    %cst_157 = arith.constant dense<0.000000e+00> : vector<128x32xf32>
    %167 = tpu.matmul %164, %166, %cst_157 {dimension_numbers = #tpu.dot_dimension_numbers<[1], [0], [0], [1], [0, 0, 1, 1], [], []>} : vector<128x32xf32>, vector<32x32xf32>, vector<128x32xf32> -> vector<128x32xf32>
    %168 = arith.addf %162, %167 : vector<128x32xf32>
    %169 = vector.shape_cast %168 : vector<128x32xf32> to vector<2x64x32xf32>
    %170 = vector.shape_cast %138 : vector<1x32xf32> to vector<1x1x32xf32>
    %171 = vector.broadcast %170 : vector<1x1x32xf32> to vector<2x64x32xf32>
    %172 = arith.addf %169, %171 : vector<2x64x32xf32>
    %173 = arith.addf %88, %172 : vector<2x64x32xf32>
    %c2_158 = arith.constant 2 : index
    %c0_159 = arith.constant 0 : index
    %c0_160 = arith.constant 0 : index
    %174 = vector.load %arg2[%c2_158, %c0_159, %c0_160] : memref<4x4x32xf32, #tpu.memory_space<vmem>>, vector<1x4x32xf32>
    %175 = vector.shape_cast %174 : vector<1x4x32xf32> to vector<4x32xf32>
    %176 = vector.extract_strided_slice %175 {offsets = [0, 0], sizes = [1, 32], strides = [1, 1]} : vector<4x32xf32> to vector<1x32xf32>
    %177 = vector.shape_cast %176 : vector<1x32xf32> to vector<1x1x32xf32>
    %178 = vector.broadcast %177 : vector<1x1x32xf32> to vector<2x64x32xf32>
    %179 = arith.mulf %173, %178 : vector<2x64x32xf32>
    %180 = vector.extract_strided_slice %175 {offsets = [1, 0], sizes = [1, 32], strides = [1, 1]} : vector<4x32xf32> to vector<1x32xf32>
    %181 = vector.shape_cast %180 : vector<1x32xf32> to vector<1x1x32xf32>
    %182 = vector.broadcast %181 : vector<1x1x32xf32> to vector<2x64x32xf32>
    %183 = arith.addf %179, %182 : vector<2x64x32xf32>
    %cst_161 = arith.constant 0.000000e+00 : f32
    %184 = vector.broadcast %cst_161 : f32 to vector<2x64x32xf32>
    %185 = arith.maximumf %183, %184 : vector<2x64x32xf32>
    %186 = vector.extract_strided_slice %175 {offsets = [2, 0], sizes = [1, 32], strides = [1, 1]} : vector<4x32xf32> to vector<1x32xf32>
    %c0_162 = arith.constant 0 : index
    %c8_163 = arith.constant 8 : index
    %c0_164 = arith.constant 0 : index
    %187 = vector.load %arg6[%c0_162, %c8_163, %c0_164] : memref<2x80x32xf32, #tpu.memory_space<vmem>>, vector<2x64x32xf32>
    tpu.vector_store %arg6[%c0_162, %c8_163, %c0_164], %185 {strides = array<i32>} : memref<2x80x32xf32, #tpu.memory_space<vmem>>, vector<2x64x32xf32>,
    %c0_165 = arith.constant 0 : index
    %c4_166 = arith.constant 4 : index
    %c0_167 = arith.constant 0 : index
    %188 = vector.load %arg6[%c0_165, %c4_166, %c0_167] : memref<2x80x32xf32, #tpu.memory_space<vmem>>, vector<2x64x32xf32>
    %189 = vector.shape_cast %188 : vector<2x64x32xf32> to vector<128x32xf32>
    %c10_168 = arith.constant 10 : index
    %c0_169 = arith.constant 0 : index
    %c0_170 = arith.constant 0 : index
    %190 = vector.load %arg3[%c10_168, %c0_169, %c0_170] : memref<20x32x32xf32, #tpu.memory_space<vmem>>, vector<1x32x32xf32>
    %191 = vector.shape_cast %190 : vector<1x32x32xf32> to vector<32x32xf32>
    %cst_171 = arith.constant dense<0.000000e+00> : vector<128x32xf32>
    %192 = tpu.matmul %189, %191, %cst_171 {dimension_numbers = #tpu.dot_dimension_numbers<[1], [0], [0], [1], [0, 0, 1, 1], [], []>} : vector<128x32xf32>, vector<32x32xf32>, vector<128x32xf32> -> vector<128x32xf32>
    %c0_172 = arith.constant 0 : index
    %c6_173 = arith.constant 6 : index
    %c0_174 = arith.constant 0 : index
    %193 = vector.load %arg6[%c0_172, %c6_173, %c0_174] : memref<2x80x32xf32, #tpu.memory_space<vmem>>, vector<2x64x32xf32>
    %194 = vector.shape_cast %193 : vector<2x64x32xf32> to vector<128x32xf32>
    %c11 = arith.constant 11 : index
    %c0_175 = arith.constant 0 : index
    %c0_176 = arith.constant 0 : index
    %195 = vector.load %arg3[%c11, %c0_175, %c0_176] : memref<20x32x32xf32, #tpu.memory_space<vmem>>, vector<1x32x32xf32>
    %196 = vector.shape_cast %195 : vector<1x32x32xf32> to vector<32x32xf32>
    %cst_177 = arith.constant dense<0.000000e+00> : vector<128x32xf32>
    %197 = tpu.matmul %194, %196, %cst_177 {dimension_numbers = #tpu.dot_dimension_numbers<[1], [0], [0], [1], [0, 0, 1, 1], [], []>} : vector<128x32xf32>, vector<32x32xf32>, vector<128x32xf32> -> vector<128x32xf32>
    %198 = arith.addf %192, %197 : vector<128x32xf32>
    %c0_178 = arith.constant 0 : index
    %c8_179 = arith.constant 8 : index
    %c0_180 = arith.constant 0 : index
    %199 = vector.load %arg6[%c0_178, %c8_179, %c0_180] : memref<2x80x32xf32, #tpu.memory_space<vmem>>, vector<2x64x32xf32>
    %200 = vector.shape_cast %199 : vector<2x64x32xf32> to vector<128x32xf32>
    %c12_181 = arith.constant 12 : index
    %c0_182 = arith.constant 0 : index
    %c0_183 = arith.constant 0 : index
    %201 = vector.load %arg3[%c12_181, %c0_182, %c0_183] : memref<20x32x32xf32, #tpu.memory_space<vmem>>, vector<1x32x32xf32>
    %202 = vector.shape_cast %201 : vector<1x32x32xf32> to vector<32x32xf32>
    %cst_184 = arith.constant dense<0.000000e+00> : vector<128x32xf32>
    %203 = tpu.matmul %200, %202, %cst_184 {dimension_numbers = #tpu.dot_dimension_numbers<[1], [0], [0], [1], [0, 0, 1, 1], [], []>} : vector<128x32xf32>, vector<32x32xf32>, vector<128x32xf32> -> vector<128x32xf32>
    %204 = arith.addf %198, %203 : vector<128x32xf32>
    %c0_185 = arith.constant 0 : index
    %c10_186 = arith.constant 10 : index
    %c0_187 = arith.constant 0 : index
    %205 = vector.load %arg6[%c0_185, %c10_186, %c0_187] : memref<2x80x32xf32, #tpu.memory_space<vmem>>, vector<2x64x32xf32>
    %206 = vector.shape_cast %205 : vector<2x64x32xf32> to vector<128x32xf32>
    %c13 = arith.constant 13 : index
    %c0_188 = arith.constant 0 : index
    %c0_189 = arith.constant 0 : index
    %207 = vector.load %arg3[%c13, %c0_188, %c0_189] : memref<20x32x32xf32, #tpu.memory_space<vmem>>, vector<1x32x32xf32>
    %208 = vector.shape_cast %207 : vector<1x32x32xf32> to vector<32x32xf32>
    %cst_190 = arith.constant dense<0.000000e+00> : vector<128x32xf32>
    %209 = tpu.matmul %206, %208, %cst_190 {dimension_numbers = #tpu.dot_dimension_numbers<[1], [0], [0], [1], [0, 0, 1, 1], [], []>} : vector<128x32xf32>, vector<32x32xf32>, vector<128x32xf32> -> vector<128x32xf32>
    %210 = arith.addf %204, %209 : vector<128x32xf32>
    %c0_191 = arith.constant 0 : index
    %c12_192 = arith.constant 12 : index
    %c0_193 = arith.constant 0 : index
    %211 = vector.load %arg6[%c0_191, %c12_192, %c0_193] : memref<2x80x32xf32, #tpu.memory_space<vmem>>, vector<2x64x32xf32>
    %212 = vector.shape_cast %211 : vector<2x64x32xf32> to vector<128x32xf32>
    %c14 = arith.constant 14 : index
    %c0_194 = arith.constant 0 : index
    %c0_195 = arith.constant 0 : index
    %213 = vector.load %arg3[%c14, %c0_194, %c0_195] : memref<20x32x32xf32, #tpu.memory_space<vmem>>, vector<1x32x32xf32>
    %214 = vector.shape_cast %213 : vector<1x32x32xf32> to vector<32x32xf32>
    %cst_196 = arith.constant dense<0.000000e+00> : vector<128x32xf32>
    %215 = tpu.matmul %212, %214, %cst_196 {dimension_numbers = #tpu.dot_dimension_numbers<[1], [0], [0], [1], [0, 0, 1, 1], [], []>} : vector<128x32xf32>, vector<32x32xf32>, vector<128x32xf32> -> vector<128x32xf32>
    %216 = arith.addf %210, %215 : vector<128x32xf32>
    %217 = vector.shape_cast %216 : vector<128x32xf32> to vector<2x64x32xf32>
    %218 = vector.shape_cast %186 : vector<1x32xf32> to vector<1x1x32xf32>
    %219 = vector.broadcast %218 : vector<1x1x32xf32> to vector<2x64x32xf32>
    %220 = arith.addf %217, %219 : vector<2x64x32xf32>
    %cst_197 = arith.constant 0.000000e+00 : f32
    %221 = vector.broadcast %cst_197 : f32 to vector<2x64x32xf32>
    %222 = arith.maximumf %220, %221 : vector<2x64x32xf32>
    %223 = vector.extract_strided_slice %175 {offsets = [3, 0], sizes = [1, 32], strides = [1, 1]} : vector<4x32xf32> to vector<1x32xf32>
    %c0_198 = arith.constant 0 : index
    %c8_199 = arith.constant 8 : index
    %c0_200 = arith.constant 0 : index
    %224 = vector.load %arg6[%c0_198, %c8_199, %c0_200] : memref<2x80x32xf32, #tpu.memory_space<vmem>>, vector<2x64x32xf32>
    tpu.vector_store %arg6[%c0_198, %c8_199, %c0_200], %222 {strides = array<i32>} : memref<2x80x32xf32, #tpu.memory_space<vmem>>, vector<2x64x32xf32>,
    %c0_201 = arith.constant 0 : index
    %c4_202 = arith.constant 4 : index
    %c0_203 = arith.constant 0 : index
    %225 = vector.load %arg6[%c0_201, %c4_202, %c0_203] : memref<2x80x32xf32, #tpu.memory_space<vmem>>, vector<2x64x32xf32>
    %226 = vector.shape_cast %225 : vector<2x64x32xf32> to vector<128x32xf32>
    %c10_204 = arith.constant 10 : index
    %c0_205 = arith.constant 0 : index
    %c0_206 = arith.constant 0 : index
    %227 = vector.load %arg4[%c10_204, %c0_205, %c0_206] : memref<20x32x32xf32, #tpu.memory_space<vmem>>, vector<1x32x32xf32>
    %228 = vector.shape_cast %227 : vector<1x32x32xf32> to vector<32x32xf32>
    %cst_207 = arith.constant dense<0.000000e+00> : vector<128x32xf32>
    %229 = tpu.matmul %226, %228, %cst_207 {dimension_numbers = #tpu.dot_dimension_numbers<[1], [0], [0], [1], [0, 0, 1, 1], [], []>} : vector<128x32xf32>, vector<32x32xf32>, vector<128x32xf32> -> vector<128x32xf32>
    %c0_208 = arith.constant 0 : index
    %c6_209 = arith.constant 6 : index
    %c0_210 = arith.constant 0 : index
    %230 = vector.load %arg6[%c0_208, %c6_209, %c0_210] : memref<2x80x32xf32, #tpu.memory_space<vmem>>, vector<2x64x32xf32>
    %231 = vector.shape_cast %230 : vector<2x64x32xf32> to vector<128x32xf32>
    %c11_211 = arith.constant 11 : index
    %c0_212 = arith.constant 0 : index
    %c0_213 = arith.constant 0 : index
    %232 = vector.load %arg4[%c11_211, %c0_212, %c0_213] : memref<20x32x32xf32, #tpu.memory_space<vmem>>, vector<1x32x32xf32>
    %233 = vector.shape_cast %232 : vector<1x32x32xf32> to vector<32x32xf32>
    %cst_214 = arith.constant dense<0.000000e+00> : vector<128x32xf32>
    %234 = tpu.matmul %231, %233, %cst_214 {dimension_numbers = #tpu.dot_dimension_numbers<[1], [0], [0], [1], [0, 0, 1, 1], [], []>} : vector<128x32xf32>, vector<32x32xf32>, vector<128x32xf32> -> vector<128x32xf32>
    %235 = arith.addf %229, %234 : vector<128x32xf32>
    %c0_215 = arith.constant 0 : index
    %c8_216 = arith.constant 8 : index
    %c0_217 = arith.constant 0 : index
    %236 = vector.load %arg6[%c0_215, %c8_216, %c0_217] : memref<2x80x32xf32, #tpu.memory_space<vmem>>, vector<2x64x32xf32>
    %237 = vector.shape_cast %236 : vector<2x64x32xf32> to vector<128x32xf32>
    %c12_218 = arith.constant 12 : index
    %c0_219 = arith.constant 0 : index
    %c0_220 = arith.constant 0 : index
    %238 = vector.load %arg4[%c12_218, %c0_219, %c0_220] : memref<20x32x32xf32, #tpu.memory_space<vmem>>, vector<1x32x32xf32>
    %239 = vector.shape_cast %238 : vector<1x32x32xf32> to vector<32x32xf32>
    %cst_221 = arith.constant dense<0.000000e+00> : vector<128x32xf32>
    %240 = tpu.matmul %237, %239, %cst_221 {dimension_numbers = #tpu.dot_dimension_numbers<[1], [0], [0], [1], [0, 0, 1, 1], [], []>} : vector<128x32xf32>, vector<32x32xf32>, vector<128x32xf32> -> vector<128x32xf32>
    %241 = arith.addf %235, %240 : vector<128x32xf32>
    %c0_222 = arith.constant 0 : index
    %c10_223 = arith.constant 10 : index
    %c0_224 = arith.constant 0 : index
    %242 = vector.load %arg6[%c0_222, %c10_223, %c0_224] : memref<2x80x32xf32, #tpu.memory_space<vmem>>, vector<2x64x32xf32>
    %243 = vector.shape_cast %242 : vector<2x64x32xf32> to vector<128x32xf32>
    %c13_225 = arith.constant 13 : index
    %c0_226 = arith.constant 0 : index
    %c0_227 = arith.constant 0 : index
    %244 = vector.load %arg4[%c13_225, %c0_226, %c0_227] : memref<20x32x32xf32, #tpu.memory_space<vmem>>, vector<1x32x32xf32>
    %245 = vector.shape_cast %244 : vector<1x32x32xf32> to vector<32x32xf32>
    %cst_228 = arith.constant dense<0.000000e+00> : vector<128x32xf32>
    %246 = tpu.matmul %243, %245, %cst_228 {dimension_numbers = #tpu.dot_dimension_numbers<[1], [0], [0], [1], [0, 0, 1, 1], [], []>} : vector<128x32xf32>, vector<32x32xf32>, vector<128x32xf32> -> vector<128x32xf32>
    %247 = arith.addf %241, %246 : vector<128x32xf32>
    %c0_229 = arith.constant 0 : index
    %c12_230 = arith.constant 12 : index
    %c0_231 = arith.constant 0 : index
    %248 = vector.load %arg6[%c0_229, %c12_230, %c0_231] : memref<2x80x32xf32, #tpu.memory_space<vmem>>, vector<2x64x32xf32>
    %249 = vector.shape_cast %248 : vector<2x64x32xf32> to vector<128x32xf32>
    %c14_232 = arith.constant 14 : index
    %c0_233 = arith.constant 0 : index
    %c0_234 = arith.constant 0 : index
    %250 = vector.load %arg4[%c14_232, %c0_233, %c0_234] : memref<20x32x32xf32, #tpu.memory_space<vmem>>, vector<1x32x32xf32>
    %251 = vector.shape_cast %250 : vector<1x32x32xf32> to vector<32x32xf32>
    %cst_235 = arith.constant dense<0.000000e+00> : vector<128x32xf32>
    %252 = tpu.matmul %249, %251, %cst_235 {dimension_numbers = #tpu.dot_dimension_numbers<[1], [0], [0], [1], [0, 0, 1, 1], [], []>} : vector<128x32xf32>, vector<32x32xf32>, vector<128x32xf32> -> vector<128x32xf32>
    %253 = arith.addf %247, %252 : vector<128x32xf32>
    %254 = vector.shape_cast %253 : vector<128x32xf32> to vector<2x64x32xf32>
    %255 = vector.shape_cast %223 : vector<1x32xf32> to vector<1x1x32xf32>
    %256 = vector.broadcast %255 : vector<1x1x32xf32> to vector<2x64x32xf32>
    %257 = arith.addf %254, %256 : vector<2x64x32xf32>
    %258 = arith.addf %173, %257 : vector<2x64x32xf32>
    %c3_236 = arith.constant 3 : index
    %c0_237 = arith.constant 0 : index
    %c0_238 = arith.constant 0 : index
    %259 = vector.load %arg2[%c3_236, %c0_237, %c0_238] : memref<4x4x32xf32, #tpu.memory_space<vmem>>, vector<1x4x32xf32>
    %260 = vector.shape_cast %259 : vector<1x4x32xf32> to vector<4x32xf32>
    %261 = vector.extract_strided_slice %260 {offsets = [0, 0], sizes = [1, 32], strides = [1, 1]} : vector<4x32xf32> to vector<1x32xf32>
    %262 = vector.shape_cast %261 : vector<1x32xf32> to vector<1x1x32xf32>
    %263 = vector.broadcast %262 : vector<1x1x32xf32> to vector<2x64x32xf32>
    %264 = arith.mulf %258, %263 : vector<2x64x32xf32>
    %265 = vector.extract_strided_slice %260 {offsets = [1, 0], sizes = [1, 32], strides = [1, 1]} : vector<4x32xf32> to vector<1x32xf32>
    %266 = vector.shape_cast %265 : vector<1x32xf32> to vector<1x1x32xf32>
    %267 = vector.broadcast %266 : vector<1x1x32xf32> to vector<2x64x32xf32>
    %268 = arith.addf %264, %267 : vector<2x64x32xf32>
    %cst_239 = arith.constant 0.000000e+00 : f32
    %269 = vector.broadcast %cst_239 : f32 to vector<2x64x32xf32>
    %270 = arith.maximumf %268, %269 : vector<2x64x32xf32>
    %271 = vector.extract_strided_slice %260 {offsets = [2, 0], sizes = [1, 32], strides = [1, 1]} : vector<4x32xf32> to vector<1x32xf32>
    %c0_240 = arith.constant 0 : index
    %c8_241 = arith.constant 8 : index
    %c0_242 = arith.constant 0 : index
    %272 = vector.load %arg6[%c0_240, %c8_241, %c0_242] : memref<2x80x32xf32, #tpu.memory_space<vmem>>, vector<2x64x32xf32>
    tpu.vector_store %arg6[%c0_240, %c8_241, %c0_242], %270 {strides = array<i32>} : memref<2x80x32xf32, #tpu.memory_space<vmem>>, vector<2x64x32xf32>,
    %c0_243 = arith.constant 0 : index
    %c4_244 = arith.constant 4 : index
    %c0_245 = arith.constant 0 : index
    %273 = vector.load %arg6[%c0_243, %c4_244, %c0_245] : memref<2x80x32xf32, #tpu.memory_space<vmem>>, vector<2x64x32xf32>
    %274 = vector.shape_cast %273 : vector<2x64x32xf32> to vector<128x32xf32>
    %c15 = arith.constant 15 : index
    %c0_246 = arith.constant 0 : index
    %c0_247 = arith.constant 0 : index
    %275 = vector.load %arg3[%c15, %c0_246, %c0_247] : memref<20x32x32xf32, #tpu.memory_space<vmem>>, vector<1x32x32xf32>
    %276 = vector.shape_cast %275 : vector<1x32x32xf32> to vector<32x32xf32>
    %cst_248 = arith.constant dense<0.000000e+00> : vector<128x32xf32>
    %277 = tpu.matmul %274, %276, %cst_248 {dimension_numbers = #tpu.dot_dimension_numbers<[1], [0], [0], [1], [0, 0, 1, 1], [], []>} : vector<128x32xf32>, vector<32x32xf32>, vector<128x32xf32> -> vector<128x32xf32>
    %c0_249 = arith.constant 0 : index
    %c6_250 = arith.constant 6 : index
    %c0_251 = arith.constant 0 : index
    %278 = vector.load %arg6[%c0_249, %c6_250, %c0_251] : memref<2x80x32xf32, #tpu.memory_space<vmem>>, vector<2x64x32xf32>
    %279 = vector.shape_cast %278 : vector<2x64x32xf32> to vector<128x32xf32>
    %c16 = arith.constant 16 : index
    %c0_252 = arith.constant 0 : index
    %c0_253 = arith.constant 0 : index
    %280 = vector.load %arg3[%c16, %c0_252, %c0_253] : memref<20x32x32xf32, #tpu.memory_space<vmem>>, vector<1x32x32xf32>
    %281 = vector.shape_cast %280 : vector<1x32x32xf32> to vector<32x32xf32>
    %cst_254 = arith.constant dense<0.000000e+00> : vector<128x32xf32>
    %282 = tpu.matmul %279, %281, %cst_254 {dimension_numbers = #tpu.dot_dimension_numbers<[1], [0], [0], [1], [0, 0, 1, 1], [], []>} : vector<128x32xf32>, vector<32x32xf32>, vector<128x32xf32> -> vector<128x32xf32>
    %283 = arith.addf %277, %282 : vector<128x32xf32>
    %c0_255 = arith.constant 0 : index
    %c8_256 = arith.constant 8 : index
    %c0_257 = arith.constant 0 : index
    %284 = vector.load %arg6[%c0_255, %c8_256, %c0_257] : memref<2x80x32xf32, #tpu.memory_space<vmem>>, vector<2x64x32xf32>
    %285 = vector.shape_cast %284 : vector<2x64x32xf32> to vector<128x32xf32>
    %c17 = arith.constant 17 : index
    %c0_258 = arith.constant 0 : index
    %c0_259 = arith.constant 0 : index
    %286 = vector.load %arg3[%c17, %c0_258, %c0_259] : memref<20x32x32xf32, #tpu.memory_space<vmem>>, vector<1x32x32xf32>
    %287 = vector.shape_cast %286 : vector<1x32x32xf32> to vector<32x32xf32>
    %cst_260 = arith.constant dense<0.000000e+00> : vector<128x32xf32>
    %288 = tpu.matmul %285, %287, %cst_260 {dimension_numbers = #tpu.dot_dimension_numbers<[1], [0], [0], [1], [0, 0, 1, 1], [], []>} : vector<128x32xf32>, vector<32x32xf32>, vector<128x32xf32> -> vector<128x32xf32>
    %289 = arith.addf %283, %288 : vector<128x32xf32>
    %c0_261 = arith.constant 0 : index
    %c10_262 = arith.constant 10 : index
    %c0_263 = arith.constant 0 : index
    %290 = vector.load %arg6[%c0_261, %c10_262, %c0_263] : memref<2x80x32xf32, #tpu.memory_space<vmem>>, vector<2x64x32xf32>
    %291 = vector.shape_cast %290 : vector<2x64x32xf32> to vector<128x32xf32>
    %c18 = arith.constant 18 : index
    %c0_264 = arith.constant 0 : index
    %c0_265 = arith.constant 0 : index
    %292 = vector.load %arg3[%c18, %c0_264, %c0_265] : memref<20x32x32xf32, #tpu.memory_space<vmem>>, vector<1x32x32xf32>
    %293 = vector.shape_cast %292 : vector<1x32x32xf32> to vector<32x32xf32>
    %cst_266 = arith.constant dense<0.000000e+00> : vector<128x32xf32>
    %294 = tpu.matmul %291, %293, %cst_266 {dimension_numbers = #tpu.dot_dimension_numbers<[1], [0], [0], [1], [0, 0, 1, 1], [], []>} : vector<128x32xf32>, vector<32x32xf32>, vector<128x32xf32> -> vector<128x32xf32>
    %295 = arith.addf %289, %294 : vector<128x32xf32>
    %c0_267 = arith.constant 0 : index
    %c12_268 = arith.constant 12 : index
    %c0_269 = arith.constant 0 : index
    %296 = vector.load %arg6[%c0_267, %c12_268, %c0_269] : memref<2x80x32xf32, #tpu.memory_space<vmem>>, vector<2x64x32xf32>
    %297 = vector.shape_cast %296 : vector<2x64x32xf32> to vector<128x32xf32>
    %c19 = arith.constant 19 : index
    %c0_270 = arith.constant 0 : index
    %c0_271 = arith.constant 0 : index
    %298 = vector.load %arg3[%c19, %c0_270, %c0_271] : memref<20x32x32xf32, #tpu.memory_space<vmem>>, vector<1x32x32xf32>
    %299 = vector.shape_cast %298 : vector<1x32x32xf32> to vector<32x32xf32>
    %cst_272 = arith.constant dense<0.000000e+00> : vector<128x32xf32>
    %300 = tpu.matmul %297, %299, %cst_272 {dimension_numbers = #tpu.dot_dimension_numbers<[1], [0], [0], [1], [0, 0, 1, 1], [], []>} : vector<128x32xf32>, vector<32x32xf32>, vector<128x32xf32> -> vector<128x32xf32>
    %301 = arith.addf %295, %300 : vector<128x32xf32>
    %302 = vector.shape_cast %301 : vector<128x32xf32> to vector<2x64x32xf32>
    %303 = vector.shape_cast %271 : vector<1x32xf32> to vector<1x1x32xf32>
    %304 = vector.broadcast %303 : vector<1x1x32xf32> to vector<2x64x32xf32>
    %305 = arith.addf %302, %304 : vector<2x64x32xf32>
    %cst_273 = arith.constant 0.000000e+00 : f32
    %306 = vector.broadcast %cst_273 : f32 to vector<2x64x32xf32>
    %307 = arith.maximumf %305, %306 : vector<2x64x32xf32>
    %308 = vector.extract_strided_slice %260 {offsets = [3, 0], sizes = [1, 32], strides = [1, 1]} : vector<4x32xf32> to vector<1x32xf32>
    %c0_274 = arith.constant 0 : index
    %c8_275 = arith.constant 8 : index
    %c0_276 = arith.constant 0 : index
    %309 = vector.load %arg6[%c0_274, %c8_275, %c0_276] : memref<2x80x32xf32, #tpu.memory_space<vmem>>, vector<2x64x32xf32>
    tpu.vector_store %arg6[%c0_274, %c8_275, %c0_276], %307 {strides = array<i32>} : memref<2x80x32xf32, #tpu.memory_space<vmem>>, vector<2x64x32xf32>,
    %c0_277 = arith.constant 0 : index
    %c4_278 = arith.constant 4 : index
    %c0_279 = arith.constant 0 : index
    %310 = vector.load %arg6[%c0_277, %c4_278, %c0_279] : memref<2x80x32xf32, #tpu.memory_space<vmem>>, vector<2x64x32xf32>
    %311 = vector.shape_cast %310 : vector<2x64x32xf32> to vector<128x32xf32>
    %c15_280 = arith.constant 15 : index
    %c0_281 = arith.constant 0 : index
    %c0_282 = arith.constant 0 : index
    %312 = vector.load %arg4[%c15_280, %c0_281, %c0_282] : memref<20x32x32xf32, #tpu.memory_space<vmem>>, vector<1x32x32xf32>
    %313 = vector.shape_cast %312 : vector<1x32x32xf32> to vector<32x32xf32>
    %cst_283 = arith.constant dense<0.000000e+00> : vector<128x32xf32>
    %314 = tpu.matmul %311, %313, %cst_283 {dimension_numbers = #tpu.dot_dimension_numbers<[1], [0], [0], [1], [0, 0, 1, 1], [], []>} : vector<128x32xf32>, vector<32x32xf32>, vector<128x32xf32> -> vector<128x32xf32>
    %c0_284 = arith.constant 0 : index
    %c6_285 = arith.constant 6 : index
    %c0_286 = arith.constant 0 : index
    %315 = vector.load %arg6[%c0_284, %c6_285, %c0_286] : memref<2x80x32xf32, #tpu.memory_space<vmem>>, vector<2x64x32xf32>
    %316 = vector.shape_cast %315 : vector<2x64x32xf32> to vector<128x32xf32>
    %c16_287 = arith.constant 16 : index
    %c0_288 = arith.constant 0 : index
    %c0_289 = arith.constant 0 : index
    %317 = vector.load %arg4[%c16_287, %c0_288, %c0_289] : memref<20x32x32xf32, #tpu.memory_space<vmem>>, vector<1x32x32xf32>
    %318 = vector.shape_cast %317 : vector<1x32x32xf32> to vector<32x32xf32>
    %cst_290 = arith.constant dense<0.000000e+00> : vector<128x32xf32>
    %319 = tpu.matmul %316, %318, %cst_290 {dimension_numbers = #tpu.dot_dimension_numbers<[1], [0], [0], [1], [0, 0, 1, 1], [], []>} : vector<128x32xf32>, vector<32x32xf32>, vector<128x32xf32> -> vector<128x32xf32>
    %320 = arith.addf %314, %319 : vector<128x32xf32>
    %c0_291 = arith.constant 0 : index
    %c8_292 = arith.constant 8 : index
    %c0_293 = arith.constant 0 : index
    %321 = vector.load %arg6[%c0_291, %c8_292, %c0_293] : memref<2x80x32xf32, #tpu.memory_space<vmem>>, vector<2x64x32xf32>
    %322 = vector.shape_cast %321 : vector<2x64x32xf32> to vector<128x32xf32>
    %c17_294 = arith.constant 17 : index
    %c0_295 = arith.constant 0 : index
    %c0_296 = arith.constant 0 : index
    %323 = vector.load %arg4[%c17_294, %c0_295, %c0_296] : memref<20x32x32xf32, #tpu.memory_space<vmem>>, vector<1x32x32xf32>
    %324 = vector.shape_cast %323 : vector<1x32x32xf32> to vector<32x32xf32>
    %cst_297 = arith.constant dense<0.000000e+00> : vector<128x32xf32>
    %325 = tpu.matmul %322, %324, %cst_297 {dimension_numbers = #tpu.dot_dimension_numbers<[1], [0], [0], [1], [0, 0, 1, 1], [], []>} : vector<128x32xf32>, vector<32x32xf32>, vector<128x32xf32> -> vector<128x32xf32>
    %326 = arith.addf %320, %325 : vector<128x32xf32>
    %c0_298 = arith.constant 0 : index
    %c10_299 = arith.constant 10 : index
    %c0_300 = arith.constant 0 : index
    %327 = vector.load %arg6[%c0_298, %c10_299, %c0_300] : memref<2x80x32xf32, #tpu.memory_space<vmem>>, vector<2x64x32xf32>
    %328 = vector.shape_cast %327 : vector<2x64x32xf32> to vector<128x32xf32>
    %c18_301 = arith.constant 18 : index
    %c0_302 = arith.constant 0 : index
    %c0_303 = arith.constant 0 : index
    %329 = vector.load %arg4[%c18_301, %c0_302, %c0_303] : memref<20x32x32xf32, #tpu.memory_space<vmem>>, vector<1x32x32xf32>
    %330 = vector.shape_cast %329 : vector<1x32x32xf32> to vector<32x32xf32>
    %cst_304 = arith.constant dense<0.000000e+00> : vector<128x32xf32>
    %331 = tpu.matmul %328, %330, %cst_304 {dimension_numbers = #tpu.dot_dimension_numbers<[1], [0], [0], [1], [0, 0, 1, 1], [], []>} : vector<128x32xf32>, vector<32x32xf32>, vector<128x32xf32> -> vector<128x32xf32>
    %332 = arith.addf %326, %331 : vector<128x32xf32>
    %c0_305 = arith.constant 0 : index
    %c12_306 = arith.constant 12 : index
    %c0_307 = arith.constant 0 : index
    %333 = vector.load %arg6[%c0_305, %c12_306, %c0_307] : memref<2x80x32xf32, #tpu.memory_space<vmem>>, vector<2x64x32xf32>
    %334 = vector.shape_cast %333 : vector<2x64x32xf32> to vector<128x32xf32>
    %c19_308 = arith.constant 19 : index
    %c0_309 = arith.constant 0 : index
    %c0_310 = arith.constant 0 : index
    %335 = vector.load %arg4[%c19_308, %c0_309, %c0_310] : memref<20x32x32xf32, #tpu.memory_space<vmem>>, vector<1x32x32xf32>
    %336 = vector.shape_cast %335 : vector<1x32x32xf32> to vector<32x32xf32>
    %cst_311 = arith.constant dense<0.000000e+00> : vector<128x32xf32>
    %337 = tpu.matmul %334, %336, %cst_311 {dimension_numbers = #tpu.dot_dimension_numbers<[1], [0], [0], [1], [0, 0, 1, 1], [], []>} : vector<128x32xf32>, vector<32x32xf32>, vector<128x32xf32> -> vector<128x32xf32>
    %338 = arith.addf %332, %337 : vector<128x32xf32>
    %339 = vector.shape_cast %338 : vector<128x32xf32> to vector<2x64x32xf32>
    %340 = vector.shape_cast %308 : vector<1x32xf32> to vector<1x1x32xf32>
    %341 = vector.broadcast %340 : vector<1x1x32xf32> to vector<2x64x32xf32>
    %342 = arith.addf %339, %341 : vector<2x64x32xf32>
    %343 = arith.addf %258, %342 : vector<2x64x32xf32>
    %c0_312 = arith.constant 0 : index
    %c0_313 = arith.constant 0 : index
    %c0_314 = arith.constant 0 : index
    %344 = vector.load %arg5[%c0_312, %c0_313, %c0_314] : memref<2x64x32xf32, #tpu.memory_space<vmem>>, vector<2x64x32xf32>
    tpu.vector_store %arg5[%c0_312, %c0_313, %c0_314], %343 {strides = array<i32>} : memref<2x64x32xf32, #tpu.memory_space<vmem>>, vector<2x64x32xf32>,
    return
  }
  func.func @transform_0(%arg0: i32) -> (i32, i32, i32) {
    %c0_i32 = arith.constant 0 : i32
    %c0_i32_0 = arith.constant 0 : i32
    %c0_i32_1 = arith.constant 0 : i32
    return %arg0, %c0_i32, %c0_i32_0 : i32, i32, i32
  }
  func.func @transform_1(%arg0: i32) -> (i32, i32, i32) {
    %c0_i32 = arith.constant 0 : i32
    %c0_i32_0 = arith.constant 0 : i32
    %c0_i32_1 = arith.constant 0 : i32
    %c0_i32_2 = arith.constant 0 : i32
    return %c0_i32, %c0_i32_0, %c0_i32_1 : i32, i32, i32
  }
  func.func @transform_2(%arg0: i32) -> (i32, i32, i32) {
    %c0_i32 = arith.constant 0 : i32
    %c0_i32_0 = arith.constant 0 : i32
    %c0_i32_1 = arith.constant 0 : i32
    %c0_i32_2 = arith.constant 0 : i32
    return %c0_i32, %c0_i32_0, %c0_i32_1 : i32, i32, i32
  }
  func.func @transform_3(%arg0: i32) -> (i32, i32, i32) {
    %c0_i32 = arith.constant 0 : i32
    %c0_i32_0 = arith.constant 0 : i32
    %c0_i32_1 = arith.constant 0 : i32
    %c0_i32_2 = arith.constant 0 : i32
    return %c0_i32, %c0_i32_0, %c0_i32_1 : i32, i32, i32
  }
  func.func @transform_4(%arg0: i32) -> (i32, i32, i32) {
    %c0_i32 = arith.constant 0 : i32
    %c0_i32_0 = arith.constant 0 : i32
    %c0_i32_1 = arith.constant 0 : i32
    return %arg0, %c0_i32, %c0_i32_0 : i32, i32, i32
  }
}

</mosaic_0001>

<llo_original>
// kernel: tpu_custom_call.1
$region0: #{tpu_custom_call.1}
  #allocation0 [shape = 'u32[]', space=smem, size = 0x4, offset = 0x4, fixed_abs, tag = 'smem constant byte address 0x4 - core index']
  #allocation1 [shape = 'u32[144,128]{1,0:T(1,128)}', space=vmem, size = 0x12000, scoped, tag = 'internal scratch']
  #allocation2 [shape = 'f32[2,80,32]{2,1,0:T(8,128)}', space=vmem, size = 0x14000, scoped, tag = 'scratch operand']
  %s0 = inlined_call_operand.vmem [shape: f32[2,64,32], index: 0, kind: input, shape index: {}]
  %s1 = inlined_call_operand.vmem [shape: f32[4,4,32], index: 1, kind: input, shape index: {}]
  %s2 = inlined_call_operand.hbm [shape: f32[20,32,32], index: 2, kind: input, shape index: {}]
  %s3 = inlined_call_operand.hbm [shape: f32[20,32,32], index: 3, kind: input, shape index: {}]
  %s4 = inlined_call_operand.vmem [shape: f32[2,64,32], index: 4, kind: output, shape index: {}]
  %s5 = sld [smem:[#allocation0]]
  $region34: #{tpu_custom_call.1} parent=0
    _
  %s7 = ssub.s32 1, %s5
  %s8 = scalar_select 0, %s7, %s5
  $region1: #{tpu_custom_call.1} parent=0
    #allocation3 [shape = 'u8[327680]{0}', space=vmem, size = 0x50000, scoped, tag = 'input window, operand 2, single buffered']
    #allocation4 [shape = 's32[1]{0}', space=sflag, size = 0x4, scoped, tag = 'scoped memory for tpu_custom_call.1']
    #allocation5 [shape = 'u8[327680]{0}', space=vmem, size = 0x50000, scoped, tag = 'input window, operand 3, single buffered']
    #allocation6 [shape = 's32[1]{0}', space=sflag, size = 0x4, scoped, tag = 'scoped memory for tpu_custom_call.1']
    %9 = vsyncpa [#allocation4], 0
    %10 = vsyncpa [#allocation6], 0
    // Predicated region
    $region2: #{tpu_custom_call.1} parent=1 // pred_check
      _
    $region3: #{tpu_custom_call.1} parent=1 // pred_check_branch
      %12 = sbr.rel (0) target = $region5
    $region4: #{tpu_custom_call.1} parent=1 // pred_region
      _
    $region5: #{tpu_custom_call.1} parent=1 // pred_fallthru
      _
    // Predicated region
    $region6: #{tpu_custom_call.1} parent=1 // pred_check
      _
    $region7: #{tpu_custom_call.1} parent=1 // pred_check_branch
      %14 = sbr.rel (0) target = $region9
    $region8: #{tpu_custom_call.1} parent=1 // pred_region
      _
    $region9: #{tpu_custom_call.1} parent=1 // pred_fallthru
      _
    // Predicated region
    $region10: #{tpu_custom_call.1} parent=1 // pred_check
      _
    $region11: #{tpu_custom_call.1} parent=1 // pred_check_branch
      %16 = sbr.rel (0) target = $region13
    $region12: #{tpu_custom_call.1} parent=1 // pred_region
      %s18 = ssub.s32 10240, 10240
      %19 = vsyncadd [#allocation4], %s18
      %s20 = sshll.u32 [#allocation3], 4
      %s21 = int_to_ptr.vmem [resolvable:$true] %s20
      %26 = dma.hbm_to_vmem [thread:$0]  %s2, 10240, %s21, [#allocation4], 128, 128, 8
    $region13: #{tpu_custom_call.1} parent=1 // pred_fallthru
      _
    // Predicated region
    $region14: #{tpu_custom_call.1} parent=1 // pred_check
      _
    $region15: #{tpu_custom_call.1} parent=1 // pred_check_branch
      %28 = sbr.rel (0) target = $region17
    $region16: #{tpu_custom_call.1} parent=1 // pred_region
      %s30 = ssub.s32 10240, 10240
      %31 = vsyncadd [#allocation6], %s30
      %s32 = sshll.u32 [#allocation5], 4
      %s33 = int_to_ptr.vmem [resolvable:$true] %s32
      %38 = dma.hbm_to_vmem [thread:$0]  %s3, 10240, %s33, [#allocation6], 128, 128, 8
    $region17: #{tpu_custom_call.1} parent=1 // pred_fallthru
      _
    // Predicated region
    $region18: #{tpu_custom_call.1} parent=1 // pred_check
      _
    $region19: #{tpu_custom_call.1} parent=1 // pred_check_branch
      %40 = sbr.rel (0) target = $region21
    $region20: #{tpu_custom_call.1} parent=1 // pred_region
      %41 = dma.done [#allocation4], 10240
    $region21: #{tpu_custom_call.1} parent=1 // pred_fallthru
      _
    // Predicated region
    $region22: #{tpu_custom_call.1} parent=1 // pred_check
      _
    $region23: #{tpu_custom_call.1} parent=1 // pred_check_branch
      %43 = sbr.rel (0) target = $region25
    $region24: #{tpu_custom_call.1} parent=1 // pred_region
      %44 = dma.done [#allocation6], 10240
    $region25: #{tpu_custom_call.1} parent=1 // pred_fallthru
      _
    %vm45 = vcmask 261120
    %46 = vst.msk [vmem:[#allocation2] sm:$0xff] %vm45, 0.0
    %47 = vst.msk [vmem:[#allocation2 + $0x50] sm:$0xff] %vm45, 0.0
    %48 = vst.msk [vmem:[#allocation2 + $0x48] sm:$0xff] %vm45, 0.0
    %49 = vst.msk [vmem:[#allocation2 + $0x98] sm:$0xff] %vm45, 0.0
    %v50 = vld [vmem:[%s0] sm:$0xff]
    %v51 = vld [vmem:[%s0 + $0x8] sm:$0xff]
    %v52 = vld [vmem:[%s0 + $0x10] sm:$0xff]
    %v53 = vld [vmem:[%s0 + $0x18] sm:$0xff]
    %v54 = vld [vmem:[%s0 + $0x20] sm:$0xff]
    %v55 = vld [vmem:[%s0 + $0x28] sm:$0xff]
    %v56 = vld [vmem:[%s0 + $0x30] sm:$0xff]
    %v57 = vld [vmem:[%s0 + $0x38] sm:$0xff]
    %v58 = vld [vmem:[%s0 + $0x40] sm:$0xff]
    %v59 = vld [vmem:[%s0 + $0x48] sm:$0xff]
    %v60 = vld [vmem:[%s0 + $0x50] sm:$0xff]
    %v61 = vld [vmem:[%s0 + $0x58] sm:$0xff]
    %v62 = vld [vmem:[%s0 + $0x60] sm:$0xff]
    %v63 = vld [vmem:[%s0 + $0x68] sm:$0xff]
    %v64 = vld [vmem:[%s0 + $0x70] sm:$0xff]
    %v65 = vld [vmem:[%s0 + $0x78] sm:$0xff]
    %v66 = vld [vmem:[%s1] sm:$0xf]
    %v67 = vlaneseq
    %v68 = vshrl.u32 %v67, 7
    %v69 = vsub.s32 0, %v68
    %v70 = vrot.slane %v66, %v69
    %v71 = vmul.f32 %v50, %v70
    %v72 = vmul.f32 %v51, %v70
    %v73 = vmul.f32 %v52, %v70
    %v74 = vmul.f32 %v53, %v70
    %v75 = vmul.f32 %v54, %v70
    %v76 = vmul.f32 %v55, %v70
    %v77 = vmul.f32 %v56, %v70
    %v78 = vmul.f32 %v57, %v70
    %v79 = vmul.f32 %v58, %v70
    %v80 = vmul.f32 %v59, %v70
    %v81 = vmul.f32 %v60, %v70
    %v82 = vmul.f32 %v61, %v70
    %v83 = vmul.f32 %v62, %v70
    %v84 = vmul.f32 %v63, %v70
    %v85 = vmul.f32 %v64, %v70
    %v86 = vmul.f32 %v65, %v70
    %v87 = vlaneseq
    %v88 = vshrl.u32 %v87, 7
    %v89 = vsub.s32 1, %v88
    %v90 = vrot.slane %v66, %v89
    %v91 = vadd.f32 %v71, %v90
    %v92 = vadd.f32 %v72, %v90
    %v93 = vadd.f32 %v73, %v90
    %v94 = vadd.f32 %v74, %v90
    %v95 = vadd.f32 %v75, %v90
    %v96 = vadd.f32 %v76, %v90
    %v97 = vadd.f32 %v77, %v90
    %v98 = vadd.f32 %v78, %v90
    %v99 = vadd.f32 %v79, %v90
    %v100 = vadd.f32 %v80, %v90
    %v101 = vadd.f32 %v81, %v90
    %v102 = vadd.f32 %v82, %v90
    %v103 = vadd.f32 %v83, %v90
    %v104 = vadd.f32 %v84, %v90
    %v105 = vadd.f32 %v85, %v90
    %v106 = vadd.f32 %v86, %v90
    %v107 = vmax.f32 %v91, 0.0
    %v108 = vmax.f32 %v92, 0.0
    %v109 = vmax.f32 %v93, 0.0
    %v110 = vmax.f32 %v94, 0.0
    %v111 = vmax.f32 %v95, 0.0
    %v112 = vmax.f32 %v96, 0.0
    %v113 = vmax.f32 %v97, 0.0
    %v114 = vmax.f32 %v98, 0.0
    %v115 = vmax.f32 %v99, 0.0
    %v116 = vmax.f32 %v100, 0.0
    %v117 = vmax.f32 %v101, 0.0
    %v118 = vmax.f32 %v102, 0.0
    %v119 = vmax.f32 %v103, 0.0
    %v120 = vmax.f32 %v104, 0.0
    %v121 = vmax.f32 %v105, 0.0
    %v122 = vmax.f32 %v106, 0.0
    %123 = vst.msk [vmem:[#allocation2 + $0x8] sm:$0xff] %vm45, %v107
    %124 = vst.msk [vmem:[#allocation2 + $0x10] sm:$0xff] %vm45, %v108
    %125 = vst.msk [vmem:[#allocation2 + $0x18] sm:$0xff] %vm45, %v109
    %126 = vst.msk [vmem:[#allocation2 + $0x20] sm:$0xff] %vm45, %v110
    %127 = vst.msk [vmem:[#allocation2 + $0x28] sm:$0xff] %vm45, %v111
    %128 = vst.msk [vmem:[#allocation2 + $0x30] sm:$0xff] %vm45, %v112
    %129 = vst.msk [vmem:[#allocation2 + $0x38] sm:$0xff] %vm45, %v113
    %130 = vst.msk [vmem:[#allocation2 + $0x40] sm:$0xff] %vm45, %v114
    %131 = vst.msk [vmem:[#allocation2 + $0x58] sm:$0xff] %vm45, %v115
    %132 = vst.msk [vmem:[#allocation2 + $0x60] sm:$0xff] %vm45, %v116
    %133 = vst.msk [vmem:[#allocation2 + $0x68] sm:$0xff] %vm45, %v117
    %134 = vst.msk [vmem:[#allocation2 + $0x70] sm:$0xff] %vm45, %v118
    %135 = vst.msk [vmem:[#allocation2 + $0x78] sm:$0xff] %vm45, %v119
    %136 = vst.msk [vmem:[#allocation2 + $0x80] sm:$0xff] %vm45, %v120
    %137 = vst.msk [vmem:[#allocation2 + $0x88] sm:$0xff] %vm45, %v121
    %138 = vst.msk [vmem:[#allocation2 + $0x90] sm:$0xff] %vm45, %v122
    %v139 = vld [vmem:[#allocation2 + $0x4] sm:$0xff]
    %v140 = vld [vmem:[#allocation2 + $0xc] sm:$0xff]
    %v141 = vld [vmem:[#allocation2 + $0x14] sm:$0xff]
    %v142 = vld [vmem:[#allocation2 + $0x1c] sm:$0xff]
    %v143 = vld [vmem:[#allocation2 + $0x24] sm:$0xff]
    %v144 = vld [vmem:[#allocation2 + $0x2c] sm:$0xff]
    %v145 = vld [vmem:[#allocation2 + $0x34] sm:$0xff]
    %v146 = vld [vmem:[#allocation2 + $0x3c] sm:$0xff]
    %v147 = vld [vmem:[#allocation2 + $0x54] sm:$0xff]
    %v148 = vld [vmem:[#allocation2 + $0x5c] sm:$0xff]
    %v149 = vld [vmem:[#allocation2 + $0x64] sm:$0xff]
    %v150 = vld [vmem:[#allocation2 + $0x6c] sm:$0xff]
    %v151 = vld [vmem:[#allocation2 + $0x74] sm:$0xff]
    %v152 = vld [vmem:[#allocation2 + $0x7c] sm:$0xff]
    %v153 = vld [vmem:[#allocation2 + $0x84] sm:$0xff]
    %v154 = vld [vmem:[#allocation2 + $0x8c] sm:$0xff]
    %v155 = vld [vmem:[#allocation3] sm:$0xff]
    %v156 = vld [vmem:[#allocation3 + $0x8] sm:$0xff]
    %v157 = vld [vmem:[#allocation3 + $0x10] sm:$0xff]
    %v158 = vld [vmem:[#allocation3 + $0x18] sm:$0xff]
    %v159 = vld [vmem:[#allocation2 + $0x6] sm:$0xff]
    %v160 = vld [vmem:[#allocation2 + $0xe] sm:$0xff]
    %v161 = vld [vmem:[#allocation2 + $0x16] sm:$0xff]
    %v162 = vld [vmem:[#allocation2 + $0x1e] sm:$0xff]
    %v163 = vld [vmem:[#allocation2 + $0x26] sm:$0xff]
    %v164 = vld [vmem:[#allocation2 + $0x2e] sm:$0xff]
    %v165 = vld [vmem:[#allocation2 + $0x36] sm:$0xff]
    %v166 = vld [vmem:[#allocation2 + $0x3e] sm:$0xff]
    %v167 = vld [vmem:[#allocation2 + $0x56] sm:$0xff]
    %v168 = vld [vmem:[#allocation2 + $0x5e] sm:$0xff]
    %v169 = vld [vmem:[#allocation2 + $0x66] sm:$0xff]
    %v170 = vld [vmem:[#allocation2 + $0x6e] sm:$0xff]
    %v171 = vld [vmem:[#allocation2 + $0x76] sm:$0xff]
    %v172 = vld [vmem:[#allocation2 + $0x7e] sm:$0xff]
    %v173 = vld [vmem:[#allocation2 + $0x86] sm:$0xff]
    %v174 = vld [vmem:[#allocation2 + $0x8e] sm:$0xff]
    %s175 = scalar_lea.vmem [#allocation3], 32
    %v176 = vld [vmem:[%s175] sm:$0xff]
    %v177 = vld [vmem:[%s175 + $0x8] sm:$0xff]
    %v178 = vld [vmem:[%s175 + $0x10] sm:$0xff]
    %v179 = vld [vmem:[%s175 + $0x18] sm:$0xff]
    %v181 = vsel %vm45, %v159, 0
    %v184 = vsel %vm45, %v160, 0
    %v187 = vsel %vm45, %v161, 0
    %v190 = vsel %vm45, %v162, 0
    %v193 = vsel %vm45, %v163, 0
    %v196 = vsel %vm45, %v164, 0
    %v199 = vsel %vm45, %v165, 0
    %v202 = vsel %vm45, %v166, 0
    %v205 = vsel %vm45, %v167, 0
    %v208 = vsel %vm45, %v168, 0
    %v211 = vsel %vm45, %v169, 0
    %v214 = vsel %vm45, %v170, 0
    %v217 = vsel %vm45, %v171, 0
    %v220 = vsel %vm45, %v172, 0
    %v223 = vsel %vm45, %v173, 0
    %v226 = vsel %vm45, %v174, 0
    %228 = vmatprep.subr.mxu0 0.0
    %229 = vmatpush1.msra.mxu0 %v176
    %230 = vmatprep.subr.mxu0 0.0
    %231 = vmatpush1.msra.mxu0 %v177
    %232 = vmatprep.subr.mxu0 0.0
    %233 = vmatpush1.msra.mxu0 %v178
    %234 = vmatprep.subr.mxu0 0.0
    %235 = vmatpush1.msra.mxu0 %v179
    %236 = vmatprep.subr.mxu0 0.0
    %237 = vmatpush1.msra.mxu0 0.0
    %238 = vmatprep.subr.mxu0 0.0
    %239 = vmatpush1.msra.mxu0 0.0
    %240 = vmatprep.subr.mxu0 0.0
    %241 = vmatpush1.msra.mxu0 0.0
    %242 = vmatprep.subr.mxu0 0.0
    %243 = vmatpush1.msra.mxu0 0.0
    %244 = vmatprep.subr.mxu0 0.0
    %245 = vmatpush1.msra.mxu0 0.0
    %246 = vmatprep.subr.mxu0 0.0
    %247 = vmatpush1.msra.mxu0 0.0
    %248 = vmatprep.subr.mxu0 0.0
    %249 = vmatpush1.msra.mxu0 0.0
    %250 = vmatprep.subr.mxu0 0.0
    %251 = vmatpush1.msra.mxu0 0.0
    %252 = vmatprep.subr.mxu0 0.0
    %253 = vmatpush1.msra.mxu0 0.0
    %254 = vmatprep.subr.mxu0 0.0
    %255 = vmatpush1.msra.mxu0 0.0
    %256 = vmatprep.subr.mxu0 0.0
    %257 = vmatpush1.msra.mxu0 0.0
    %258 = vmatprep.subr.mxu0 0.0
    %259 = vmatpush1.msra.mxu0 0.0
    %260 = vmatprep.subr.mxu0 0.0
    %261 = vmatpush1.msra.mxu0 0.0
    %262 = vmatprep.subr.mxu0 0.0
    %263 = vmatpush1.msra.mxu0 0.0
    %264 = vmatprep.subr.mxu0 0.0
    %265 = vmatpush1.msra.mxu0 0.0
    %266 = vmatprep.subr.mxu0 0.0
    %267 = vmatpush1.msra.mxu0 0.0
    %268 = vmatprep.subr.mxu0 0.0
    %269 = vmatpush1.msra.mxu0 0.0
    %270 = vmatprep.subr.mxu0 0.0
    %271 = vmatpush1.msra.mxu0 0.0
    %272 = vmatprep.subr.mxu0 0.0
    %273 = vmatpush1.msra.mxu0 0.0
    %274 = vmatprep.subr.mxu0 0.0
    %275 = vmatpush1.msra.mxu0 0.0
    %276 = vmatprep.subr.mxu0 0.0
    %277 = vmatpush1.msra.mxu0 0.0
    %278 = vmatprep.subr.mxu0 0.0
    %279 = vmatpush1.msra.mxu0 0.0
    %280 = vmatprep.subr.mxu0 0.0
    %281 = vmatpush1.msra.mxu0 0.0
    %282 = vmatprep.subr.mxu0 0.0
    %283 = vmatpush1.msra.mxu0 0.0
    %284 = vmatprep.subr.mxu0 0.0
    %285 = vmatpush1.msra.mxu0 0.0
    %286 = vmatprep.subr.mxu0 0.0
    %287 = vmatpush1.msra.mxu0 0.0
    %288 = vmatprep.subr.mxu0 0.0
    %289 = vmatpush1.msra.mxu0 0.0
    %290 = vmatprep.subr.mxu0 0.0
    %291 = vmatpush1.msra.mxu0 0.0
    %292 = vmatprep.mubr.f32.mxu0 0.0
    %293 = vmatmul.mubr.f32.gmra.mrb[0].mxu0 %v181
    %v294 = vpop.f32.mrb[0].mxu0
    %v295 = vadd.f32 0.0, %v294
    %v296 = vpop.f32.mrb[0].mxu0
    %297 = vmatprep.mubr.f32.mxu0 0.0
    %298 = vmatmul.mubr.f32.gmra.mrb[0].mxu0 %v184
    %v299 = vpop.f32.mrb[0].mxu0
    %v300 = vadd.f32 0.0, %v299
    %v301 = vpop.f32.mrb[0].mxu0
    %302 = vmatprep.mubr.f32.mxu0 0.0
    %303 = vmatmul.mubr.f32.gmra.mrb[0].mxu0 %v187
    %v304 = vpop.f32.mrb[0].mxu0
    %v305 = vadd.f32 0.0, %v304
    %v306 = vpop.f32.mrb[0].mxu0
    %307 = vmatprep.mubr.f32.mxu0 0.0
    %308 = vmatmul.mubr.f32.gmra.mrb[0].mxu0 %v190
    %v309 = vpop.f32.mrb[0].mxu0
    %v310 = vadd.f32 0.0, %v309
    %v311 = vpop.f32.mrb[0].mxu0
    %312 = vmatprep.mubr.f32.mxu0 0.0
    %313 = vmatmul.mubr.f32.gmra.mrb[0].mxu0 %v193
    %v314 = vpop.f32.mrb[0].mxu0
    %v315 = vadd.f32 0.0, %v314
    %v316 = vpop.f32.mrb[0].mxu0
    %317 = vmatprep.mubr.f32.mxu0 0.0
    %318 = vmatmul.mubr.f32.gmra.mrb[0].mxu0 %v196
    %v319 = vpop.f32.mrb[0].mxu0
    %v320 = vadd.f32 0.0, %v319
    %v321 = vpop.f32.mrb[0].mxu0
    %322 = vmatprep.mubr.f32.mxu0 0.0
    %323 = vmatmul.mubr.f32.gmra.mrb[0].mxu0 %v199
    %v324 = vpop.f32.mrb[0].mxu0
    %v325 = vadd.f32 0.0, %v324
    %v326 = vpop.f32.mrb[0].mxu0
    %327 = vmatprep.mubr.f32.mxu0 0.0
    %328 = vmatmul.mubr.f32.gmra.mrb[0].mxu0 %v202
    %v329 = vpop.f32.mrb[0].mxu0
    %v330 = vadd.f32 0.0, %v329
    %v331 = vpop.f32.mrb[0].mxu0
    %332 = vmatprep.mubr.f32.mxu0 0.0
    %333 = vmatmul.mubr.f32.gmra.mrb[0].mxu0 %v205
    %v334 = vpop.f32.mrb[0].mxu0
    %v335 = vadd.f32 0.0, %v334
    %v336 = vpop.f32.mrb[0].mxu0
    %337 = vmatprep.mubr.f32.mxu0 0.0
    %338 = vmatmul.mubr.f32.gmra.mrb[0].mxu0 %v208
    %v339 = vpop.f32.mrb[0].mxu0
    %v340 = vadd.f32 0.0, %v339
    %v341 = vpop.f32.mrb[0].mxu0
    %342 = vmatprep.mubr.f32.mxu0 0.0
    %343 = vmatmul.mubr.f32.gmra.mrb[0].mxu0 %v211
    %v344 = vpop.f32.mrb[0].mxu0
    %v345 = vadd.f32 0.0, %v344
    %v346 = vpop.f32.mrb[0].mxu0
    %347 = vmatprep.mubr.f32.mxu0 0.0
    %348 = vmatmul.mubr.f32.gmra.mrb[0].mxu0 %v214
    %v349 = vpop.f32.mrb[0].mxu0
    %v350 = vadd.f32 0.0, %v349
    %v351 = vpop.f32.mrb[0].mxu0
    %352 = vmatprep.mubr.f32.mxu0 0.0
    %353 = vmatmul.mubr.f32.gmra.mrb[0].mxu0 %v217
    %v354 = vpop.f32.mrb[0].mxu0
    %v355 = vadd.f32 0.0, %v354
    %v356 = vpop.f32.mrb[0].mxu0
    %357 = vmatprep.mubr.f32.mxu0 0.0
    %358 = vmatmul.mubr.f32.gmra.mrb[0].mxu0 %v220
    %v359 = vpop.f32.mrb[0].mxu0
    %v360 = vadd.f32 0.0, %v359
    %v361 = vpop.f32.mrb[0].mxu0
    %362 = vmatprep.mubr.f32.mxu0 0.0
    %363 = vmatmul.mubr.f32.gmra.mrb[0].mxu0 %v223
    %v364 = vpop.f32.mrb[0].mxu0
    %v365 = vadd.f32 0.0, %v364
    %v366 = vpop.f32.mrb[0].mxu0
    %367 = vmatprep.mubr.f32.mxu0 0.0
    %368 = vmatmul.mubr.f32.gmra.mrb[0].mxu0 %v226
    %v369 = vpop.f32.mrb[0].mxu0
    %v370 = vadd.f32 0.0, %v369
    %v371 = vpop.f32.mrb[0].mxu0
    %372 = vdwg.mxu0
    %v374 = vsel %vm45, %v139, 0
    %v377 = vsel %vm45, %v140, 0
    %v380 = vsel %vm45, %v141, 0
    %v383 = vsel %vm45, %v142, 0
    %v386 = vsel %vm45, %v143, 0
    %v389 = vsel %vm45, %v144, 0
    %v392 = vsel %vm45, %v145, 0
    %v395 = vsel %vm45, %v146, 0
    %v398 = vsel %vm45, %v147, 0
    %v401 = vsel %vm45, %v148, 0
    %v404 = vsel %vm45, %v149, 0
    %v407 = vsel %vm45, %v150, 0
    %v410 = vsel %vm45, %v151, 0
    %v413 = vsel %vm45, %v152, 0
    %v416 = vsel %vm45, %v153, 0
    %v419 = vsel %vm45, %v154, 0
    %421 = vmatprep.subr.mxu0 0.0
    %422 = vmatpush1.msra.mxu0 %v155
    %423 = vmatprep.subr.mxu0 0.0
    %424 = vmatpush1.msra.mxu0 %v156
    %425 = vmatprep.subr.mxu0 0.0
    %426 = vmatpush1.msra.mxu0 %v157
    %427 = vmatprep.subr.mxu0 0.0
    %428 = vmatpush1.msra.mxu0 %v158
    %429 = vmatprep.subr.mxu0 0.0
    %430 = vmatpush1.msra.mxu0 0.0
    %431 = vmatprep.subr.mxu0 0.0
    %432 = vmatpush1.msra.mxu0 0.0
    %433 = vmatprep.subr.mxu0 0.0
    %434 = vmatpush1.msra.mxu0 0.0
    %435 = vmatprep.subr.mxu0 0.0
    %436 = vmatpush1.msra.mxu0 0.0
    %437 = vmatprep.subr.mxu0 0.0
    %438 = vmatpush1.msra.mxu0 0.0
    %439 = vmatprep.subr.mxu0 0.0
    %440 = vmatpush1.msra.mxu0 0.0
    %441 = vmatprep.subr.mxu0 0.0
    %442 = vmatpush1.msra.mxu0 0.0
    %443 = vmatprep.subr.mxu0 0.0
    %444 = vmatpush1.msra.mxu0 0.0
    %445 = vmatprep.subr.mxu0 0.0
    %446 = vmatpush1.msra.mxu0 0.0
    %447 = vmatprep.subr.mxu0 0.0
    %448 = vmatpush1.msra.mxu0 0.0
    %449 = vmatprep.subr.mxu0 0.0
    %450 = vmatpush1.msra.mxu0 0.0
    %451 = vmatprep.subr.mxu0 0.0
    %452 = vmatpush1.msra.mxu0 0.0
    %453 = vmatprep.subr.mxu0 0.0
    %454 = vmatpush1.msra.mxu0 0.0
    %455 = vmatprep.subr.mxu0 0.0
    %456 = vmatpush1.msra.mxu0 0.0
    %457 = vmatprep.subr.mxu0 0.0
    %458 = vmatpush1.msra.mxu0 0.0
    %459 = vmatprep.subr.mxu0 0.0
    %460 = vmatpush1.msra.mxu0 0.0
    %461 = vmatprep.subr.mxu0 0.0
    %462 = vmatpush1.msra.mxu0 0.0
    %463 = vmatprep.subr.mxu0 0.0
    %464 = vmatpush1.msra.mxu0 0.0
    %465 = vmatprep.subr.mxu0 0.0
    %466 = vmatpush1.msra.mxu0 0.0
    %467 = vmatprep.subr.mxu0 0.0
    %468 = vmatpush1.msra.mxu0 0.0
    %469 = vmatprep.subr.mxu0 0.0
    %470 = vmatpush1.msra.mxu0 0.0
    %471 = vmatprep.subr.mxu0 0.0
    %472 = vmatpush1.msra.mxu0 0.0
    %473 = vmatprep.subr.mxu0 0.0
    %474 = vmatpush1.msra.mxu0 0.0
    %475 = vmatprep.subr.mxu0 0.0
    %476 = vmatpush1.msra.mxu0 0.0
    %477 = vmatprep.subr.mxu0 0.0
    %478 = vmatpush1.msra.mxu0 0.0
    %479 = vmatprep.subr.mxu0 0.0
    %480 = vmatpush1.msra.mxu0 0.0
    %481 = vmatprep.subr.mxu0 0.0
    %482 = vmatpush1.msra.mxu0 0.0
    %483 = vmatprep.subr.mxu0 0.0
    %484 = vmatpush1.msra.mxu0 0.0
    %485 = vmatprep.mubr.f32.mxu0 0.0
    %486 = vmatmul.mubr.f32.gmra.mrb[0].mxu0 %v374
    %v487 = vpop.f32.mrb[0].mxu0
    %v488 = vadd.f32 %v295, %v487
    %v489 = vpop.f32.mrb[0].mxu0
    %490 = vmatprep.mubr.f32.mxu0 0.0
    %491 = vmatmul.mubr.f32.gmra.mrb[0].mxu0 %v377
    %v492 = vpop.f32.mrb[0].mxu0
    %v493 = vadd.f32 %v300, %v492
    %v494 = vpop.f32.mrb[0].mxu0
    %495 = vmatprep.mubr.f32.mxu0 0.0
    %496 = vmatmul.mubr.f32.gmra.mrb[0].mxu0 %v380
    %v497 = vpop.f32.mrb[0].mxu0
    %v498 = vadd.f32 %v305, %v497
    %v499 = vpop.f32.mrb[0].mxu0
    %500 = vmatprep.mubr.f32.mxu0 0.0
    %501 = vmatmul.mubr.f32.gmra.mrb[0].mxu0 %v383
    %v502 = vpop.f32.mrb[0].mxu0
    %v503 = vadd.f32 %v310, %v502
    %v504 = vpop.f32.mrb[0].mxu0
    %505 = vmatprep.mubr.f32.mxu0 0.0
    %506 = vmatmul.mubr.f32.gmra.mrb[0].mxu0 %v386
    %v507 = vpop.f32.mrb[0].mxu0
    %v508 = vadd.f32 %v315, %v507
    %v509 = vpop.f32.mrb[0].mxu0
    %510 = vmatprep.mubr.f32.mxu0 0.0
    %511 = vmatmul.mubr.f32.gmra.mrb[0].mxu0 %v389
    %v512 = vpop.f32.mrb[0].mxu0
    %v513 = vadd.f32 %v320, %v512
    %v514 = vpop.f32.mrb[0].mxu0
    %515 = vmatprep.mubr.f32.mxu0 0.0
    %516 = vmatmul.mubr.f32.gmra.mrb[0].mxu0 %v392
    %v517 = vpop.f32.mrb[0].mxu0
    %v518 = vadd.f32 %v325, %v517
    %v519 = vpop.f32.mrb[0].mxu0
    %520 = vmatprep.mubr.f32.mxu0 0.0
    %521 = vmatmul.mubr.f32.gmra.mrb[0].mxu0 %v395
    %v522 = vpop.f32.mrb[0].mxu0
    %v523 = vadd.f32 %v330, %v522
    %v524 = vpop.f32.mrb[0].mxu0
    %525 = vmatprep.mubr.f32.mxu0 0.0
    %526 = vmatmul.mubr.f32.gmra.mrb[0].mxu0 %v398
    %v527 = vpop.f32.mrb[0].mxu0
    %v528 = vadd.f32 %v335, %v527
    %v529 = vpop.f32.mrb[0].mxu0
    %530 = vmatprep.mubr.f32.mxu0 0.0
    %531 = vmatmul.mubr.f32.gmra.mrb[0].mxu0 %v401
    %v532 = vpop.f32.mrb[0].mxu0
    %v533 = vadd.f32 %v340, %v532
    %v534 = vpop.f32.mrb[0].mxu0
    %535 = vmatprep.mubr.f32.mxu0 0.0
    %536 = vmatmul.mubr.f32.gmra.mrb[0].mxu0 %v404
    %v537 = vpop.f32.mrb[0].mxu0
    %v538 = vadd.f32 %v345, %v537
    %v539 = vpop.f32.mrb[0].mxu0
    %540 = vmatprep.mubr.f32.mxu0 0.0
    %541 = vmatmul.mubr.f32.gmra.mrb[0].mxu0 %v407
    %v542 = vpop.f32.mrb[0].mxu0
    %v543 = vadd.f32 %v350, %v542
    %v544 = vpop.f32.mrb[0].mxu0
    %545 = vmatprep.mubr.f32.mxu0 0.0
    %546 = vmatmul.mubr.f32.gmra.mrb[0].mxu0 %v410
    %v547 = vpop.f32.mrb[0].mxu0
    %v548 = vadd.f32 %v355, %v547
    %v549 = vpop.f32.mrb[0].mxu0
    %550 = vmatprep.mubr.f32.mxu0 0.0
    %551 = vmatmul.mubr.f32.gmra.mrb[0].mxu0 %v413
    %v552 = vpop.f32.mrb[0].mxu0
    %v553 = vadd.f32 %v360, %v552
    %v554 = vpop.f32.mrb[0].mxu0
    %555 = vmatprep.mubr.f32.mxu0 0.0
    %556 = vmatmul.mubr.f32.gmra.mrb[0].mxu0 %v416
    %v557 = vpop.f32.mrb[0].mxu0
    %v558 = vadd.f32 %v365, %v557
    %v559 = vpop.f32.mrb[0].mxu0
    %560 = vmatprep.mubr.f32.mxu0 0.0
    %561 = vmatmul.mubr.f32.gmra.mrb[0].mxu0 %v419
    %v562 = vpop.f32.mrb[0].mxu0
    %v563 = vadd.f32 %v370, %v562
    %v564 = vpop.f32.mrb[0].mxu0
    %565 = vdwg.mxu0
    %v566 = vld [vmem:[#allocation2 + $0x8] sm:$0xff]
    %v567 = vld [vmem:[#allocation2 + $0x10] sm:$0xff]
    %v568 = vld [vmem:[#allocation2 + $0x18] sm:$0xff]
    %v569 = vld [vmem:[#allocation2 + $0x20] sm:$0xff]
    %v570 = vld [vmem:[#allocation2 + $0x28] sm:$0xff]
    %v571 = vld [vmem:[#allocation2 + $0x30] sm:$0xff]
    %v572 = vld [vmem:[#allocation2 + $0x38] sm:$0xff]
    %v573 = vld [vmem:[#allocation2 + $0x40] sm:$0xff]
    %v574 = vld [vmem:[#allocation2 + $0x58] sm:$0xff]
    %v575 = vld [vmem:[#allocation2 + $0x60] sm:$0xff]
    %v576 = vld [vmem:[#allocation2 + $0x68] sm:$0xff]
    %v577 = vld [vmem:[#allocation2 + $0x70] sm:$0xff]
    %v578 = vld [vmem:[#allocation2 + $0x78] sm:$0xff]
    %v579 = vld [vmem:[#allocation2 + $0x80] sm:$0xff]
    %v580 = vld [vmem:[#allocation2 + $0x88] sm:$0xff]
    %v581 = vld [vmem:[#allocation2 + $0x90] sm:$0xff]
    %s582 = scalar_lea.vmem [#allocation3], 64
    %v583 = vld [vmem:[%s582] sm:$0xff]
    %v584 = vld [vmem:[%s582 + $0x8] sm:$0xff]
    %v585 = vld [vmem:[%s582 + $0x10] sm:$0xff]
    %v586 = vld [vmem:[%s582 + $0x18] sm:$0xff]
    %v588 = vsel %vm45, %v566, 0
    %v591 = vsel %vm45, %v567, 0
    %v594 = vsel %vm45, %v568, 0
    %v597 = vsel %vm45, %v569, 0
    %v600 = vsel %vm45, %v570, 0
    %v603 = vsel %vm45, %v571, 0
    %v606 = vsel %vm45, %v572, 0
    %v609 = vsel %vm45, %v573, 0
    %v612 = vsel %vm45, %v574, 0
    %v615 = vsel %vm45, %v575, 0
    %v618 = vsel %vm45, %v576, 0
    %v621 = vsel %vm45, %v577, 0
    %v624 = vsel %vm45, %v578, 0
    %v627 = vsel %vm45, %v579, 0
    %v630 = vsel %vm45, %v580, 0
    %v633 = vsel %vm45, %v581, 0
    %635 = vmatprep.subr.mxu0 0.0
    %636 = vmatpush1.msra.mxu0 %v583
    %637 = vmatprep.subr.mxu0 0.0
    %638 = vmatpush1.msra.mxu0 %v584
    %639 = vmatprep.subr.mxu0 0.0
    %640 = vmatpush1.msra.mxu0 %v585
    %641 = vmatprep.subr.mxu0 0.0
    %642 = vmatpush1.msra.mxu0 %v586
    %643 = vmatprep.subr.mxu0 0.0
    %644 = vmatpush1.msra.mxu0 0.0
    %645 = vmatprep.subr.mxu0 0.0
    %646 = vmatpush1.msra.mxu0 0.0
    %647 = vmatprep.subr.mxu0 0.0
    %648 = vmatpush1.msra.mxu0 0.0
    %649 = vmatprep.subr.mxu0 0.0
    %650 = vmatpush1.msra.mxu0 0.0
    %651 = vmatprep.subr.mxu0 0.0
    %652 = vmatpush1.msra.mxu0 0.0
    %653 = vmatprep.subr.mxu0 0.0
    %654 = vmatpush1.msra.mxu0 0.0
    %655 = vmatprep.subr.mxu0 0.0
    %656 = vmatpush1.msra.mxu0 0.0
    %657 = vmatprep.subr.mxu0 0.0
    %658 = vmatpush1.msra.mxu0 0.0
    %659 = vmatprep.subr.mxu0 0.0
    %660 = vmatpush1.msra.mxu0 0.0
    %661 = vmatprep.subr.mxu0 0.0
    %662 = vmatpush1.msra.mxu0 0.0
    %663 = vmatprep.subr.mxu0 0.0
    %664 = vmatpush1.msra.mxu0 0.0
    %665 = vmatprep.subr.mxu0 0.0
    %666 = vmatpush1.msra.mxu0 0.0
    %667 = vmatprep.subr.mxu0 0.0
    %668 = vmatpush1.msra.mxu0 0.0
    %669 = vmatprep.subr.mxu0 0.0
    %670 = vmatpush1.msra.mxu0 0.0
    %671 = vmatprep.subr.mxu0 0.0
    %672 = vmatpush1.msra.mxu0 0.0
    %673 = vmatprep.subr.mxu0 0.0
    %674 = vmatpush1.msra.mxu0 0.0
    %675 = vmatprep.subr.mxu0 0.0
    %676 = vmatpush1.msra.mxu0 0.0
    %677 = vmatprep.subr.mxu0 0.0
    %678 = vmatpush1.msra.mxu0 0.0
    %679 = vmatprep.subr.mxu0 0.0
    %680 = vmatpush1.msra.mxu0 0.0
    %681 = vmatprep.subr.mxu0 0.0
    %682 = vmatpush1.msra.mxu0 0.0
    %683 = vmatprep.subr.mxu0 0.0
    %684 = vmatpush1.msra.mxu0 0.0
    %685 = vmatprep.subr.mxu0 0.0
    %686 = vmatpush1.msra.mxu0 0.0
    %687 = vmatprep.subr.mxu0 0.0
    %688 = vmatpush1.msra.mxu0 0.0
    %689 = vmatprep.subr.mxu0 0.0
    %690 = vmatpush1.msra.mxu0 0.0
    %691 = vmatprep.subr.mxu0 0.0
    %692 = vmatpush1.msra.mxu0 0.0
    %693 = vmatprep.subr.mxu0 0.0
    %694 = vmatpush1.msra.mxu0 0.0
    %695 = vmatprep.subr.mxu0 0.0
    %696 = vmatpush1.msra.mxu0 0.0
    %697 = vmatprep.subr.mxu0 0.0
    %698 = vmatpush1.msra.mxu0 0.0
    %699 = vmatprep.mubr.f32.mxu0 0.0
    %700 = vmatmul.mubr.f32.gmra.mrb[0].mxu0 %v588
    %v701 = vpop.f32.mrb[0].mxu0
    %v702 = vadd.f32 0.0, %v701
    %v703 = vpop.f32.mrb[0].mxu0
    %704 = vmatprep.mubr.f32.mxu0 0.0
    %705 = vmatmul.mubr.f32.gmra.mrb[0].mxu0 %v591
    %v706 = vpop.f32.mrb[0].mxu0
    %v707 = vadd.f32 0.0, %v706
    %v708 = vpop.f32.mrb[0].mxu0
    %709 = vmatprep.mubr.f32.mxu0 0.0
    %710 = vmatmul.mubr.f32.gmra.mrb[0].mxu0 %v594
    %v711 = vpop.f32.mrb[0].mxu0
    %v712 = vadd.f32 0.0, %v711
    %v713 = vpop.f32.mrb[0].mxu0
    %714 = vmatprep.mubr.f32.mxu0 0.0
    %715 = vmatmul.mubr.f32.gmra.mrb[0].mxu0 %v597
    %v716 = vpop.f32.mrb[0].mxu0
    %v717 = vadd.f32 0.0, %v716
    %v718 = vpop.f32.mrb[0].mxu0
    %719 = vmatprep.mubr.f32.mxu0 0.0
    %720 = vmatmul.mubr.f32.gmra.mrb[0].mxu0 %v600
    %v721 = vpop.f32.mrb[0].mxu0
    %v722 = vadd.f32 0.0, %v721
    %v723 = vpop.f32.mrb[0].mxu0
    %724 = vmatprep.mubr.f32.mxu0 0.0
    %725 = vmatmul.mubr.f32.gmra.mrb[0].mxu0 %v603
    %v726 = vpop.f32.mrb[0].mxu0
    %v727 = vadd.f32 0.0, %v726
    %v728 = vpop.f32.mrb[0].mxu0
    %729 = vmatprep.mubr.f32.mxu0 0.0
    %730 = vmatmul.mubr.f32.gmra.mrb[0].mxu0 %v606
    %v731 = vpop.f32.mrb[0].mxu0
    %v732 = vadd.f32 0.0, %v731
    %v733 = vpop.f32.mrb[0].mxu0
    %734 = vmatprep.mubr.f32.mxu0 0.0
    %735 = vmatmul.mubr.f32.gmra.mrb[0].mxu0 %v609
    %v736 = vpop.f32.mrb[0].mxu0
    %v737 = vadd.f32 0.0, %v736
    %v738 = vpop.f32.mrb[0].mxu0
    %739 = vmatprep.mubr.f32.mxu0 0.0
    %740 = vmatmul.mubr.f32.gmra.mrb[0].mxu0 %v612
    %v741 = vpop.f32.mrb[0].mxu0
    %v742 = vadd.f32 0.0, %v741
    %v743 = vpop.f32.mrb[0].mxu0
    %744 = vmatprep.mubr.f32.mxu0 0.0
    %745 = vmatmul.mubr.f32.gmra.mrb[0].mxu0 %v615
    %v746 = vpop.f32.mrb[0].mxu0
    %v747 = vadd.f32 0.0, %v746
    %v748 = vpop.f32.mrb[0].mxu0
    %749 = vmatprep.mubr.f32.mxu0 0.0
    %750 = vmatmul.mubr.f32.gmra.mrb[0].mxu0 %v618
    %v751 = vpop.f32.mrb[0].mxu0
    %v752 = vadd.f32 0.0, %v751
    %v753 = vpop.f32.mrb[0].mxu0
    %754 = vmatprep.mubr.f32.mxu0 0.0
    %755 = vmatmul.mubr.f32.gmra.mrb[0].mxu0 %v621
    %v756 = vpop.f32.mrb[0].mxu0
    %v757 = vadd.f32 0.0, %v756
    %v758 = vpop.f32.mrb[0].mxu0
    %759 = vmatprep.mubr.f32.mxu0 0.0
    %760 = vmatmul.mubr.f32.gmra.mrb[0].mxu0 %v624
    %v761 = vpop.f32.mrb[0].mxu0
    %v762 = vadd.f32 0.0, %v761
    %v763 = vpop.f32.mrb[0].mxu0
    %764 = vmatprep.mubr.f32.mxu0 0.0
    %765 = vmatmul.mubr.f32.gmra.mrb[0].mxu0 %v627
    %v766 = vpop.f32.mrb[0].mxu0
    %v767 = vadd.f32 0.0, %v766
    %v768 = vpop.f32.mrb[0].mxu0
    %769 = vmatprep.mubr.f32.mxu0 0.0
    %770 = vmatmul.mubr.f32.gmra.mrb[0].mxu0 %v630
    %v771 = vpop.f32.mrb[0].mxu0
    %v772 = vadd.f32 0.0, %v771
    %v773 = vpop.f32.mrb[0].mxu0
    %774 = vmatprep.mubr.f32.mxu0 0.0
    %775 = vmatmul.mubr.f32.gmra.mrb[0].mxu0 %v633
    %v776 = vpop.f32.mrb[0].mxu0
    %v777 = vadd.f32 0.0, %v776
    %v778 = vpop.f32.mrb[0].mxu0
    %779 = vdwg.mxu0
    %v780 = vadd.f32 %v488, %v702
    %v781 = vadd.f32 %v493, %v707
    %v782 = vadd.f32 %v498, %v712
    %v783 = vadd.f32 %v503, %v717
    %v784 = vadd.f32 %v508, %v722
    %v785 = vadd.f32 %v513, %v727
    %v786 = vadd.f32 %v518, %v732
    %v787 = vadd.f32 %v523, %v737
    %v788 = vadd.f32 %v528, %v742
    %v789 = vadd.f32 %v533, %v747
    %v790 = vadd.f32 %v538, %v752
    %v791 = vadd.f32 %v543, %v757
    %v792 = vadd.f32 %v548, %v762
    %v793 = vadd.f32 %v553, %v767
    %v794 = vadd.f32 %v558, %v772
    %v795 = vadd.f32 %v563, %v777
    %v796 = vld [vmem:[#allocation2 + $0xa] sm:$0xff]
    %v797 = vld [vmem:[#allocation2 + $0x12] sm:$0xff]
    %v798 = vld [vmem:[#allocation2 + $0x1a] sm:$0xff]
    %v799 = vld [vmem:[#allocation2 + $0x22] sm:$0xff]
    %v800 = vld [vmem:[#allocation2 + $0x2a] sm:$0xff]
    %v801 = vld [vmem:[#allocation2 + $0x32] sm:$0xff]
    %v802 = vld [vmem:[#allocation2 + $0x3a] sm:$0xff]
    %v803 = vld [vmem:[#allocation2 + $0x42] sm:$0xff]
    %v804 = vld [vmem:[#allocation2 + $0x5a] sm:$0xff]
    %v805 = vld [vmem:[#allocation2 + $0x62] sm:$0xff]
    %v806 = vld [vmem:[#allocation2 + $0x6a] sm:$0xff]
    %v807 = vld [vmem:[#allocation2 + $0x72] sm:$0xff]
    %v808 = vld [vmem:[#allocation2 + $0x7a] sm:$0xff]
    %v809 = vld [vmem:[#allocation2 + $0x82] sm:$0xff]
    %v810 = vld [vmem:[#allocation2 + $0x8a] sm:$0xff]
    %v811 = vld [vmem:[#allocation2 + $0x92] sm:$0xff]
    %s812 = scalar_lea.vmem [#allocation3], 96
    %v813 = vld [vmem:[%s812] sm:$0xff]
    %v814 = vld [vmem:[%s812 + $0x8] sm:$0xff]
    %v815 = vld [vmem:[%s812 + $0x10] sm:$0xff]
    %v816 = vld [vmem:[%s812 + $0x18] sm:$0xff]
    %v818 = vsel %vm45, %v796, 0
    %v821 = vsel %vm45, %v797, 0
    %v824 = vsel %vm45, %v798, 0
    %v827 = vsel %vm45, %v799, 0
    %v830 = vsel %vm45, %v800, 0
    %v833 = vsel %vm45, %v801, 0
    %v836 = vsel %vm45, %v802, 0
    %v839 = vsel %vm45, %v803, 0
    %v842 = vsel %vm45, %v804, 0
    %v845 = vsel %vm45, %v805, 0
    %v848 = vsel %vm45, %v806, 0
    %v851 = vsel %vm45, %v807, 0
    %v854 = vsel %vm45, %v808, 0
    %v857 = vsel %vm45, %v809, 0
    %v860 = vsel %vm45, %v810, 0
    %v863 = vsel %vm45, %v811, 0
    %865 = vmatprep.subr.mxu0 0.0
    %866 = vmatpush1.msra.mxu0 %v813
    %867 = vmatprep.subr.mxu0 0.0
    %868 = vmatpush1.msra.mxu0 %v814
    %869 = vmatprep.subr.mxu0 0.0
    %870 = vmatpush1.msra.mxu0 %v815
    %871 = vmatprep.subr.mxu0 0.0
    %872 = vmatpush1.msra.mxu0 %v816
    %873 = vmatprep.subr.mxu0 0.0
    %874 = vmatpush1.msra.mxu0 0.0
    %875 = vmatprep.subr.mxu0 0.0
    %876 = vmatpush1.msra.mxu0 0.0
    %877 = vmatprep.subr.mxu0 0.0
    %878 = vmatpush1.msra.mxu0 0.0
    %879 = vmatprep.subr.mxu0 0.0
    %880 = vmatpush1.msra.mxu0 0.0
    %881 = vmatprep.subr.mxu0 0.0
    %882 = vmatpush1.msra.mxu0 0.0
    %883 = vmatprep.subr.mxu0 0.0
    %884 = vmatpush1.msra.mxu0 0.0
    %885 = vmatprep.subr.mxu0 0.0
    %886 = vmatpush1.msra.mxu0 0.0
    %887 = vmatprep.subr.mxu0 0.0
    %888 = vmatpush1.msra.mxu0 0.0
    %889 = vmatprep.subr.mxu0 0.0
    %890 = vmatpush1.msra.mxu0 0.0
    %891 = vmatprep.subr.mxu0 0.0
    %892 = vmatpush1.msra.mxu0 0.0
    %893 = vmatprep.subr.mxu0 0.0
    %894 = vmatpush1.msra.mxu0 0.0
    %895 = vmatprep.subr.mxu0 0.0
    %896 = vmatpush1.msra.mxu0 0.0
    %897 = vmatprep.subr.mxu0 0.0
    %898 = vmatpush1.msra.mxu0 0.0
    %899 = vmatprep.subr.mxu0 0.0
    %900 = vmatpush1.msra.mxu0 0.0
    %901 = vmatprep.subr.mxu0 0.0
    %902 = vmatpush1.msra.mxu0 0.0
    %903 = vmatprep.subr.mxu0 0.0
    %904 = vmatpush1.msra.mxu0 0.0
    %905 = vmatprep.subr.mxu0 0.0
    %906 = vmatpush1.msra.mxu0 0.0
    %907 = vmatprep.subr.mxu0 0.0
    %908 = vmatpush1.msra.mxu0 0.0
    %909 = vmatprep.subr.mxu0 0.0
    %910 = vmatpush1.msra.mxu0 0.0
    %911 = vmatprep.subr.mxu0 0.0
    %912 = vmatpush1.msra.mxu0 0.0
    %913 = vmatprep.subr.mxu0 0.0
    %914 = vmatpush1.msra.mxu0 0.0
    %915 = vmatprep.subr.mxu0 0.0
    %916 = vmatpush1.msra.mxu0 0.0
    %917 = vmatprep.subr.mxu0 0.0
    %918 = vmatpush1.msra.mxu0 0.0
    %919 = vmatprep.subr.mxu0 0.0
    %920 = vmatpush1.msra.mxu0 0.0
    %921 = vmatprep.subr.mxu0 0.0
    %922 = vmatpush1.msra.mxu0 0.0
    %923 = vmatprep.subr.mxu0 0.0
    %924 = vmatpush1.msra.mxu0 0.0
    %925 = vmatprep.subr.mxu0 0.0
    %926 = vmatpush1.msra.mxu0 0.0
    %927 = vmatprep.subr.mxu0 0.0
    %928 = vmatpush1.msra.mxu0 0.0
    %929 = vmatprep.mubr.f32.mxu0 0.0
    %930 = vmatmul.mubr.f32.gmra.mrb[0].mxu0 %v818
    %v931 = vpop.f32.mrb[0].mxu0
    %v932 = vadd.f32 0.0, %v931
    %v933 = vpop.f32.mrb[0].mxu0
    %934 = vmatprep.mubr.f32.mxu0 0.0
    %935 = vmatmul.mubr.f32.gmra.mrb[0].mxu0 %v821
    %v936 = vpop.f32.mrb[0].mxu0
    %v937 = vadd.f32 0.0, %v936
    %v938 = vpop.f32.mrb[0].mxu0
    %939 = vmatprep.mubr.f32.mxu0 0.0
    %940 = vmatmul.mubr.f32.gmra.mrb[0].mxu0 %v824
    %v941 = vpop.f32.mrb[0].mxu0
    %v942 = vadd.f32 0.0, %v941
    %v943 = vpop.f32.mrb[0].mxu0
    %944 = vmatprep.mubr.f32.mxu0 0.0
    %945 = vmatmul.mubr.f32.gmra.mrb[0].mxu0 %v827
    %v946 = vpop.f32.mrb[0].mxu0
    %v947 = vadd.f32 0.0, %v946
    %v948 = vpop.f32.mrb[0].mxu0
    %949 = vmatprep.mubr.f32.mxu0 0.0
    %950 = vmatmul.mubr.f32.gmra.mrb[0].mxu0 %v830
    %v951 = vpop.f32.mrb[0].mxu0
    %v952 = vadd.f32 0.0, %v951
    %v953 = vpop.f32.mrb[0].mxu0
    %954 = vmatprep.mubr.f32.mxu0 0.0
    %955 = vmatmul.mubr.f32.gmra.mrb[0].mxu0 %v833
    %v956 = vpop.f32.mrb[0].mxu0
    %v957 = vadd.f32 0.0, %v956
    %v958 = vpop.f32.mrb[0].mxu0
    %959 = vmatprep.mubr.f32.mxu0 0.0
    %960 = vmatmul.mubr.f32.gmra.mrb[0].mxu0 %v836
    %v961 = vpop.f32.mrb[0].mxu0
    %v962 = vadd.f32 0.0, %v961
    %v963 = vpop.f32.mrb[0].mxu0
    %964 = vmatprep.mubr.f32.mxu0 0.0
    %965 = vmatmul.mubr.f32.gmra.mrb[0].mxu0 %v839
    %v966 = vpop.f32.mrb[0].mxu0
    %v967 = vadd.f32 0.0, %v966
    %v968 = vpop.f32.mrb[0].mxu0
    %969 = vmatprep.mubr.f32.mxu0 0.0
    %970 = vmatmul.mubr.f32.gmra.mrb[0].mxu0 %v842
    %v971 = vpop.f32.mrb[0].mxu0
    %v972 = vadd.f32 0.0, %v971
    %v973 = vpop.f32.mrb[0].mxu0
    %974 = vmatprep.mubr.f32.mxu0 0.0
    %975 = vmatmul.mubr.f32.gmra.mrb[0].mxu0 %v845
    %v976 = vpop.f32.mrb[0].mxu0
    %v977 = vadd.f32 0.0, %v976
    %v978 = vpop.f32.mrb[0].mxu0
    %979 = vmatprep.mubr.f32.mxu0 0.0
    %980 = vmatmul.mubr.f32.gmra.mrb[0].mxu0 %v848
    %v981 = vpop.f32.mrb[0].mxu0
    %v982 = vadd.f32 0.0, %v981
    %v983 = vpop.f32.mrb[0].mxu0
    %984 = vmatprep.mubr.f32.mxu0 0.0
    %985 = vmatmul.mubr.f32.gmra.mrb[0].mxu0 %v851
    %v986 = vpop.f32.mrb[0].mxu0
    %v987 = vadd.f32 0.0, %v986
    %v988 = vpop.f32.mrb[0].mxu0
    %989 = vmatprep.mubr.f32.mxu0 0.0
    %990 = vmatmul.mubr.f32.gmra.mrb[0].mxu0 %v854
    %v991 = vpop.f32.mrb[0].mxu0
    %v992 = vadd.f32 0.0, %v991
    %v993 = vpop.f32.mrb[0].mxu0
    %994 = vmatprep.mubr.f32.mxu0 0.0
    %995 = vmatmul.mubr.f32.gmra.mrb[0].mxu0 %v857
    %v996 = vpop.f32.mrb[0].mxu0
    %v997 = vadd.f32 0.0, %v996
    %v998 = vpop.f32.mrb[0].mxu0
    %999 = vmatprep.mubr.f32.mxu0 0.0
    %1000 = vmatmul.mubr.f32.gmra.mrb[0].mxu0 %v860
    %v1001 = vpop.f32.mrb[0].mxu0
    %v1002 = vadd.f32 0.0, %v1001
    %v1003 = vpop.f32.mrb[0].mxu0
    %1004 = vmatprep.mubr.f32.mxu0 0.0
    %1005 = vmatmul.mubr.f32.gmra.mrb[0].mxu0 %v863
    %v1006 = vpop.f32.mrb[0].mxu0
    %v1007 = vadd.f32 0.0, %v1006
    %v1008 = vpop.f32.mrb[0].mxu0
    %1009 = vdwg.mxu0
    %v1010 = vadd.f32 %v780, %v932
    %v1011 = vadd.f32 %v781, %v937
    %v1012 = vadd.f32 %v782, %v942
    %v1013 = vadd.f32 %v783, %v947
    %v1014 = vadd.f32 %v784, %v952
    %v1015 = vadd.f32 %v785, %v957
    %v1016 = vadd.f32 %v786, %v962
    %v1017 = vadd.f32 %v787, %v967
    %v1018 = vadd.f32 %v788, %v972
    %v1019 = vadd.f32 %v789, %v977
    %v1020 = vadd.f32 %v790, %v982
    %v1021 = vadd.f32 %v791, %v987
    %v1022 = vadd.f32 %v792, %v992
    %v1023 = vadd.f32 %v793, %v997
    %v1024 = vadd.f32 %v794, %v1002
    %v1025 = vadd.f32 %v795, %v1007
    %v1026 = vld [vmem:[#allocation2 + $0xc] sm:$0xff]
    %v1027 = vld [vmem:[#allocation2 + $0x14] sm:$0xff]
    %v1028 = vld [vmem:[#allocation2 + $0x1c] sm:$0xff]
    %v1029 = vld [vmem:[#allocation2 + $0x24] sm:$0xff]
    %v1030 = vld [vmem:[#allocation2 + $0x2c] sm:$0xff]
    %v1031 = vld [vmem:[#allocation2 + $0x34] sm:$0xff]
    %v1032 = vld [vmem:[#allocation2 + $0x3c] sm:$0xff]
    %v1033 = vld [vmem:[#allocation2 + $0x44] sm:$0xff]
    %v1034 = vld [vmem:[#allocation2 + $0x5c] sm:$0xff]
    %v1035 = vld [vmem:[#allocation2 + $0x64] sm:$0xff]
    %v1036 = vld [vmem:[#allocation2 + $0x6c] sm:$0xff]
    %v1037 = vld [vmem:[#allocation2 + $0x74] sm:$0xff]
    %v1038 = vld [vmem:[#allocation2 + $0x7c] sm:$0xff]
    %v1039 = vld [vmem:[#allocation2 + $0x84] sm:$0xff]
    %v1040 = vld [vmem:[#allocation2 + $0x8c] sm:$0xff]
    %v1041 = vld [vmem:[#allocation2 + $0x94] sm:$0xff]
    %s1042 = scalar_lea.vmem [#allocation3], 128
    %v1043 = vld [vmem:[%s1042] sm:$0xff]
    %v1044 = vld [vmem:[%s1042 + $0x8] sm:$0xff]
    %v1045 = vld [vmem:[%s1042 + $0x10] sm:$0xff]
    %v1046 = vld [vmem:[%s1042 + $0x18] sm:$0xff]
    %v1048 = vsel %vm45, %v1026, 0
    %v1051 = vsel %vm45, %v1027, 0
    %v1054 = vsel %vm45, %v1028, 0
    %v1057 = vsel %vm45, %v1029, 0
    %v1060 = vsel %vm45, %v1030, 0
    %v1063 = vsel %vm45, %v1031, 0
    %v1066 = vsel %vm45, %v1032, 0
    %v1069 = vsel %vm45, %v1033, 0
    %v1072 = vsel %vm45, %v1034, 0
    %v1075 = vsel %vm45, %v1035, 0
    %v1078 = vsel %vm45, %v1036, 0
    %v1081 = vsel %vm45, %v1037, 0
    %v1084 = vsel %vm45, %v1038, 0
    %v1087 = vsel %vm45, %v1039, 0
    %v1090 = vsel %vm45, %v1040, 0
    %v1093 = vsel %vm45, %v1041, 0
    %1095 = vmatprep.subr.mxu0 0.0
    %1096 = vmatpush1.msra.mxu0 %v1043
    %1097 = vmatprep.subr.mxu0 0.0
    %1098 = vmatpush1.msra.mxu0 %v1044
    %1099 = vmatprep.subr.mxu0 0.0
    %1100 = vmatpush1.msra.mxu0 %v1045
    %1101 = vmatprep.subr.mxu0 0.0
    %1102 = vmatpush1.msra.mxu0 %v1046
    %1103 = vmatprep.subr.mxu0 0.0
    %1104 = vmatpush1.msra.mxu0 0.0
    %1105 = vmatprep.subr.mxu0 0.0
    %1106 = vmatpush1.msra.mxu0 0.0
    %1107 = vmatprep.subr.mxu0 0.0
    %1108 = vmatpush1.msra.mxu0 0.0
    %1109 = vmatprep.subr.mxu0 0.0
    %1110 = vmatpush1.msra.mxu0 0.0
    %1111 = vmatprep.subr.mxu0 0.0
    %1112 = vmatpush1.msra.mxu0 0.0
    %1113 = vmatprep.subr.mxu0 0.0
    %1114 = vmatpush1.msra.mxu0 0.0
    %1115 = vmatprep.subr.mxu0 0.0
    %1116 = vmatpush1.msra.mxu0 0.0
    %1117 = vmatprep.subr.mxu0 0.0
    %1118 = vmatpush1.msra.mxu0 0.0
    %1119 = vmatprep.subr.mxu0 0.0
    %1120 = vmatpush1.msra.mxu0 0.0
    %1121 = vmatprep.subr.mxu0 0.0
    %1122 = vmatpush1.msra.mxu0 0.0
    %1123 = vmatprep.subr.mxu0 0.0
    %1124 = vmatpush1.msra.mxu0 0.0
    %1125 = vmatprep.subr.mxu0 0.0
    %1126 = vmatpush1.msra.mxu0 0.0
    %1127 = vmatprep.subr.mxu0 0.0
    %1128 = vmatpush1.msra.mxu0 0.0
    %1129 = vmatprep.subr.mxu0 0.0
    %1130 = vmatpush1.msra.mxu0 0.0
    %1131 = vmatprep.subr.mxu0 0.0
    %1132 = vmatpush1.msra.mxu0 0.0
    %1133 = vmatprep.subr.mxu0 0.0
    %1134 = vmatpush1.msra.mxu0 0.0
    %1135 = vmatprep.subr.mxu0 0.0
    %1136 = vmatpush1.msra.mxu0 0.0
    %1137 = vmatprep.subr.mxu0 0.0
    %1138 = vmatpush1.msra.mxu0 0.0
    %1139 = vmatprep.subr.mxu0 0.0
    %1140 = vmatpush1.msra.mxu0 0.0
    %1141 = vmatprep.subr.mxu0 0.0
    %1142 = vmatpush1.msra.mxu0 0.0
    %1143 = vmatprep.subr.mxu0 0.0
    %1144 = vmatpush1.msra.mxu0 0.0
    %1145 = vmatprep.subr.mxu0 0.0
    %1146 = vmatpush1.msra.mxu0 0.0
    %1147 = vmatprep.subr.mxu0 0.0
    %1148 = vmatpush1.msra.mxu0 0.0
    %1149 = vmatprep.subr.mxu0 0.0
    %1150 = vmatpush1.msra.mxu0 0.0
    %1151 = vmatprep.subr.mxu0 0.0
    %1152 = vmatpush1.msra.mxu0 0.0
    %1153 = vmatprep.subr.mxu0 0.0
    %1154 = vmatpush1.msra.mxu0 0.0
    %1155 = vmatprep.subr.mxu0 0.0
    %1156 = vmatpush1.msra.mxu0 0.0
    %1157 = vmatprep.subr.mxu0 0.0
    %1158 = vmatpush1.msra.mxu0 0.0
    %1159 = vmatprep.mubr.f32.mxu0 0.0
    %1160 = vmatmul.mubr.f32.gmra.mrb[0].mxu0 %v1048
    %v1161 = vpop.f32.mrb[0].mxu0
    %v1162 = vadd.f32 0.0, %v1161
    %v1163 = vpop.f32.mrb[0].mxu0
    %1164 = vmatprep.mubr.f32.mxu0 0.0
    %1165 = vmatmul.mubr.f32.gmra.mrb[0].mxu0 %v1051
    %v1166 = vpop.f32.mrb[0].mxu0
    %v1167 = vadd.f32 0.0, %v1166
    %v1168 = vpop.f32.mrb[0].mxu0
    %1169 = vmatprep.mubr.f32.mxu0 0.0
    %1170 = vmatmul.mubr.f32.gmra.mrb[0].mxu0 %v1054
    %v1171 = vpop.f32.mrb[0].mxu0
    %v1172 = vadd.f32 0.0, %v1171
    %v1173 = vpop.f32.mrb[0].mxu0
    %1174 = vmatprep.mubr.f32.mxu0 0.0
    %1175 = vmatmul.mubr.f32.gmra.mrb[0].mxu0 %v1057
    %v1176 = vpop.f32.mrb[0].mxu0
    %v1177 = vadd.f32 0.0, %v1176
    %v1178 = vpop.f32.mrb[0].mxu0
    %1179 = vmatprep.mubr.f32.mxu0 0.0
    %1180 = vmatmul.mubr.f32.gmra.mrb[0].mxu0 %v1060
    %v1181 = vpop.f32.mrb[0].mxu0
    %v1182 = vadd.f32 0.0, %v1181
    %v1183 = vpop.f32.mrb[0].mxu0
    %1184 = vmatprep.mubr.f32.mxu0 0.0
    %1185 = vmatmul.mubr.f32.gmra.mrb[0].mxu0 %v1063
    %v1186 = vpop.f32.mrb[0].mxu0
    %v1187 = vadd.f32 0.0, %v1186
    %v1188 = vpop.f32.mrb[0].mxu0
    %1189 = vmatprep.mubr.f32.mxu0 0.0
    %1190 = vmatmul.mubr.f32.gmra.mrb[0].mxu0 %v1066
    %v1191 = vpop.f32.mrb[0].mxu0
    %v1192 = vadd.f32 0.0, %v1191
    %v1193 = vpop.f32.mrb[0].mxu0
    %1194 = vmatprep.mubr.f32.mxu0 0.0
    %1195 = vmatmul.mubr.f32.gmra.mrb[0].mxu0 %v1069
    %v1196 = vpop.f32.mrb[0].mxu0
    %v1197 = vadd.f32 0.0, %v1196
    %v1198 = vpop.f32.mrb[0].mxu0
    %1199 = vmatprep.mubr.f32.mxu0 0.0
    %1200 = vmatmul.mubr.f32.gmra.mrb[0].mxu0 %v1072
    %v1201 = vpop.f32.mrb[0].mxu0
    %v1202 = vadd.f32 0.0, %v1201
    %v1203 = vpop.f32.mrb[0].mxu0
    %1204 = vmatprep.mubr.f32.mxu0 0.0
    %1205 = vmatmul.mubr.f32.gmra.mrb[0].mxu0 %v1075
    %v1206 = vpop.f32.mrb[0].mxu0
    %v1207 = vadd.f32 0.0, %v1206
    %v1208 = vpop.f32.mrb[0].mxu0
    %1209 = vmatprep.mubr.f32.mxu0 0.0
    %1210 = vmatmul.mubr.f32.gmra.mrb[0].mxu0 %v1078
    %v1211 = vpop.f32.mrb[0].mxu0
    %v1212 = vadd.f32 0.0, %v1211
    %v1213 = vpop.f32.mrb[0].mxu0
    %1214 = vmatprep.mubr.f32.mxu0 0.0
    %1215 = vmatmul.mubr.f32.gmra.mrb[0].mxu0 %v1081
    %v1216 = vpop.f32.mrb[0].mxu0
    %v1217 = vadd.f32 0.0, %v1216
    %v1218 = vpop.f32.mrb[0].mxu0
    %1219 = vmatprep.mubr.f32.mxu0 0.0
    %1220 = vmatmul.mubr.f32.gmra.mrb[0].mxu0 %v1084
    %v1221 = vpop.f32.mrb[0].mxu0
    %v1222 = vadd.f32 0.0, %v1221
    %v1223 = vpop.f32.mrb[0].mxu0
    %1224 = vmatprep.mubr.f32.mxu0 0.0
    %1225 = vmatmul.mubr.f32.gmra.mrb[0].mxu0 %v1087
    %v1226 = vpop.f32.mrb[0].mxu0
    %v1227 = vadd.f32 0.0, %v1226
    %v1228 = vpop.f32.mrb[0].mxu0
    %1229 = vmatprep.mubr.f32.mxu0 0.0
    %1230 = vmatmul.mubr.f32.gmra.mrb[0].mxu0 %v1090
    %v1231 = vpop.f32.mrb[0].mxu0
    %v1232 = vadd.f32 0.0, %v1231
    %v1233 = vpop.f32.mrb[0].mxu0
    %1234 = vmatprep.mubr.f32.mxu0 0.0
    %1235 = vmatmul.mubr.f32.gmra.mrb[0].mxu0 %v1093
    %v1236 = vpop.f32.mrb[0].mxu0
    %v1237 = vadd.f32 0.0, %v1236
    %v1238 = vpop.f32.mrb[0].mxu0
    %1239 = vdwg.mxu0
    %v1240 = vadd.f32 %v1010, %v1162
    %v1241 = vadd.f32 %v1011, %v1167
    %v1242 = vadd.f32 %v1012, %v1172
    %v1243 = vadd.f32 %v1013, %v1177
    %v1244 = vadd.f32 %v1014, %v1182
    %v1245 = vadd.f32 %v1015, %v1187
    %v1246 = vadd.f32 %v1016, %v1192
    %v1247 = vadd.f32 %v1017, %v1197
    %v1248 = vadd.f32 %v1018, %v1202
    %v1249 = vadd.f32 %v1019, %v1207
    %v1250 = vadd.f32 %v1020, %v1212
    %v1251 = vadd.f32 %v1021, %v1217
    %v1252 = vadd.f32 %v1022, %v1222
    %v1253 = vadd.f32 %v1023, %v1227
    %v1254 = vadd.f32 %v1024, %v1232
    %v1255 = vadd.f32 %v1025, %v1237
    %v1256 = vlaneseq
    %v1257 = vshrl.u32 %v1256, 7
    %v1258 = vsub.s32 2, %v1257
    %v1259 = vrot.slane %v66, %v1258
    %v1260 = vadd.f32 %v1240, %v1259
    %v1261 = vadd.f32 %v1241, %v1259
    %v1262 = vadd.f32 %v1242, %v1259
    %v1263 = vadd.f32 %v1243, %v1259
    %v1264 = vadd.f32 %v1244, %v1259
    %v1265 = vadd.f32 %v1245, %v1259
    %v1266 = vadd.f32 %v1246, %v1259
    %v1267 = vadd.f32 %v1247, %v1259
    %v1268 = vadd.f32 %v1248, %v1259
    %v1269 = vadd.f32 %v1249, %v1259
    %v1270 = vadd.f32 %v1250, %v1259
    %v1271 = vadd.f32 %v1251, %v1259
    %v1272 = vadd.f32 %v1252, %v1259
    %v1273 = vadd.f32 %v1253, %v1259
    %v1274 = vadd.f32 %v1254, %v1259
    %v1275 = vadd.f32 %v1255, %v1259
    %v1276 = vmax.f32 %v1260, 0.0
    %v1277 = vmax.f32 %v1261, 0.0
    %v1278 = vmax.f32 %v1262, 0.0
    %v1279 = vmax.f32 %v1263, 0.0
    %v1280 = vmax.f32 %v1264, 0.0
    %v1281 = vmax.f32 %v1265, 0.0
    %v1282 = vmax.f32 %v1266, 0.0
    %v1283 = vmax.f32 %v1267, 0.0
    %v1284 = vmax.f32 %v1268, 0.0
    %v1285 = vmax.f32 %v1269, 0.0
    %v1286 = vmax.f32 %v1270, 0.0
    %v1287 = vmax.f32 %v1271, 0.0
    %v1288 = vmax.f32 %v1272, 0.0
    %v1289 = vmax.f32 %v1273, 0.0
    %v1290 = vmax.f32 %v1274, 0.0
    %v1291 = vmax.f32 %v1275, 0.0
    %1292 = vst.msk [vmem:[#allocation2 + $0x8] sm:$0xff] %vm45, %v1276
    %1293 = vst.msk [vmem:[#allocation2 + $0x10] sm:$0xff] %vm45, %v1277
    %1294 = vst.msk [vmem:[#allocation2 + $0x18] sm:$0xff] %vm45, %v1278
    %1295 = vst.msk [vmem:[#allocation2 + $0x20] sm:$0xff] %vm45, %v1279
    %1296 = vst.msk [vmem:[#allocation2 + $0x28] sm:$0xff] %vm45, %v1280
    %1297 = vst.msk [vmem:[#allocation2 + $0x30] sm:$0xff] %vm45, %v1281
    %1298 = vst.msk [vmem:[#allocation2 + $0x38] sm:$0xff] %vm45, %v1282
    %1299 = vst.msk [vmem:[#allocation2 + $0x40] sm:$0xff] %vm45, %v1283
    %1300 = vst.msk [vmem:[#allocation2 + $0x58] sm:$0xff] %vm45, %v1284
    %1301 = vst.msk [vmem:[#allocation2 + $0x60] sm:$0xff] %vm45, %v1285
    %1302 = vst.msk [vmem:[#allocation2 + $0x68] sm:$0xff] %vm45, %v1286
    %1303 = vst.msk [vmem:[#allocation2 + $0x70] sm:$0xff] %vm45, %v1287
    %1304 = vst.msk [vmem:[#allocation2 + $0x78] sm:$0xff] %vm45, %v1288
    %1305 = vst.msk [vmem:[#allocation2 + $0x80] sm:$0xff] %vm45, %v1289
    %1306 = vst.msk [vmem:[#allocation2 + $0x88] sm:$0xff] %vm45, %v1290
    %1307 = vst.msk [vmem:[#allocation2 + $0x90] sm:$0xff] %vm45, %v1291
    %v1308 = vld [vmem:[#allocation2 + $0x4] sm:$0xff]
    %v1309 = vld [vmem:[#allocation2 + $0xc] sm:$0xff]
    %v1310 = vld [vmem:[#allocation2 + $0x14] sm:$0xff]
    %v1311 = vld [vmem:[#allocation2 + $0x1c] sm:$0xff]
    %v1312 = vld [vmem:[#allocation2 + $0x24] sm:$0xff]
    %v1313 = vld [vmem:[#allocation2 + $0x2c] sm:$0xff]
    %v1314 = vld [vmem:[#allocation2 + $0x34] sm:$0xff]
    %v1315 = vld [vmem:[#allocation2 + $0x3c] sm:$0xff]
    %v1316 = vld [vmem:[#allocation2 + $0x54] sm:$0xff]
    %v1317 = vld [vmem:[#allocation2 + $0x5c] sm:$0xff]
    %v1318 = vld [vmem:[#allocation2 + $0x64] sm:$0xff]
    %v1319 = vld [vmem:[#allocation2 + $0x6c] sm:$0xff]
    %v1320 = vld [vmem:[#allocation2 + $0x74] sm:$0xff]
    %v1321 = vld [vmem:[#allocation2 + $0x7c] sm:$0xff]
    %v1322 = vld [vmem:[#allocation2 + $0x84] sm:$0xff]
    %v1323 = vld [vmem:[#allocation2 + $0x8c] sm:$0xff]
    %v1324 = vld [vmem:[#allocation5] sm:$0xff]
    %v1325 = vld [vmem:[#allocation5 + $0x8] sm:$0xff]
    %v1326 = vld [vmem:[#allocation5 + $0x10] sm:$0xff]
    %v1327 = vld [vmem:[#allocation5 + $0x18] sm:$0xff]
    %v1328 = vld [vmem:[#allocation2 + $0x6] sm:$0xff]
    %v1329 = vld [vmem:[#allocation2 + $0xe] sm:$0xff]
    %v1330 = vld [vmem:[#allocation2 + $0x16] sm:$0xff]
    %v1331 = vld [vmem:[#allocation2 + $0x1e] sm:$0xff]
    %v1332 = vld [vmem:[#allocation2 + $0x26] sm:$0xff]
    %v1333 = vld [vmem:[#allocation2 + $0x2e] sm:$0xff]
    %v1334 = vld [vmem:[#allocation2 + $0x36] sm:$0xff]
    %v1335 = vld [vmem:[#allocation2 + $0x3e] sm:$0xff]
    %v1336 = vld [vmem:[#allocation2 + $0x56] sm:$0xff]
    %v1337 = vld [vmem:[#allocation2 + $0x5e] sm:$0xff]
    %v1338 = vld [vmem:[#allocation2 + $0x66] sm:$0xff]
    %v1339 = vld [vmem:[#allocation2 + $0x6e] sm:$0xff]
    %v1340 = vld [vmem:[#allocation2 + $0x76] sm:$0xff]
    %v1341 = vld [vmem:[#allocation2 + $0x7e] sm:$0xff]
    %v1342 = vld [vmem:[#allocation2 + $0x86] sm:$0xff]
    %v1343 = vld [vmem:[#allocation2 + $0x8e] sm:$0xff]
    %s1344 = scalar_lea.vmem [#allocation5], 32
    %v1345 = vld [vmem:[%s1344] sm:$0xff]
    %v1346 = vld [vmem:[%s1344 + $0x8] sm:$0xff]
    %v1347 = vld [vmem:[%s1344 + $0x10] sm:$0xff]
    %v1348 = vld [vmem:[%s1344 + $0x18] sm:$0xff]
    %v1350 = vsel %vm45, %v1328, 0
    %v1353 = vsel %vm45, %v1329, 0
    %v1356 = vsel %vm45, %v1330, 0
    %v1359 = vsel %vm45, %v1331, 0
    %v1362 = vsel %vm45, %v1332, 0
    %v1365 = vsel %vm45, %v1333, 0
    %v1368 = vsel %vm45, %v1334, 0
    %v1371 = vsel %vm45, %v1335, 0
    %v1374 = vsel %vm45, %v1336, 0
    %v1377 = vsel %vm45, %v1337, 0
    %v1380 = vsel %vm45, %v1338, 0
    %v1383 = vsel %vm45, %v1339, 0
    %v1386 = vsel %vm45, %v1340, 0
    %v1389 = vsel %vm45, %v1341, 0
    %v1392 = vsel %vm45, %v1342, 0
    %v1395 = vsel %vm45, %v1343, 0
    %1397 = vmatprep.subr.mxu0 0.0
    %1398 = vmatpush1.msra.mxu0 %v1345
    %1399 = vmatprep.subr.mxu0 0.0
    %1400 = vmatpush1.msra.mxu0 %v1346
    %1401 = vmatprep.subr.mxu0 0.0
    %1402 = vmatpush1.msra.mxu0 %v1347
    %1403 = vmatprep.subr.mxu0 0.0
    %1404 = vmatpush1.msra.mxu0 %v1348
    %1405 = vmatprep.subr.mxu0 0.0
    %1406 = vmatpush1.msra.mxu0 0.0
    %1407 = vmatprep.subr.mxu0 0.0
    %1408 = vmatpush1.msra.mxu0 0.0
    %1409 = vmatprep.subr.mxu0 0.0
    %1410 = vmatpush1.msra.mxu0 0.0
    %1411 = vmatprep.subr.mxu0 0.0
    %1412 = vmatpush1.msra.mxu0 0.0
    %1413 = vmatprep.subr.mxu0 0.0
    %1414 = vmatpush1.msra.mxu0 0.0
    %1415 = vmatprep.subr.mxu0 0.0
    %1416 = vmatpush1.msra.mxu0 0.0
    %1417 = vmatprep.subr.mxu0 0.0
    %1418 = vmatpush1.msra.mxu0 0.0
    %1419 = vmatprep.subr.mxu0 0.0
    %1420 = vmatpush1.msra.mxu0 0.0
    %1421 = vmatprep.subr.mxu0 0.0
    %1422 = vmatpush1.msra.mxu0 0.0
    %1423 = vmatprep.subr.mxu0 0.0
    %1424 = vmatpush1.msra.mxu0 0.0
    %1425 = vmatprep.subr.mxu0 0.0
    %1426 = vmatpush1.msra.mxu0 0.0
    %1427 = vmatprep.subr.mxu0 0.0
    %1428 = vmatpush1.msra.mxu0 0.0
    %1429 = vmatprep.subr.mxu0 0.0
    %1430 = vmatpush1.msra.mxu0 0.0
    %1431 = vmatprep.subr.mxu0 0.0
    %1432 = vmatpush1.msra.mxu0 0.0
    %1433 = vmatprep.subr.mxu0 0.0
    %1434 = vmatpush1.msra.mxu0 0.0
    %1435 = vmatprep.subr.mxu0 0.0
    %1436 = vmatpush1.msra.mxu0 0.0
    %1437 = vmatprep.subr.mxu0 0.0
    %1438 = vmatpush1.msra.mxu0 0.0
    %1439 = vmatprep.subr.mxu0 0.0
    %1440 = vmatpush1.msra.mxu0 0.0
    %1441 = vmatprep.subr.mxu0 0.0
    %1442 = vmatpush1.msra.mxu0 0.0
    %1443 = vmatprep.subr.mxu0 0.0
    %1444 = vmatpush1.msra.mxu0 0.0
    %1445 = vmatprep.subr.mxu0 0.0
    %1446 = vmatpush1.msra.mxu0 0.0
    %1447 = vmatprep.subr.mxu0 0.0
    %1448 = vmatpush1.msra.mxu0 0.0
    %1449 = vmatprep.subr.mxu0 0.0
    %1450 = vmatpush1.msra.mxu0 0.0
    %1451 = vmatprep.subr.mxu0 0.0
    %1452 = vmatpush1.msra.mxu0 0.0
    %1453 = vmatprep.subr.mxu0 0.0
    %1454 = vmatpush1.msra.mxu0 0.0
    %1455 = vmatprep.subr.mxu0 0.0
    %1456 = vmatpush1.msra.mxu0 0.0
    %1457 = vmatprep.subr.mxu0 0.0
    %1458 = vmatpush1.msra.mxu0 0.0
    %1459 = vmatprep.subr.mxu0 0.0
    %1460 = vmatpush1.msra.mxu0 0.0
    %1461 = vmatprep.mubr.f32.mxu0 0.0
    %1462 = vmatmul.mubr.f32.gmra.mrb[0].mxu0 %v1350
    %v1463 = vpop.f32.mrb[0].mxu0
    %v1464 = vadd.f32 0.0, %v1463
    %v1465 = vpop.f32.mrb[0].mxu0
    %1466 = vmatprep.mubr.f32.mxu0 0.0
    %1467 = vmatmul.mubr.f32.gmra.mrb[0].mxu0 %v1353
    %v1468 = vpop.f32.mrb[0].mxu0
    %v1469 = vadd.f32 0.0, %v1468
    %v1470 = vpop.f32.mrb[0].mxu0
    %1471 = vmatprep.mubr.f32.mxu0 0.0
    %1472 = vmatmul.mubr.f32.gmra.mrb[0].mxu0 %v1356
    %v1473 = vpop.f32.mrb[0].mxu0
    %v1474 = vadd.f32 0.0, %v1473
    %v1475 = vpop.f32.mrb[0].mxu0
    %1476 = vmatprep.mubr.f32.mxu0 0.0
    %1477 = vmatmul.mubr.f32.gmra.mrb[0].mxu0 %v1359
    %v1478 = vpop.f32.mrb[0].mxu0
    %v1479 = vadd.f32 0.0, %v1478
    %v1480 = vpop.f32.mrb[0].mxu0
    %1481 = vmatprep.mubr.f32.mxu0 0.0
    %1482 = vmatmul.mubr.f32.gmra.mrb[0].mxu0 %v1362
    %v1483 = vpop.f32.mrb[0].mxu0
    %v1484 = vadd.f32 0.0, %v1483
    %v1485 = vpop.f32.mrb[0].mxu0
    %1486 = vmatprep.mubr.f32.mxu0 0.0
    %1487 = vmatmul.mubr.f32.gmra.mrb[0].mxu0 %v1365
    %v1488 = vpop.f32.mrb[0].mxu0
    %v1489 = vadd.f32 0.0, %v1488
    %v1490 = vpop.f32.mrb[0].mxu0
    %1491 = vmatprep.mubr.f32.mxu0 0.0
    %1492 = vmatmul.mubr.f32.gmra.mrb[0].mxu0 %v1368
    %v1493 = vpop.f32.mrb[0].mxu0
    %v1494 = vadd.f32 0.0, %v1493
    %v1495 = vpop.f32.mrb[0].mxu0
    %1496 = vmatprep.mubr.f32.mxu0 0.0
    %1497 = vmatmul.mubr.f32.gmra.mrb[0].mxu0 %v1371
    %v1498 = vpop.f32.mrb[0].mxu0
    %v1499 = vadd.f32 0.0, %v1498
    %v1500 = vpop.f32.mrb[0].mxu0
    %1501 = vmatprep.mubr.f32.mxu0 0.0
    %1502 = vmatmul.mubr.f32.gmra.mrb[0].mxu0 %v1374
    %v1503 = vpop.f32.mrb[0].mxu0
    %v1504 = vadd.f32 0.0, %v1503
    %v1505 = vpop.f32.mrb[0].mxu0
    %1506 = vmatprep.mubr.f32.mxu0 0.0
    %1507 = vmatmul.mubr.f32.gmra.mrb[0].mxu0 %v1377
    %v1508 = vpop.f32.mrb[0].mxu0
    %v1509 = vadd.f32 0.0, %v1508
    %v1510 = vpop.f32.mrb[0].mxu0
    %1511 = vmatprep.mubr.f32.mxu0 0.0
    %1512 = vmatmul.mubr.f32.gmra.mrb[0].mxu0 %v1380
    %v1513 = vpop.f32.mrb[0].mxu0
    %v1514 = vadd.f32 0.0, %v1513
    %v1515 = vpop.f32.mrb[0].mxu0
    %1516 = vmatprep.mubr.f32.mxu0 0.0
    %1517 = vmatmul.mubr.f32.gmra.mrb[0].mxu0 %v1383
    %v1518 = vpop.f32.mrb[0].mxu0
    %v1519 = vadd.f32 0.0, %v1518
    %v1520 = vpop.f32.mrb[0].mxu0
    %1521 = vmatprep.mubr.f32.mxu0 0.0
    %1522 = vmatmul.mubr.f32.gmra.mrb[0].mxu0 %v1386
    %v1523 = vpop.f32.mrb[0].mxu0
    %v1524 = vadd.f32 0.0, %v1523
    %v1525 = vpop.f32.mrb[0].mxu0
    %1526 = vmatprep.mubr.f32.mxu0 0.0
    %1527 = vmatmul.mubr.f32.gmra.mrb[0].mxu0 %v1389
    %v1528 = vpop.f32.mrb[0].mxu0
    %v1529 = vadd.f32 0.0, %v1528
    %v1530 = vpop.f32.mrb[0].mxu0
    %1531 = vmatprep.mubr.f32.mxu0 0.0
    %1532 = vmatmul.mubr.f32.gmra.mrb[0].mxu0 %v1392
    %v1533 = vpop.f32.mrb[0].mxu0
    %v1534 = vadd.f32 0.0, %v1533
    %v1535 = vpop.f32.mrb[0].mxu0
    %1536 = vmatprep.mubr.f32.mxu0 0.0
    %1537 = vmatmul.mubr.f32.gmra.mrb[0].mxu0 %v1395
    %v1538 = vpop.f32.mrb[0].mxu0
    %v1539 = vadd.f32 0.0, %v1538
    %v1540 = vpop.f32.mrb[0].mxu0
    %1541 = vdwg.mxu0
    %v1543 = vsel %vm45, %v1308, 0
    %v1546 = vsel %vm45, %v1309, 0
    %v1549 = vsel %vm45, %v1310, 0
    %v1552 = vsel %vm45, %v1311, 0
    %v1555 = vsel %vm45, %v1312, 0
    %v1558 = vsel %vm45, %v1313, 0
    %v1561 = vsel %vm45, %v1314, 0
    %v1564 = vsel %vm45, %v1315, 0
    %v1567 = vsel %vm45, %v1316, 0
    %v1570 = vsel %vm45, %v1317, 0
    %v1573 = vsel %vm45, %v1318, 0
    %v1576 = vsel %vm45, %v1319, 0
    %v1579 = vsel %vm45, %v1320, 0
    %v1582 = vsel %vm45, %v1321, 0
    %v1585 = vsel %vm45, %v1322, 0
    %v1588 = vsel %vm45, %v1323, 0
    %1590 = vmatprep.subr.mxu0 0.0
    %1591 = vmatpush1.msra.mxu0 %v1324
    %1592 = vmatprep.subr.mxu0 0.0
    %1593 = vmatpush1.msra.mxu0 %v1325
    %1594 = vmatprep.subr.mxu0 0.0
    %1595 = vmatpush1.msra.mxu0 %v1326
    %1596 = vmatprep.subr.mxu0 0.0
    %1597 = vmatpush1.msra.mxu0 %v1327
    %1598 = vmatprep.subr.mxu0 0.0
    %1599 = vmatpush1.msra.mxu0 0.0
    %1600 = vmatprep.subr.mxu0 0.0
    %1601 = vmatpush1.msra.mxu0 0.0
    %1602 = vmatprep.subr.mxu0 0.0
    %1603 = vmatpush1.msra.mxu0 0.0
    %1604 = vmatprep.subr.mxu0 0.0
    %1605 = vmatpush1.msra.mxu0 0.0
    %1606 = vmatprep.subr.mxu0 0.0
    %1607 = vmatpush1.msra.mxu0 0.0
    %1608 = vmatprep.subr.mxu0 0.0
    %1609 = vmatpush1.msra.mxu0 0.0
    %1610 = vmatprep.subr.mxu0 0.0
    %1611 = vmatpush1.msra.mxu0 0.0
    %1612 = vmatprep.subr.mxu0 0.0
    %1613 = vmatpush1.msra.mxu0 0.0
    %1614 = vmatprep.subr.mxu0 0.0
    %1615 = vmatpush1.msra.mxu0 0.0
    %1616 = vmatprep.subr.mxu0 0.0
    %1617 = vmatpush1.msra.mxu0 0.0
    %1618 = vmatprep.subr.mxu0 0.0
    %1619 = vmatpush1.msra.mxu0 0.0
    %1620 = vmatprep.subr.mxu0 0.0
    %1621 = vmatpush1.msra.mxu0 0.0
    %1622 = vmatprep.subr.mxu0 0.0
    %1623 = vmatpush1.msra.mxu0 0.0
    %1624 = vmatprep.subr.mxu0 0.0
    %1625 = vmatpush1.msra.mxu0 0.0
    %1626 = vmatprep.subr.mxu0 0.0
    %1627 = vmatpush1.msra.mxu0 0.0
    %1628 = vmatprep.subr.mxu0 0.0
    %1629 = vmatpush1.msra.mxu0 0.0
    %1630 = vmatprep.subr.mxu0 0.0
    %1631 = vmatpush1.msra.mxu0 0.0
    %1632 = vmatprep.subr.mxu0 0.0
    %1633 = vmatpush1.msra.mxu0 0.0
    %1634 = vmatprep.subr.mxu0 0.0
    %1635 = vmatpush1.msra.mxu0 0.0
    %1636 = vmatprep.subr.mxu0 0.0
    %1637 = vmatpush1.msra.mxu0 0.0
    %1638 = vmatprep.subr.mxu0 0.0
    %1639 = vmatpush1.msra.mxu0 0.0
    %1640 = vmatprep.subr.mxu0 0.0
    %1641 = vmatpush1.msra.mxu0 0.0
    %1642 = vmatprep.subr.mxu0 0.0
    %1643 = vmatpush1.msra.mxu0 0.0
    %1644 = vmatprep.subr.mxu0 0.0
    %1645 = vmatpush1.msra.mxu0 0.0
    %1646 = vmatprep.subr.mxu0 0.0
    %1647 = vmatpush1.msra.mxu0 0.0
    %1648 = vmatprep.subr.mxu0 0.0
    %1649 = vmatpush1.msra.mxu0 0.0
    %1650 = vmatprep.subr.mxu0 0.0
    %1651 = vmatpush1.msra.mxu0 0.0
    %1652 = vmatprep.subr.mxu0 0.0
    %1653 = vmatpush1.msra.mxu0 0.0
    %1654 = vmatprep.mubr.f32.mxu0 0.0
    %1655 = vmatmul.mubr.f32.gmra.mrb[0].mxu0 %v1543
    %v1656 = vpop.f32.mrb[0].mxu0
    %v1657 = vadd.f32 %v1464, %v1656
    %v1658 = vpop.f32.mrb[0].mxu0
    %1659 = vmatprep.mubr.f32.mxu0 0.0
    %1660 = vmatmul.mubr.f32.gmra.mrb[0].mxu0 %v1546
    %v1661 = vpop.f32.mrb[0].mxu0
    %v1662 = vadd.f32 %v1469, %v1661
    %v1663 = vpop.f32.mrb[0].mxu0
    %1664 = vmatprep.mubr.f32.mxu0 0.0
    %1665 = vmatmul.mubr.f32.gmra.mrb[0].mxu0 %v1549
    %v1666 = vpop.f32.mrb[0].mxu0
    %v1667 = vadd.f32 %v1474, %v1666
    %v1668 = vpop.f32.mrb[0].mxu0
    %1669 = vmatprep.mubr.f32.mxu0 0.0
    %1670 = vmatmul.mubr.f32.gmra.mrb[0].mxu0 %v1552
    %v1671 = vpop.f32.mrb[0].mxu0
    %v1672 = vadd.f32 %v1479, %v1671
    %v1673 = vpop.f32.mrb[0].mxu0
    %1674 = vmatprep.mubr.f32.mxu0 0.0
    %1675 = vmatmul.mubr.f32.gmra.mrb[0].mxu0 %v1555
    %v1676 = vpop.f32.mrb[0].mxu0
    %v1677 = vadd.f32 %v1484, %v1676
    %v1678 = vpop.f32.mrb[0].mxu0
    %1679 = vmatprep.mubr.f32.mxu0 0.0
    %1680 = vmatmul.mubr.f32.gmra.mrb[0].mxu0 %v1558
    %v1681 = vpop.f32.mrb[0].mxu0
    %v1682 = vadd.f32 %v1489, %v1681
    %v1683 = vpop.f32.mrb[0].mxu0
    %1684 = vmatprep.mubr.f32.mxu0 0.0
    %1685 = vmatmul.mubr.f32.gmra.mrb[0].mxu0 %v1561
    %v1686 = vpop.f32.mrb[0].mxu0
    %v1687 = vadd.f32 %v1494, %v1686
    %v1688 = vpop.f32.mrb[0].mxu0
    %1689 = vmatprep.mubr.f32.mxu0 0.0
    %1690 = vmatmul.mubr.f32.gmra.mrb[0].mxu0 %v1564
    %v1691 = vpop.f32.mrb[0].mxu0
    %v1692 = vadd.f32 %v1499, %v1691
    %v1693 = vpop.f32.mrb[0].mxu0
    %1694 = vmatprep.mubr.f32.mxu0 0.0
    %1695 = vmatmul.mubr.f32.gmra.mrb[0].mxu0 %v1567
    %v1696 = vpop.f32.mrb[0].mxu0
    %v1697 = vadd.f32 %v1504, %v1696
    %v1698 = vpop.f32.mrb[0].mxu0
    %1699 = vmatprep.mubr.f32.mxu0 0.0
    %1700 = vmatmul.mubr.f32.gmra.mrb[0].mxu0 %v1570
    %v1701 = vpop.f32.mrb[0].mxu0
    %v1702 = vadd.f32 %v1509, %v1701
    %v1703 = vpop.f32.mrb[0].mxu0
    %1704 = vmatprep.mubr.f32.mxu0 0.0
    %1705 = vmatmul.mubr.f32.gmra.mrb[0].mxu0 %v1573
    %v1706 = vpop.f32.mrb[0].mxu0
    %v1707 = vadd.f32 %v1514, %v1706
    %v1708 = vpop.f32.mrb[0].mxu0
    %1709 = vmatprep.mubr.f32.mxu0 0.0
    %1710 = vmatmul.mubr.f32.gmra.mrb[0].mxu0 %v1576
    %v1711 = vpop.f32.mrb[0].mxu0
    %v1712 = vadd.f32 %v1519, %v1711
    %v1713 = vpop.f32.mrb[0].mxu0
    %1714 = vmatprep.mubr.f32.mxu0 0.0
    %1715 = vmatmul.mubr.f32.gmra.mrb[0].mxu0 %v1579
    %v1716 = vpop.f32.mrb[0].mxu0
    %v1717 = vadd.f32 %v1524, %v1716
    %v1718 = vpop.f32.mrb[0].mxu0
    %1719 = vmatprep.mubr.f32.mxu0 0.0
    %1720 = vmatmul.mubr.f32.gmra.mrb[0].mxu0 %v1582
    %v1721 = vpop.f32.mrb[0].mxu0
    %v1722 = vadd.f32 %v1529, %v1721
    %v1723 = vpop.f32.mrb[0].mxu0
    %1724 = vmatprep.mubr.f32.mxu0 0.0
    %1725 = vmatmul.mubr.f32.gmra.mrb[0].mxu0 %v1585
    %v1726 = vpop.f32.mrb[0].mxu0
    %v1727 = vadd.f32 %v1534, %v1726
    %v1728 = vpop.f32.mrb[0].mxu0
    %1729 = vmatprep.mubr.f32.mxu0 0.0
    %1730 = vmatmul.mubr.f32.gmra.mrb[0].mxu0 %v1588
    %v1731 = vpop.f32.mrb[0].mxu0
    %v1732 = vadd.f32 %v1539, %v1731
    %v1733 = vpop.f32.mrb[0].mxu0
    %1734 = vdwg.mxu0
    %v1735 = vld [vmem:[#allocation2 + $0x8] sm:$0xff]
    %v1736 = vld [vmem:[#allocation2 + $0x10] sm:$0xff]
    %v1737 = vld [vmem:[#allocation2 + $0x18] sm:$0xff]
    %v1738 = vld [vmem:[#allocation2 + $0x20] sm:$0xff]
    %v1739 = vld [vmem:[#allocation2 + $0x28] sm:$0xff]
    %v1740 = vld [vmem:[#allocation2 + $0x30] sm:$0xff]
    %v1741 = vld [vmem:[#allocation2 + $0x38] sm:$0xff]
    %v1742 = vld [vmem:[#allocation2 + $0x40] sm:$0xff]
    %v1743 = vld [vmem:[#allocation2 + $0x58] sm:$0xff]
    %v1744 = vld [vmem:[#allocation2 + $0x60] sm:$0xff]
    %v1745 = vld [vmem:[#allocation2 + $0x68] sm:$0xff]
    %v1746 = vld [vmem:[#allocation2 + $0x70] sm:$0xff]
    %v1747 = vld [vmem:[#allocation2 + $0x78] sm:$0xff]
    %v1748 = vld [vmem:[#allocation2 + $0x80] sm:$0xff]
    %v1749 = vld [vmem:[#allocation2 + $0x88] sm:$0xff]
    %v1750 = vld [vmem:[#allocation2 + $0x90] sm:$0xff]
    %s1751 = scalar_lea.vmem [#allocation5], 64
    %v1752 = vld [vmem:[%s1751] sm:$0xff]
    %v1753 = vld [vmem:[%s1751 + $0x8] sm:$0xff]
    %v1754 = vld [vmem:[%s1751 + $0x10] sm:$0xff]
    %v1755 = vld [vmem:[%s1751 + $0x18] sm:$0xff]
    %v1757 = vsel %vm45, %v1735, 0
    %v1760 = vsel %vm45, %v1736, 0
    %v1763 = vsel %vm45, %v1737, 0
    %v1766 = vsel %vm45, %v1738, 0
    %v1769 = vsel %vm45, %v1739, 0
    %v1772 = vsel %vm45, %v1740, 0
    %v1775 = vsel %vm45, %v1741, 0
    %v1778 = vsel %vm45, %v1742, 0
    %v1781 = vsel %vm45, %v1743, 0
    %v1784 = vsel %vm45, %v1744, 0
    %v1787 = vsel %vm45, %v1745, 0
    %v1790 = vsel %vm45, %v1746, 0
    %v1793 = vsel %vm45, %v1747, 0
    %v1796 = vsel %vm45, %v1748, 0
    %v1799 = vsel %vm45, %v1749, 0
    %v1802 = vsel %vm45, %v1750, 0
    %1804 = vmatprep.subr.mxu0 0.0
    %1805 = vmatpush1.msra.mxu0 %v1752
    %1806 = vmatprep.subr.mxu0 0.0
    %1807 = vmatpush1.msra.mxu0 %v1753
    %1808 = vmatprep.subr.mxu0 0.0
    %1809 = vmatpush1.msra.mxu0 %v1754
    %1810 = vmatprep.subr.mxu0 0.0
    %1811 = vmatpush1.msra.mxu0 %v1755
    %1812 = vmatprep.subr.mxu0 0.0
    %1813 = vmatpush1.msra.mxu0 0.0
    %1814 = vmatprep.subr.mxu0 0.0
    %1815 = vmatpush1.msra.mxu0 0.0
    %1816 = vmatprep.subr.mxu0 0.0
    %1817 = vmatpush1.msra.mxu0 0.0
    %1818 = vmatprep.subr.mxu0 0.0
    %1819 = vmatpush1.msra.mxu0 0.0
    %1820 = vmatprep.subr.mxu0 0.0
    %1821 = vmatpush1.msra.mxu0 0.0
    %1822 = vmatprep.subr.mxu0 0.0
    %1823 = vmatpush1.msra.mxu0 0.0
    %1824 = vmatprep.subr.mxu0 0.0
    %1825 = vmatpush1.msra.mxu0 0.0
    %1826 = vmatprep.subr.mxu0 0.0
    %1827 = vmatpush1.msra.mxu0 0.0
    %1828 = vmatprep.subr.mxu0 0.0
    %1829 = vmatpush1.msra.mxu0 0.0
    %1830 = vmatprep.subr.mxu0 0.0
    %1831 = vmatpush1.msra.mxu0 0.0
    %1832 = vmatprep.subr.mxu0 0.0
    %1833 = vmatpush1.msra.mxu0 0.0
    %1834 = vmatprep.subr.mxu0 0.0
    %1835 = vmatpush1.msra.mxu0 0.0
    %1836 = vmatprep.subr.mxu0 0.0
    %1837 = vmatpush1.msra.mxu0 0.0
    %1838 = vmatprep.subr.mxu0 0.0
    %1839 = vmatpush1.msra.mxu0 0.0
    %1840 = vmatprep.subr.mxu0 0.0
    %1841 = vmatpush1.msra.mxu0 0.0
    %1842 = vmatprep.subr.mxu0 0.0
    %1843 = vmatpush1.msra.mxu0 0.0
    %1844 = vmatprep.subr.mxu0 0.0
    %1845 = vmatpush1.msra.mxu0 0.0
    %1846 = vmatprep.subr.mxu0 0.0
    %1847 = vmatpush1.msra.mxu0 0.0
    %1848 = vmatprep.subr.mxu0 0.0
    %1849 = vmatpush1.msra.mxu0 0.0
    %1850 = vmatprep.subr.mxu0 0.0
    %1851 = vmatpush1.msra.mxu0 0.0
    %1852 = vmatprep.subr.mxu0 0.0
    %1853 = vmatpush1.msra.mxu0 0.0
    %1854 = vmatprep.subr.mxu0 0.0
    %1855 = vmatpush1.msra.mxu0 0.0
    %1856 = vmatprep.subr.mxu0 0.0
    %1857 = vmatpush1.msra.mxu0 0.0
    %1858 = vmatprep.subr.mxu0 0.0
    %1859 = vmatpush1.msra.mxu0 0.0
    %1860 = vmatprep.subr.mxu0 0.0
    %1861 = vmatpush1.msra.mxu0 0.0
    %1862 = vmatprep.subr.mxu0 0.0
    %1863 = vmatpush1.msra.mxu0 0.0
    %1864 = vmatprep.subr.mxu0 0.0
    %1865 = vmatpush1.msra.mxu0 0.0
    %1866 = vmatprep.subr.mxu0 0.0
    %1867 = vmatpush1.msra.mxu0 0.0
    %1868 = vmatprep.mubr.f32.mxu0 0.0
    %1869 = vmatmul.mubr.f32.gmra.mrb[0].mxu0 %v1757
    %v1870 = vpop.f32.mrb[0].mxu0
    %v1871 = vadd.f32 0.0, %v1870
    %v1872 = vpop.f32.mrb[0].mxu0
    %1873 = vmatprep.mubr.f32.mxu0 0.0
    %1874 = vmatmul.mubr.f32.gmra.mrb[0].mxu0 %v1760
    %v1875 = vpop.f32.mrb[0].mxu0
    %v1876 = vadd.f32 0.0, %v1875
    %v1877 = vpop.f32.mrb[0].mxu0
    %1878 = vmatprep.mubr.f32.mxu0 0.0
    %1879 = vmatmul.mubr.f32.gmra.mrb[0].mxu0 %v1763
    %v1880 = vpop.f32.mrb[0].mxu0
    %v1881 = vadd.f32 0.0, %v1880
    %v1882 = vpop.f32.mrb[0].mxu0
    %1883 = vmatprep.mubr.f32.mxu0 0.0
    %1884 = vmatmul.mubr.f32.gmra.mrb[0].mxu0 %v1766
    %v1885 = vpop.f32.mrb[0].mxu0
    %v1886 = vadd.f32 0.0, %v1885
    %v1887 = vpop.f32.mrb[0].mxu0
    %1888 = vmatprep.mubr.f32.mxu0 0.0
    %1889 = vmatmul.mubr.f32.gmra.mrb[0].mxu0 %v1769
    %v1890 = vpop.f32.mrb[0].mxu0
    %v1891 = vadd.f32 0.0, %v1890
    %v1892 = vpop.f32.mrb[0].mxu0
    %1893 = vmatprep.mubr.f32.mxu0 0.0
    %1894 = vmatmul.mubr.f32.gmra.mrb[0].mxu0 %v1772
    %v1895 = vpop.f32.mrb[0].mxu0
    %v1896 = vadd.f32 0.0, %v1895
    %v1897 = vpop.f32.mrb[0].mxu0
    %1898 = vmatprep.mubr.f32.mxu0 0.0
    %1899 = vmatmul.mubr.f32.gmra.mrb[0].mxu0 %v1775
    %v1900 = vpop.f32.mrb[0].mxu0
    %v1901 = vadd.f32 0.0, %v1900
    %v1902 = vpop.f32.mrb[0].mxu0
    %1903 = vmatprep.mubr.f32.mxu0 0.0
    %1904 = vmatmul.mubr.f32.gmra.mrb[0].mxu0 %v1778
    %v1905 = vpop.f32.mrb[0].mxu0
    %v1906 = vadd.f32 0.0, %v1905
    %v1907 = vpop.f32.mrb[0].mxu0
    %1908 = vmatprep.mubr.f32.mxu0 0.0
    %1909 = vmatmul.mubr.f32.gmra.mrb[0].mxu0 %v1781
    %v1910 = vpop.f32.mrb[0].mxu0
    %v1911 = vadd.f32 0.0, %v1910
    %v1912 = vpop.f32.mrb[0].mxu0
    %1913 = vmatprep.mubr.f32.mxu0 0.0
    %1914 = vmatmul.mubr.f32.gmra.mrb[0].mxu0 %v1784
    %v1915 = vpop.f32.mrb[0].mxu0
    %v1916 = vadd.f32 0.0, %v1915
    %v1917 = vpop.f32.mrb[0].mxu0
    %1918 = vmatprep.mubr.f32.mxu0 0.0
    %1919 = vmatmul.mubr.f32.gmra.mrb[0].mxu0 %v1787
    %v1920 = vpop.f32.mrb[0].mxu0
    %v1921 = vadd.f32 0.0, %v1920
    %v1922 = vpop.f32.mrb[0].mxu0
    %1923 = vmatprep.mubr.f32.mxu0 0.0
    %1924 = vmatmul.mubr.f32.gmra.mrb[0].mxu0 %v1790
    %v1925 = vpop.f32.mrb[0].mxu0
    %v1926 = vadd.f32 0.0, %v1925
    %v1927 = vpop.f32.mrb[0].mxu0
    %1928 = vmatprep.mubr.f32.mxu0 0.0
    %1929 = vmatmul.mubr.f32.gmra.mrb[0].mxu0 %v1793
    %v1930 = vpop.f32.mrb[0].mxu0
    %v1931 = vadd.f32 0.0, %v1930
    %v1932 = vpop.f32.mrb[0].mxu0
    %1933 = vmatprep.mubr.f32.mxu0 0.0
    %1934 = vmatmul.mubr.f32.gmra.mrb[0].mxu0 %v1796
    %v1935 = vpop.f32.mrb[0].mxu0
    %v1936 = vadd.f32 0.0, %v1935
    %v1937 = vpop.f32.mrb[0].mxu0
    %1938 = vmatprep.mubr.f32.mxu0 0.0
    %1939 = vmatmul.mubr.f32.gmra.mrb[0].mxu0 %v1799
    %v1940 = vpop.f32.mrb[0].mxu0
    %v1941 = vadd.f32 0.0, %v1940
    %v1942 = vpop.f32.mrb[0].mxu0
    %1943 = vmatprep.mubr.f32.mxu0 0.0
    %1944 = vmatmul.mubr.f32.gmra.mrb[0].mxu0 %v1802
    %v1945 = vpop.f32.mrb[0].mxu0
    %v1946 = vadd.f32 0.0, %v1945
    %v1947 = vpop.f32.mrb[0].mxu0
    %1948 = vdwg.mxu0
    %v1949 = vadd.f32 %v1657, %v1871
    %v1950 = vadd.f32 %v1662, %v1876
    %v1951 = vadd.f32 %v1667, %v1881
    %v1952 = vadd.f32 %v1672, %v1886
    %v1953 = vadd.f32 %v1677, %v1891
    %v1954 = vadd.f32 %v1682, %v1896
    %v1955 = vadd.f32 %v1687, %v1901
    %v1956 = vadd.f32 %v1692, %v1906
    %v1957 = vadd.f32 %v1697, %v1911
    %v1958 = vadd.f32 %v1702, %v1916
    %v1959 = vadd.f32 %v1707, %v1921
    %v1960 = vadd.f32 %v1712, %v1926
    %v1961 = vadd.f32 %v1717, %v1931
    %v1962 = vadd.f32 %v1722, %v1936
    %v1963 = vadd.f32 %v1727, %v1941
    %v1964 = vadd.f32 %v1732, %v1946
    %v1965 = vld [vmem:[#allocation2 + $0xa] sm:$0xff]
    %v1966 = vld [vmem:[#allocation2 + $0x12] sm:$0xff]
    %v1967 = vld [vmem:[#allocation2 + $0x1a] sm:$0xff]
    %v1968 = vld [vmem:[#allocation2 + $0x22] sm:$0xff]
    %v1969 = vld [vmem:[#allocation2 + $0x2a] sm:$0xff]
    %v1970 = vld [vmem:[#allocation2 + $0x32] sm:$0xff]
    %v1971 = vld [vmem:[#allocation2 + $0x3a] sm:$0xff]
    %v1972 = vld [vmem:[#allocation2 + $0x42] sm:$0xff]
    %v1973 = vld [vmem:[#allocation2 + $0x5a] sm:$0xff]
    %v1974 = vld [vmem:[#allocation2 + $0x62] sm:$0xff]
    %v1975 = vld [vmem:[#allocation2 + $0x6a] sm:$0xff]
    %v1976 = vld [vmem:[#allocation2 + $0x72] sm:$0xff]
    %v1977 = vld [vmem:[#allocation2 + $0x7a] sm:$0xff]
    %v1978 = vld [vmem:[#allocation2 + $0x82] sm:$0xff]
    %v1979 = vld [vmem:[#allocation2 + $0x8a] sm:$0xff]
    %v1980 = vld [vmem:[#allocation2 + $0x92] sm:$0xff]
    %s1981 = scalar_lea.vmem [#allocation5], 96
    %v1982 = vld [vmem:[%s1981] sm:$0xff]
    %v1983 = vld [vmem:[%s1981 + $0x8] sm:$0xff]
    %v1984 = vld [vmem:[%s1981 + $0x10] sm:$0xff]
    %v1985 = vld [vmem:[%s1981 + $0x18] sm:$0xff]
    %v1987 = vsel %vm45, %v1965, 0
    %v1990 = vsel %vm45, %v1966, 0
    %v1993 = vsel %vm45, %v1967, 0
    %v1996 = vsel %vm45, %v1968, 0
    %v1999 = vsel %vm45, %v1969, 0
    %v2002 = vsel %vm45, %v1970, 0
    %v2005 = vsel %vm45, %v1971, 0
    %v2008 = vsel %vm45, %v1972, 0
    %v2011 = vsel %vm45, %v1973, 0
    %v2014 = vsel %vm45, %v1974, 0
    %v2017 = vsel %vm45, %v1975, 0
    %v2020 = vsel %vm45, %v1976, 0
    %v2023 = vsel %vm45, %v1977, 0
    %v2026 = vsel %vm45, %v1978, 0
    %v2029 = vsel %vm45, %v1979, 0
    %v2032 = vsel %vm45, %v1980, 0
    %2034 = vmatprep.subr.mxu0 0.0
    %2035 = vmatpush1.msra.mxu0 %v1982
    %2036 = vmatprep.subr.mxu0 0.0
    %2037 = vmatpush1.msra.mxu0 %v1983
    %2038 = vmatprep.subr.mxu0 0.0
    %2039 = vmatpush1.msra.mxu0 %v1984
    %2040 = vmatprep.subr.mxu0 0.0
    %2041 = vmatpush1.msra.mxu0 %v1985
    %2042 = vmatprep.subr.mxu0 0.0
    %2043 = vmatpush1.msra.mxu0 0.0
    %2044 = vmatprep.subr.mxu0 0.0
    %2045 = vmatpush1.msra.mxu0 0.0
    %2046 = vmatprep.subr.mxu0 0.0
    %2047 = vmatpush1.msra.mxu0 0.0
    %2048 = vmatprep.subr.mxu0 0.0
    %2049 = vmatpush1.msra.mxu0 0.0
    %2050 = vmatprep.subr.mxu0 0.0
    %2051 = vmatpush1.msra.mxu0 0.0
    %2052 = vmatprep.subr.mxu0 0.0
    %2053 = vmatpush1.msra.mxu0 0.0
    %2054 = vmatprep.subr.mxu0 0.0
    %2055 = vmatpush1.msra.mxu0 0.0
    %2056 = vmatprep.subr.mxu0 0.0
    %2057 = vmatpush1.msra.mxu0 0.0
    %2058 = vmatprep.subr.mxu0 0.0
    %2059 = vmatpush1.msra.mxu0 0.0
    %2060 = vmatprep.subr.mxu0 0.0
    %2061 = vmatpush1.msra.mxu0 0.0
    %2062 = vmatprep.subr.mxu0 0.0
    %2063 = vmatpush1.msra.mxu0 0.0
    %2064 = vmatprep.subr.mxu0 0.0
    %2065 = vmatpush1.msra.mxu0 0.0
    %2066 = vmatprep.subr.mxu0 0.0
    %2067 = vmatpush1.msra.mxu0 0.0
    %2068 = vmatprep.subr.mxu0 0.0
    %2069 = vmatpush1.msra.mxu0 0.0
    %2070 = vmatprep.subr.mxu0 0.0
    %2071 = vmatpush1.msra.mxu0 0.0
    %2072 = vmatprep.subr.mxu0 0.0
    %2073 = vmatpush1.msra.mxu0 0.0
    %2074 = vmatprep.subr.mxu0 0.0
    %2075 = vmatpush1.msra.mxu0 0.0
    %2076 = vmatprep.subr.mxu0 0.0
    %2077 = vmatpush1.msra.mxu0 0.0
    %2078 = vmatprep.subr.mxu0 0.0
    %2079 = vmatpush1.msra.mxu0 0.0
    %2080 = vmatprep.subr.mxu0 0.0
    %2081 = vmatpush1.msra.mxu0 0.0
    %2082 = vmatprep.subr.mxu0 0.0
    %2083 = vmatpush1.msra.mxu0 0.0
    %2084 = vmatprep.subr.mxu0 0.0
    %2085 = vmatpush1.msra.mxu0 0.0
    %2086 = vmatprep.subr.mxu0 0.0
    %2087 = vmatpush1.msra.mxu0 0.0
    %2088 = vmatprep.subr.mxu0 0.0
    %2089 = vmatpush1.msra.mxu0 0.0
    %2090 = vmatprep.subr.mxu0 0.0
    %2091 = vmatpush1.msra.mxu0 0.0
    %2092 = vmatprep.subr.mxu0 0.0
    %2093 = vmatpush1.msra.mxu0 0.0
    %2094 = vmatprep.subr.mxu0 0.0
    %2095 = vmatpush1.msra.mxu0 0.0
    %2096 = vmatprep.subr.mxu0 0.0
    %2097 = vmatpush1.msra.mxu0 0.0
    %2098 = vmatprep.mubr.f32.mxu0 0.0
    %2099 = vmatmul.mubr.f32.gmra.mrb[0].mxu0 %v1987
    %v2100 = vpop.f32.mrb[0].mxu0
    %v2101 = vadd.f32 0.0, %v2100
    %v2102 = vpop.f32.mrb[0].mxu0
    %2103 = vmatprep.mubr.f32.mxu0 0.0
    %2104 = vmatmul.mubr.f32.gmra.mrb[0].mxu0 %v1990
    %v2105 = vpop.f32.mrb[0].mxu0
    %v2106 = vadd.f32 0.0, %v2105
    %v2107 = vpop.f32.mrb[0].mxu0
    %2108 = vmatprep.mubr.f32.mxu0 0.0
    %2109 = vmatmul.mubr.f32.gmra.mrb[0].mxu0 %v1993
    %v2110 = vpop.f32.mrb[0].mxu0
    %v2111 = vadd.f32 0.0, %v2110
    %v2112 = vpop.f32.mrb[0].mxu0
    %2113 = vmatprep.mubr.f32.mxu0 0.0
    %2114 = vmatmul.mubr.f32.gmra.mrb[0].mxu0 %v1996
    %v2115 = vpop.f32.mrb[0].mxu0
    %v2116 = vadd.f32 0.0, %v2115
    %v2117 = vpop.f32.mrb[0].mxu0
    %2118 = vmatprep.mubr.f32.mxu0 0.0
    %2119 = vmatmul.mubr.f32.gmra.mrb[0].mxu0 %v1999
    %v2120 = vpop.f32.mrb[0].mxu0
    %v2121 = vadd.f32 0.0, %v2120
    %v2122 = vpop.f32.mrb[0].mxu0
    %2123 = vmatprep.mubr.f32.mxu0 0.0
    %2124 = vmatmul.mubr.f32.gmra.mrb[0].mxu0 %v2002
    %v2125 = vpop.f32.mrb[0].mxu0
    %v2126 = vadd.f32 0.0, %v2125
    %v2127 = vpop.f32.mrb[0].mxu0
    %2128 = vmatprep.mubr.f32.mxu0 0.0
    %2129 = vmatmul.mubr.f32.gmra.mrb[0].mxu0 %v2005
    %v2130 = vpop.f32.mrb[0].mxu0
    %v2131 = vadd.f32 0.0, %v2130
    %v2132 = vpop.f32.mrb[0].mxu0
    %2133 = vmatprep.mubr.f32.mxu0 0.0
    %2134 = vmatmul.mubr.f32.gmra.mrb[0].mxu0 %v2008
    %v2135 = vpop.f32.mrb[0].mxu0
    %v2136 = vadd.f32 0.0, %v2135
    %v2137 = vpop.f32.mrb[0].mxu0
    %2138 = vmatprep.mubr.f32.mxu0 0.0
    %2139 = vmatmul.mubr.f32.gmra.mrb[0].mxu0 %v2011
    %v2140 = vpop.f32.mrb[0].mxu0
    %v2141 = vadd.f32 0.0, %v2140
    %v2142 = vpop.f32.mrb[0].mxu0
    %2143 = vmatprep.mubr.f32.mxu0 0.0
    %2144 = vmatmul.mubr.f32.gmra.mrb[0].mxu0 %v2014
    %v2145 = vpop.f32.mrb[0].mxu0
    %v2146 = vadd.f32 0.0, %v2145
    %v2147 = vpop.f32.mrb[0].mxu0
    %2148 = vmatprep.mubr.f32.mxu0 0.0
    %2149 = vmatmul.mubr.f32.gmra.mrb[0].mxu0 %v2017
    %v2150 = vpop.f32.mrb[0].mxu0
    %v2151 = vadd.f32 0.0, %v2150
    %v2152 = vpop.f32.mrb[0].mxu0
    %2153 = vmatprep.mubr.f32.mxu0 0.0
    %2154 = vmatmul.mubr.f32.gmra.mrb[0].mxu0 %v2020
    %v2155 = vpop.f32.mrb[0].mxu0
    %v2156 = vadd.f32 0.0, %v2155
    %v2157 = vpop.f32.mrb[0].mxu0
    %2158 = vmatprep.mubr.f32.mxu0 0.0
    %2159 = vmatmul.mubr.f32.gmra.mrb[0].mxu0 %v2023
    %v2160 = vpop.f32.mrb[0].mxu0
    %v2161 = vadd.f32 0.0, %v2160
    %v2162 = vpop.f32.mrb[0].mxu0
    %2163 = vmatprep.mubr.f32.mxu0 0.0
    %2164 = vmatmul.mubr.f32.gmra.mrb[0].mxu0 %v2026
    %v2165 = vpop.f32.mrb[0].mxu0
    %v2166 = vadd.f32 0.0, %v2165
    %v2167 = vpop.f32.mrb[0].mxu0
    %2168 = vmatprep.mubr.f32.mxu0 0.0
    %2169 = vmatmul.mubr.f32.gmra.mrb[0].mxu0 %v2029
    %v2170 = vpop.f32.mrb[0].mxu0
    %v2171 = vadd.f32 0.0, %v2170
    %v2172 = vpop.f32.mrb[0].mxu0
    %2173 = vmatprep.mubr.f32.mxu0 0.0
    %2174 = vmatmul.mubr.f32.gmra.mrb[0].mxu0 %v2032
    %v2175 = vpop.f32.mrb[0].mxu0
    %v2176 = vadd.f32 0.0, %v2175
    %v2177 = vpop.f32.mrb[0].mxu0
    %2178 = vdwg.mxu0
    %v2179 = vadd.f32 %v1949, %v2101
    %v2180 = vadd.f32 %v1950, %v2106
    %v2181 = vadd.f32 %v1951, %v2111
    %v2182 = vadd.f32 %v1952, %v2116
    %v2183 = vadd.f32 %v1953, %v2121
    %v2184 = vadd.f32 %v1954, %v2126
    %v2185 = vadd.f32 %v1955, %v2131
    %v2186 = vadd.f32 %v1956, %v2136
    %v2187 = vadd.f32 %v1957, %v2141
    %v2188 = vadd.f32 %v1958, %v2146
    %v2189 = vadd.f32 %v1959, %v2151
    %v2190 = vadd.f32 %v1960, %v2156
    %v2191 = vadd.f32 %v1961, %v2161
    %v2192 = vadd.f32 %v1962, %v2166
    %v2193 = vadd.f32 %v1963, %v2171
    %v2194 = vadd.f32 %v1964, %v2176
    %v2195 = vld [vmem:[#allocation2 + $0xc] sm:$0xff]
    %v2196 = vld [vmem:[#allocation2 + $0x14] sm:$0xff]
    %v2197 = vld [vmem:[#allocation2 + $0x1c] sm:$0xff]
    %v2198 = vld [vmem:[#allocation2 + $0x24] sm:$0xff]
    %v2199 = vld [vmem:[#allocation2 + $0x2c] sm:$0xff]
    %v2200 = vld [vmem:[#allocation2 + $0x34] sm:$0xff]
    %v2201 = vld [vmem:[#allocation2 + $0x3c] sm:$0xff]
    %v2202 = vld [vmem:[#allocation2 + $0x44] sm:$0xff]
    %v2203 = vld [vmem:[#allocation2 + $0x5c] sm:$0xff]
    %v2204 = vld [vmem:[#allocation2 + $0x64] sm:$0xff]
    %v2205 = vld [vmem:[#allocation2 + $0x6c] sm:$0xff]
    %v2206 = vld [vmem:[#allocation2 + $0x74] sm:$0xff]
    %v2207 = vld [vmem:[#allocation2 + $0x7c] sm:$0xff]
    %v2208 = vld [vmem:[#allocation2 + $0x84] sm:$0xff]
    %v2209 = vld [vmem:[#allocation2 + $0x8c] sm:$0xff]
    %v2210 = vld [vmem:[#allocation2 + $0x94] sm:$0xff]
    %s2211 = scalar_lea.vmem [#allocation5], 128
    %v2212 = vld [vmem:[%s2211] sm:$0xff]
    %v2213 = vld [vmem:[%s2211 + $0x8] sm:$0xff]
    %v2214 = vld [vmem:[%s2211 + $0x10] sm:$0xff]
    %v2215 = vld [vmem:[%s2211 + $0x18] sm:$0xff]
    %v2217 = vsel %vm45, %v2195, 0
    %v2220 = vsel %vm45, %v2196, 0
    %v2223 = vsel %vm45, %v2197, 0
    %v2226 = vsel %vm45, %v2198, 0
    %v2229 = vsel %vm45, %v2199, 0
    %v2232 = vsel %vm45, %v2200, 0
    %v2235 = vsel %vm45, %v2201, 0
    %v2238 = vsel %vm45, %v2202, 0
    %v2241 = vsel %vm45, %v2203, 0
    %v2244 = vsel %vm45, %v2204, 0
    %v2247 = vsel %vm45, %v2205, 0
    %v2250 = vsel %vm45, %v2206, 0
    %v2253 = vsel %vm45, %v2207, 0
    %v2256 = vsel %vm45, %v2208, 0
    %v2259 = vsel %vm45, %v2209, 0
    %v2262 = vsel %vm45, %v2210, 0
    %2264 = vmatprep.subr.mxu0 0.0
    %2265 = vmatpush1.msra.mxu0 %v2212
    %2266 = vmatprep.subr.mxu0 0.0
    %2267 = vmatpush1.msra.mxu0 %v2213
    %2268 = vmatprep.subr.mxu0 0.0
    %2269 = vmatpush1.msra.mxu0 %v2214
    %2270 = vmatprep.subr.mxu0 0.0
    %2271 = vmatpush1.msra.mxu0 %v2215
    %2272 = vmatprep.subr.mxu0 0.0
    %2273 = vmatpush1.msra.mxu0 0.0
    %2274 = vmatprep.subr.mxu0 0.0
    %2275 = vmatpush1.msra.mxu0 0.0
    %2276 = vmatprep.subr.mxu0 0.0
    %2277 = vmatpush1.msra.mxu0 0.0
    %2278 = vmatprep.subr.mxu0 0.0
    %2279 = vmatpush1.msra.mxu0 0.0
    %2280 = vmatprep.subr.mxu0 0.0
    %2281 = vmatpush1.msra.mxu0 0.0
    %2282 = vmatprep.subr.mxu0 0.0
    %2283 = vmatpush1.msra.mxu0 0.0
    %2284 = vmatprep.subr.mxu0 0.0
    %2285 = vmatpush1.msra.mxu0 0.0
    %2286 = vmatprep.subr.mxu0 0.0
    %2287 = vmatpush1.msra.mxu0 0.0
    %2288 = vmatprep.subr.mxu0 0.0
    %2289 = vmatpush1.msra.mxu0 0.0
    %2290 = vmatprep.subr.mxu0 0.0
    %2291 = vmatpush1.msra.mxu0 0.0
    %2292 = vmatprep.subr.mxu0 0.0
    %2293 = vmatpush1.msra.mxu0 0.0
    %2294 = vmatprep.subr.mxu0 0.0
    %2295 = vmatpush1.msra.mxu0 0.0
    %2296 = vmatprep.subr.mxu0 0.0
    %2297 = vmatpush1.msra.mxu0 0.0
    %2298 = vmatprep.subr.mxu0 0.0
    %2299 = vmatpush1.msra.mxu0 0.0
    %2300 = vmatprep.subr.mxu0 0.0
    %2301 = vmatpush1.msra.mxu0 0.0
    %2302 = vmatprep.subr.mxu0 0.0
    %2303 = vmatpush1.msra.mxu0 0.0
    %2304 = vmatprep.subr.mxu0 0.0
    %2305 = vmatpush1.msra.mxu0 0.0
    %2306 = vmatprep.subr.mxu0 0.0
    %2307 = vmatpush1.msra.mxu0 0.0
    %2308 = vmatprep.subr.mxu0 0.0
    %2309 = vmatpush1.msra.mxu0 0.0
    %2310 = vmatprep.subr.mxu0 0.0
    %2311 = vmatpush1.msra.mxu0 0.0
    %2312 = vmatprep.subr.mxu0 0.0
    %2313 = vmatpush1.msra.mxu0 0.0
    %2314 = vmatprep.subr.mxu0 0.0
    %2315 = vmatpush1.msra.mxu0 0.0
    %2316 = vmatprep.subr.mxu0 0.0
    %2317 = vmatpush1.msra.mxu0 0.0
    %2318 = vmatprep.subr.mxu0 0.0
    %2319 = vmatpush1.msra.mxu0 0.0
    %2320 = vmatprep.subr.mxu0 0.0
    %2321 = vmatpush1.msra.mxu0 0.0
    %2322 = vmatprep.subr.mxu0 0.0
    %2323 = vmatpush1.msra.mxu0 0.0
    %2324 = vmatprep.subr.mxu0 0.0
    %2325 = vmatpush1.msra.mxu0 0.0
    %2326 = vmatprep.subr.mxu0 0.0
    %2327 = vmatpush1.msra.mxu0 0.0
    %2328 = vmatprep.mubr.f32.mxu0 0.0
    %2329 = vmatmul.mubr.f32.gmra.mrb[0].mxu0 %v2217
    %v2330 = vpop.f32.mrb[0].mxu0
    %v2331 = vadd.f32 0.0, %v2330
    %v2332 = vpop.f32.mrb[0].mxu0
    %2333 = vmatprep.mubr.f32.mxu0 0.0
    %2334 = vmatmul.mubr.f32.gmra.mrb[0].mxu0 %v2220
    %v2335 = vpop.f32.mrb[0].mxu0
    %v2336 = vadd.f32 0.0, %v2335
    %v2337 = vpop.f32.mrb[0].mxu0
    %2338 = vmatprep.mubr.f32.mxu0 0.0
    %2339 = vmatmul.mubr.f32.gmra.mrb[0].mxu0 %v2223
    %v2340 = vpop.f32.mrb[0].mxu0
    %v2341 = vadd.f32 0.0, %v2340
    %v2342 = vpop.f32.mrb[0].mxu0
    %2343 = vmatprep.mubr.f32.mxu0 0.0
    %2344 = vmatmul.mubr.f32.gmra.mrb[0].mxu0 %v2226
    %v2345 = vpop.f32.mrb[0].mxu0
    %v2346 = vadd.f32 0.0, %v2345
    %v2347 = vpop.f32.mrb[0].mxu0
    %2348 = vmatprep.mubr.f32.mxu0 0.0
    %2349 = vmatmul.mubr.f32.gmra.mrb[0].mxu0 %v2229
    %v2350 = vpop.f32.mrb[0].mxu0
    %v2351 = vadd.f32 0.0, %v2350
    %v2352 = vpop.f32.mrb[0].mxu0
    %2353 = vmatprep.mubr.f32.mxu0 0.0
    %2354 = vmatmul.mubr.f32.gmra.mrb[0].mxu0 %v2232
    %v2355 = vpop.f32.mrb[0].mxu0
    %v2356 = vadd.f32 0.0, %v2355
    %v2357 = vpop.f32.mrb[0].mxu0
    %2358 = vmatprep.mubr.f32.mxu0 0.0
    %2359 = vmatmul.mubr.f32.gmra.mrb[0].mxu0 %v2235
    %v2360 = vpop.f32.mrb[0].mxu0
    %v2361 = vadd.f32 0.0, %v2360
    %v2362 = vpop.f32.mrb[0].mxu0
    %2363 = vmatprep.mubr.f32.mxu0 0.0
    %2364 = vmatmul.mubr.f32.gmra.mrb[0].mxu0 %v2238
    %v2365 = vpop.f32.mrb[0].mxu0
    %v2366 = vadd.f32 0.0, %v2365
    %v2367 = vpop.f32.mrb[0].mxu0
    %2368 = vmatprep.mubr.f32.mxu0 0.0
    %2369 = vmatmul.mubr.f32.gmra.mrb[0].mxu0 %v2241
    %v2370 = vpop.f32.mrb[0].mxu0
    %v2371 = vadd.f32 0.0, %v2370
    %v2372 = vpop.f32.mrb[0].mxu0
    %2373 = vmatprep.mubr.f32.mxu0 0.0
    %2374 = vmatmul.mubr.f32.gmra.mrb[0].mxu0 %v2244
    %v2375 = vpop.f32.mrb[0].mxu0
    %v2376 = vadd.f32 0.0, %v2375
    %v2377 = vpop.f32.mrb[0].mxu0
    %2378 = vmatprep.mubr.f32.mxu0 0.0
    %2379 = vmatmul.mubr.f32.gmra.mrb[0].mxu0 %v2247
    %v2380 = vpop.f32.mrb[0].mxu0
    %v2381 = vadd.f32 0.0, %v2380
    %v2382 = vpop.f32.mrb[0].mxu0
    %2383 = vmatprep.mubr.f32.mxu0 0.0
    %2384 = vmatmul.mubr.f32.gmra.mrb[0].mxu0 %v2250
    %v2385 = vpop.f32.mrb[0].mxu0
    %v2386 = vadd.f32 0.0, %v2385
    %v2387 = vpop.f32.mrb[0].mxu0
    %2388 = vmatprep.mubr.f32.mxu0 0.0
    %2389 = vmatmul.mubr.f32.gmra.mrb[0].mxu0 %v2253
    %v2390 = vpop.f32.mrb[0].mxu0
    %v2391 = vadd.f32 0.0, %v2390
    %v2392 = vpop.f32.mrb[0].mxu0
    %2393 = vmatprep.mubr.f32.mxu0 0.0
    %2394 = vmatmul.mubr.f32.gmra.mrb[0].mxu0 %v2256
    %v2395 = vpop.f32.mrb[0].mxu0
    %v2396 = vadd.f32 0.0, %v2395
    %v2397 = vpop.f32.mrb[0].mxu0
    %2398 = vmatprep.mubr.f32.mxu0 0.0
    %2399 = vmatmul.mubr.f32.gmra.mrb[0].mxu0 %v2259
    %v2400 = vpop.f32.mrb[0].mxu0
    %v2401 = vadd.f32 0.0, %v2400
    %v2402 = vpop.f32.mrb[0].mxu0
    %2403 = vmatprep.mubr.f32.mxu0 0.0
    %2404 = vmatmul.mubr.f32.gmra.mrb[0].mxu0 %v2262
    %v2405 = vpop.f32.mrb[0].mxu0
    %v2406 = vadd.f32 0.0, %v2405
    %v2407 = vpop.f32.mrb[0].mxu0
    %2408 = vdwg.mxu0
    %v2409 = vadd.f32 %v2179, %v2331
    %v2410 = vadd.f32 %v2180, %v2336
    %v2411 = vadd.f32 %v2181, %v2341
    %v2412 = vadd.f32 %v2182, %v2346
    %v2413 = vadd.f32 %v2183, %v2351
    %v2414 = vadd.f32 %v2184, %v2356
    %v2415 = vadd.f32 %v2185, %v2361
    %v2416 = vadd.f32 %v2186, %v2366
    %v2417 = vadd.f32 %v2187, %v2371
    %v2418 = vadd.f32 %v2188, %v2376
    %v2419 = vadd.f32 %v2189, %v2381
    %v2420 = vadd.f32 %v2190, %v2386
    %v2421 = vadd.f32 %v2191, %v2391
    %v2422 = vadd.f32 %v2192, %v2396
    %v2423 = vadd.f32 %v2193, %v2401
    %v2424 = vadd.f32 %v2194, %v2406
    %v2425 = vlaneseq
    %v2426 = vshrl.u32 %v2425, 7
    %v2427 = vsub.s32 3, %v2426
    %v2428 = vrot.slane %v66, %v2427
    %v2429 = vadd.f32 %v2409, %v2428
    %v2430 = vadd.f32 %v2410, %v2428
    %v2431 = vadd.f32 %v2411, %v2428
    %v2432 = vadd.f32 %v2412, %v2428
    %v2433 = vadd.f32 %v2413, %v2428
    %v2434 = vadd.f32 %v2414, %v2428
    %v2435 = vadd.f32 %v2415, %v2428
    %v2436 = vadd.f32 %v2416, %v2428
    %v2437 = vadd.f32 %v2417, %v2428
    %v2438 = vadd.f32 %v2418, %v2428
    %v2439 = vadd.f32 %v2419, %v2428
    %v2440 = vadd.f32 %v2420, %v2428
    %v2441 = vadd.f32 %v2421, %v2428
    %v2442 = vadd.f32 %v2422, %v2428
    %v2443 = vadd.f32 %v2423, %v2428
    %v2444 = vadd.f32 %v2424, %v2428
    %v2445 = vadd.f32 %v50, %v2429
    %v2446 = vadd.f32 %v51, %v2430
    %v2447 = vadd.f32 %v52, %v2431
    %v2448 = vadd.f32 %v53, %v2432
    %v2449 = vadd.f32 %v54, %v2433
    %v2450 = vadd.f32 %v55, %v2434
    %v2451 = vadd.f32 %v56, %v2435
    %v2452 = vadd.f32 %v57, %v2436
    %v2453 = vadd.f32 %v58, %v2437
    %v2454 = vadd.f32 %v59, %v2438
    %v2455 = vadd.f32 %v60, %v2439
    %v2456 = vadd.f32 %v61, %v2440
    %v2457 = vadd.f32 %v62, %v2441
    %v2458 = vadd.f32 %v63, %v2442
    %v2459 = vadd.f32 %v64, %v2443
    %v2460 = vadd.f32 %v65, %v2444
    %s2461 = scalar_lea.vmem %s1, 4
    %v2462 = vld [vmem:[%s2461] sm:$0xf]
    %v2463 = vlaneseq
    %v2464 = vshrl.u32 %v2463, 7
    %v2465 = vsub.s32 0, %v2464
    %v2466 = vrot.slane %v2462, %v2465
    %v2467 = vmul.f32 %v2445, %v2466
    %v2468 = vmul.f32 %v2446, %v2466
    %v2469 = vmul.f32 %v2447, %v2466
    %v2470 = vmul.f32 %v2448, %v2466
    %v2471 = vmul.f32 %v2449, %v2466
    %v2472 = vmul.f32 %v2450, %v2466
    %v2473 = vmul.f32 %v2451, %v2466
    %v2474 = vmul.f32 %v2452, %v2466
    %v2475 = vmul.f32 %v2453, %v2466
    %v2476 = vmul.f32 %v2454, %v2466
    %v2477 = vmul.f32 %v2455, %v2466
    %v2478 = vmul.f32 %v2456, %v2466
    %v2479 = vmul.f32 %v2457, %v2466
    %v2480 = vmul.f32 %v2458, %v2466
    %v2481 = vmul.f32 %v2459, %v2466
    %v2482 = vmul.f32 %v2460, %v2466
    %v2483 = vlaneseq
    %v2484 = vshrl.u32 %v2483, 7
    %v2485 = vsub.s32 1, %v2484
    %v2486 = vrot.slane %v2462, %v2485
    %v2487 = vadd.f32 %v2467, %v2486
    %v2488 = vadd.f32 %v2468, %v2486
    %v2489 = vadd.f32 %v2469, %v2486
    %v2490 = vadd.f32 %v2470, %v2486
    %v2491 = vadd.f32 %v2471, %v2486
    %v2492 = vadd.f32 %v2472, %v2486
    %v2493 = vadd.f32 %v2473, %v2486
    %v2494 = vadd.f32 %v2474, %v2486
    %v2495 = vadd.f32 %v2475, %v2486
    %v2496 = vadd.f32 %v2476, %v2486
    %v2497 = vadd.f32 %v2477, %v2486
    %v2498 = vadd.f32 %v2478, %v2486
    %v2499 = vadd.f32 %v2479, %v2486
    %v2500 = vadd.f32 %v2480, %v2486
    %v2501 = vadd.f32 %v2481, %v2486
    %v2502 = vadd.f32 %v2482, %v2486
    %v2503 = vmax.f32 %v2487, 0.0
    %v2504 = vmax.f32 %v2488, 0.0
    %v2505 = vmax.f32 %v2489, 0.0
    %v2506 = vmax.f32 %v2490, 0.0
    %v2507 = vmax.f32 %v2491, 0.0
    %v2508 = vmax.f32 %v2492, 0.0
    %v2509 = vmax.f32 %v2493, 0.0
    %v2510 = vmax.f32 %v2494, 0.0
    %v2511 = vmax.f32 %v2495, 0.0
    %v2512 = vmax.f32 %v2496, 0.0
    %v2513 = vmax.f32 %v2497, 0.0
    %v2514 = vmax.f32 %v2498, 0.0
    %v2515 = vmax.f32 %v2499, 0.0
    %v2516 = vmax.f32 %v2500, 0.0
    %v2517 = vmax.f32 %v2501, 0.0
    %v2518 = vmax.f32 %v2502, 0.0
    %2519 = vst.msk [vmem:[#allocation2 + $0x8] sm:$0xff] %vm45, %v2503
    %2520 = vst.msk [vmem:[#allocation2 + $0x10] sm:$0xff] %vm45, %v2504
    %2521 = vst.msk [vmem:[#allocation2 + $0x18] sm:$0xff] %vm45, %v2505
    %2522 = vst.msk [vmem:[#allocation2 + $0x20] sm:$0xff] %vm45, %v2506
    %2523 = vst.msk [vmem:[#allocation2 + $0x28] sm:$0xff] %vm45, %v2507
    %2524 = vst.msk [vmem:[#allocation2 + $0x30] sm:$0xff] %vm45, %v2508
    %2525 = vst.msk [vmem:[#allocation2 + $0x38] sm:$0xff] %vm45, %v2509
    %2526 = vst.msk [vmem:[#allocation2 + $0x40] sm:$0xff] %vm45, %v2510
    %2527 = vst.msk [vmem:[#allocation2 + $0x58] sm:$0xff] %vm45, %v2511
    %2528 = vst.msk [vmem:[#allocation2 + $0x60] sm:$0xff] %vm45, %v2512
    %2529 = vst.msk [vmem:[#allocation2 + $0x68] sm:$0xff] %vm45, %v2513
    %2530 = vst.msk [vmem:[#allocation2 + $0x70] sm:$0xff] %vm45, %v2514
    %2531 = vst.msk [vmem:[#allocation2 + $0x78] sm:$0xff] %vm45, %v2515
    %2532 = vst.msk [vmem:[#allocation2 + $0x80] sm:$0xff] %vm45, %v2516
    %2533 = vst.msk [vmem:[#allocation2 + $0x88] sm:$0xff] %vm45, %v2517
    %2534 = vst.msk [vmem:[#allocation2 + $0x90] sm:$0xff] %vm45, %v2518
    %v2535 = vld [vmem:[#allocation2 + $0x4] sm:$0xff]
    %v2536 = vld [vmem:[#allocation2 + $0xc] sm:$0xff]
    %v2537 = vld [vmem:[#allocation2 + $0x14] sm:$0xff]
    %v2538 = vld [vmem:[#allocation2 + $0x1c] sm:$0xff]
    %v2539 = vld [vmem:[#allocation2 + $0x24] sm:$0xff]
    %v2540 = vld [vmem:[#allocation2 + $0x2c] sm:$0xff]
    %v2541 = vld [vmem:[#allocation2 + $0x34] sm:$0xff]
    %v2542 = vld [vmem:[#allocation2 + $0x3c] sm:$0xff]
    %v2543 = vld [vmem:[#allocation2 + $0x54] sm:$0xff]
    %v2544 = vld [vmem:[#allocation2 + $0x5c] sm:$0xff]
    %v2545 = vld [vmem:[#allocation2 + $0x64] sm:$0xff]
    %v2546 = vld [vmem:[#allocation2 + $0x6c] sm:$0xff]
    %v2547 = vld [vmem:[#allocation2 + $0x74] sm:$0xff]
    %v2548 = vld [vmem:[#allocation2 + $0x7c] sm:$0xff]
    %v2549 = vld [vmem:[#allocation2 + $0x84] sm:$0xff]
    %v2550 = vld [vmem:[#allocation2 + $0x8c] sm:$0xff]
    %s2551 = scalar_lea.vmem [#allocation3], 160
    %v2552 = vld [vmem:[%s2551] sm:$0xff]
    %v2553 = vld [vmem:[%s2551 + $0x8] sm:$0xff]
    %v2554 = vld [vmem:[%s2551 + $0x10] sm:$0xff]
    %v2555 = vld [vmem:[%s2551 + $0x18] sm:$0xff]
    %v2556 = vld [vmem:[#allocation2 + $0x6] sm:$0xff]
    %v2557 = vld [vmem:[#allocation2 + $0xe] sm:$0xff]
    %v2558 = vld [vmem:[#allocation2 + $0x16] sm:$0xff]
    %v2559 = vld [vmem:[#allocation2 + $0x1e] sm:$0xff]
    %v2560 = vld [vmem:[#allocation2 + $0x26] sm:$0xff]
    %v2561 = vld [vmem:[#allocation2 + $0x2e] sm:$0xff]
    %v2562 = vld [vmem:[#allocation2 + $0x36] sm:$0xff]
    %v2563 = vld [vmem:[#allocation2 + $0x3e] sm:$0xff]
    %v2564 = vld [vmem:[#allocation2 + $0x56] sm:$0xff]
    %v2565 = vld [vmem:[#allocation2 + $0x5e] sm:$0xff]
    %v2566 = vld [vmem:[#allocation2 + $0x66] sm:$0xff]
    %v2567 = vld [vmem:[#allocation2 + $0x6e] sm:$0xff]
    %v2568 = vld [vmem:[#allocation2 + $0x76] sm:$0xff]
    %v2569 = vld [vmem:[#allocation2 + $0x7e] sm:$0xff]
    %v2570 = vld [vmem:[#allocation2 + $0x86] sm:$0xff]
    %v2571 = vld [vmem:[#allocation2 + $0x8e] sm:$0xff]
    %s2572 = scalar_lea.vmem [#allocation3], 192
    %v2573 = vld [vmem:[%s2572] sm:$0xff]
    %v2574 = vld [vmem:[%s2572 + $0x8] sm:$0xff]
    %v2575 = vld [vmem:[%s2572 + $0x10] sm:$0xff]
    %v2576 = vld [vmem:[%s2572 + $0x18] sm:$0xff]
    %v2578 = vsel %vm45, %v2556, 0
    %v2581 = vsel %vm45, %v2557, 0
    %v2584 = vsel %vm45, %v2558, 0
    %v2587 = vsel %vm45, %v2559, 0
    %v2590 = vsel %vm45, %v2560, 0
    %v2593 = vsel %vm45, %v2561, 0
    %v2596 = vsel %vm45, %v2562, 0
    %v2599 = vsel %vm45, %v2563, 0
    %v2602 = vsel %vm45, %v2564, 0
    %v2605 = vsel %vm45, %v2565, 0
    %v2608 = vsel %vm45, %v2566, 0
    %v2611 = vsel %vm45, %v2567, 0
    %v2614 = vsel %vm45, %v2568, 0
    %v2617 = vsel %vm45, %v2569, 0
    %v2620 = vsel %vm45, %v2570, 0
    %v2623 = vsel %vm45, %v2571, 0
    %2625 = vmatprep.subr.mxu0 0.0
    %2626 = vmatpush1.msra.mxu0 %v2573
    %2627 = vmatprep.subr.mxu0 0.0
    %2628 = vmatpush1.msra.mxu0 %v2574
    %2629 = vmatprep.subr.mxu0 0.0
    %2630 = vmatpush1.msra.mxu0 %v2575
    %2631 = vmatprep.subr.mxu0 0.0
    %2632 = vmatpush1.msra.mxu0 %v2576
    %2633 = vmatprep.subr.mxu0 0.0
    %2634 = vmatpush1.msra.mxu0 0.0
    %2635 = vmatprep.subr.mxu0 0.0
    %2636 = vmatpush1.msra.mxu0 0.0
    %2637 = vmatprep.subr.mxu0 0.0
    %2638 = vmatpush1.msra.mxu0 0.0
    %2639 = vmatprep.subr.mxu0 0.0
    %2640 = vmatpush1.msra.mxu0 0.0
    %2641 = vmatprep.subr.mxu0 0.0
    %2642 = vmatpush1.msra.mxu0 0.0
    %2643 = vmatprep.subr.mxu0 0.0
    %2644 = vmatpush1.msra.mxu0 0.0
    %2645 = vmatprep.subr.mxu0 0.0
    %2646 = vmatpush1.msra.mxu0 0.0
    %2647 = vmatprep.subr.mxu0 0.0
    %2648 = vmatpush1.msra.mxu0 0.0
    %2649 = vmatprep.subr.mxu0 0.0
    %2650 = vmatpush1.msra.mxu0 0.0
    %2651 = vmatprep.subr.mxu0 0.0
    %2652 = vmatpush1.msra.mxu0 0.0
    %2653 = vmatprep.subr.mxu0 0.0
    %2654 = vmatpush1.msra.mxu0 0.0
    %2655 = vmatprep.subr.mxu0 0.0
    %2656 = vmatpush1.msra.mxu0 0.0
    %2657 = vmatprep.subr.mxu0 0.0
    %2658 = vmatpush1.msra.mxu0 0.0
    %2659 = vmatprep.subr.mxu0 0.0
    %2660 = vmatpush1.msra.mxu0 0.0
    %2661 = vmatprep.subr.mxu0 0.0
    %2662 = vmatpush1.msra.mxu0 0.0
    %2663 = vmatprep.subr.mxu0 0.0
    %2664 = vmatpush1.msra.mxu0 0.0
    %2665 = vmatprep.subr.mxu0 0.0
    %2666 = vmatpush1.msra.mxu0 0.0
    %2667 = vmatprep.subr.mxu0 0.0
    %2668 = vmatpush1.msra.mxu0 0.0
    %2669 = vmatprep.subr.mxu0 0.0
    %2670 = vmatpush1.msra.mxu0 0.0
    %2671 = vmatprep.subr.mxu0 0.0
    %2672 = vmatpush1.msra.mxu0 0.0
    %2673 = vmatprep.subr.mxu0 0.0
    %2674 = vmatpush1.msra.mxu0 0.0
    %2675 = vmatprep.subr.mxu0 0.0
    %2676 = vmatpush1.msra.mxu0 0.0
    %2677 = vmatprep.subr.mxu0 0.0
    %2678 = vmatpush1.msra.mxu0 0.0
    %2679 = vmatprep.subr.mxu0 0.0
    %2680 = vmatpush1.msra.mxu0 0.0
    %2681 = vmatprep.subr.mxu0 0.0
    %2682 = vmatpush1.msra.mxu0 0.0
    %2683 = vmatprep.subr.mxu0 0.0
    %2684 = vmatpush1.msra.mxu0 0.0
    %2685 = vmatprep.subr.mxu0 0.0
    %2686 = vmatpush1.msra.mxu0 0.0
    %2687 = vmatprep.subr.mxu0 0.0
    %2688 = vmatpush1.msra.mxu0 0.0
    %2689 = vmatprep.mubr.f32.mxu0 0.0
    %2690 = vmatmul.mubr.f32.gmra.mrb[0].mxu0 %v2578
    %v2691 = vpop.f32.mrb[0].mxu0
    %v2692 = vadd.f32 0.0, %v2691
    %v2693 = vpop.f32.mrb[0].mxu0
    %2694 = vmatprep.mubr.f32.mxu0 0.0
    %2695 = vmatmul.mubr.f32.gmra.mrb[0].mxu0 %v2581
    %v2696 = vpop.f32.mrb[0].mxu0
    %v2697 = vadd.f32 0.0, %v2696
    %v2698 = vpop.f32.mrb[0].mxu0
    %2699 = vmatprep.mubr.f32.mxu0 0.0
    %2700 = vmatmul.mubr.f32.gmra.mrb[0].mxu0 %v2584
    %v2701 = vpop.f32.mrb[0].mxu0
    %v2702 = vadd.f32 0.0, %v2701
    %v2703 = vpop.f32.mrb[0].mxu0
    %2704 = vmatprep.mubr.f32.mxu0 0.0
    %2705 = vmatmul.mubr.f32.gmra.mrb[0].mxu0 %v2587
    %v2706 = vpop.f32.mrb[0].mxu0
    %v2707 = vadd.f32 0.0, %v2706
    %v2708 = vpop.f32.mrb[0].mxu0
    %2709 = vmatprep.mubr.f32.mxu0 0.0
    %2710 = vmatmul.mubr.f32.gmra.mrb[0].mxu0 %v2590
    %v2711 = vpop.f32.mrb[0].mxu0
    %v2712 = vadd.f32 0.0, %v2711
    %v2713 = vpop.f32.mrb[0].mxu0
    %2714 = vmatprep.mubr.f32.mxu0 0.0
    %2715 = vmatmul.mubr.f32.gmra.mrb[0].mxu0 %v2593
    %v2716 = vpop.f32.mrb[0].mxu0
    %v2717 = vadd.f32 0.0, %v2716
    %v2718 = vpop.f32.mrb[0].mxu0
    %2719 = vmatprep.mubr.f32.mxu0 0.0
    %2720 = vmatmul.mubr.f32.gmra.mrb[0].mxu0 %v2596
    %v2721 = vpop.f32.mrb[0].mxu0
    %v2722 = vadd.f32 0.0, %v2721
    %v2723 = vpop.f32.mrb[0].mxu0
    %2724 = vmatprep.mubr.f32.mxu0 0.0
    %2725 = vmatmul.mubr.f32.gmra.mrb[0].mxu0 %v2599
    %v2726 = vpop.f32.mrb[0].mxu0
    %v2727 = vadd.f32 0.0, %v2726
    %v2728 = vpop.f32.mrb[0].mxu0
    %2729 = vmatprep.mubr.f32.mxu0 0.0
    %2730 = vmatmul.mubr.f32.gmra.mrb[0].mxu0 %v2602
    %v2731 = vpop.f32.mrb[0].mxu0
    %v2732 = vadd.f32 0.0, %v2731
    %v2733 = vpop.f32.mrb[0].mxu0
    %2734 = vmatprep.mubr.f32.mxu0 0.0
    %2735 = vmatmul.mubr.f32.gmra.mrb[0].mxu0 %v2605
    %v2736 = vpop.f32.mrb[0].mxu0
    %v2737 = vadd.f32 0.0, %v2736
    %v2738 = vpop.f32.mrb[0].mxu0
    %2739 = vmatprep.mubr.f32.mxu0 0.0
    %2740 = vmatmul.mubr.f32.gmra.mrb[0].mxu0 %v2608
    %v2741 = vpop.f32.mrb[0].mxu0
    %v2742 = vadd.f32 0.0, %v2741
    %v2743 = vpop.f32.mrb[0].mxu0
    %2744 = vmatprep.mubr.f32.mxu0 0.0
    %2745 = vmatmul.mubr.f32.gmra.mrb[0].mxu0 %v2611
    %v2746 = vpop.f32.mrb[0].mxu0
    %v2747 = vadd.f32 0.0, %v2746
    %v2748 = vpop.f32.mrb[0].mxu0
    %2749 = vmatprep.mubr.f32.mxu0 0.0
    %2750 = vmatmul.mubr.f32.gmra.mrb[0].mxu0 %v2614
    %v2751 = vpop.f32.mrb[0].mxu0
    %v2752 = vadd.f32 0.0, %v2751
    %v2753 = vpop.f32.mrb[0].mxu0
    %2754 = vmatprep.mubr.f32.mxu0 0.0
    %2755 = vmatmul.mubr.f32.gmra.mrb[0].mxu0 %v2617
    %v2756 = vpop.f32.mrb[0].mxu0
    %v2757 = vadd.f32 0.0, %v2756
    %v2758 = vpop.f32.mrb[0].mxu0
    %2759 = vmatprep.mubr.f32.mxu0 0.0
    %2760 = vmatmul.mubr.f32.gmra.mrb[0].mxu0 %v2620
    %v2761 = vpop.f32.mrb[0].mxu0
    %v2762 = vadd.f32 0.0, %v2761
    %v2763 = vpop.f32.mrb[0].mxu0
    %2764 = vmatprep.mubr.f32.mxu0 0.0
    %2765 = vmatmul.mubr.f32.gmra.mrb[0].mxu0 %v2623
    %v2766 = vpop.f32.mrb[0].mxu0
    %v2767 = vadd.f32 0.0, %v2766
    %v2768 = vpop.f32.mrb[0].mxu0
    %2769 = vdwg.mxu0
    %v2771 = vsel %vm45, %v2535, 0
    %v2774 = vsel %vm45, %v2536, 0
    %v2777 = vsel %vm45, %v2537, 0
    %v2780 = vsel %vm45, %v2538, 0
    %v2783 = vsel %vm45, %v2539, 0
    %v2786 = vsel %vm45, %v2540, 0
    %v2789 = vsel %vm45, %v2541, 0
    %v2792 = vsel %vm45, %v2542, 0
    %v2795 = vsel %vm45, %v2543, 0
    %v2798 = vsel %vm45, %v2544, 0
    %v2801 = vsel %vm45, %v2545, 0
    %v2804 = vsel %vm45, %v2546, 0
    %v2807 = vsel %vm45, %v2547, 0
    %v2810 = vsel %vm45, %v2548, 0
    %v2813 = vsel %vm45, %v2549, 0
    %v2816 = vsel %vm45, %v2550, 0
    %2818 = vmatprep.subr.mxu0 0.0
    %2819 = vmatpush1.msra.mxu0 %v2552
    %2820 = vmatprep.subr.mxu0 0.0
    %2821 = vmatpush1.msra.mxu0 %v2553
    %2822 = vmatprep.subr.mxu0 0.0
    %2823 = vmatpush1.msra.mxu0 %v2554
    %2824 = vmatprep.subr.mxu0 0.0
    %2825 = vmatpush1.msra.mxu0 %v2555
    %2826 = vmatprep.subr.mxu0 0.0
    %2827 = vmatpush1.msra.mxu0 0.0
    %2828 = vmatprep.subr.mxu0 0.0
    %2829 = vmatpush1.msra.mxu0 0.0
    %2830 = vmatprep.subr.mxu0 0.0
    %2831 = vmatpush1.msra.mxu0 0.0
    %2832 = vmatprep.subr.mxu0 0.0
    %2833 = vmatpush1.msra.mxu0 0.0
    %2834 = vmatprep.subr.mxu0 0.0
    %2835 = vmatpush1.msra.mxu0 0.0
    %2836 = vmatprep.subr.mxu0 0.0
    %2837 = vmatpush1.msra.mxu0 0.0
    %2838 = vmatprep.subr.mxu0 0.0
    %2839 = vmatpush1.msra.mxu0 0.0
    %2840 = vmatprep.subr.mxu0 0.0
    %2841 = vmatpush1.msra.mxu0 0.0
    %2842 = vmatprep.subr.mxu0 0.0
    %2843 = vmatpush1.msra.mxu0 0.0
    %2844 = vmatprep.subr.mxu0 0.0
    %2845 = vmatpush1.msra.mxu0 0.0
    %2846 = vmatprep.subr.mxu0 0.0
    %2847 = vmatpush1.msra.mxu0 0.0
    %2848 = vmatprep.subr.mxu0 0.0
    %2849 = vmatpush1.msra.mxu0 0.0
    %2850 = vmatprep.subr.mxu0 0.0
    %2851 = vmatpush1.msra.mxu0 0.0
    %2852 = vmatprep.subr.mxu0 0.0
    %2853 = vmatpush1.msra.mxu0 0.0
    %2854 = vmatprep.subr.mxu0 0.0
    %2855 = vmatpush1.msra.mxu0 0.0
    %2856 = vmatprep.subr.mxu0 0.0
    %2857 = vmatpush1.msra.mxu0 0.0
    %2858 = vmatprep.subr.mxu0 0.0
    %2859 = vmatpush1.msra.mxu0 0.0
    %2860 = vmatprep.subr.mxu0 0.0
    %2861 = vmatpush1.msra.mxu0 0.0
    %2862 = vmatprep.subr.mxu0 0.0
    %2863 = vmatpush1.msra.mxu0 0.0
    %2864 = vmatprep.subr.mxu0 0.0
    %2865 = vmatpush1.msra.mxu0 0.0
    %2866 = vmatprep.subr.mxu0 0.0
    %2867 = vmatpush1.msra.mxu0 0.0
    %2868 = vmatprep.subr.mxu0 0.0
    %2869 = vmatpush1.msra.mxu0 0.0
    %2870 = vmatprep.subr.mxu0 0.0
    %2871 = vmatpush1.msra.mxu0 0.0
    %2872 = vmatprep.subr.mxu0 0.0
    %2873 = vmatpush1.msra.mxu0 0.0
    %2874 = vmatprep.subr.mxu0 0.0
    %2875 = vmatpush1.msra.mxu0 0.0
    %2876 = vmatprep.subr.mxu0 0.0
    %2877 = vmatpush1.msra.mxu0 0.0
    %2878 = vmatprep.subr.mxu0 0.0
    %2879 = vmatpush1.msra.mxu0 0.0
    %2880 = vmatprep.subr.mxu0 0.0
    %2881 = vmatpush1.msra.mxu0 0.0
    %2882 = vmatprep.mubr.f32.mxu0 0.0
    %2883 = vmatmul.mubr.f32.gmra.mrb[0].mxu0 %v2771
    %v2884 = vpop.f32.mrb[0].mxu0
    %v2885 = vadd.f32 %v2692, %v2884
    %v2886 = vpop.f32.mrb[0].mxu0
    %2887 = vmatprep.mubr.f32.mxu0 0.0
    %2888 = vmatmul.mubr.f32.gmra.mrb[0].mxu0 %v2774
    %v2889 = vpop.f32.mrb[0].mxu0
    %v2890 = vadd.f32 %v2697, %v2889
    %v2891 = vpop.f32.mrb[0].mxu0
    %2892 = vmatprep.mubr.f32.mxu0 0.0
    %2893 = vmatmul.mubr.f32.gmra.mrb[0].mxu0 %v2777
    %v2894 = vpop.f32.mrb[0].mxu0
    %v2895 = vadd.f32 %v2702, %v2894
    %v2896 = vpop.f32.mrb[0].mxu0
    %2897 = vmatprep.mubr.f32.mxu0 0.0
    %2898 = vmatmul.mubr.f32.gmra.mrb[0].mxu0 %v2780
    %v2899 = vpop.f32.mrb[0].mxu0
    %v2900 = vadd.f32 %v2707, %v2899
    %v2901 = vpop.f32.mrb[0].mxu0
    %2902 = vmatprep.mubr.f32.mxu0 0.0
    %2903 = vmatmul.mubr.f32.gmra.mrb[0].mxu0 %v2783
    %v2904 = vpop.f32.mrb[0].mxu0
    %v2905 = vadd.f32 %v2712, %v2904
    %v2906 = vpop.f32.mrb[0].mxu0
    %2907 = vmatprep.mubr.f32.mxu0 0.0
    %2908 = vmatmul.mubr.f32.gmra.mrb[0].mxu0 %v2786
    %v2909 = vpop.f32.mrb[0].mxu0
    %v2910 = vadd.f32 %v2717, %v2909
    %v2911 = vpop.f32.mrb[0].mxu0
    %2912 = vmatprep.mubr.f32.mxu0 0.0
    %2913 = vmatmul.mubr.f32.gmra.mrb[0].mxu0 %v2789
    %v2914 = vpop.f32.mrb[0].mxu0
    %v2915 = vadd.f32 %v2722, %v2914
    %v2916 = vpop.f32.mrb[0].mxu0
    %2917 = vmatprep.mubr.f32.mxu0 0.0
    %2918 = vmatmul.mubr.f32.gmra.mrb[0].mxu0 %v2792
    %v2919 = vpop.f32.mrb[0].mxu0
    %v2920 = vadd.f32 %v2727, %v2919
    %v2921 = vpop.f32.mrb[0].mxu0
    %2922 = vmatprep.mubr.f32.mxu0 0.0
    %2923 = vmatmul.mubr.f32.gmra.mrb[0].mxu0 %v2795
    %v2924 = vpop.f32.mrb[0].mxu0
    %v2925 = vadd.f32 %v2732, %v2924
    %v2926 = vpop.f32.mrb[0].mxu0
    %2927 = vmatprep.mubr.f32.mxu0 0.0
    %2928 = vmatmul.mubr.f32.gmra.mrb[0].mxu0 %v2798
    %v2929 = vpop.f32.mrb[0].mxu0
    %v2930 = vadd.f32 %v2737, %v2929
    %v2931 = vpop.f32.mrb[0].mxu0
    %2932 = vmatprep.mubr.f32.mxu0 0.0
    %2933 = vmatmul.mubr.f32.gmra.mrb[0].mxu0 %v2801
    %v2934 = vpop.f32.mrb[0].mxu0
    %v2935 = vadd.f32 %v2742, %v2934
    %v2936 = vpop.f32.mrb[0].mxu0
    %2937 = vmatprep.mubr.f32.mxu0 0.0
    %2938 = vmatmul.mubr.f32.gmra.mrb[0].mxu0 %v2804
    %v2939 = vpop.f32.mrb[0].mxu0
    %v2940 = vadd.f32 %v2747, %v2939
    %v2941 = vpop.f32.mrb[0].mxu0
    %2942 = vmatprep.mubr.f32.mxu0 0.0
    %2943 = vmatmul.mubr.f32.gmra.mrb[0].mxu0 %v2807
    %v2944 = vpop.f32.mrb[0].mxu0
    %v2945 = vadd.f32 %v2752, %v2944
    %v2946 = vpop.f32.mrb[0].mxu0
    %2947 = vmatprep.mubr.f32.mxu0 0.0
    %2948 = vmatmul.mubr.f32.gmra.mrb[0].mxu0 %v2810
    %v2949 = vpop.f32.mrb[0].mxu0
    %v2950 = vadd.f32 %v2757, %v2949
    %v2951 = vpop.f32.mrb[0].mxu0
    %2952 = vmatprep.mubr.f32.mxu0 0.0
    %2953 = vmatmul.mubr.f32.gmra.mrb[0].mxu0 %v2813
    %v2954 = vpop.f32.mrb[0].mxu0
    %v2955 = vadd.f32 %v2762, %v2954
    %v2956 = vpop.f32.mrb[0].mxu0
    %2957 = vmatprep.mubr.f32.mxu0 0.0
    %2958 = vmatmul.mubr.f32.gmra.mrb[0].mxu0 %v2816
    %v2959 = vpop.f32.mrb[0].mxu0
    %v2960 = vadd.f32 %v2767, %v2959
    %v2961 = vpop.f32.mrb[0].mxu0
    %2962 = vdwg.mxu0
    %v2963 = vld [vmem:[#allocation2 + $0x8] sm:$0xff]
    %v2964 = vld [vmem:[#allocation2 + $0x10] sm:$0xff]
    %v2965 = vld [vmem:[#allocation2 + $0x18] sm:$0xff]
    %v2966 = vld [vmem:[#allocation2 + $0x20] sm:$0xff]
    %v2967 = vld [vmem:[#allocation2 + $0x28] sm:$0xff]
    %v2968 = vld [vmem:[#allocation2 + $0x30] sm:$0xff]
    %v2969 = vld [vmem:[#allocation2 + $0x38] sm:$0xff]
    %v2970 = vld [vmem:[#allocation2 + $0x40] sm:$0xff]
    %v2971 = vld [vmem:[#allocation2 + $0x58] sm:$0xff]
    %v2972 = vld [vmem:[#allocation2 + $0x60] sm:$0xff]
    %v2973 = vld [vmem:[#allocation2 + $0x68] sm:$0xff]
    %v2974 = vld [vmem:[#allocation2 + $0x70] sm:$0xff]
    %v2975 = vld [vmem:[#allocation2 + $0x78] sm:$0xff]
    %v2976 = vld [vmem:[#allocation2 + $0x80] sm:$0xff]
    %v2977 = vld [vmem:[#allocation2 + $0x88] sm:$0xff]
    %v2978 = vld [vmem:[#allocation2 + $0x90] sm:$0xff]
    %s2979 = scalar_lea.vmem [#allocation3], 224
    %v2980 = vld [vmem:[%s2979] sm:$0xff]
    %v2981 = vld [vmem:[%s2979 + $0x8] sm:$0xff]
    %v2982 = vld [vmem:[%s2979 + $0x10] sm:$0xff]
    %v2983 = vld [vmem:[%s2979 + $0x18] sm:$0xff]
    %v2985 = vsel %vm45, %v2963, 0
    %v2988 = vsel %vm45, %v2964, 0
    %v2991 = vsel %vm45, %v2965, 0
    %v2994 = vsel %vm45, %v2966, 0
    %v2997 = vsel %vm45, %v2967, 0
    %v3000 = vsel %vm45, %v2968, 0
    %v3003 = vsel %vm45, %v2969, 0
    %v3006 = vsel %vm45, %v2970, 0
    %v3009 = vsel %vm45, %v2971, 0
    %v3012 = vsel %vm45, %v2972, 0
    %v3015 = vsel %vm45, %v2973, 0
    %v3018 = vsel %vm45, %v2974, 0
    %v3021 = vsel %vm45, %v2975, 0
    %v3024 = vsel %vm45, %v2976, 0
    %v3027 = vsel %vm45, %v2977, 0
    %v3030 = vsel %vm45, %v2978, 0
    %3032 = vmatprep.subr.mxu0 0.0
    %3033 = vmatpush1.msra.mxu0 %v2980
    %3034 = vmatprep.subr.mxu0 0.0
    %3035 = vmatpush1.msra.mxu0 %v2981
    %3036 = vmatprep.subr.mxu0 0.0
    %3037 = vmatpush1.msra.mxu0 %v2982
    %3038 = vmatprep.subr.mxu0 0.0
    %3039 = vmatpush1.msra.mxu0 %v2983
    %3040 = vmatprep.subr.mxu0 0.0
    %3041 = vmatpush1.msra.mxu0 0.0
    %3042 = vmatprep.subr.mxu0 0.0
    %3043 = vmatpush1.msra.mxu0 0.0
    %3044 = vmatprep.subr.mxu0 0.0
    %3045 = vmatpush1.msra.mxu0 0.0
    %3046 = vmatprep.subr.mxu0 0.0
    %3047 = vmatpush1.msra.mxu0 0.0
    %3048 = vmatprep.subr.mxu0 0.0
    %3049 = vmatpush1.msra.mxu0 0.0
    %3050 = vmatprep.subr.mxu0 0.0
    %3051 = vmatpush1.msra.mxu0 0.0
    %3052 = vmatprep.subr.mxu0 0.0
    %3053 = vmatpush1.msra.mxu0 0.0
    %3054 = vmatprep.subr.mxu0 0.0
    %3055 = vmatpush1.msra.mxu0 0.0
    %3056 = vmatprep.subr.mxu0 0.0
    %3057 = vmatpush1.msra.mxu0 0.0
    %3058 = vmatprep.subr.mxu0 0.0
    %3059 = vmatpush1.msra.mxu0 0.0
    %3060 = vmatprep.subr.mxu0 0.0
    %3061 = vmatpush1.msra.mxu0 0.0
    %3062 = vmatprep.subr.mxu0 0.0
    %3063 = vmatpush1.msra.mxu0 0.0
    %3064 = vmatprep.subr.mxu0 0.0
    %3065 = vmatpush1.msra.mxu0 0.0
    %3066 = vmatprep.subr.mxu0 0.0
    %3067 = vmatpush1.msra.mxu0 0.0
    %3068 = vmatprep.subr.mxu0 0.0
    %3069 = vmatpush1.msra.mxu0 0.0
    %3070 = vmatprep.subr.mxu0 0.0
    %3071 = vmatpush1.msra.mxu0 0.0
    %3072 = vmatprep.subr.mxu0 0.0
    %3073 = vmatpush1.msra.mxu0 0.0
    %3074 = vmatprep.subr.mxu0 0.0
    %3075 = vmatpush1.msra.mxu0 0.0
    %3076 = vmatprep.subr.mxu0 0.0
    %3077 = vmatpush1.msra.mxu0 0.0
    %3078 = vmatprep.subr.mxu0 0.0
    %3079 = vmatpush1.msra.mxu0 0.0
    %3080 = vmatprep.subr.mxu0 0.0
    %3081 = vmatpush1.msra.mxu0 0.0
    %3082 = vmatprep.subr.mxu0 0.0
    %3083 = vmatpush1.msra.mxu0 0.0
    %3084 = vmatprep.subr.mxu0 0.0
    %3085 = vmatpush1.msra.mxu0 0.0
    %3086 = vmatprep.subr.mxu0 0.0
    %3087 = vmatpush1.msra.mxu0 0.0
    %3088 = vmatprep.subr.mxu0 0.0
    %3089 = vmatpush1.msra.mxu0 0.0
    %3090 = vmatprep.subr.mxu0 0.0
    %3091 = vmatpush1.msra.mxu0 0.0
    %3092 = vmatprep.subr.mxu0 0.0
    %3093 = vmatpush1.msra.mxu0 0.0
    %3094 = vmatprep.subr.mxu0 0.0
    %3095 = vmatpush1.msra.mxu0 0.0
    %3096 = vmatprep.mubr.f32.mxu0 0.0
    %3097 = vmatmul.mubr.f32.gmra.mrb[0].mxu0 %v2985
    %v3098 = vpop.f32.mrb[0].mxu0
    %v3099 = vadd.f32 0.0, %v3098
    %v3100 = vpop.f32.mrb[0].mxu0
    %3101 = vmatprep.mubr.f32.mxu0 0.0
    %3102 = vmatmul.mubr.f32.gmra.mrb[0].mxu0 %v2988
    %v3103 = vpop.f32.mrb[0].mxu0
    %v3104 = vadd.f32 0.0, %v3103
    %v3105 = vpop.f32.mrb[0].mxu0
    %3106 = vmatprep.mubr.f32.mxu0 0.0
    %3107 = vmatmul.mubr.f32.gmra.mrb[0].mxu0 %v2991
    %v3108 = vpop.f32.mrb[0].mxu0
    %v3109 = vadd.f32 0.0, %v3108
    %v3110 = vpop.f32.mrb[0].mxu0
    %3111 = vmatprep.mubr.f32.mxu0 0.0
    %3112 = vmatmul.mubr.f32.gmra.mrb[0].mxu0 %v2994
    %v3113 = vpop.f32.mrb[0].mxu0
    %v3114 = vadd.f32 0.0, %v3113
    %v3115 = vpop.f32.mrb[0].mxu0
    %3116 = vmatprep.mubr.f32.mxu0 0.0
    %3117 = vmatmul.mubr.f32.gmra.mrb[0].mxu0 %v2997
    %v3118 = vpop.f32.mrb[0].mxu0
    %v3119 = vadd.f32 0.0, %v3118
    %v3120 = vpop.f32.mrb[0].mxu0
    %3121 = vmatprep.mubr.f32.mxu0 0.0
    %3122 = vmatmul.mubr.f32.gmra.mrb[0].mxu0 %v3000
    %v3123 = vpop.f32.mrb[0].mxu0
    %v3124 = vadd.f32 0.0, %v3123
    %v3125 = vpop.f32.mrb[0].mxu0
    %3126 = vmatprep.mubr.f32.mxu0 0.0
    %3127 = vmatmul.mubr.f32.gmra.mrb[0].mxu0 %v3003
    %v3128 = vpop.f32.mrb[0].mxu0
    %v3129 = vadd.f32 0.0, %v3128
    %v3130 = vpop.f32.mrb[0].mxu0
    %3131 = vmatprep.mubr.f32.mxu0 0.0
    %3132 = vmatmul.mubr.f32.gmra.mrb[0].mxu0 %v3006
    %v3133 = vpop.f32.mrb[0].mxu0
    %v3134 = vadd.f32 0.0, %v3133
    %v3135 = vpop.f32.mrb[0].mxu0
    %3136 = vmatprep.mubr.f32.mxu0 0.0
    %3137 = vmatmul.mubr.f32.gmra.mrb[0].mxu0 %v3009
    %v3138 = vpop.f32.mrb[0].mxu0
    %v3139 = vadd.f32 0.0, %v3138
    %v3140 = vpop.f32.mrb[0].mxu0
    %3141 = vmatprep.mubr.f32.mxu0 0.0
    %3142 = vmatmul.mubr.f32.gmra.mrb[0].mxu0 %v3012
    %v3143 = vpop.f32.mrb[0].mxu0
    %v3144 = vadd.f32 0.0, %v3143
    %v3145 = vpop.f32.mrb[0].mxu0
    %3146 = vmatprep.mubr.f32.mxu0 0.0
    %3147 = vmatmul.mubr.f32.gmra.mrb[0].mxu0 %v3015
    %v3148 = vpop.f32.mrb[0].mxu0
    %v3149 = vadd.f32 0.0, %v3148
    %v3150 = vpop.f32.mrb[0].mxu0
    %3151 = vmatprep.mubr.f32.mxu0 0.0
    %3152 = vmatmul.mubr.f32.gmra.mrb[0].mxu0 %v3018
    %v3153 = vpop.f32.mrb[0].mxu0
    %v3154 = vadd.f32 0.0, %v3153
    %v3155 = vpop.f32.mrb[0].mxu0
    %3156 = vmatprep.mubr.f32.mxu0 0.0
    %3157 = vmatmul.mubr.f32.gmra.mrb[0].mxu0 %v3021
    %v3158 = vpop.f32.mrb[0].mxu0
    %v3159 = vadd.f32 0.0, %v3158
    %v3160 = vpop.f32.mrb[0].mxu0
    %3161 = vmatprep.mubr.f32.mxu0 0.0
    %3162 = vmatmul.mubr.f32.gmra.mrb[0].mxu0 %v3024
    %v3163 = vpop.f32.mrb[0].mxu0
    %v3164 = vadd.f32 0.0, %v3163
    %v3165 = vpop.f32.mrb[0].mxu0
    %3166 = vmatprep.mubr.f32.mxu0 0.0
    %3167 = vmatmul.mubr.f32.gmra.mrb[0].mxu0 %v3027
    %v3168 = vpop.f32.mrb[0].mxu0
    %v3169 = vadd.f32 0.0, %v3168
    %v3170 = vpop.f32.mrb[0].mxu0
    %3171 = vmatprep.mubr.f32.mxu0 0.0
    %3172 = vmatmul.mubr.f32.gmra.mrb[0].mxu0 %v3030
    %v3173 = vpop.f32.mrb[0].mxu0
    %v3174 = vadd.f32 0.0, %v3173
    %v3175 = vpop.f32.mrb[0].mxu0
    %3176 = vdwg.mxu0
    %v3177 = vadd.f32 %v2885, %v3099
    %v3178 = vadd.f32 %v2890, %v3104
    %v3179 = vadd.f32 %v2895, %v3109
    %v3180 = vadd.f32 %v2900, %v3114
    %v3181 = vadd.f32 %v2905, %v3119
    %v3182 = vadd.f32 %v2910, %v3124
    %v3183 = vadd.f32 %v2915, %v3129
    %v3184 = vadd.f32 %v2920, %v3134
    %v3185 = vadd.f32 %v2925, %v3139
    %v3186 = vadd.f32 %v2930, %v3144
    %v3187 = vadd.f32 %v2935, %v3149
    %v3188 = vadd.f32 %v2940, %v3154
    %v3189 = vadd.f32 %v2945, %v3159
    %v3190 = vadd.f32 %v2950, %v3164
    %v3191 = vadd.f32 %v2955, %v3169
    %v3192 = vadd.f32 %v2960, %v3174
    %v3193 = vld [vmem:[#allocation2 + $0xa] sm:$0xff]
    %v3194 = vld [vmem:[#allocation2 + $0x12] sm:$0xff]
    %v3195 = vld [vmem:[#allocation2 + $0x1a] sm:$0xff]
    %v3196 = vld [vmem:[#allocation2 + $0x22] sm:$0xff]
    %v3197 = vld [vmem:[#allocation2 + $0x2a] sm:$0xff]
    %v3198 = vld [vmem:[#allocation2 + $0x32] sm:$0xff]
    %v3199 = vld [vmem:[#allocation2 + $0x3a] sm:$0xff]
    %v3200 = vld [vmem:[#allocation2 + $0x42] sm:$0xff]
    %v3201 = vld [vmem:[#allocation2 + $0x5a] sm:$0xff]
    %v3202 = vld [vmem:[#allocation2 + $0x62] sm:$0xff]
    %v3203 = vld [vmem:[#allocation2 + $0x6a] sm:$0xff]
    %v3204 = vld [vmem:[#allocation2 + $0x72] sm:$0xff]
    %v3205 = vld [vmem:[#allocation2 + $0x7a] sm:$0xff]
    %v3206 = vld [vmem:[#allocation2 + $0x82] sm:$0xff]
    %v3207 = vld [vmem:[#allocation2 + $0x8a] sm:$0xff]
    %v3208 = vld [vmem:[#allocation2 + $0x92] sm:$0xff]
    %s3209 = scalar_lea.vmem [#allocation3], 256
    %v3210 = vld [vmem:[%s3209] sm:$0xff]
    %v3211 = vld [vmem:[%s3209 + $0x8] sm:$0xff]
    %v3212 = vld [vmem:[%s3209 + $0x10] sm:$0xff]
    %v3213 = vld [vmem:[%s3209 + $0x18] sm:$0xff]
    %v3215 = vsel %vm45, %v3193, 0
    %v3218 = vsel %vm45, %v3194, 0
    %v3221 = vsel %vm45, %v3195, 0
    %v3224 = vsel %vm45, %v3196, 0
    %v3227 = vsel %vm45, %v3197, 0
    %v3230 = vsel %vm45, %v3198, 0
    %v3233 = vsel %vm45, %v3199, 0
    %v3236 = vsel %vm45, %v3200, 0
    %v3239 = vsel %vm45, %v3201, 0
    %v3242 = vsel %vm45, %v3202, 0
    %v3245 = vsel %vm45, %v3203, 0
    %v3248 = vsel %vm45, %v3204, 0
    %v3251 = vsel %vm45, %v3205, 0
    %v3254 = vsel %vm45, %v3206, 0
    %v3257 = vsel %vm45, %v3207, 0
    %v3260 = vsel %vm45, %v3208, 0
    %3262 = vmatprep.subr.mxu0 0.0
    %3263 = vmatpush1.msra.mxu0 %v3210
    %3264 = vmatprep.subr.mxu0 0.0
    %3265 = vmatpush1.msra.mxu0 %v3211
    %3266 = vmatprep.subr.mxu0 0.0
    %3267 = vmatpush1.msra.mxu0 %v3212
    %3268 = vmatprep.subr.mxu0 0.0
    %3269 = vmatpush1.msra.mxu0 %v3213
    %3270 = vmatprep.subr.mxu0 0.0
    %3271 = vmatpush1.msra.mxu0 0.0
    %3272 = vmatprep.subr.mxu0 0.0
    %3273 = vmatpush1.msra.mxu0 0.0
    %3274 = vmatprep.subr.mxu0 0.0
    %3275 = vmatpush1.msra.mxu0 0.0
    %3276 = vmatprep.subr.mxu0 0.0
    %3277 = vmatpush1.msra.mxu0 0.0
    %3278 = vmatprep.subr.mxu0 0.0
    %3279 = vmatpush1.msra.mxu0 0.0
    %3280 = vmatprep.subr.mxu0 0.0
    %3281 = vmatpush1.msra.mxu0 0.0
    %3282 = vmatprep.subr.mxu0 0.0
    %3283 = vmatpush1.msra.mxu0 0.0
    %3284 = vmatprep.subr.mxu0 0.0
    %3285 = vmatpush1.msra.mxu0 0.0
    %3286 = vmatprep.subr.mxu0 0.0
    %3287 = vmatpush1.msra.mxu0 0.0
    %3288 = vmatprep.subr.mxu0 0.0
    %3289 = vmatpush1.msra.mxu0 0.0
    %3290 = vmatprep.subr.mxu0 0.0
    %3291 = vmatpush1.msra.mxu0 0.0
    %3292 = vmatprep.subr.mxu0 0.0
    %3293 = vmatpush1.msra.mxu0 0.0
    %3294 = vmatprep.subr.mxu0 0.0
    %3295 = vmatpush1.msra.mxu0 0.0
    %3296 = vmatprep.subr.mxu0 0.0
    %3297 = vmatpush1.msra.mxu0 0.0
    %3298 = vmatprep.subr.mxu0 0.0
    %3299 = vmatpush1.msra.mxu0 0.0
    %3300 = vmatprep.subr.mxu0 0.0
    %3301 = vmatpush1.msra.mxu0 0.0
    %3302 = vmatprep.subr.mxu0 0.0
    %3303 = vmatpush1.msra.mxu0 0.0
    %3304 = vmatprep.subr.mxu0 0.0
    %3305 = vmatpush1.msra.mxu0 0.0
    %3306 = vmatprep.subr.mxu0 0.0
    %3307 = vmatpush1.msra.mxu0 0.0
    %3308 = vmatprep.subr.mxu0 0.0
    %3309 = vmatpush1.msra.mxu0 0.0
    %3310 = vmatprep.subr.mxu0 0.0
    %3311 = vmatpush1.msra.mxu0 0.0
    %3312 = vmatprep.subr.mxu0 0.0
    %3313 = vmatpush1.msra.mxu0 0.0
    %3314 = vmatprep.subr.mxu0 0.0
    %3315 = vmatpush1.msra.mxu0 0.0
    %3316 = vmatprep.subr.mxu0 0.0
    %3317 = vmatpush1.msra.mxu0 0.0
    %3318 = vmatprep.subr.mxu0 0.0
    %3319 = vmatpush1.msra.mxu0 0.0
    %3320 = vmatprep.subr.mxu0 0.0
    %3321 = vmatpush1.msra.mxu0 0.0
    %3322 = vmatprep.subr.mxu0 0.0
    %3323 = vmatpush1.msra.mxu0 0.0
    %3324 = vmatprep.subr.mxu0 0.0
    %3325 = vmatpush1.msra.mxu0 0.0
    %3326 = vmatprep.mubr.f32.mxu0 0.0
    %3327 = vmatmul.mubr.f32.gmra.mrb[0].mxu0 %v3215
    %v3328 = vpop.f32.mrb[0].mxu0
    %v3329 = vadd.f32 0.0, %v3328
    %v3330 = vpop.f32.mrb[0].mxu0
    %3331 = vmatprep.mubr.f32.mxu0 0.0
    %3332 = vmatmul.mubr.f32.gmra.mrb[0].mxu0 %v3218
    %v3333 = vpop.f32.mrb[0].mxu0
    %v3334 = vadd.f32 0.0, %v3333
    %v3335 = vpop.f32.mrb[0].mxu0
    %3336 = vmatprep.mubr.f32.mxu0 0.0
    %3337 = vmatmul.mubr.f32.gmra.mrb[0].mxu0 %v3221
    %v3338 = vpop.f32.mrb[0].mxu0
    %v3339 = vadd.f32 0.0, %v3338
    %v3340 = vpop.f32.mrb[0].mxu0
    %3341 = vmatprep.mubr.f32.mxu0 0.0
    %3342 = vmatmul.mubr.f32.gmra.mrb[0].mxu0 %v3224
    %v3343 = vpop.f32.mrb[0].mxu0
    %v3344 = vadd.f32 0.0, %v3343
    %v3345 = vpop.f32.mrb[0].mxu0
    %3346 = vmatprep.mubr.f32.mxu0 0.0
    %3347 = vmatmul.mubr.f32.gmra.mrb[0].mxu0 %v3227
    %v3348 = vpop.f32.mrb[0].mxu0
    %v3349 = vadd.f32 0.0, %v3348
    %v3350 = vpop.f32.mrb[0].mxu0
    %3351 = vmatprep.mubr.f32.mxu0 0.0
    %3352 = vmatmul.mubr.f32.gmra.mrb[0].mxu0 %v3230
    %v3353 = vpop.f32.mrb[0].mxu0
    %v3354 = vadd.f32 0.0, %v3353
    %v3355 = vpop.f32.mrb[0].mxu0
    %3356 = vmatprep.mubr.f32.mxu0 0.0
    %3357 = vmatmul.mubr.f32.gmra.mrb[0].mxu0 %v3233
    %v3358 = vpop.f32.mrb[0].mxu0
    %v3359 = vadd.f32 0.0, %v3358
    %v3360 = vpop.f32.mrb[0].mxu0
    %3361 = vmatprep.mubr.f32.mxu0 0.0
    %3362 = vmatmul.mubr.f32.gmra.mrb[0].mxu0 %v3236
    %v3363 = vpop.f32.mrb[0].mxu0
    %v3364 = vadd.f32 0.0, %v3363
    %v3365 = vpop.f32.mrb[0].mxu0
    %3366 = vmatprep.mubr.f32.mxu0 0.0
    %3367 = vmatmul.mubr.f32.gmra.mrb[0].mxu0 %v3239
    %v3368 = vpop.f32.mrb[0].mxu0
    %v3369 = vadd.f32 0.0, %v3368
    %v3370 = vpop.f32.mrb[0].mxu0
    %3371 = vmatprep.mubr.f32.mxu0 0.0
    %3372 = vmatmul.mubr.f32.gmra.mrb[0].mxu0 %v3242
    %v3373 = vpop.f32.mrb[0].mxu0
    %v3374 = vadd.f32 0.0, %v3373
    %v3375 = vpop.f32.mrb[0].mxu0
    %3376 = vmatprep.mubr.f32.mxu0 0.0
    %3377 = vmatmul.mubr.f32.gmra.mrb[0].mxu0 %v3245
    %v3378 = vpop.f32.mrb[0].mxu0
    %v3379 = vadd.f32 0.0, %v3378
    %v3380 = vpop.f32.mrb[0].mxu0
    %3381 = vmatprep.mubr.f32.mxu0 0.0
    %3382 = vmatmul.mubr.f32.gmra.mrb[0].mxu0 %v3248
    %v3383 = vpop.f32.mrb[0].mxu0
    %v3384 = vadd.f32 0.0, %v3383
    %v3385 = vpop.f32.mrb[0].mxu0
    %3386 = vmatprep.mubr.f32.mxu0 0.0
    %3387 = vmatmul.mubr.f32.gmra.mrb[0].mxu0 %v3251
    %v3388 = vpop.f32.mrb[0].mxu0
    %v3389 = vadd.f32 0.0, %v3388
    %v3390 = vpop.f32.mrb[0].mxu0
    %3391 = vmatprep.mubr.f32.mxu0 0.0
    %3392 = vmatmul.mubr.f32.gmra.mrb[0].mxu0 %v3254
    %v3393 = vpop.f32.mrb[0].mxu0
    %v3394 = vadd.f32 0.0, %v3393
    %v3395 = vpop.f32.mrb[0].mxu0
    %3396 = vmatprep.mubr.f32.mxu0 0.0
    %3397 = vmatmul.mubr.f32.gmra.mrb[0].mxu0 %v3257
    %v3398 = vpop.f32.mrb[0].mxu0
    %v3399 = vadd.f32 0.0, %v3398
    %v3400 = vpop.f32.mrb[0].mxu0
    %3401 = vmatprep.mubr.f32.mxu0 0.0
    %3402 = vmatmul.mubr.f32.gmra.mrb[0].mxu0 %v3260
    %v3403 = vpop.f32.mrb[0].mxu0
    %v3404 = vadd.f32 0.0, %v3403
    %v3405 = vpop.f32.mrb[0].mxu0
    %3406 = vdwg.mxu0
    %v3407 = vadd.f32 %v3177, %v3329
    %v3408 = vadd.f32 %v3178, %v3334
    %v3409 = vadd.f32 %v3179, %v3339
    %v3410 = vadd.f32 %v3180, %v3344
    %v3411 = vadd.f32 %v3181, %v3349
    %v3412 = vadd.f32 %v3182, %v3354
    %v3413 = vadd.f32 %v3183, %v3359
    %v3414 = vadd.f32 %v3184, %v3364
    %v3415 = vadd.f32 %v3185, %v3369
    %v3416 = vadd.f32 %v3186, %v3374
    %v3417 = vadd.f32 %v3187, %v3379
    %v3418 = vadd.f32 %v3188, %v3384
    %v3419 = vadd.f32 %v3189, %v3389
    %v3420 = vadd.f32 %v3190, %v3394
    %v3421 = vadd.f32 %v3191, %v3399
    %v3422 = vadd.f32 %v3192, %v3404
    %v3423 = vld [vmem:[#allocation2 + $0xc] sm:$0xff]
    %v3424 = vld [vmem:[#allocation2 + $0x14] sm:$0xff]
    %v3425 = vld [vmem:[#allocation2 + $0x1c] sm:$0xff]
    %v3426 = vld [vmem:[#allocation2 + $0x24] sm:$0xff]
    %v3427 = vld [vmem:[#allocation2 + $0x2c] sm:$0xff]
    %v3428 = vld [vmem:[#allocation2 + $0x34] sm:$0xff]
    %v3429 = vld [vmem:[#allocation2 + $0x3c] sm:$0xff]
    %v3430 = vld [vmem:[#allocation2 + $0x44] sm:$0xff]
    %v3431 = vld [vmem:[#allocation2 + $0x5c] sm:$0xff]
    %v3432 = vld [vmem:[#allocation2 + $0x64] sm:$0xff]
    %v3433 = vld [vmem:[#allocation2 + $0x6c] sm:$0xff]
    %v3434 = vld [vmem:[#allocation2 + $0x74] sm:$0xff]
    %v3435 = vld [vmem:[#allocation2 + $0x7c] sm:$0xff]
    %v3436 = vld [vmem:[#allocation2 + $0x84] sm:$0xff]
    %v3437 = vld [vmem:[#allocation2 + $0x8c] sm:$0xff]
    %v3438 = vld [vmem:[#allocation2 + $0x94] sm:$0xff]
    %s3439 = scalar_lea.vmem [#allocation3], 288
    %v3440 = vld [vmem:[%s3439] sm:$0xff]
    %v3441 = vld [vmem:[%s3439 + $0x8] sm:$0xff]
    %v3442 = vld [vmem:[%s3439 + $0x10] sm:$0xff]
    %v3443 = vld [vmem:[%s3439 + $0x18] sm:$0xff]
    %v3445 = vsel %vm45, %v3423, 0
    %v3448 = vsel %vm45, %v3424, 0
    %v3451 = vsel %vm45, %v3425, 0
    %v3454 = vsel %vm45, %v3426, 0
    %v3457 = vsel %vm45, %v3427, 0
    %v3460 = vsel %vm45, %v3428, 0
    %v3463 = vsel %vm45, %v3429, 0
    %v3466 = vsel %vm45, %v3430, 0
    %v3469 = vsel %vm45, %v3431, 0
    %v3472 = vsel %vm45, %v3432, 0
    %v3475 = vsel %vm45, %v3433, 0
    %v3478 = vsel %vm45, %v3434, 0
    %v3481 = vsel %vm45, %v3435, 0
    %v3484 = vsel %vm45, %v3436, 0
    %v3487 = vsel %vm45, %v3437, 0
    %v3490 = vsel %vm45, %v3438, 0
    %3492 = vmatprep.subr.mxu0 0.0
    %3493 = vmatpush1.msra.mxu0 %v3440
    %3494 = vmatprep.subr.mxu0 0.0
    %3495 = vmatpush1.msra.mxu0 %v3441
    %3496 = vmatprep.subr.mxu0 0.0
    %3497 = vmatpush1.msra.mxu0 %v3442
    %3498 = vmatprep.subr.mxu0 0.0
    %3499 = vmatpush1.msra.mxu0 %v3443
    %3500 = vmatprep.subr.mxu0 0.0
    %3501 = vmatpush1.msra.mxu0 0.0
    %3502 = vmatprep.subr.mxu0 0.0
    %3503 = vmatpush1.msra.mxu0 0.0
    %3504 = vmatprep.subr.mxu0 0.0
    %3505 = vmatpush1.msra.mxu0 0.0
    %3506 = vmatprep.subr.mxu0 0.0
    %3507 = vmatpush1.msra.mxu0 0.0
    %3508 = vmatprep.subr.mxu0 0.0
    %3509 = vmatpush1.msra.mxu0 0.0
    %3510 = vmatprep.subr.mxu0 0.0
    %3511 = vmatpush1.msra.mxu0 0.0
    %3512 = vmatprep.subr.mxu0 0.0
    %3513 = vmatpush1.msra.mxu0 0.0
    %3514 = vmatprep.subr.mxu0 0.0
    %3515 = vmatpush1.msra.mxu0 0.0
    %3516 = vmatprep.subr.mxu0 0.0
    %3517 = vmatpush1.msra.mxu0 0.0
    %3518 = vmatprep.subr.mxu0 0.0
    %3519 = vmatpush1.msra.mxu0 0.0
    %3520 = vmatprep.subr.mxu0 0.0
    %3521 = vmatpush1.msra.mxu0 0.0
    %3522 = vmatprep.subr.mxu0 0.0
    %3523 = vmatpush1.msra.mxu0 0.0
    %3524 = vmatprep.subr.mxu0 0.0
    %3525 = vmatpush1.msra.mxu0 0.0
    %3526 = vmatprep.subr.mxu0 0.0
    %3527 = vmatpush1.msra.mxu0 0.0
    %3528 = vmatprep.subr.mxu0 0.0
    %3529 = vmatpush1.msra.mxu0 0.0
    %3530 = vmatprep.subr.mxu0 0.0
    %3531 = vmatpush1.msra.mxu0 0.0
    %3532 = vmatprep.subr.mxu0 0.0
    %3533 = vmatpush1.msra.mxu0 0.0
    %3534 = vmatprep.subr.mxu0 0.0
    %3535 = vmatpush1.msra.mxu0 0.0
    %3536 = vmatprep.subr.mxu0 0.0
    %3537 = vmatpush1.msra.mxu0 0.0
    %3538 = vmatprep.subr.mxu0 0.0
    %3539 = vmatpush1.msra.mxu0 0.0
    %3540 = vmatprep.subr.mxu0 0.0
    %3541 = vmatpush1.msra.mxu0 0.0
    %3542 = vmatprep.subr.mxu0 0.0
    %3543 = vmatpush1.msra.mxu0 0.0
    %3544 = vmatprep.subr.mxu0 0.0
    %3545 = vmatpush1.msra.mxu0 0.0
    %3546 = vmatprep.subr.mxu0 0.0
    %3547 = vmatpush1.msra.mxu0 0.0
    %3548 = vmatprep.subr.mxu0 0.0
    %3549 = vmatpush1.msra.mxu0 0.0
    %3550 = vmatprep.subr.mxu0 0.0
    %3551 = vmatpush1.msra.mxu0 0.0
    %3552 = vmatprep.subr.mxu0 0.0
    %3553 = vmatpush1.msra.mxu0 0.0
    %3554 = vmatprep.subr.mxu0 0.0
    %3555 = vmatpush1.msra.mxu0 0.0
    %3556 = vmatprep.mubr.f32.mxu0 0.0
    %3557 = vmatmul.mubr.f32.gmra.mrb[0].mxu0 %v3445
    %v3558 = vpop.f32.mrb[0].mxu0
    %v3559 = vadd.f32 0.0, %v3558
    %v3560 = vpop.f32.mrb[0].mxu0
    %3561 = vmatprep.mubr.f32.mxu0 0.0
    %3562 = vmatmul.mubr.f32.gmra.mrb[0].mxu0 %v3448
    %v3563 = vpop.f32.mrb[0].mxu0
    %v3564 = vadd.f32 0.0, %v3563
    %v3565 = vpop.f32.mrb[0].mxu0
    %3566 = vmatprep.mubr.f32.mxu0 0.0
    %3567 = vmatmul.mubr.f32.gmra.mrb[0].mxu0 %v3451
    %v3568 = vpop.f32.mrb[0].mxu0
    %v3569 = vadd.f32 0.0, %v3568
    %v3570 = vpop.f32.mrb[0].mxu0
    %3571 = vmatprep.mubr.f32.mxu0 0.0
    %3572 = vmatmul.mubr.f32.gmra.mrb[0].mxu0 %v3454
    %v3573 = vpop.f32.mrb[0].mxu0
    %v3574 = vadd.f32 0.0, %v3573
    %v3575 = vpop.f32.mrb[0].mxu0
    %3576 = vmatprep.mubr.f32.mxu0 0.0
    %3577 = vmatmul.mubr.f32.gmra.mrb[0].mxu0 %v3457
    %v3578 = vpop.f32.mrb[0].mxu0
    %v3579 = vadd.f32 0.0, %v3578
    %v3580 = vpop.f32.mrb[0].mxu0
    %3581 = vmatprep.mubr.f32.mxu0 0.0
    %3582 = vmatmul.mubr.f32.gmra.mrb[0].mxu0 %v3460
    %v3583 = vpop.f32.mrb[0].mxu0
    %v3584 = vadd.f32 0.0, %v3583
    %v3585 = vpop.f32.mrb[0].mxu0
    %3586 = vmatprep.mubr.f32.mxu0 0.0
    %3587 = vmatmul.mubr.f32.gmra.mrb[0].mxu0 %v3463
    %v3588 = vpop.f32.mrb[0].mxu0
    %v3589 = vadd.f32 0.0, %v3588
    %v3590 = vpop.f32.mrb[0].mxu0
    %3591 = vmatprep.mubr.f32.mxu0 0.0
    %3592 = vmatmul.mubr.f32.gmra.mrb[0].mxu0 %v3466
    %v3593 = vpop.f32.mrb[0].mxu0
    %v3594 = vadd.f32 0.0, %v3593
    %v3595 = vpop.f32.mrb[0].mxu0
    %3596 = vmatprep.mubr.f32.mxu0 0.0
    %3597 = vmatmul.mubr.f32.gmra.mrb[0].mxu0 %v3469
    %v3598 = vpop.f32.mrb[0].mxu0
    %v3599 = vadd.f32 0.0, %v3598
    %v3600 = vpop.f32.mrb[0].mxu0
    %3601 = vmatprep.mubr.f32.mxu0 0.0
    %3602 = vmatmul.mubr.f32.gmra.mrb[0].mxu0 %v3472
    %v3603 = vpop.f32.mrb[0].mxu0
    %v3604 = vadd.f32 0.0, %v3603
    %v3605 = vpop.f32.mrb[0].mxu0
    %3606 = vmatprep.mubr.f32.mxu0 0.0
    %3607 = vmatmul.mubr.f32.gmra.mrb[0].mxu0 %v3475
    %v3608 = vpop.f32.mrb[0].mxu0
    %v3609 = vadd.f32 0.0, %v3608
    %v3610 = vpop.f32.mrb[0].mxu0
    %3611 = vmatprep.mubr.f32.mxu0 0.0
    %3612 = vmatmul.mubr.f32.gmra.mrb[0].mxu0 %v3478
    %v3613 = vpop.f32.mrb[0].mxu0
    %v3614 = vadd.f32 0.0, %v3613
    %v3615 = vpop.f32.mrb[0].mxu0
    %3616 = vmatprep.mubr.f32.mxu0 0.0
    %3617 = vmatmul.mubr.f32.gmra.mrb[0].mxu0 %v3481
    %v3618 = vpop.f32.mrb[0].mxu0
    %v3619 = vadd.f32 0.0, %v3618
    %v3620 = vpop.f32.mrb[0].mxu0
    %3621 = vmatprep.mubr.f32.mxu0 0.0
    %3622 = vmatmul.mubr.f32.gmra.mrb[0].mxu0 %v3484
    %v3623 = vpop.f32.mrb[0].mxu0
    %v3624 = vadd.f32 0.0, %v3623
    %v3625 = vpop.f32.mrb[0].mxu0
    %3626 = vmatprep.mubr.f32.mxu0 0.0
    %3627 = vmatmul.mubr.f32.gmra.mrb[0].mxu0 %v3487
    %v3628 = vpop.f32.mrb[0].mxu0
    %v3629 = vadd.f32 0.0, %v3628
    %v3630 = vpop.f32.mrb[0].mxu0
    %3631 = vmatprep.mubr.f32.mxu0 0.0
    %3632 = vmatmul.mubr.f32.gmra.mrb[0].mxu0 %v3490
    %v3633 = vpop.f32.mrb[0].mxu0
    %v3634 = vadd.f32 0.0, %v3633
    %v3635 = vpop.f32.mrb[0].mxu0
    %3636 = vdwg.mxu0
    %v3637 = vadd.f32 %v3407, %v3559
    %v3638 = vadd.f32 %v3408, %v3564
    %v3639 = vadd.f32 %v3409, %v3569
    %v3640 = vadd.f32 %v3410, %v3574
    %v3641 = vadd.f32 %v3411, %v3579
    %v3642 = vadd.f32 %v3412, %v3584
    %v3643 = vadd.f32 %v3413, %v3589
    %v3644 = vadd.f32 %v3414, %v3594
    %v3645 = vadd.f32 %v3415, %v3599
    %v3646 = vadd.f32 %v3416, %v3604
    %v3647 = vadd.f32 %v3417, %v3609
    %v3648 = vadd.f32 %v3418, %v3614
    %v3649 = vadd.f32 %v3419, %v3619
    %v3650 = vadd.f32 %v3420, %v3624
    %v3651 = vadd.f32 %v3421, %v3629
    %v3652 = vadd.f32 %v3422, %v3634
    %v3653 = vlaneseq
    %v3654 = vshrl.u32 %v3653, 7
    %v3655 = vsub.s32 2, %v3654
    %v3656 = vrot.slane %v2462, %v3655
    %v3657 = vadd.f32 %v3637, %v3656
    %v3658 = vadd.f32 %v3638, %v3656
    %v3659 = vadd.f32 %v3639, %v3656
    %v3660 = vadd.f32 %v3640, %v3656
    %v3661 = vadd.f32 %v3641, %v3656
    %v3662 = vadd.f32 %v3642, %v3656
    %v3663 = vadd.f32 %v3643, %v3656
    %v3664 = vadd.f32 %v3644, %v3656
    %v3665 = vadd.f32 %v3645, %v3656
    %v3666 = vadd.f32 %v3646, %v3656
    %v3667 = vadd.f32 %v3647, %v3656
    %v3668 = vadd.f32 %v3648, %v3656
    %v3669 = vadd.f32 %v3649, %v3656
    %v3670 = vadd.f32 %v3650, %v3656
    %v3671 = vadd.f32 %v3651, %v3656
    %v3672 = vadd.f32 %v3652, %v3656
    %v3673 = vmax.f32 %v3657, 0.0
    %v3674 = vmax.f32 %v3658, 0.0
    %v3675 = vmax.f32 %v3659, 0.0
    %v3676 = vmax.f32 %v3660, 0.0
    %v3677 = vmax.f32 %v3661, 0.0
    %v3678 = vmax.f32 %v3662, 0.0
    %v3679 = vmax.f32 %v3663, 0.0
    %v3680 = vmax.f32 %v3664, 0.0
    %v3681 = vmax.f32 %v3665, 0.0
    %v3682 = vmax.f32 %v3666, 0.0
    %v3683 = vmax.f32 %v3667, 0.0
    %v3684 = vmax.f32 %v3668, 0.0
    %v3685 = vmax.f32 %v3669, 0.0
    %v3686 = vmax.f32 %v3670, 0.0
    %v3687 = vmax.f32 %v3671, 0.0
    %v3688 = vmax.f32 %v3672, 0.0
    %3689 = vst.msk [vmem:[#allocation2 + $0x8] sm:$0xff] %vm45, %v3673
    %3690 = vst.msk [vmem:[#allocation2 + $0x10] sm:$0xff] %vm45, %v3674
    %3691 = vst.msk [vmem:[#allocation2 + $0x18] sm:$0xff] %vm45, %v3675
    %3692 = vst.msk [vmem:[#allocation2 + $0x20] sm:$0xff] %vm45, %v3676
    %3693 = vst.msk [vmem:[#allocation2 + $0x28] sm:$0xff] %vm45, %v3677
    %3694 = vst.msk [vmem:[#allocation2 + $0x30] sm:$0xff] %vm45, %v3678
    %3695 = vst.msk [vmem:[#allocation2 + $0x38] sm:$0xff] %vm45, %v3679
    %3696 = vst.msk [vmem:[#allocation2 + $0x40] sm:$0xff] %vm45, %v3680
    %3697 = vst.msk [vmem:[#allocation2 + $0x58] sm:$0xff] %vm45, %v3681
    %3698 = vst.msk [vmem:[#allocation2 + $0x60] sm:$0xff] %vm45, %v3682
    %3699 = vst.msk [vmem:[#allocation2 + $0x68] sm:$0xff] %vm45, %v3683
    %3700 = vst.msk [vmem:[#allocation2 + $0x70] sm:$0xff] %vm45, %v3684
    %3701 = vst.msk [vmem:[#allocation2 + $0x78] sm:$0xff] %vm45, %v3685
    %3702 = vst.msk [vmem:[#allocation2 + $0x80] sm:$0xff] %vm45, %v3686
    %3703 = vst.msk [vmem:[#allocation2 + $0x88] sm:$0xff] %vm45, %v3687
    %3704 = vst.msk [vmem:[#allocation2 + $0x90] sm:$0xff] %vm45, %v3688
    %v3705 = vld [vmem:[#allocation2 + $0x4] sm:$0xff]
    %v3706 = vld [vmem:[#allocation2 + $0xc] sm:$0xff]
    %v3707 = vld [vmem:[#allocation2 + $0x14] sm:$0xff]
    %v3708 = vld [vmem:[#allocation2 + $0x1c] sm:$0xff]
    %v3709 = vld [vmem:[#allocation2 + $0x24] sm:$0xff]
    %v3710 = vld [vmem:[#allocation2 + $0x2c] sm:$0xff]
    %v3711 = vld [vmem:[#allocation2 + $0x34] sm:$0xff]
    %v3712 = vld [vmem:[#allocation2 + $0x3c] sm:$0xff]
    %v3713 = vld [vmem:[#allocation2 + $0x54] sm:$0xff]
    %v3714 = vld [vmem:[#allocation2 + $0x5c] sm:$0xff]
    %v3715 = vld [vmem:[#allocation2 + $0x64] sm:$0xff]
    %v3716 = vld [vmem:[#allocation2 + $0x6c] sm:$0xff]
    %v3717 = vld [vmem:[#allocation2 + $0x74] sm:$0xff]
    %v3718 = vld [vmem:[#allocation2 + $0x7c] sm:$0xff]
    %v3719 = vld [vmem:[#allocation2 + $0x84] sm:$0xff]
    %v3720 = vld [vmem:[#allocation2 + $0x8c] sm:$0xff]
    %s3721 = scalar_lea.vmem [#allocation5], 160
    %v3722 = vld [vmem:[%s3721] sm:$0xff]
    %v3723 = vld [vmem:[%s3721 + $0x8] sm:$0xff]
    %v3724 = vld [vmem:[%s3721 + $0x10] sm:$0xff]
    %v3725 = vld [vmem:[%s3721 + $0x18] sm:$0xff]
    %v3726 = vld [vmem:[#allocation2 + $0x6] sm:$0xff]
    %v3727 = vld [vmem:[#allocation2 + $0xe] sm:$0xff]
    %v3728 = vld [vmem:[#allocation2 + $0x16] sm:$0xff]
    %v3729 = vld [vmem:[#allocation2 + $0x1e] sm:$0xff]
    %v3730 = vld [vmem:[#allocation2 + $0x26] sm:$0xff]
    %v3731 = vld [vmem:[#allocation2 + $0x2e] sm:$0xff]
    %v3732 = vld [vmem:[#allocation2 + $0x36] sm:$0xff]
    %v3733 = vld [vmem:[#allocation2 + $0x3e] sm:$0xff]
    %v3734 = vld [vmem:[#allocation2 + $0x56] sm:$0xff]
    %v3735 = vld [vmem:[#allocation2 + $0x5e] sm:$0xff]
    %v3736 = vld [vmem:[#allocation2 + $0x66] sm:$0xff]
    %v3737 = vld [vmem:[#allocation2 + $0x6e] sm:$0xff]
    %v3738 = vld [vmem:[#allocation2 + $0x76] sm:$0xff]
    %v3739 = vld [vmem:[#allocation2 + $0x7e] sm:$0xff]
    %v3740 = vld [vmem:[#allocation2 + $0x86] sm:$0xff]
    %v3741 = vld [vmem:[#allocation2 + $0x8e] sm:$0xff]
    %s3742 = scalar_lea.vmem [#allocation5], 192
    %v3743 = vld [vmem:[%s3742] sm:$0xff]
    %v3744 = vld [vmem:[%s3742 + $0x8] sm:$0xff]
    %v3745 = vld [vmem:[%s3742 + $0x10] sm:$0xff]
    %v3746 = vld [vmem:[%s3742 + $0x18] sm:$0xff]
    %v3748 = vsel %vm45, %v3726, 0
    %v3751 = vsel %vm45, %v3727, 0
    %v3754 = vsel %vm45, %v3728, 0
    %v3757 = vsel %vm45, %v3729, 0
    %v3760 = vsel %vm45, %v3730, 0
    %v3763 = vsel %vm45, %v3731, 0
    %v3766 = vsel %vm45, %v3732, 0
    %v3769 = vsel %vm45, %v3733, 0
    %v3772 = vsel %vm45, %v3734, 0
    %v3775 = vsel %vm45, %v3735, 0
    %v3778 = vsel %vm45, %v3736, 0
    %v3781 = vsel %vm45, %v3737, 0
    %v3784 = vsel %vm45, %v3738, 0
    %v3787 = vsel %vm45, %v3739, 0
    %v3790 = vsel %vm45, %v3740, 0
    %v3793 = vsel %vm45, %v3741, 0
    %3795 = vmatprep.subr.mxu0 0.0
    %3796 = vmatpush1.msra.mxu0 %v3743
    %3797 = vmatprep.subr.mxu0 0.0
    %3798 = vmatpush1.msra.mxu0 %v3744
    %3799 = vmatprep.subr.mxu0 0.0
    %3800 = vmatpush1.msra.mxu0 %v3745
    %3801 = vmatprep.subr.mxu0 0.0
    %3802 = vmatpush1.msra.mxu0 %v3746
    %3803 = vmatprep.subr.mxu0 0.0
    %3804 = vmatpush1.msra.mxu0 0.0
    %3805 = vmatprep.subr.mxu0 0.0
    %3806 = vmatpush1.msra.mxu0 0.0
    %3807 = vmatprep.subr.mxu0 0.0
    %3808 = vmatpush1.msra.mxu0 0.0
    %3809 = vmatprep.subr.mxu0 0.0
    %3810 = vmatpush1.msra.mxu0 0.0
    %3811 = vmatprep.subr.mxu0 0.0
    %3812 = vmatpush1.msra.mxu0 0.0
    %3813 = vmatprep.subr.mxu0 0.0
    %3814 = vmatpush1.msra.mxu0 0.0
    %3815 = vmatprep.subr.mxu0 0.0
    %3816 = vmatpush1.msra.mxu0 0.0
    %3817 = vmatprep.subr.mxu0 0.0
    %3818 = vmatpush1.msra.mxu0 0.0
    %3819 = vmatprep.subr.mxu0 0.0
    %3820 = vmatpush1.msra.mxu0 0.0
    %3821 = vmatprep.subr.mxu0 0.0
    %3822 = vmatpush1.msra.mxu0 0.0
    %3823 = vmatprep.subr.mxu0 0.0
    %3824 = vmatpush1.msra.mxu0 0.0
    %3825 = vmatprep.subr.mxu0 0.0
    %3826 = vmatpush1.msra.mxu0 0.0
    %3827 = vmatprep.subr.mxu0 0.0
    %3828 = vmatpush1.msra.mxu0 0.0
    %3829 = vmatprep.subr.mxu0 0.0
    %3830 = vmatpush1.msra.mxu0 0.0
    %3831 = vmatprep.subr.mxu0 0.0
    %3832 = vmatpush1.msra.mxu0 0.0
    %3833 = vmatprep.subr.mxu0 0.0
    %3834 = vmatpush1.msra.mxu0 0.0
    %3835 = vmatprep.subr.mxu0 0.0
    %3836 = vmatpush1.msra.mxu0 0.0
    %3837 = vmatprep.subr.mxu0 0.0
    %3838 = vmatpush1.msra.mxu0 0.0
    %3839 = vmatprep.subr.mxu0 0.0
    %3840 = vmatpush1.msra.mxu0 0.0
    %3841 = vmatprep.subr.mxu0 0.0
    %3842 = vmatpush1.msra.mxu0 0.0
    %3843 = vmatprep.subr.mxu0 0.0
    %3844 = vmatpush1.msra.mxu0 0.0
    %3845 = vmatprep.subr.mxu0 0.0
    %3846 = vmatpush1.msra.mxu0 0.0
    %3847 = vmatprep.subr.mxu0 0.0
    %3848 = vmatpush1.msra.mxu0 0.0
    %3849 = vmatprep.subr.mxu0 0.0
    %3850 = vmatpush1.msra.mxu0 0.0
    %3851 = vmatprep.subr.mxu0 0.0
    %3852 = vmatpush1.msra.mxu0 0.0
    %3853 = vmatprep.subr.mxu0 0.0
    %3854 = vmatpush1.msra.mxu0 0.0
    %3855 = vmatprep.subr.mxu0 0.0
    %3856 = vmatpush1.msra.mxu0 0.0
    %3857 = vmatprep.subr.mxu0 0.0
    %3858 = vmatpush1.msra.mxu0 0.0
    %3859 = vmatprep.mubr.f32.mxu0 0.0
    %3860 = vmatmul.mubr.f32.gmra.mrb[0].mxu0 %v3748
    %v3861 = vpop.f32.mrb[0].mxu0
    %v3862 = vadd.f32 0.0, %v3861
    %v3863 = vpop.f32.mrb[0].mxu0
    %3864 = vmatprep.mubr.f32.mxu0 0.0
    %3865 = vmatmul.mubr.f32.gmra.mrb[0].mxu0 %v3751
    %v3866 = vpop.f32.mrb[0].mxu0
    %v3867 = vadd.f32 0.0, %v3866
    %v3868 = vpop.f32.mrb[0].mxu0
    %3869 = vmatprep.mubr.f32.mxu0 0.0
    %3870 = vmatmul.mubr.f32.gmra.mrb[0].mxu0 %v3754
    %v3871 = vpop.f32.mrb[0].mxu0
    %v3872 = vadd.f32 0.0, %v3871
    %v3873 = vpop.f32.mrb[0].mxu0
    %3874 = vmatprep.mubr.f32.mxu0 0.0
    %3875 = vmatmul.mubr.f32.gmra.mrb[0].mxu0 %v3757
    %v3876 = vpop.f32.mrb[0].mxu0
    %v3877 = vadd.f32 0.0, %v3876
    %v3878 = vpop.f32.mrb[0].mxu0
    %3879 = vmatprep.mubr.f32.mxu0 0.0
    %3880 = vmatmul.mubr.f32.gmra.mrb[0].mxu0 %v3760
    %v3881 = vpop.f32.mrb[0].mxu0
    %v3882 = vadd.f32 0.0, %v3881
    %v3883 = vpop.f32.mrb[0].mxu0
    %3884 = vmatprep.mubr.f32.mxu0 0.0
    %3885 = vmatmul.mubr.f32.gmra.mrb[0].mxu0 %v3763
    %v3886 = vpop.f32.mrb[0].mxu0
    %v3887 = vadd.f32 0.0, %v3886
    %v3888 = vpop.f32.mrb[0].mxu0
    %3889 = vmatprep.mubr.f32.mxu0 0.0
    %3890 = vmatmul.mubr.f32.gmra.mrb[0].mxu0 %v3766
    %v3891 = vpop.f32.mrb[0].mxu0
    %v3892 = vadd.f32 0.0, %v3891
    %v3893 = vpop.f32.mrb[0].mxu0
    %3894 = vmatprep.mubr.f32.mxu0 0.0
    %3895 = vmatmul.mubr.f32.gmra.mrb[0].mxu0 %v3769
    %v3896 = vpop.f32.mrb[0].mxu0
    %v3897 = vadd.f32 0.0, %v3896
    %v3898 = vpop.f32.mrb[0].mxu0
    %3899 = vmatprep.mubr.f32.mxu0 0.0
    %3900 = vmatmul.mubr.f32.gmra.mrb[0].mxu0 %v3772
    %v3901 = vpop.f32.mrb[0].mxu0
    %v3902 = vadd.f32 0.0, %v3901
    %v3903 = vpop.f32.mrb[0].mxu0
    %3904 = vmatprep.mubr.f32.mxu0 0.0
    %3905 = vmatmul.mubr.f32.gmra.mrb[0].mxu0 %v3775
    %v3906 = vpop.f32.mrb[0].mxu0
    %v3907 = vadd.f32 0.0, %v3906
    %v3908 = vpop.f32.mrb[0].mxu0
    %3909 = vmatprep.mubr.f32.mxu0 0.0
    %3910 = vmatmul.mubr.f32.gmra.mrb[0].mxu0 %v3778
    %v3911 = vpop.f32.mrb[0].mxu0
    %v3912 = vadd.f32 0.0, %v3911
    %v3913 = vpop.f32.mrb[0].mxu0
    %3914 = vmatprep.mubr.f32.mxu0 0.0
    %3915 = vmatmul.mubr.f32.gmra.mrb[0].mxu0 %v3781
    %v3916 = vpop.f32.mrb[0].mxu0
    %v3917 = vadd.f32 0.0, %v3916
    %v3918 = vpop.f32.mrb[0].mxu0
    %3919 = vmatprep.mubr.f32.mxu0 0.0
    %3920 = vmatmul.mubr.f32.gmra.mrb[0].mxu0 %v3784
    %v3921 = vpop.f32.mrb[0].mxu0
    %v3922 = vadd.f32 0.0, %v3921
    %v3923 = vpop.f32.mrb[0].mxu0
    %3924 = vmatprep.mubr.f32.mxu0 0.0
    %3925 = vmatmul.mubr.f32.gmra.mrb[0].mxu0 %v3787
    %v3926 = vpop.f32.mrb[0].mxu0
    %v3927 = vadd.f32 0.0, %v3926
    %v3928 = vpop.f32.mrb[0].mxu0
    %3929 = vmatprep.mubr.f32.mxu0 0.0
    %3930 = vmatmul.mubr.f32.gmra.mrb[0].mxu0 %v3790
    %v3931 = vpop.f32.mrb[0].mxu0
    %v3932 = vadd.f32 0.0, %v3931
    %v3933 = vpop.f32.mrb[0].mxu0
    %3934 = vmatprep.mubr.f32.mxu0 0.0
    %3935 = vmatmul.mubr.f32.gmra.mrb[0].mxu0 %v3793
    %v3936 = vpop.f32.mrb[0].mxu0
    %v3937 = vadd.f32 0.0, %v3936
    %v3938 = vpop.f32.mrb[0].mxu0
    %3939 = vdwg.mxu0
    %v3941 = vsel %vm45, %v3705, 0
    %v3944 = vsel %vm45, %v3706, 0
    %v3947 = vsel %vm45, %v3707, 0
    %v3950 = vsel %vm45, %v3708, 0
    %v3953 = vsel %vm45, %v3709, 0
    %v3956 = vsel %vm45, %v3710, 0
    %v3959 = vsel %vm45, %v3711, 0
    %v3962 = vsel %vm45, %v3712, 0
    %v3965 = vsel %vm45, %v3713, 0
    %v3968 = vsel %vm45, %v3714, 0
    %v3971 = vsel %vm45, %v3715, 0
    %v3974 = vsel %vm45, %v3716, 0
    %v3977 = vsel %vm45, %v3717, 0
    %v3980 = vsel %vm45, %v3718, 0
    %v3983 = vsel %vm45, %v3719, 0
    %v3986 = vsel %vm45, %v3720, 0
    %3988 = vmatprep.subr.mxu0 0.0
    %3989 = vmatpush1.msra.mxu0 %v3722
    %3990 = vmatprep.subr.mxu0 0.0
    %3991 = vmatpush1.msra.mxu0 %v3723
    %3992 = vmatprep.subr.mxu0 0.0
    %3993 = vmatpush1.msra.mxu0 %v3724
    %3994 = vmatprep.subr.mxu0 0.0
    %3995 = vmatpush1.msra.mxu0 %v3725
    %3996 = vmatprep.subr.mxu0 0.0
    %3997 = vmatpush1.msra.mxu0 0.0
    %3998 = vmatprep.subr.mxu0 0.0
    %3999 = vmatpush1.msra.mxu0 0.0
    %4000 = vmatprep.subr.mxu0 0.0
    %4001 = vmatpush1.msra.mxu0 0.0
    %4002 = vmatprep.subr.mxu0 0.0
    %4003 = vmatpush1.msra.mxu0 0.0
    %4004 = vmatprep.subr.mxu0 0.0
    %4005 = vmatpush1.msra.mxu0 0.0
    %4006 = vmatprep.subr.mxu0 0.0
    %4007 = vmatpush1.msra.mxu0 0.0
    %4008 = vmatprep.subr.mxu0 0.0
    %4009 = vmatpush1.msra.mxu0 0.0
    %4010 = vmatprep.subr.mxu0 0.0
    %4011 = vmatpush1.msra.mxu0 0.0
    %4012 = vmatprep.subr.mxu0 0.0
    %4013 = vmatpush1.msra.mxu0 0.0
    %4014 = vmatprep.subr.mxu0 0.0
    %4015 = vmatpush1.msra.mxu0 0.0
    %4016 = vmatprep.subr.mxu0 0.0
    %4017 = vmatpush1.msra.mxu0 0.0
    %4018 = vmatprep.subr.mxu0 0.0
    %4019 = vmatpush1.msra.mxu0 0.0
    %4020 = vmatprep.subr.mxu0 0.0
    %4021 = vmatpush1.msra.mxu0 0.0
    %4022 = vmatprep.subr.mxu0 0.0
    %4023 = vmatpush1.msra.mxu0 0.0
    %4024 = vmatprep.subr.mxu0 0.0
    %4025 = vmatpush1.msra.mxu0 0.0
    %4026 = vmatprep.subr.mxu0 0.0
    %4027 = vmatpush1.msra.mxu0 0.0
    %4028 = vmatprep.subr.mxu0 0.0
    %4029 = vmatpush1.msra.mxu0 0.0
    %4030 = vmatprep.subr.mxu0 0.0
    %4031 = vmatpush1.msra.mxu0 0.0
    %4032 = vmatprep.subr.mxu0 0.0
    %4033 = vmatpush1.msra.mxu0 0.0
    %4034 = vmatprep.subr.mxu0 0.0
    %4035 = vmatpush1.msra.mxu0 0.0
    %4036 = vmatprep.subr.mxu0 0.0
    %4037 = vmatpush1.msra.mxu0 0.0
    %4038 = vmatprep.subr.mxu0 0.0
    %4039 = vmatpush1.msra.mxu0 0.0
    %4040 = vmatprep.subr.mxu0 0.0
    %4041 = vmatpush1.msra.mxu0 0.0
    %4042 = vmatprep.subr.mxu0 0.0
    %4043 = vmatpush1.msra.mxu0 0.0
    %4044 = vmatprep.subr.mxu0 0.0
    %4045 = vmatpush1.msra.mxu0 0.0
    %4046 = vmatprep.subr.mxu0 0.0
    %4047 = vmatpush1.msra.mxu0 0.0
    %4048 = vmatprep.subr.mxu0 0.0
    %4049 = vmatpush1.msra.mxu0 0.0
    %4050 = vmatprep.subr.mxu0 0.0
    %4051 = vmatpush1.msra.mxu0 0.0
    %4052 = vmatprep.mubr.f32.mxu0 0.0
    %4053 = vmatmul.mubr.f32.gmra.mrb[0].mxu0 %v3941
    %v4054 = vpop.f32.mrb[0].mxu0
    %v4055 = vadd.f32 %v3862, %v4054
    %v4056 = vpop.f32.mrb[0].mxu0
    %4057 = vmatprep.mubr.f32.mxu0 0.0
    %4058 = vmatmul.mubr.f32.gmra.mrb[0].mxu0 %v3944
    %v4059 = vpop.f32.mrb[0].mxu0
    %v4060 = vadd.f32 %v3867, %v4059
    %v4061 = vpop.f32.mrb[0].mxu0
    %4062 = vmatprep.mubr.f32.mxu0 0.0
    %4063 = vmatmul.mubr.f32.gmra.mrb[0].mxu0 %v3947
    %v4064 = vpop.f32.mrb[0].mxu0
    %v4065 = vadd.f32 %v3872, %v4064
    %v4066 = vpop.f32.mrb[0].mxu0
    %4067 = vmatprep.mubr.f32.mxu0 0.0
    %4068 = vmatmul.mubr.f32.gmra.mrb[0].mxu0 %v3950
    %v4069 = vpop.f32.mrb[0].mxu0
    %v4070 = vadd.f32 %v3877, %v4069
    %v4071 = vpop.f32.mrb[0].mxu0
    %4072 = vmatprep.mubr.f32.mxu0 0.0
    %4073 = vmatmul.mubr.f32.gmra.mrb[0].mxu0 %v3953
    %v4074 = vpop.f32.mrb[0].mxu0
    %v4075 = vadd.f32 %v3882, %v4074
    %v4076 = vpop.f32.mrb[0].mxu0
    %4077 = vmatprep.mubr.f32.mxu0 0.0
    %4078 = vmatmul.mubr.f32.gmra.mrb[0].mxu0 %v3956
    %v4079 = vpop.f32.mrb[0].mxu0
    %v4080 = vadd.f32 %v3887, %v4079
    %v4081 = vpop.f32.mrb[0].mxu0
    %4082 = vmatprep.mubr.f32.mxu0 0.0
    %4083 = vmatmul.mubr.f32.gmra.mrb[0].mxu0 %v3959
    %v4084 = vpop.f32.mrb[0].mxu0
    %v4085 = vadd.f32 %v3892, %v4084
    %v4086 = vpop.f32.mrb[0].mxu0
    %4087 = vmatprep.mubr.f32.mxu0 0.0
    %4088 = vmatmul.mubr.f32.gmra.mrb[0].mxu0 %v3962
    %v4089 = vpop.f32.mrb[0].mxu0
    %v4090 = vadd.f32 %v3897, %v4089
    %v4091 = vpop.f32.mrb[0].mxu0
    %4092 = vmatprep.mubr.f32.mxu0 0.0
    %4093 = vmatmul.mubr.f32.gmra.mrb[0].mxu0 %v3965
    %v4094 = vpop.f32.mrb[0].mxu0
    %v4095 = vadd.f32 %v3902, %v4094
    %v4096 = vpop.f32.mrb[0].mxu0
    %4097 = vmatprep.mubr.f32.mxu0 0.0
    %4098 = vmatmul.mubr.f32.gmra.mrb[0].mxu0 %v3968
    %v4099 = vpop.f32.mrb[0].mxu0
    %v4100 = vadd.f32 %v3907, %v4099
    %v4101 = vpop.f32.mrb[0].mxu0
    %4102 = vmatprep.mubr.f32.mxu0 0.0
    %4103 = vmatmul.mubr.f32.gmra.mrb[0].mxu0 %v3971
    %v4104 = vpop.f32.mrb[0].mxu0
    %v4105 = vadd.f32 %v3912, %v4104
    %v4106 = vpop.f32.mrb[0].mxu0
    %4107 = vmatprep.mubr.f32.mxu0 0.0
    %4108 = vmatmul.mubr.f32.gmra.mrb[0].mxu0 %v3974
    %v4109 = vpop.f32.mrb[0].mxu0
    %v4110 = vadd.f32 %v3917, %v4109
    %v4111 = vpop.f32.mrb[0].mxu0
    %4112 = vmatprep.mubr.f32.mxu0 0.0
    %4113 = vmatmul.mubr.f32.gmra.mrb[0].mxu0 %v3977
    %v4114 = vpop.f32.mrb[0].mxu0
    %v4115 = vadd.f32 %v3922, %v4114
    %v4116 = vpop.f32.mrb[0].mxu0
    %4117 = vmatprep.mubr.f32.mxu0 0.0
    %4118 = vmatmul.mubr.f32.gmra.mrb[0].mxu0 %v3980
    %v4119 = vpop.f32.mrb[0].mxu0
    %v4120 = vadd.f32 %v3927, %v4119
    %v4121 = vpop.f32.mrb[0].mxu0
    %4122 = vmatprep.mubr.f32.mxu0 0.0
    %4123 = vmatmul.mubr.f32.gmra.mrb[0].mxu0 %v3983
    %v4124 = vpop.f32.mrb[0].mxu0
    %v4125 = vadd.f32 %v3932, %v4124
    %v4126 = vpop.f32.mrb[0].mxu0
    %4127 = vmatprep.mubr.f32.mxu0 0.0
    %4128 = vmatmul.mubr.f32.gmra.mrb[0].mxu0 %v3986
    %v4129 = vpop.f32.mrb[0].mxu0
    %v4130 = vadd.f32 %v3937, %v4129
    %v4131 = vpop.f32.mrb[0].mxu0
    %4132 = vdwg.mxu0
    %v4133 = vld [vmem:[#allocation2 + $0x8] sm:$0xff]
    %v4134 = vld [vmem:[#allocation2 + $0x10] sm:$0xff]
    %v4135 = vld [vmem:[#allocation2 + $0x18] sm:$0xff]
    %v4136 = vld [vmem:[#allocation2 + $0x20] sm:$0xff]
    %v4137 = vld [vmem:[#allocation2 + $0x28] sm:$0xff]
    %v4138 = vld [vmem:[#allocation2 + $0x30] sm:$0xff]
    %v4139 = vld [vmem:[#allocation2 + $0x38] sm:$0xff]
    %v4140 = vld [vmem:[#allocation2 + $0x40] sm:$0xff]
    %v4141 = vld [vmem:[#allocation2 + $0x58] sm:$0xff]
    %v4142 = vld [vmem:[#allocation2 + $0x60] sm:$0xff]
    %v4143 = vld [vmem:[#allocation2 + $0x68] sm:$0xff]
    %v4144 = vld [vmem:[#allocation2 + $0x70] sm:$0xff]
    %v4145 = vld [vmem:[#allocation2 + $0x78] sm:$0xff]
    %v4146 = vld [vmem:[#allocation2 + $0x80] sm:$0xff]
    %v4147 = vld [vmem:[#allocation2 + $0x88] sm:$0xff]
    %v4148 = vld [vmem:[#allocation2 + $0x90] sm:$0xff]
    %s4149 = scalar_lea.vmem [#allocation5], 224
    %v4150 = vld [vmem:[%s4149] sm:$0xff]
    %v4151 = vld [vmem:[%s4149 + $0x8] sm:$0xff]
    %v4152 = vld [vmem:[%s4149 + $0x10] sm:$0xff]
    %v4153 = vld [vmem:[%s4149 + $0x18] sm:$0xff]
    %v4155 = vsel %vm45, %v4133, 0
    %v4158 = vsel %vm45, %v4134, 0
    %v4161 = vsel %vm45, %v4135, 0
    %v4164 = vsel %vm45, %v4136, 0
    %v4167 = vsel %vm45, %v4137, 0
    %v4170 = vsel %vm45, %v4138, 0
    %v4173 = vsel %vm45, %v4139, 0
    %v4176 = vsel %vm45, %v4140, 0
    %v4179 = vsel %vm45, %v4141, 0
    %v4182 = vsel %vm45, %v4142, 0
    %v4185 = vsel %vm45, %v4143, 0
    %v4188 = vsel %vm45, %v4144, 0
    %v4191 = vsel %vm45, %v4145, 0
    %v4194 = vsel %vm45, %v4146, 0
    %v4197 = vsel %vm45, %v4147, 0
    %v4200 = vsel %vm45, %v4148, 0
    %4202 = vmatprep.subr.mxu0 0.0
    %4203 = vmatpush1.msra.mxu0 %v4150
    %4204 = vmatprep.subr.mxu0 0.0
    %4205 = vmatpush1.msra.mxu0 %v4151
    %4206 = vmatprep.subr.mxu0 0.0
    %4207 = vmatpush1.msra.mxu0 %v4152
    %4208 = vmatprep.subr.mxu0 0.0
    %4209 = vmatpush1.msra.mxu0 %v4153
    %4210 = vmatprep.subr.mxu0 0.0
    %4211 = vmatpush1.msra.mxu0 0.0
    %4212 = vmatprep.subr.mxu0 0.0
    %4213 = vmatpush1.msra.mxu0 0.0
    %4214 = vmatprep.subr.mxu0 0.0
    %4215 = vmatpush1.msra.mxu0 0.0
    %4216 = vmatprep.subr.mxu0 0.0
    %4217 = vmatpush1.msra.mxu0 0.0
    %4218 = vmatprep.subr.mxu0 0.0
    %4219 = vmatpush1.msra.mxu0 0.0
    %4220 = vmatprep.subr.mxu0 0.0
    %4221 = vmatpush1.msra.mxu0 0.0
    %4222 = vmatprep.subr.mxu0 0.0
    %4223 = vmatpush1.msra.mxu0 0.0
    %4224 = vmatprep.subr.mxu0 0.0
    %4225 = vmatpush1.msra.mxu0 0.0
    %4226 = vmatprep.subr.mxu0 0.0
    %4227 = vmatpush1.msra.mxu0 0.0
    %4228 = vmatprep.subr.mxu0 0.0
    %4229 = vmatpush1.msra.mxu0 0.0
    %4230 = vmatprep.subr.mxu0 0.0
    %4231 = vmatpush1.msra.mxu0 0.0
    %4232 = vmatprep.subr.mxu0 0.0
    %4233 = vmatpush1.msra.mxu0 0.0
    %4234 = vmatprep.subr.mxu0 0.0
    %4235 = vmatpush1.msra.mxu0 0.0
    %4236 = vmatprep.subr.mxu0 0.0
    %4237 = vmatpush1.msra.mxu0 0.0
    %4238 = vmatprep.subr.mxu0 0.0
    %4239 = vmatpush1.msra.mxu0 0.0
    %4240 = vmatprep.subr.mxu0 0.0
    %4241 = vmatpush1.msra.mxu0 0.0
    %4242 = vmatprep.subr.mxu0 0.0
    %4243 = vmatpush1.msra.mxu0 0.0
    %4244 = vmatprep.subr.mxu0 0.0
    %4245 = vmatpush1.msra.mxu0 0.0
    %4246 = vmatprep.subr.mxu0 0.0
    %4247 = vmatpush1.msra.mxu0 0.0
    %4248 = vmatprep.subr.mxu0 0.0
    %4249 = vmatpush1.msra.mxu0 0.0
    %4250 = vmatprep.subr.mxu0 0.0
    %4251 = vmatpush1.msra.mxu0 0.0
    %4252 = vmatprep.subr.mxu0 0.0
    %4253 = vmatpush1.msra.mxu0 0.0
    %4254 = vmatprep.subr.mxu0 0.0
    %4255 = vmatpush1.msra.mxu0 0.0
    %4256 = vmatprep.subr.mxu0 0.0
    %4257 = vmatpush1.msra.mxu0 0.0
    %4258 = vmatprep.subr.mxu0 0.0
    %4259 = vmatpush1.msra.mxu0 0.0
    %4260 = vmatprep.subr.mxu0 0.0
    %4261 = vmatpush1.msra.mxu0 0.0
    %4262 = vmatprep.subr.mxu0 0.0
    %4263 = vmatpush1.msra.mxu0 0.0
    %4264 = vmatprep.subr.mxu0 0.0
    %4265 = vmatpush1.msra.mxu0 0.0
    %4266 = vmatprep.mubr.f32.mxu0 0.0
    %4267 = vmatmul.mubr.f32.gmra.mrb[0].mxu0 %v4155
    %v4268 = vpop.f32.mrb[0].mxu0
    %v4269 = vadd.f32 0.0, %v4268
    %v4270 = vpop.f32.mrb[0].mxu0
    %4271 = vmatprep.mubr.f32.mxu0 0.0
    %4272 = vmatmul.mubr.f32.gmra.mrb[0].mxu0 %v4158
    %v4273 = vpop.f32.mrb[0].mxu0
    %v4274 = vadd.f32 0.0, %v4273
    %v4275 = vpop.f32.mrb[0].mxu0
    %4276 = vmatprep.mubr.f32.mxu0 0.0
    %4277 = vmatmul.mubr.f32.gmra.mrb[0].mxu0 %v4161
    %v4278 = vpop.f32.mrb[0].mxu0
    %v4279 = vadd.f32 0.0, %v4278
    %v4280 = vpop.f32.mrb[0].mxu0
    %4281 = vmatprep.mubr.f32.mxu0 0.0
    %4282 = vmatmul.mubr.f32.gmra.mrb[0].mxu0 %v4164
    %v4283 = vpop.f32.mrb[0].mxu0
    %v4284 = vadd.f32 0.0, %v4283
    %v4285 = vpop.f32.mrb[0].mxu0
    %4286 = vmatprep.mubr.f32.mxu0 0.0
    %4287 = vmatmul.mubr.f32.gmra.mrb[0].mxu0 %v4167
    %v4288 = vpop.f32.mrb[0].mxu0
    %v4289 = vadd.f32 0.0, %v4288
    %v4290 = vpop.f32.mrb[0].mxu0
    %4291 = vmatprep.mubr.f32.mxu0 0.0
    %4292 = vmatmul.mubr.f32.gmra.mrb[0].mxu0 %v4170
    %v4293 = vpop.f32.mrb[0].mxu0
    %v4294 = vadd.f32 0.0, %v4293
    %v4295 = vpop.f32.mrb[0].mxu0
    %4296 = vmatprep.mubr.f32.mxu0 0.0
    %4297 = vmatmul.mubr.f32.gmra.mrb[0].mxu0 %v4173
    %v4298 = vpop.f32.mrb[0].mxu0
    %v4299 = vadd.f32 0.0, %v4298
    %v4300 = vpop.f32.mrb[0].mxu0
    %4301 = vmatprep.mubr.f32.mxu0 0.0
    %4302 = vmatmul.mubr.f32.gmra.mrb[0].mxu0 %v4176
    %v4303 = vpop.f32.mrb[0].mxu0
    %v4304 = vadd.f32 0.0, %v4303
    %v4305 = vpop.f32.mrb[0].mxu0
    %4306 = vmatprep.mubr.f32.mxu0 0.0
    %4307 = vmatmul.mubr.f32.gmra.mrb[0].mxu0 %v4179
    %v4308 = vpop.f32.mrb[0].mxu0
    %v4309 = vadd.f32 0.0, %v4308
    %v4310 = vpop.f32.mrb[0].mxu0
    %4311 = vmatprep.mubr.f32.mxu0 0.0
    %4312 = vmatmul.mubr.f32.gmra.mrb[0].mxu0 %v4182
    %v4313 = vpop.f32.mrb[0].mxu0
    %v4314 = vadd.f32 0.0, %v4313
    %v4315 = vpop.f32.mrb[0].mxu0
    %4316 = vmatprep.mubr.f32.mxu0 0.0
    %4317 = vmatmul.mubr.f32.gmra.mrb[0].mxu0 %v4185
    %v4318 = vpop.f32.mrb[0].mxu0
    %v4319 = vadd.f32 0.0, %v4318
    %v4320 = vpop.f32.mrb[0].mxu0
    %4321 = vmatprep.mubr.f32.mxu0 0.0
    %4322 = vmatmul.mubr.f32.gmra.mrb[0].mxu0 %v4188
    %v4323 = vpop.f32.mrb[0].mxu0
    %v4324 = vadd.f32 0.0, %v4323
    %v4325 = vpop.f32.mrb[0].mxu0
    %4326 = vmatprep.mubr.f32.mxu0 0.0
    %4327 = vmatmul.mubr.f32.gmra.mrb[0].mxu0 %v4191
    %v4328 = vpop.f32.mrb[0].mxu0
    %v4329 = vadd.f32 0.0, %v4328
    %v4330 = vpop.f32.mrb[0].mxu0
    %4331 = vmatprep.mubr.f32.mxu0 0.0
    %4332 = vmatmul.mubr.f32.gmra.mrb[0].mxu0 %v4194
    %v4333 = vpop.f32.mrb[0].mxu0
    %v4334 = vadd.f32 0.0, %v4333
    %v4335 = vpop.f32.mrb[0].mxu0
    %4336 = vmatprep.mubr.f32.mxu0 0.0
    %4337 = vmatmul.mubr.f32.gmra.mrb[0].mxu0 %v4197
    %v4338 = vpop.f32.mrb[0].mxu0
    %v4339 = vadd.f32 0.0, %v4338
    %v4340 = vpop.f32.mrb[0].mxu0
    %4341 = vmatprep.mubr.f32.mxu0 0.0
    %4342 = vmatmul.mubr.f32.gmra.mrb[0].mxu0 %v4200
    %v4343 = vpop.f32.mrb[0].mxu0
    %v4344 = vadd.f32 0.0, %v4343
    %v4345 = vpop.f32.mrb[0].mxu0
    %4346 = vdwg.mxu0
    %v4347 = vadd.f32 %v4055, %v4269
    %v4348 = vadd.f32 %v4060, %v4274
    %v4349 = vadd.f32 %v4065, %v4279
    %v4350 = vadd.f32 %v4070, %v4284
    %v4351 = vadd.f32 %v4075, %v4289
    %v4352 = vadd.f32 %v4080, %v4294
    %v4353 = vadd.f32 %v4085, %v4299
    %v4354 = vadd.f32 %v4090, %v4304
    %v4355 = vadd.f32 %v4095, %v4309
    %v4356 = vadd.f32 %v4100, %v4314
    %v4357 = vadd.f32 %v4105, %v4319
    %v4358 = vadd.f32 %v4110, %v4324
    %v4359 = vadd.f32 %v4115, %v4329
    %v4360 = vadd.f32 %v4120, %v4334
    %v4361 = vadd.f32 %v4125, %v4339
    %v4362 = vadd.f32 %v4130, %v4344
    %v4363 = vld [vmem:[#allocation2 + $0xa] sm:$0xff]
    %v4364 = vld [vmem:[#allocation2 + $0x12] sm:$0xff]
    %v4365 = vld [vmem:[#allocation2 + $0x1a] sm:$0xff]
    %v4366 = vld [vmem:[#allocation2 + $0x22] sm:$0xff]
    %v4367 = vld [vmem:[#allocation2 + $0x2a] sm:$0xff]
    %v4368 = vld [vmem:[#allocation2 + $0x32] sm:$0xff]
    %v4369 = vld [vmem:[#allocation2 + $0x3a] sm:$0xff]
    %v4370 = vld [vmem:[#allocation2 + $0x42] sm:$0xff]
    %v4371 = vld [vmem:[#allocation2 + $0x5a] sm:$0xff]
    %v4372 = vld [vmem:[#allocation2 + $0x62] sm:$0xff]
    %v4373 = vld [vmem:[#allocation2 + $0x6a] sm:$0xff]
    %v4374 = vld [vmem:[#allocation2 + $0x72] sm:$0xff]
    %v4375 = vld [vmem:[#allocation2 + $0x7a] sm:$0xff]
    %v4376 = vld [vmem:[#allocation2 + $0x82] sm:$0xff]
    %v4377 = vld [vmem:[#allocation2 + $0x8a] sm:$0xff]
    %v4378 = vld [vmem:[#allocation2 + $0x92] sm:$0xff]
    %s4379 = scalar_lea.vmem [#allocation5], 256
    %v4380 = vld [vmem:[%s4379] sm:$0xff]
    %v4381 = vld [vmem:[%s4379 + $0x8] sm:$0xff]
    %v4382 = vld [vmem:[%s4379 + $0x10] sm:$0xff]
    %v4383 = vld [vmem:[%s4379 + $0x18] sm:$0xff]
    %v4385 = vsel %vm45, %v4363, 0
    %v4388 = vsel %vm45, %v4364, 0
    %v4391 = vsel %vm45, %v4365, 0
    %v4394 = vsel %vm45, %v4366, 0
    %v4397 = vsel %vm45, %v4367, 0
    %v4400 = vsel %vm45, %v4368, 0
    %v4403 = vsel %vm45, %v4369, 0
    %v4406 = vsel %vm45, %v4370, 0
    %v4409 = vsel %vm45, %v4371, 0
    %v4412 = vsel %vm45, %v4372, 0
    %v4415 = vsel %vm45, %v4373, 0
    %v4418 = vsel %vm45, %v4374, 0
    %v4421 = vsel %vm45, %v4375, 0
    %v4424 = vsel %vm45, %v4376, 0
    %v4427 = vsel %vm45, %v4377, 0
    %v4430 = vsel %vm45, %v4378, 0
    %4432 = vmatprep.subr.mxu0 0.0
    %4433 = vmatpush1.msra.mxu0 %v4380
    %4434 = vmatprep.subr.mxu0 0.0
    %4435 = vmatpush1.msra.mxu0 %v4381
    %4436 = vmatprep.subr.mxu0 0.0
    %4437 = vmatpush1.msra.mxu0 %v4382
    %4438 = vmatprep.subr.mxu0 0.0
    %4439 = vmatpush1.msra.mxu0 %v4383
    %4440 = vmatprep.subr.mxu0 0.0
    %4441 = vmatpush1.msra.mxu0 0.0
    %4442 = vmatprep.subr.mxu0 0.0
    %4443 = vmatpush1.msra.mxu0 0.0
    %4444 = vmatprep.subr.mxu0 0.0
    %4445 = vmatpush1.msra.mxu0 0.0
    %4446 = vmatprep.subr.mxu0 0.0
    %4447 = vmatpush1.msra.mxu0 0.0
    %4448 = vmatprep.subr.mxu0 0.0
    %4449 = vmatpush1.msra.mxu0 0.0
    %4450 = vmatprep.subr.mxu0 0.0
    %4451 = vmatpush1.msra.mxu0 0.0
    %4452 = vmatprep.subr.mxu0 0.0
    %4453 = vmatpush1.msra.mxu0 0.0
    %4454 = vmatprep.subr.mxu0 0.0
    %4455 = vmatpush1.msra.mxu0 0.0
    %4456 = vmatprep.subr.mxu0 0.0
    %4457 = vmatpush1.msra.mxu0 0.0
    %4458 = vmatprep.subr.mxu0 0.0
    %4459 = vmatpush1.msra.mxu0 0.0
    %4460 = vmatprep.subr.mxu0 0.0
    %4461 = vmatpush1.msra.mxu0 0.0
    %4462 = vmatprep.subr.mxu0 0.0
    %4463 = vmatpush1.msra.mxu0 0.0
    %4464 = vmatprep.subr.mxu0 0.0
    %4465 = vmatpush1.msra.mxu0 0.0
    %4466 = vmatprep.subr.mxu0 0.0
    %4467 = vmatpush1.msra.mxu0 0.0
    %4468 = vmatprep.subr.mxu0 0.0
    %4469 = vmatpush1.msra.mxu0 0.0
    %4470 = vmatprep.subr.mxu0 0.0
    %4471 = vmatpush1.msra.mxu0 0.0
    %4472 = vmatprep.subr.mxu0 0.0
    %4473 = vmatpush1.msra.mxu0 0.0
    %4474 = vmatprep.subr.mxu0 0.0
    %4475 = vmatpush1.msra.mxu0 0.0
    %4476 = vmatprep.subr.mxu0 0.0
    %4477 = vmatpush1.msra.mxu0 0.0
    %4478 = vmatprep.subr.mxu0 0.0
    %4479 = vmatpush1.msra.mxu0 0.0
    %4480 = vmatprep.subr.mxu0 0.0
    %4481 = vmatpush1.msra.mxu0 0.0
    %4482 = vmatprep.subr.mxu0 0.0
    %4483 = vmatpush1.msra.mxu0 0.0
    %4484 = vmatprep.subr.mxu0 0.0
    %4485 = vmatpush1.msra.mxu0 0.0
    %4486 = vmatprep.subr.mxu0 0.0
    %4487 = vmatpush1.msra.mxu0 0.0
    %4488 = vmatprep.subr.mxu0 0.0
    %4489 = vmatpush1.msra.mxu0 0.0
    %4490 = vmatprep.subr.mxu0 0.0
    %4491 = vmatpush1.msra.mxu0 0.0
    %4492 = vmatprep.subr.mxu0 0.0
    %4493 = vmatpush1.msra.mxu0 0.0
    %4494 = vmatprep.subr.mxu0 0.0
    %4495 = vmatpush1.msra.mxu0 0.0
    %4496 = vmatprep.mubr.f32.mxu0 0.0
    %4497 = vmatmul.mubr.f32.gmra.mrb[0].mxu0 %v4385
    %v4498 = vpop.f32.mrb[0].mxu0
    %v4499 = vadd.f32 0.0, %v4498
    %v4500 = vpop.f32.mrb[0].mxu0
    %4501 = vmatprep.mubr.f32.mxu0 0.0
    %4502 = vmatmul.mubr.f32.gmra.mrb[0].mxu0 %v4388
    %v4503 = vpop.f32.mrb[0].mxu0
    %v4504 = vadd.f32 0.0, %v4503
    %v4505 = vpop.f32.mrb[0].mxu0
    %4506 = vmatprep.mubr.f32.mxu0 0.0
    %4507 = vmatmul.mubr.f32.gmra.mrb[0].mxu0 %v4391
    %v4508 = vpop.f32.mrb[0].mxu0
    %v4509 = vadd.f32 0.0, %v4508
    %v4510 = vpop.f32.mrb[0].mxu0
    %4511 = vmatprep.mubr.f32.mxu0 0.0
    %4512 = vmatmul.mubr.f32.gmra.mrb[0].mxu0 %v4394
    %v4513 = vpop.f32.mrb[0].mxu0
    %v4514 = vadd.f32 0.0, %v4513
    %v4515 = vpop.f32.mrb[0].mxu0
    %4516 = vmatprep.mubr.f32.mxu0 0.0
    %4517 = vmatmul.mubr.f32.gmra.mrb[0].mxu0 %v4397
    %v4518 = vpop.f32.mrb[0].mxu0
    %v4519 = vadd.f32 0.0, %v4518
    %v4520 = vpop.f32.mrb[0].mxu0
    %4521 = vmatprep.mubr.f32.mxu0 0.0
    %4522 = vmatmul.mubr.f32.gmra.mrb[0].mxu0 %v4400
    %v4523 = vpop.f32.mrb[0].mxu0
    %v4524 = vadd.f32 0.0, %v4523
    %v4525 = vpop.f32.mrb[0].mxu0
    %4526 = vmatprep.mubr.f32.mxu0 0.0
    %4527 = vmatmul.mubr.f32.gmra.mrb[0].mxu0 %v4403
    %v4528 = vpop.f32.mrb[0].mxu0
    %v4529 = vadd.f32 0.0, %v4528
    %v4530 = vpop.f32.mrb[0].mxu0
    %4531 = vmatprep.mubr.f32.mxu0 0.0
    %4532 = vmatmul.mubr.f32.gmra.mrb[0].mxu0 %v4406
    %v4533 = vpop.f32.mrb[0].mxu0
    %v4534 = vadd.f32 0.0, %v4533
    %v4535 = vpop.f32.mrb[0].mxu0
    %4536 = vmatprep.mubr.f32.mxu0 0.0
    %4537 = vmatmul.mubr.f32.gmra.mrb[0].mxu0 %v4409
    %v4538 = vpop.f32.mrb[0].mxu0
    %v4539 = vadd.f32 0.0, %v4538
    %v4540 = vpop.f32.mrb[0].mxu0
    %4541 = vmatprep.mubr.f32.mxu0 0.0
    %4542 = vmatmul.mubr.f32.gmra.mrb[0].mxu0 %v4412
    %v4543 = vpop.f32.mrb[0].mxu0
    %v4544 = vadd.f32 0.0, %v4543
    %v4545 = vpop.f32.mrb[0].mxu0
    %4546 = vmatprep.mubr.f32.mxu0 0.0
    %4547 = vmatmul.mubr.f32.gmra.mrb[0].mxu0 %v4415
    %v4548 = vpop.f32.mrb[0].mxu0
    %v4549 = vadd.f32 0.0, %v4548
    %v4550 = vpop.f32.mrb[0].mxu0
    %4551 = vmatprep.mubr.f32.mxu0 0.0
    %4552 = vmatmul.mubr.f32.gmra.mrb[0].mxu0 %v4418
    %v4553 = vpop.f32.mrb[0].mxu0
    %v4554 = vadd.f32 0.0, %v4553
    %v4555 = vpop.f32.mrb[0].mxu0
    %4556 = vmatprep.mubr.f32.mxu0 0.0
    %4557 = vmatmul.mubr.f32.gmra.mrb[0].mxu0 %v4421
    %v4558 = vpop.f32.mrb[0].mxu0
    %v4559 = vadd.f32 0.0, %v4558
    %v4560 = vpop.f32.mrb[0].mxu0
    %4561 = vmatprep.mubr.f32.mxu0 0.0
    %4562 = vmatmul.mubr.f32.gmra.mrb[0].mxu0 %v4424
    %v4563 = vpop.f32.mrb[0].mxu0
    %v4564 = vadd.f32 0.0, %v4563
    %v4565 = vpop.f32.mrb[0].mxu0
    %4566 = vmatprep.mubr.f32.mxu0 0.0
    %4567 = vmatmul.mubr.f32.gmra.mrb[0].mxu0 %v4427
    %v4568 = vpop.f32.mrb[0].mxu0
    %v4569 = vadd.f32 0.0, %v4568
    %v4570 = vpop.f32.mrb[0].mxu0
    %4571 = vmatprep.mubr.f32.mxu0 0.0
    %4572 = vmatmul.mubr.f32.gmra.mrb[0].mxu0 %v4430
    %v4573 = vpop.f32.mrb[0].mxu0
    %v4574 = vadd.f32 0.0, %v4573
    %v4575 = vpop.f32.mrb[0].mxu0
    %4576 = vdwg.mxu0
    %v4577 = vadd.f32 %v4347, %v4499
    %v4578 = vadd.f32 %v4348, %v4504
    %v4579 = vadd.f32 %v4349, %v4509
    %v4580 = vadd.f32 %v4350, %v4514
    %v4581 = vadd.f32 %v4351, %v4519
    %v4582 = vadd.f32 %v4352, %v4524
    %v4583 = vadd.f32 %v4353, %v4529
    %v4584 = vadd.f32 %v4354, %v4534
    %v4585 = vadd.f32 %v4355, %v4539
    %v4586 = vadd.f32 %v4356, %v4544
    %v4587 = vadd.f32 %v4357, %v4549
    %v4588 = vadd.f32 %v4358, %v4554
    %v4589 = vadd.f32 %v4359, %v4559
    %v4590 = vadd.f32 %v4360, %v4564
    %v4591 = vadd.f32 %v4361, %v4569
    %v4592 = vadd.f32 %v4362, %v4574
    %v4593 = vld [vmem:[#allocation2 + $0xc] sm:$0xff]
    %v4594 = vld [vmem:[#allocation2 + $0x14] sm:$0xff]
    %v4595 = vld [vmem:[#allocation2 + $0x1c] sm:$0xff]
    %v4596 = vld [vmem:[#allocation2 + $0x24] sm:$0xff]
    %v4597 = vld [vmem:[#allocation2 + $0x2c] sm:$0xff]
    %v4598 = vld [vmem:[#allocation2 + $0x34] sm:$0xff]
    %v4599 = vld [vmem:[#allocation2 + $0x3c] sm:$0xff]
    %v4600 = vld [vmem:[#allocation2 + $0x44] sm:$0xff]
    %v4601 = vld [vmem:[#allocation2 + $0x5c] sm:$0xff]
    %v4602 = vld [vmem:[#allocation2 + $0x64] sm:$0xff]
    %v4603 = vld [vmem:[#allocation2 + $0x6c] sm:$0xff]
    %v4604 = vld [vmem:[#allocation2 + $0x74] sm:$0xff]
    %v4605 = vld [vmem:[#allocation2 + $0x7c] sm:$0xff]
    %v4606 = vld [vmem:[#allocation2 + $0x84] sm:$0xff]
    %v4607 = vld [vmem:[#allocation2 + $0x8c] sm:$0xff]
    %v4608 = vld [vmem:[#allocation2 + $0x94] sm:$0xff]
    %s4609 = scalar_lea.vmem [#allocation5], 288
    %v4610 = vld [vmem:[%s4609] sm:$0xff]
    %v4611 = vld [vmem:[%s4609 + $0x8] sm:$0xff]
    %v4612 = vld [vmem:[%s4609 + $0x10] sm:$0xff]
    %v4613 = vld [vmem:[%s4609 + $0x18] sm:$0xff]
    %v4615 = vsel %vm45, %v4593, 0
    %v4618 = vsel %vm45, %v4594, 0
    %v4621 = vsel %vm45, %v4595, 0
    %v4624 = vsel %vm45, %v4596, 0
    %v4627 = vsel %vm45, %v4597, 0
    %v4630 = vsel %vm45, %v4598, 0
    %v4633 = vsel %vm45, %v4599, 0
    %v4636 = vsel %vm45, %v4600, 0
    %v4639 = vsel %vm45, %v4601, 0
    %v4642 = vsel %vm45, %v4602, 0
    %v4645 = vsel %vm45, %v4603, 0
    %v4648 = vsel %vm45, %v4604, 0
    %v4651 = vsel %vm45, %v4605, 0
    %v4654 = vsel %vm45, %v4606, 0
    %v4657 = vsel %vm45, %v4607, 0
    %v4660 = vsel %vm45, %v4608, 0
    %4662 = vmatprep.subr.mxu0 0.0
    %4663 = vmatpush1.msra.mxu0 %v4610
    %4664 = vmatprep.subr.mxu0 0.0
    %4665 = vmatpush1.msra.mxu0 %v4611
    %4666 = vmatprep.subr.mxu0 0.0
    %4667 = vmatpush1.msra.mxu0 %v4612
    %4668 = vmatprep.subr.mxu0 0.0
    %4669 = vmatpush1.msra.mxu0 %v4613
    %4670 = vmatprep.subr.mxu0 0.0
    %4671 = vmatpush1.msra.mxu0 0.0
    %4672 = vmatprep.subr.mxu0 0.0
    %4673 = vmatpush1.msra.mxu0 0.0
    %4674 = vmatprep.subr.mxu0 0.0
    %4675 = vmatpush1.msra.mxu0 0.0
    %4676 = vmatprep.subr.mxu0 0.0
    %4677 = vmatpush1.msra.mxu0 0.0
    %4678 = vmatprep.subr.mxu0 0.0
    %4679 = vmatpush1.msra.mxu0 0.0
    %4680 = vmatprep.subr.mxu0 0.0
    %4681 = vmatpush1.msra.mxu0 0.0
    %4682 = vmatprep.subr.mxu0 0.0
    %4683 = vmatpush1.msra.mxu0 0.0
    %4684 = vmatprep.subr.mxu0 0.0
    %4685 = vmatpush1.msra.mxu0 0.0
    %4686 = vmatprep.subr.mxu0 0.0
    %4687 = vmatpush1.msra.mxu0 0.0
    %4688 = vmatprep.subr.mxu0 0.0
    %4689 = vmatpush1.msra.mxu0 0.0
    %4690 = vmatprep.subr.mxu0 0.0
    %4691 = vmatpush1.msra.mxu0 0.0
    %4692 = vmatprep.subr.mxu0 0.0
    %4693 = vmatpush1.msra.mxu0 0.0
    %4694 = vmatprep.subr.mxu0 0.0
    %4695 = vmatpush1.msra.mxu0 0.0
    %4696 = vmatprep.subr.mxu0 0.0
    %4697 = vmatpush1.msra.mxu0 0.0
    %4698 = vmatprep.subr.mxu0 0.0
    %4699 = vmatpush1.msra.mxu0 0.0
    %4700 = vmatprep.subr.mxu0 0.0
    %4701 = vmatpush1.msra.mxu0 0.0
    %4702 = vmatprep.subr.mxu0 0.0
    %4703 = vmatpush1.msra.mxu0 0.0
    %4704 = vmatprep.subr.mxu0 0.0
    %4705 = vmatpush1.msra.mxu0 0.0
    %4706 = vmatprep.subr.mxu0 0.0
    %4707 = vmatpush1.msra.mxu0 0.0
    %4708 = vmatprep.subr.mxu0 0.0
    %4709 = vmatpush1.msra.mxu0 0.0
    %4710 = vmatprep.subr.mxu0 0.0
    %4711 = vmatpush1.msra.mxu0 0.0
    %4712 = vmatprep.subr.mxu0 0.0
    %4713 = vmatpush1.msra.mxu0 0.0
    %4714 = vmatprep.subr.mxu0 0.0
    %4715 = vmatpush1.msra.mxu0 0.0
    %4716 = vmatprep.subr.mxu0 0.0
    %4717 = vmatpush1.msra.mxu0 0.0
    %4718 = vmatprep.subr.mxu0 0.0
    %4719 = vmatpush1.msra.mxu0 0.0
    %4720 = vmatprep.subr.mxu0 0.0
    %4721 = vmatpush1.msra.mxu0 0.0
    %4722 = vmatprep.subr.mxu0 0.0
    %4723 = vmatpush1.msra.mxu0 0.0
    %4724 = vmatprep.subr.mxu0 0.0
    %4725 = vmatpush1.msra.mxu0 0.0
    %4726 = vmatprep.mubr.f32.mxu0 0.0
    %4727 = vmatmul.mubr.f32.gmra.mrb[0].mxu0 %v4615
    %v4728 = vpop.f32.mrb[0].mxu0
    %v4729 = vadd.f32 0.0, %v4728
    %v4730 = vpop.f32.mrb[0].mxu0
    %4731 = vmatprep.mubr.f32.mxu0 0.0
    %4732 = vmatmul.mubr.f32.gmra.mrb[0].mxu0 %v4618
    %v4733 = vpop.f32.mrb[0].mxu0
    %v4734 = vadd.f32 0.0, %v4733
    %v4735 = vpop.f32.mrb[0].mxu0
    %4736 = vmatprep.mubr.f32.mxu0 0.0
    %4737 = vmatmul.mubr.f32.gmra.mrb[0].mxu0 %v4621
    %v4738 = vpop.f32.mrb[0].mxu0
    %v4739 = vadd.f32 0.0, %v4738
    %v4740 = vpop.f32.mrb[0].mxu0
    %4741 = vmatprep.mubr.f32.mxu0 0.0
    %4742 = vmatmul.mubr.f32.gmra.mrb[0].mxu0 %v4624
    %v4743 = vpop.f32.mrb[0].mxu0
    %v4744 = vadd.f32 0.0, %v4743
    %v4745 = vpop.f32.mrb[0].mxu0
    %4746 = vmatprep.mubr.f32.mxu0 0.0
    %4747 = vmatmul.mubr.f32.gmra.mrb[0].mxu0 %v4627
    %v4748 = vpop.f32.mrb[0].mxu0
    %v4749 = vadd.f32 0.0, %v4748
    %v4750 = vpop.f32.mrb[0].mxu0
    %4751 = vmatprep.mubr.f32.mxu0 0.0
    %4752 = vmatmul.mubr.f32.gmra.mrb[0].mxu0 %v4630
    %v4753 = vpop.f32.mrb[0].mxu0
    %v4754 = vadd.f32 0.0, %v4753
    %v4755 = vpop.f32.mrb[0].mxu0
    %4756 = vmatprep.mubr.f32.mxu0 0.0
    %4757 = vmatmul.mubr.f32.gmra.mrb[0].mxu0 %v4633
    %v4758 = vpop.f32.mrb[0].mxu0
    %v4759 = vadd.f32 0.0, %v4758
    %v4760 = vpop.f32.mrb[0].mxu0
    %4761 = vmatprep.mubr.f32.mxu0 0.0
    %4762 = vmatmul.mubr.f32.gmra.mrb[0].mxu0 %v4636
    %v4763 = vpop.f32.mrb[0].mxu0
    %v4764 = vadd.f32 0.0, %v4763
    %v4765 = vpop.f32.mrb[0].mxu0
    %4766 = vmatprep.mubr.f32.mxu0 0.0
    %4767 = vmatmul.mubr.f32.gmra.mrb[0].mxu0 %v4639
    %v4768 = vpop.f32.mrb[0].mxu0
    %v4769 = vadd.f32 0.0, %v4768
    %v4770 = vpop.f32.mrb[0].mxu0
    %4771 = vmatprep.mubr.f32.mxu0 0.0
    %4772 = vmatmul.mubr.f32.gmra.mrb[0].mxu0 %v4642
    %v4773 = vpop.f32.mrb[0].mxu0
    %v4774 = vadd.f32 0.0, %v4773
    %v4775 = vpop.f32.mrb[0].mxu0
    %4776 = vmatprep.mubr.f32.mxu0 0.0
    %4777 = vmatmul.mubr.f32.gmra.mrb[0].mxu0 %v4645
    %v4778 = vpop.f32.mrb[0].mxu0
    %v4779 = vadd.f32 0.0, %v4778
    %v4780 = vpop.f32.mrb[0].mxu0
    %4781 = vmatprep.mubr.f32.mxu0 0.0
    %4782 = vmatmul.mubr.f32.gmra.mrb[0].mxu0 %v4648
    %v4783 = vpop.f32.mrb[0].mxu0
    %v4784 = vadd.f32 0.0, %v4783
    %v4785 = vpop.f32.mrb[0].mxu0
    %4786 = vmatprep.mubr.f32.mxu0 0.0
    %4787 = vmatmul.mubr.f32.gmra.mrb[0].mxu0 %v4651
    %v4788 = vpop.f32.mrb[0].mxu0
    %v4789 = vadd.f32 0.0, %v4788
    %v4790 = vpop.f32.mrb[0].mxu0
    %4791 = vmatprep.mubr.f32.mxu0 0.0
    %4792 = vmatmul.mubr.f32.gmra.mrb[0].mxu0 %v4654
    %v4793 = vpop.f32.mrb[0].mxu0
    %v4794 = vadd.f32 0.0, %v4793
    %v4795 = vpop.f32.mrb[0].mxu0
    %4796 = vmatprep.mubr.f32.mxu0 0.0
    %4797 = vmatmul.mubr.f32.gmra.mrb[0].mxu0 %v4657
    %v4798 = vpop.f32.mrb[0].mxu0
    %v4799 = vadd.f32 0.0, %v4798
    %v4800 = vpop.f32.mrb[0].mxu0
    %4801 = vmatprep.mubr.f32.mxu0 0.0
    %4802 = vmatmul.mubr.f32.gmra.mrb[0].mxu0 %v4660
    %v4803 = vpop.f32.mrb[0].mxu0
    %v4804 = vadd.f32 0.0, %v4803
    %v4805 = vpop.f32.mrb[0].mxu0
    %4806 = vdwg.mxu0
    %v4807 = vadd.f32 %v4577, %v4729
    %v4808 = vadd.f32 %v4578, %v4734
    %v4809 = vadd.f32 %v4579, %v4739
    %v4810 = vadd.f32 %v4580, %v4744
    %v4811 = vadd.f32 %v4581, %v4749
    %v4812 = vadd.f32 %v4582, %v4754
    %v4813 = vadd.f32 %v4583, %v4759
    %v4814 = vadd.f32 %v4584, %v4764
    %v4815 = vadd.f32 %v4585, %v4769
    %v4816 = vadd.f32 %v4586, %v4774
    %v4817 = vadd.f32 %v4587, %v4779
    %v4818 = vadd.f32 %v4588, %v4784
    %v4819 = vadd.f32 %v4589, %v4789
    %v4820 = vadd.f32 %v4590, %v4794
    %v4821 = vadd.f32 %v4591, %v4799
    %v4822 = vadd.f32 %v4592, %v4804
    %v4823 = vlaneseq
    %v4824 = vshrl.u32 %v4823, 7
    %v4825 = vsub.s32 3, %v4824
    %v4826 = vrot.slane %v2462, %v4825
    %v4827 = vadd.f32 %v4807, %v4826
    %v4828 = vadd.f32 %v4808, %v4826
    %v4829 = vadd.f32 %v4809, %v4826
    %v4830 = vadd.f32 %v4810, %v4826
    %v4831 = vadd.f32 %v4811, %v4826
    %v4832 = vadd.f32 %v4812, %v4826
    %v4833 = vadd.f32 %v4813, %v4826
    %v4834 = vadd.f32 %v4814, %v4826
    %v4835 = vadd.f32 %v4815, %v4826
    %v4836 = vadd.f32 %v4816, %v4826
    %v4837 = vadd.f32 %v4817, %v4826
    %v4838 = vadd.f32 %v4818, %v4826
    %v4839 = vadd.f32 %v4819, %v4826
    %v4840 = vadd.f32 %v4820, %v4826
    %v4841 = vadd.f32 %v4821, %v4826
    %v4842 = vadd.f32 %v4822, %v4826
    %v4843 = vadd.f32 %v2445, %v4827
    %v4844 = vadd.f32 %v2446, %v4828
    %v4845 = vadd.f32 %v2447, %v4829
    %v4846 = vadd.f32 %v2448, %v4830
    %v4847 = vadd.f32 %v2449, %v4831
    %v4848 = vadd.f32 %v2450, %v4832
    %v4849 = vadd.f32 %v2451, %v4833
    %v4850 = vadd.f32 %v2452, %v4834
    %v4851 = vadd.f32 %v2453, %v4835
    %v4852 = vadd.f32 %v2454, %v4836
    %v4853 = vadd.f32 %v2455, %v4837
    %v4854 = vadd.f32 %v2456, %v4838
    %v4855 = vadd.f32 %v2457, %v4839
    %v4856 = vadd.f32 %v2458, %v4840
    %v4857 = vadd.f32 %v2459, %v4841
    %v4858 = vadd.f32 %v2460, %v4842
    %s4859 = scalar_lea.vmem %s1, 8
    %v4860 = vld [vmem:[%s4859] sm:$0xf]
    %v4861 = vlaneseq
    %v4862 = vshrl.u32 %v4861, 7
    %v4863 = vsub.s32 0, %v4862
    %v4864 = vrot.slane %v4860, %v4863
    %v4865 = vmul.f32 %v4843, %v4864
    %v4866 = vmul.f32 %v4844, %v4864
    %v4867 = vmul.f32 %v4845, %v4864
    %v4868 = vmul.f32 %v4846, %v4864
    %v4869 = vmul.f32 %v4847, %v4864
    %v4870 = vmul.f32 %v4848, %v4864
    %v4871 = vmul.f32 %v4849, %v4864
    %v4872 = vmul.f32 %v4850, %v4864
    %v4873 = vmul.f32 %v4851, %v4864
    %v4874 = vmul.f32 %v4852, %v4864
    %v4875 = vmul.f32 %v4853, %v4864
    %v4876 = vmul.f32 %v4854, %v4864
    %v4877 = vmul.f32 %v4855, %v4864
    %v4878 = vmul.f32 %v4856, %v4864
    %v4879 = vmul.f32 %v4857, %v4864
    %v4880 = vmul.f32 %v4858, %v4864
    %v4881 = vlaneseq
    %v4882 = vshrl.u32 %v4881, 7
    %v4883 = vsub.s32 1, %v4882
    %v4884 = vrot.slane %v4860, %v4883
    %v4885 = vadd.f32 %v4865, %v4884
    %v4886 = vadd.f32 %v4866, %v4884
    %v4887 = vadd.f32 %v4867, %v4884
    %v4888 = vadd.f32 %v4868, %v4884
    %v4889 = vadd.f32 %v4869, %v4884
    %v4890 = vadd.f32 %v4870, %v4884
    %v4891 = vadd.f32 %v4871, %v4884
    %v4892 = vadd.f32 %v4872, %v4884
    %v4893 = vadd.f32 %v4873, %v4884
    %v4894 = vadd.f32 %v4874, %v4884
    %v4895 = vadd.f32 %v4875, %v4884
    %v4896 = vadd.f32 %v4876, %v4884
    %v4897 = vadd.f32 %v4877, %v4884
    %v4898 = vadd.f32 %v4878, %v4884
    %v4899 = vadd.f32 %v4879, %v4884
    %v4900 = vadd.f32 %v4880, %v4884
    %v4901 = vmax.f32 %v4885, 0.0
    %v4902 = vmax.f32 %v4886, 0.0
    %v4903 = vmax.f32 %v4887, 0.0
    %v4904 = vmax.f32 %v4888, 0.0
    %v4905 = vmax.f32 %v4889, 0.0
    %v4906 = vmax.f32 %v4890, 0.0
    %v4907 = vmax.f32 %v4891, 0.0
    %v4908 = vmax.f32 %v4892, 0.0
    %v4909 = vmax.f32 %v4893, 0.0
    %v4910 = vmax.f32 %v4894, 0.0
    %v4911 = vmax.f32 %v4895, 0.0
    %v4912 = vmax.f32 %v4896, 0.0
    %v4913 = vmax.f32 %v4897, 0.0
    %v4914 = vmax.f32 %v4898, 0.0
    %v4915 = vmax.f32 %v4899, 0.0
    %v4916 = vmax.f32 %v4900, 0.0
    %4917 = vst.msk [vmem:[#allocation2 + $0x8] sm:$0xff] %vm45, %v4901
    %4918 = vst.msk [vmem:[#allocation2 + $0x10] sm:$0xff] %vm45, %v4902
    %4919 = vst.msk [vmem:[#allocation2 + $0x18] sm:$0xff] %vm45, %v4903
    %4920 = vst.msk [vmem:[#allocation2 + $0x20] sm:$0xff] %vm45, %v4904
    %4921 = vst.msk [vmem:[#allocation2 + $0x28] sm:$0xff] %vm45, %v4905
    %4922 = vst.msk [vmem:[#allocation2 + $0x30] sm:$0xff] %vm45, %v4906
    %4923 = vst.msk [vmem:[#allocation2 + $0x38] sm:$0xff] %vm45, %v4907
    %4924 = vst.msk [vmem:[#allocation2 + $0x40] sm:$0xff] %vm45, %v4908
    %4925 = vst.msk [vmem:[#allocation2 + $0x58] sm:$0xff] %vm45, %v4909
    %4926 = vst.msk [vmem:[#allocation2 + $0x60] sm:$0xff] %vm45, %v4910
    %4927 = vst.msk [vmem:[#allocation2 + $0x68] sm:$0xff] %vm45, %v4911
    %4928 = vst.msk [vmem:[#allocation2 + $0x70] sm:$0xff] %vm45, %v4912
    %4929 = vst.msk [vmem:[#allocation2 + $0x78] sm:$0xff] %vm45, %v4913
    %4930 = vst.msk [vmem:[#allocation2 + $0x80] sm:$0xff] %vm45, %v4914
    %4931 = vst.msk [vmem:[#allocation2 + $0x88] sm:$0xff] %vm45, %v4915
    %4932 = vst.msk [vmem:[#allocation2 + $0x90] sm:$0xff] %vm45, %v4916
    %v4933 = vld [vmem:[#allocation2 + $0x4] sm:$0xff]
    %v4934 = vld [vmem:[#allocation2 + $0xc] sm:$0xff]
    %v4935 = vld [vmem:[#allocation2 + $0x14] sm:$0xff]
    %v4936 = vld [vmem:[#allocation2 + $0x1c] sm:$0xff]
    %v4937 = vld [vmem:[#allocation2 + $0x24] sm:$0xff]
    %v4938 = vld [vmem:[#allocation2 + $0x2c] sm:$0xff]
    %v4939 = vld [vmem:[#allocation2 + $0x34] sm:$0xff]
    %v4940 = vld [vmem:[#allocation2 + $0x3c] sm:$0xff]
    %v4941 = vld [vmem:[#allocation2 + $0x54] sm:$0xff]
    %v4942 = vld [vmem:[#allocation2 + $0x5c] sm:$0xff]
    %v4943 = vld [vmem:[#allocation2 + $0x64] sm:$0xff]
    %v4944 = vld [vmem:[#allocation2 + $0x6c] sm:$0xff]
    %v4945 = vld [vmem:[#allocation2 + $0x74] sm:$0xff]
    %v4946 = vld [vmem:[#allocation2 + $0x7c] sm:$0xff]
    %v4947 = vld [vmem:[#allocation2 + $0x84] sm:$0xff]
    %v4948 = vld [vmem:[#allocation2 + $0x8c] sm:$0xff]
    %s4949 = scalar_lea.vmem [#allocation3], 320
    %v4950 = vld [vmem:[%s4949] sm:$0xff]
    %v4951 = vld [vmem:[%s4949 + $0x8] sm:$0xff]
    %v4952 = vld [vmem:[%s4949 + $0x10] sm:$0xff]
    %v4953 = vld [vmem:[%s4949 + $0x18] sm:$0xff]
    %v4954 = vld [vmem:[#allocation2 + $0x6] sm:$0xff]
    %v4955 = vld [vmem:[#allocation2 + $0xe] sm:$0xff]
    %v4956 = vld [vmem:[#allocation2 + $0x16] sm:$0xff]
    %v4957 = vld [vmem:[#allocation2 + $0x1e] sm:$0xff]
    %v4958 = vld [vmem:[#allocation2 + $0x26] sm:$0xff]
    %v4959 = vld [vmem:[#allocation2 + $0x2e] sm:$0xff]
    %v4960 = vld [vmem:[#allocation2 + $0x36] sm:$0xff]
    %v4961 = vld [vmem:[#allocation2 + $0x3e] sm:$0xff]
    %v4962 = vld [vmem:[#allocation2 + $0x56] sm:$0xff]
    %v4963 = vld [vmem:[#allocation2 + $0x5e] sm:$0xff]
    %v4964 = vld [vmem:[#allocation2 + $0x66] sm:$0xff]
    %v4965 = vld [vmem:[#allocation2 + $0x6e] sm:$0xff]
    %v4966 = vld [vmem:[#allocation2 + $0x76] sm:$0xff]
    %v4967 = vld [vmem:[#allocation2 + $0x7e] sm:$0xff]
    %v4968 = vld [vmem:[#allocation2 + $0x86] sm:$0xff]
    %v4969 = vld [vmem:[#allocation2 + $0x8e] sm:$0xff]
    %s4970 = scalar_lea.vmem [#allocation3], 352
    %v4971 = vld [vmem:[%s4970] sm:$0xff]
    %v4972 = vld [vmem:[%s4970 + $0x8] sm:$0xff]
    %v4973 = vld [vmem:[%s4970 + $0x10] sm:$0xff]
    %v4974 = vld [vmem:[%s4970 + $0x18] sm:$0xff]
    %v4976 = vsel %vm45, %v4954, 0
    %v4979 = vsel %vm45, %v4955, 0
    %v4982 = vsel %vm45, %v4956, 0
    %v4985 = vsel %vm45, %v4957, 0
    %v4988 = vsel %vm45, %v4958, 0
    %v4991 = vsel %vm45, %v4959, 0
    %v4994 = vsel %vm45, %v4960, 0
    %v4997 = vsel %vm45, %v4961, 0
    %v5000 = vsel %vm45, %v4962, 0
    %v5003 = vsel %vm45, %v4963, 0
    %v5006 = vsel %vm45, %v4964, 0
    %v5009 = vsel %vm45, %v4965, 0
    %v5012 = vsel %vm45, %v4966, 0
    %v5015 = vsel %vm45, %v4967, 0
    %v5018 = vsel %vm45, %v4968, 0
    %v5021 = vsel %vm45, %v4969, 0
    %5023 = vmatprep.subr.mxu0 0.0
    %5024 = vmatpush1.msra.mxu0 %v4971
    %5025 = vmatprep.subr.mxu0 0.0
    %5026 = vmatpush1.msra.mxu0 %v4972
    %5027 = vmatprep.subr.mxu0 0.0
    %5028 = vmatpush1.msra.mxu0 %v4973
    %5029 = vmatprep.subr.mxu0 0.0
    %5030 = vmatpush1.msra.mxu0 %v4974
    %5031 = vmatprep.subr.mxu0 0.0
    %5032 = vmatpush1.msra.mxu0 0.0
    %5033 = vmatprep.subr.mxu0 0.0
    %5034 = vmatpush1.msra.mxu0 0.0
    %5035 = vmatprep.subr.mxu0 0.0
    %5036 = vmatpush1.msra.mxu0 0.0
    %5037 = vmatprep.subr.mxu0 0.0
    %5038 = vmatpush1.msra.mxu0 0.0
    %5039 = vmatprep.subr.mxu0 0.0
    %5040 = vmatpush1.msra.mxu0 0.0
    %5041 = vmatprep.subr.mxu0 0.0
    %5042 = vmatpush1.msra.mxu0 0.0
    %5043 = vmatprep.subr.mxu0 0.0
    %5044 = vmatpush1.msra.mxu0 0.0
    %5045 = vmatprep.subr.mxu0 0.0
    %5046 = vmatpush1.msra.mxu0 0.0
    %5047 = vmatprep.subr.mxu0 0.0
    %5048 = vmatpush1.msra.mxu0 0.0
    %5049 = vmatprep.subr.mxu0 0.0
    %5050 = vmatpush1.msra.mxu0 0.0
    %5051 = vmatprep.subr.mxu0 0.0
    %5052 = vmatpush1.msra.mxu0 0.0
    %5053 = vmatprep.subr.mxu0 0.0
    %5054 = vmatpush1.msra.mxu0 0.0
    %5055 = vmatprep.subr.mxu0 0.0
    %5056 = vmatpush1.msra.mxu0 0.0
    %5057 = vmatprep.subr.mxu0 0.0
    %5058 = vmatpush1.msra.mxu0 0.0
    %5059 = vmatprep.subr.mxu0 0.0
    %5060 = vmatpush1.msra.mxu0 0.0
    %5061 = vmatprep.subr.mxu0 0.0
    %5062 = vmatpush1.msra.mxu0 0.0
    %5063 = vmatprep.subr.mxu0 0.0
    %5064 = vmatpush1.msra.mxu0 0.0
    %5065 = vmatprep.subr.mxu0 0.0
    %5066 = vmatpush1.msra.mxu0 0.0
    %5067 = vmatprep.subr.mxu0 0.0
    %5068 = vmatpush1.msra.mxu0 0.0
    %5069 = vmatprep.subr.mxu0 0.0
    %5070 = vmatpush1.msra.mxu0 0.0
    %5071 = vmatprep.subr.mxu0 0.0
    %5072 = vmatpush1.msra.mxu0 0.0
    %5073 = vmatprep.subr.mxu0 0.0
    %5074 = vmatpush1.msra.mxu0 0.0
    %5075 = vmatprep.subr.mxu0 0.0
    %5076 = vmatpush1.msra.mxu0 0.0
    %5077 = vmatprep.subr.mxu0 0.0
    %5078 = vmatpush1.msra.mxu0 0.0
    %5079 = vmatprep.subr.mxu0 0.0
    %5080 = vmatpush1.msra.mxu0 0.0
    %5081 = vmatprep.subr.mxu0 0.0
    %5082 = vmatpush1.msra.mxu0 0.0
    %5083 = vmatprep.subr.mxu0 0.0
    %5084 = vmatpush1.msra.mxu0 0.0
    %5085 = vmatprep.subr.mxu0 0.0
    %5086 = vmatpush1.msra.mxu0 0.0
    %5087 = vmatprep.mubr.f32.mxu0 0.0
    %5088 = vmatmul.mubr.f32.gmra.mrb[0].mxu0 %v4976
    %v5089 = vpop.f32.mrb[0].mxu0
    %v5090 = vadd.f32 0.0, %v5089
    %v5091 = vpop.f32.mrb[0].mxu0
    %5092 = vmatprep.mubr.f32.mxu0 0.0
    %5093 = vmatmul.mubr.f32.gmra.mrb[0].mxu0 %v4979
    %v5094 = vpop.f32.mrb[0].mxu0
    %v5095 = vadd.f32 0.0, %v5094
    %v5096 = vpop.f32.mrb[0].mxu0
    %5097 = vmatprep.mubr.f32.mxu0 0.0
    %5098 = vmatmul.mubr.f32.gmra.mrb[0].mxu0 %v4982
    %v5099 = vpop.f32.mrb[0].mxu0
    %v5100 = vadd.f32 0.0, %v5099
    %v5101 = vpop.f32.mrb[0].mxu0
    %5102 = vmatprep.mubr.f32.mxu0 0.0
    %5103 = vmatmul.mubr.f32.gmra.mrb[0].mxu0 %v4985
    %v5104 = vpop.f32.mrb[0].mxu0
    %v5105 = vadd.f32 0.0, %v5104
    %v5106 = vpop.f32.mrb[0].mxu0
    %5107 = vmatprep.mubr.f32.mxu0 0.0
    %5108 = vmatmul.mubr.f32.gmra.mrb[0].mxu0 %v4988
    %v5109 = vpop.f32.mrb[0].mxu0
    %v5110 = vadd.f32 0.0, %v5109
    %v5111 = vpop.f32.mrb[0].mxu0
    %5112 = vmatprep.mubr.f32.mxu0 0.0
    %5113 = vmatmul.mubr.f32.gmra.mrb[0].mxu0 %v4991
    %v5114 = vpop.f32.mrb[0].mxu0
    %v5115 = vadd.f32 0.0, %v5114
    %v5116 = vpop.f32.mrb[0].mxu0
    %5117 = vmatprep.mubr.f32.mxu0 0.0
    %5118 = vmatmul.mubr.f32.gmra.mrb[0].mxu0 %v4994
    %v5119 = vpop.f32.mrb[0].mxu0
    %v5120 = vadd.f32 0.0, %v5119
    %v5121 = vpop.f32.mrb[0].mxu0
    %5122 = vmatprep.mubr.f32.mxu0 0.0
    %5123 = vmatmul.mubr.f32.gmra.mrb[0].mxu0 %v4997
    %v5124 = vpop.f32.mrb[0].mxu0
    %v5125 = vadd.f32 0.0, %v5124
    %v5126 = vpop.f32.mrb[0].mxu0
    %5127 = vmatprep.mubr.f32.mxu0 0.0
    %5128 = vmatmul.mubr.f32.gmra.mrb[0].mxu0 %v5000
    %v5129 = vpop.f32.mrb[0].mxu0
    %v5130 = vadd.f32 0.0, %v5129
    %v5131 = vpop.f32.mrb[0].mxu0
    %5132 = vmatprep.mubr.f32.mxu0 0.0
    %5133 = vmatmul.mubr.f32.gmra.mrb[0].mxu0 %v5003
    %v5134 = vpop.f32.mrb[0].mxu0
    %v5135 = vadd.f32 0.0, %v5134
    %v5136 = vpop.f32.mrb[0].mxu0
    %5137 = vmatprep.mubr.f32.mxu0 0.0
    %5138 = vmatmul.mubr.f32.gmra.mrb[0].mxu0 %v5006
    %v5139 = vpop.f32.mrb[0].mxu0
    %v5140 = vadd.f32 0.0, %v5139
    %v5141 = vpop.f32.mrb[0].mxu0
    %5142 = vmatprep.mubr.f32.mxu0 0.0
    %5143 = vmatmul.mubr.f32.gmra.mrb[0].mxu0 %v5009
    %v5144 = vpop.f32.mrb[0].mxu0
    %v5145 = vadd.f32 0.0, %v5144
    %v5146 = vpop.f32.mrb[0].mxu0
    %5147 = vmatprep.mubr.f32.mxu0 0.0
    %5148 = vmatmul.mubr.f32.gmra.mrb[0].mxu0 %v5012
    %v5149 = vpop.f32.mrb[0].mxu0
    %v5150 = vadd.f32 0.0, %v5149
    %v5151 = vpop.f32.mrb[0].mxu0
    %5152 = vmatprep.mubr.f32.mxu0 0.0
    %5153 = vmatmul.mubr.f32.gmra.mrb[0].mxu0 %v5015
    %v5154 = vpop.f32.mrb[0].mxu0
    %v5155 = vadd.f32 0.0, %v5154
    %v5156 = vpop.f32.mrb[0].mxu0
    %5157 = vmatprep.mubr.f32.mxu0 0.0
    %5158 = vmatmul.mubr.f32.gmra.mrb[0].mxu0 %v5018
    %v5159 = vpop.f32.mrb[0].mxu0
    %v5160 = vadd.f32 0.0, %v5159
    %v5161 = vpop.f32.mrb[0].mxu0
    %5162 = vmatprep.mubr.f32.mxu0 0.0
    %5163 = vmatmul.mubr.f32.gmra.mrb[0].mxu0 %v5021
    %v5164 = vpop.f32.mrb[0].mxu0
    %v5165 = vadd.f32 0.0, %v5164
    %v5166 = vpop.f32.mrb[0].mxu0
    %5167 = vdwg.mxu0
    %v5169 = vsel %vm45, %v4933, 0
    %v5172 = vsel %vm45, %v4934, 0
    %v5175 = vsel %vm45, %v4935, 0
    %v5178 = vsel %vm45, %v4936, 0
    %v5181 = vsel %vm45, %v4937, 0
    %v5184 = vsel %vm45, %v4938, 0
    %v5187 = vsel %vm45, %v4939, 0
    %v5190 = vsel %vm45, %v4940, 0
    %v5193 = vsel %vm45, %v4941, 0
    %v5196 = vsel %vm45, %v4942, 0
    %v5199 = vsel %vm45, %v4943, 0
    %v5202 = vsel %vm45, %v4944, 0
    %v5205 = vsel %vm45, %v4945, 0
    %v5208 = vsel %vm45, %v4946, 0
    %v5211 = vsel %vm45, %v4947, 0
    %v5214 = vsel %vm45, %v4948, 0
    %5216 = vmatprep.subr.mxu0 0.0
    %5217 = vmatpush1.msra.mxu0 %v4950
    %5218 = vmatprep.subr.mxu0 0.0
    %5219 = vmatpush1.msra.mxu0 %v4951
    %5220 = vmatprep.subr.mxu0 0.0
    %5221 = vmatpush1.msra.mxu0 %v4952
    %5222 = vmatprep.subr.mxu0 0.0
    %5223 = vmatpush1.msra.mxu0 %v4953
    %5224 = vmatprep.subr.mxu0 0.0
    %5225 = vmatpush1.msra.mxu0 0.0
    %5226 = vmatprep.subr.mxu0 0.0
    %5227 = vmatpush1.msra.mxu0 0.0
    %5228 = vmatprep.subr.mxu0 0.0
    %5229 = vmatpush1.msra.mxu0 0.0
    %5230 = vmatprep.subr.mxu0 0.0
    %5231 = vmatpush1.msra.mxu0 0.0
    %5232 = vmatprep.subr.mxu0 0.0
    %5233 = vmatpush1.msra.mxu0 0.0
    %5234 = vmatprep.subr.mxu0 0.0
    %5235 = vmatpush1.msra.mxu0 0.0
    %5236 = vmatprep.subr.mxu0 0.0
    %5237 = vmatpush1.msra.mxu0 0.0
    %5238 = vmatprep.subr.mxu0 0.0
    %5239 = vmatpush1.msra.mxu0 0.0
    %5240 = vmatprep.subr.mxu0 0.0
    %5241 = vmatpush1.msra.mxu0 0.0
    %5242 = vmatprep.subr.mxu0 0.0
    %5243 = vmatpush1.msra.mxu0 0.0
    %5244 = vmatprep.subr.mxu0 0.0
    %5245 = vmatpush1.msra.mxu0 0.0
    %5246 = vmatprep.subr.mxu0 0.0
    %5247 = vmatpush1.msra.mxu0 0.0
    %5248 = vmatprep.subr.mxu0 0.0
    %5249 = vmatpush1.msra.mxu0 0.0
    %5250 = vmatprep.subr.mxu0 0.0
    %5251 = vmatpush1.msra.mxu0 0.0
    %5252 = vmatprep.subr.mxu0 0.0
    %5253 = vmatpush1.msra.mxu0 0.0
    %5254 = vmatprep.subr.mxu0 0.0
    %5255 = vmatpush1.msra.mxu0 0.0
    %5256 = vmatprep.subr.mxu0 0.0
    %5257 = vmatpush1.msra.mxu0 0.0
    %5258 = vmatprep.subr.mxu0 0.0
    %5259 = vmatpush1.msra.mxu0 0.0
    %5260 = vmatprep.subr.mxu0 0.0
    %5261 = vmatpush1.msra.mxu0 0.0
    %5262 = vmatprep.subr.mxu0 0.0
    %5263 = vmatpush1.msra.mxu0 0.0
    %5264 = vmatprep.subr.mxu0 0.0
    %5265 = vmatpush1.msra.mxu0 0.0
    %5266 = vmatprep.subr.mxu0 0.0
    %5267 = vmatpush1.msra.mxu0 0.0
    %5268 = vmatprep.subr.mxu0 0.0
    %5269 = vmatpush1.msra.mxu0 0.0
    %5270 = vmatprep.subr.mxu0 0.0
    %5271 = vmatpush1.msra.mxu0 0.0
    %5272 = vmatprep.subr.mxu0 0.0
    %5273 = vmatpush1.msra.mxu0 0.0
    %5274 = vmatprep.subr.mxu0 0.0
    %5275 = vmatpush1.msra.mxu0 0.0
    %5276 = vmatprep.subr.mxu0 0.0
    %5277 = vmatpush1.msra.mxu0 0.0
    %5278 = vmatprep.subr.mxu0 0.0
    %5279 = vmatpush1.msra.mxu0 0.0
    %5280 = vmatprep.mubr.f32.mxu0 0.0
    %5281 = vmatmul.mubr.f32.gmra.mrb[0].mxu0 %v5169
    %v5282 = vpop.f32.mrb[0].mxu0
    %v5283 = vadd.f32 %v5090, %v5282
    %v5284 = vpop.f32.mrb[0].mxu0
    %5285 = vmatprep.mubr.f32.mxu0 0.0
    %5286 = vmatmul.mubr.f32.gmra.mrb[0].mxu0 %v5172
    %v5287 = vpop.f32.mrb[0].mxu0
    %v5288 = vadd.f32 %v5095, %v5287
    %v5289 = vpop.f32.mrb[0].mxu0
    %5290 = vmatprep.mubr.f32.mxu0 0.0
    %5291 = vmatmul.mubr.f32.gmra.mrb[0].mxu0 %v5175
    %v5292 = vpop.f32.mrb[0].mxu0
    %v5293 = vadd.f32 %v5100, %v5292
    %v5294 = vpop.f32.mrb[0].mxu0
    %5295 = vmatprep.mubr.f32.mxu0 0.0
    %5296 = vmatmul.mubr.f32.gmra.mrb[0].mxu0 %v5178
    %v5297 = vpop.f32.mrb[0].mxu0
    %v5298 = vadd.f32 %v5105, %v5297
    %v5299 = vpop.f32.mrb[0].mxu0
    %5300 = vmatprep.mubr.f32.mxu0 0.0
    %5301 = vmatmul.mubr.f32.gmra.mrb[0].mxu0 %v5181
    %v5302 = vpop.f32.mrb[0].mxu0
    %v5303 = vadd.f32 %v5110, %v5302
    %v5304 = vpop.f32.mrb[0].mxu0
    %5305 = vmatprep.mubr.f32.mxu0 0.0
    %5306 = vmatmul.mubr.f32.gmra.mrb[0].mxu0 %v5184
    %v5307 = vpop.f32.mrb[0].mxu0
    %v5308 = vadd.f32 %v5115, %v5307
    %v5309 = vpop.f32.mrb[0].mxu0
    %5310 = vmatprep.mubr.f32.mxu0 0.0
    %5311 = vmatmul.mubr.f32.gmra.mrb[0].mxu0 %v5187
    %v5312 = vpop.f32.mrb[0].mxu0
    %v5313 = vadd.f32 %v5120, %v5312
    %v5314 = vpop.f32.mrb[0].mxu0
    %5315 = vmatprep.mubr.f32.mxu0 0.0
    %5316 = vmatmul.mubr.f32.gmra.mrb[0].mxu0 %v5190
    %v5317 = vpop.f32.mrb[0].mxu0
    %v5318 = vadd.f32 %v5125, %v5317
    %v5319 = vpop.f32.mrb[0].mxu0
    %5320 = vmatprep.mubr.f32.mxu0 0.0
    %5321 = vmatmul.mubr.f32.gmra.mrb[0].mxu0 %v5193
    %v5322 = vpop.f32.mrb[0].mxu0
    %v5323 = vadd.f32 %v5130, %v5322
    %v5324 = vpop.f32.mrb[0].mxu0
    %5325 = vmatprep.mubr.f32.mxu0 0.0
    %5326 = vmatmul.mubr.f32.gmra.mrb[0].mxu0 %v5196
    %v5327 = vpop.f32.mrb[0].mxu0
    %v5328 = vadd.f32 %v5135, %v5327
    %v5329 = vpop.f32.mrb[0].mxu0
    %5330 = vmatprep.mubr.f32.mxu0 0.0
    %5331 = vmatmul.mubr.f32.gmra.mrb[0].mxu0 %v5199
    %v5332 = vpop.f32.mrb[0].mxu0
    %v5333 = vadd.f32 %v5140, %v5332
    %v5334 = vpop.f32.mrb[0].mxu0
    %5335 = vmatprep.mubr.f32.mxu0 0.0
    %5336 = vmatmul.mubr.f32.gmra.mrb[0].mxu0 %v5202
    %v5337 = vpop.f32.mrb[0].mxu0
    %v5338 = vadd.f32 %v5145, %v5337
    %v5339 = vpop.f32.mrb[0].mxu0
    %5340 = vmatprep.mubr.f32.mxu0 0.0
    %5341 = vmatmul.mubr.f32.gmra.mrb[0].mxu0 %v5205
    %v5342 = vpop.f32.mrb[0].mxu0
    %v5343 = vadd.f32 %v5150, %v5342
    %v5344 = vpop.f32.mrb[0].mxu0
    %5345 = vmatprep.mubr.f32.mxu0 0.0
    %5346 = vmatmul.mubr.f32.gmra.mrb[0].mxu0 %v5208
    %v5347 = vpop.f32.mrb[0].mxu0
    %v5348 = vadd.f32 %v5155, %v5347
    %v5349 = vpop.f32.mrb[0].mxu0
    %5350 = vmatprep.mubr.f32.mxu0 0.0
    %5351 = vmatmul.mubr.f32.gmra.mrb[0].mxu0 %v5211
    %v5352 = vpop.f32.mrb[0].mxu0
    %v5353 = vadd.f32 %v5160, %v5352
    %v5354 = vpop.f32.mrb[0].mxu0
    %5355 = vmatprep.mubr.f32.mxu0 0.0
    %5356 = vmatmul.mubr.f32.gmra.mrb[0].mxu0 %v5214
    %v5357 = vpop.f32.mrb[0].mxu0
    %v5358 = vadd.f32 %v5165, %v5357
    %v5359 = vpop.f32.mrb[0].mxu0
    %5360 = vdwg.mxu0
    %v5361 = vld [vmem:[#allocation2 + $0x8] sm:$0xff]
    %v5362 = vld [vmem:[#allocation2 + $0x10] sm:$0xff]
    %v5363 = vld [vmem:[#allocation2 + $0x18] sm:$0xff]
    %v5364 = vld [vmem:[#allocation2 + $0x20] sm:$0xff]
    %v5365 = vld [vmem:[#allocation2 + $0x28] sm:$0xff]
    %v5366 = vld [vmem:[#allocation2 + $0x30] sm:$0xff]
    %v5367 = vld [vmem:[#allocation2 + $0x38] sm:$0xff]
    %v5368 = vld [vmem:[#allocation2 + $0x40] sm:$0xff]
    %v5369 = vld [vmem:[#allocation2 + $0x58] sm:$0xff]
    %v5370 = vld [vmem:[#allocation2 + $0x60] sm:$0xff]
    %v5371 = vld [vmem:[#allocation2 + $0x68] sm:$0xff]
    %v5372 = vld [vmem:[#allocation2 + $0x70] sm:$0xff]
    %v5373 = vld [vmem:[#allocation2 + $0x78] sm:$0xff]
    %v5374 = vld [vmem:[#allocation2 + $0x80] sm:$0xff]
    %v5375 = vld [vmem:[#allocation2 + $0x88] sm:$0xff]
    %v5376 = vld [vmem:[#allocation2 + $0x90] sm:$0xff]
    %s5377 = scalar_lea.vmem [#allocation3], 384
    %v5378 = vld [vmem:[%s5377] sm:$0xff]
    %v5379 = vld [vmem:[%s5377 + $0x8] sm:$0xff]
    %v5380 = vld [vmem:[%s5377 + $0x10] sm:$0xff]
    %v5381 = vld [vmem:[%s5377 + $0x18] sm:$0xff]
    %v5383 = vsel %vm45, %v5361, 0
    %v5386 = vsel %vm45, %v5362, 0
    %v5389 = vsel %vm45, %v5363, 0
    %v5392 = vsel %vm45, %v5364, 0
    %v5395 = vsel %vm45, %v5365, 0
    %v5398 = vsel %vm45, %v5366, 0
    %v5401 = vsel %vm45, %v5367, 0
    %v5404 = vsel %vm45, %v5368, 0
    %v5407 = vsel %vm45, %v5369, 0
    %v5410 = vsel %vm45, %v5370, 0
    %v5413 = vsel %vm45, %v5371, 0
    %v5416 = vsel %vm45, %v5372, 0
    %v5419 = vsel %vm45, %v5373, 0
    %v5422 = vsel %vm45, %v5374, 0
    %v5425 = vsel %vm45, %v5375, 0
    %v5428 = vsel %vm45, %v5376, 0
    %5430 = vmatprep.subr.mxu0 0.0
    %5431 = vmatpush1.msra.mxu0 %v5378
    %5432 = vmatprep.subr.mxu0 0.0
    %5433 = vmatpush1.msra.mxu0 %v5379
    %5434 = vmatprep.subr.mxu0 0.0
    %5435 = vmatpush1.msra.mxu0 %v5380
    %5436 = vmatprep.subr.mxu0 0.0
    %5437 = vmatpush1.msra.mxu0 %v5381
    %5438 = vmatprep.subr.mxu0 0.0
    %5439 = vmatpush1.msra.mxu0 0.0
    %5440 = vmatprep.subr.mxu0 0.0
    %5441 = vmatpush1.msra.mxu0 0.0
    %5442 = vmatprep.subr.mxu0 0.0
    %5443 = vmatpush1.msra.mxu0 0.0
    %5444 = vmatprep.subr.mxu0 0.0
    %5445 = vmatpush1.msra.mxu0 0.0
    %5446 = vmatprep.subr.mxu0 0.0
    %5447 = vmatpush1.msra.mxu0 0.0
    %5448 = vmatprep.subr.mxu0 0.0
    %5449 = vmatpush1.msra.mxu0 0.0
    %5450 = vmatprep.subr.mxu0 0.0
    %5451 = vmatpush1.msra.mxu0 0.0
    %5452 = vmatprep.subr.mxu0 0.0
    %5453 = vmatpush1.msra.mxu0 0.0
    %5454 = vmatprep.subr.mxu0 0.0
    %5455 = vmatpush1.msra.mxu0 0.0
    %5456 = vmatprep.subr.mxu0 0.0
    %5457 = vmatpush1.msra.mxu0 0.0
    %5458 = vmatprep.subr.mxu0 0.0
    %5459 = vmatpush1.msra.mxu0 0.0
    %5460 = vmatprep.subr.mxu0 0.0
    %5461 = vmatpush1.msra.mxu0 0.0
    %5462 = vmatprep.subr.mxu0 0.0
    %5463 = vmatpush1.msra.mxu0 0.0
    %5464 = vmatprep.subr.mxu0 0.0
    %5465 = vmatpush1.msra.mxu0 0.0
    %5466 = vmatprep.subr.mxu0 0.0
    %5467 = vmatpush1.msra.mxu0 0.0
    %5468 = vmatprep.subr.mxu0 0.0
    %5469 = vmatpush1.msra.mxu0 0.0
    %5470 = vmatprep.subr.mxu0 0.0
    %5471 = vmatpush1.msra.mxu0 0.0
    %5472 = vmatprep.subr.mxu0 0.0
    %5473 = vmatpush1.msra.mxu0 0.0
    %5474 = vmatprep.subr.mxu0 0.0
    %5475 = vmatpush1.msra.mxu0 0.0
    %5476 = vmatprep.subr.mxu0 0.0
    %5477 = vmatpush1.msra.mxu0 0.0
    %5478 = vmatprep.subr.mxu0 0.0
    %5479 = vmatpush1.msra.mxu0 0.0
    %5480 = vmatprep.subr.mxu0 0.0
    %5481 = vmatpush1.msra.mxu0 0.0
    %5482 = vmatprep.subr.mxu0 0.0
    %5483 = vmatpush1.msra.mxu0 0.0
    %5484 = vmatprep.subr.mxu0 0.0
    %5485 = vmatpush1.msra.mxu0 0.0
    %5486 = vmatprep.subr.mxu0 0.0
    %5487 = vmatpush1.msra.mxu0 0.0
    %5488 = vmatprep.subr.mxu0 0.0
    %5489 = vmatpush1.msra.mxu0 0.0
    %5490 = vmatprep.subr.mxu0 0.0
    %5491 = vmatpush1.msra.mxu0 0.0
    %5492 = vmatprep.subr.mxu0 0.0
    %5493 = vmatpush1.msra.mxu0 0.0
    %5494 = vmatprep.mubr.f32.mxu0 0.0
    %5495 = vmatmul.mubr.f32.gmra.mrb[0].mxu0 %v5383
    %v5496 = vpop.f32.mrb[0].mxu0
    %v5497 = vadd.f32 0.0, %v5496
    %v5498 = vpop.f32.mrb[0].mxu0
    %5499 = vmatprep.mubr.f32.mxu0 0.0
    %5500 = vmatmul.mubr.f32.gmra.mrb[0].mxu0 %v5386
    %v5501 = vpop.f32.mrb[0].mxu0
    %v5502 = vadd.f32 0.0, %v5501
    %v5503 = vpop.f32.mrb[0].mxu0
    %5504 = vmatprep.mubr.f32.mxu0 0.0
    %5505 = vmatmul.mubr.f32.gmra.mrb[0].mxu0 %v5389
    %v5506 = vpop.f32.mrb[0].mxu0
    %v5507 = vadd.f32 0.0, %v5506
    %v5508 = vpop.f32.mrb[0].mxu0
    %5509 = vmatprep.mubr.f32.mxu0 0.0
    %5510 = vmatmul.mubr.f32.gmra.mrb[0].mxu0 %v5392
    %v5511 = vpop.f32.mrb[0].mxu0
    %v5512 = vadd.f32 0.0, %v5511
    %v5513 = vpop.f32.mrb[0].mxu0
    %5514 = vmatprep.mubr.f32.mxu0 0.0
    %5515 = vmatmul.mubr.f32.gmra.mrb[0].mxu0 %v5395
    %v5516 = vpop.f32.mrb[0].mxu0
    %v5517 = vadd.f32 0.0, %v5516
    %v5518 = vpop.f32.mrb[0].mxu0
    %5519 = vmatprep.mubr.f32.mxu0 0.0
    %5520 = vmatmul.mubr.f32.gmra.mrb[0].mxu0 %v5398
    %v5521 = vpop.f32.mrb[0].mxu0
    %v5522 = vadd.f32 0.0, %v5521
    %v5523 = vpop.f32.mrb[0].mxu0
    %5524 = vmatprep.mubr.f32.mxu0 0.0
    %5525 = vmatmul.mubr.f32.gmra.mrb[0].mxu0 %v5401
    %v5526 = vpop.f32.mrb[0].mxu0
    %v5527 = vadd.f32 0.0, %v5526
    %v5528 = vpop.f32.mrb[0].mxu0
    %5529 = vmatprep.mubr.f32.mxu0 0.0
    %5530 = vmatmul.mubr.f32.gmra.mrb[0].mxu0 %v5404
    %v5531 = vpop.f32.mrb[0].mxu0
    %v5532 = vadd.f32 0.0, %v5531
    %v5533 = vpop.f32.mrb[0].mxu0
    %5534 = vmatprep.mubr.f32.mxu0 0.0
    %5535 = vmatmul.mubr.f32.gmra.mrb[0].mxu0 %v5407
    %v5536 = vpop.f32.mrb[0].mxu0
    %v5537 = vadd.f32 0.0, %v5536
    %v5538 = vpop.f32.mrb[0].mxu0
    %5539 = vmatprep.mubr.f32.mxu0 0.0
    %5540 = vmatmul.mubr.f32.gmra.mrb[0].mxu0 %v5410
    %v5541 = vpop.f32.mrb[0].mxu0
    %v5542 = vadd.f32 0.0, %v5541
    %v5543 = vpop.f32.mrb[0].mxu0
    %5544 = vmatprep.mubr.f32.mxu0 0.0
    %5545 = vmatmul.mubr.f32.gmra.mrb[0].mxu0 %v5413
    %v5546 = vpop.f32.mrb[0].mxu0
    %v5547 = vadd.f32 0.0, %v5546
    %v5548 = vpop.f32.mrb[0].mxu0
    %5549 = vmatprep.mubr.f32.mxu0 0.0
    %5550 = vmatmul.mubr.f32.gmra.mrb[0].mxu0 %v5416
    %v5551 = vpop.f32.mrb[0].mxu0
    %v5552 = vadd.f32 0.0, %v5551
    %v5553 = vpop.f32.mrb[0].mxu0
    %5554 = vmatprep.mubr.f32.mxu0 0.0
    %5555 = vmatmul.mubr.f32.gmra.mrb[0].mxu0 %v5419
    %v5556 = vpop.f32.mrb[0].mxu0
    %v5557 = vadd.f32 0.0, %v5556
    %v5558 = vpop.f32.mrb[0].mxu0
    %5559 = vmatprep.mubr.f32.mxu0 0.0
    %5560 = vmatmul.mubr.f32.gmra.mrb[0].mxu0 %v5422
    %v5561 = vpop.f32.mrb[0].mxu0
    %v5562 = vadd.f32 0.0, %v5561
    %v5563 = vpop.f32.mrb[0].mxu0
    %5564 = vmatprep.mubr.f32.mxu0 0.0
    %5565 = vmatmul.mubr.f32.gmra.mrb[0].mxu0 %v5425
    %v5566 = vpop.f32.mrb[0].mxu0
    %v5567 = vadd.f32 0.0, %v5566
    %v5568 = vpop.f32.mrb[0].mxu0
    %5569 = vmatprep.mubr.f32.mxu0 0.0
    %5570 = vmatmul.mubr.f32.gmra.mrb[0].mxu0 %v5428
    %v5571 = vpop.f32.mrb[0].mxu0
    %v5572 = vadd.f32 0.0, %v5571
    %v5573 = vpop.f32.mrb[0].mxu0
    %5574 = vdwg.mxu0
    %v5575 = vadd.f32 %v5283, %v5497
    %v5576 = vadd.f32 %v5288, %v5502
    %v5577 = vadd.f32 %v5293, %v5507
    %v5578 = vadd.f32 %v5298, %v5512
    %v5579 = vadd.f32 %v5303, %v5517
    %v5580 = vadd.f32 %v5308, %v5522
    %v5581 = vadd.f32 %v5313, %v5527
    %v5582 = vadd.f32 %v5318, %v5532
    %v5583 = vadd.f32 %v5323, %v5537
    %v5584 = vadd.f32 %v5328, %v5542
    %v5585 = vadd.f32 %v5333, %v5547
    %v5586 = vadd.f32 %v5338, %v5552
    %v5587 = vadd.f32 %v5343, %v5557
    %v5588 = vadd.f32 %v5348, %v5562
    %v5589 = vadd.f32 %v5353, %v5567
    %v5590 = vadd.f32 %v5358, %v5572
    %v5591 = vld [vmem:[#allocation2 + $0xa] sm:$0xff]
    %v5592 = vld [vmem:[#allocation2 + $0x12] sm:$0xff]
    %v5593 = vld [vmem:[#allocation2 + $0x1a] sm:$0xff]
    %v5594 = vld [vmem:[#allocation2 + $0x22] sm:$0xff]
    %v5595 = vld [vmem:[#allocation2 + $0x2a] sm:$0xff]
    %v5596 = vld [vmem:[#allocation2 + $0x32] sm:$0xff]
    %v5597 = vld [vmem:[#allocation2 + $0x3a] sm:$0xff]
    %v5598 = vld [vmem:[#allocation2 + $0x42] sm:$0xff]
    %v5599 = vld [vmem:[#allocation2 + $0x5a] sm:$0xff]
    %v5600 = vld [vmem:[#allocation2 + $0x62] sm:$0xff]
    %v5601 = vld [vmem:[#allocation2 + $0x6a] sm:$0xff]
    %v5602 = vld [vmem:[#allocation2 + $0x72] sm:$0xff]
    %v5603 = vld [vmem:[#allocation2 + $0x7a] sm:$0xff]
    %v5604 = vld [vmem:[#allocation2 + $0x82] sm:$0xff]
    %v5605 = vld [vmem:[#allocation2 + $0x8a] sm:$0xff]
    %v5606 = vld [vmem:[#allocation2 + $0x92] sm:$0xff]
    %s5607 = scalar_lea.vmem [#allocation3], 416
    %v5608 = vld [vmem:[%s5607] sm:$0xff]
    %v5609 = vld [vmem:[%s5607 + $0x8] sm:$0xff]
    %v5610 = vld [vmem:[%s5607 + $0x10] sm:$0xff]
    %v5611 = vld [vmem:[%s5607 + $0x18] sm:$0xff]
    %v5613 = vsel %vm45, %v5591, 0
    %v5616 = vsel %vm45, %v5592, 0
    %v5619 = vsel %vm45, %v5593, 0
    %v5622 = vsel %vm45, %v5594, 0
    %v5625 = vsel %vm45, %v5595, 0
    %v5628 = vsel %vm45, %v5596, 0
    %v5631 = vsel %vm45, %v5597, 0
    %v5634 = vsel %vm45, %v5598, 0
    %v5637 = vsel %vm45, %v5599, 0
    %v5640 = vsel %vm45, %v5600, 0
    %v5643 = vsel %vm45, %v5601, 0
    %v5646 = vsel %vm45, %v5602, 0
    %v5649 = vsel %vm45, %v5603, 0
    %v5652 = vsel %vm45, %v5604, 0
    %v5655 = vsel %vm45, %v5605, 0
    %v5658 = vsel %vm45, %v5606, 0
    %5660 = vmatprep.subr.mxu0 0.0
    %5661 = vmatpush1.msra.mxu0 %v5608
    %5662 = vmatprep.subr.mxu0 0.0
    %5663 = vmatpush1.msra.mxu0 %v5609
    %5664 = vmatprep.subr.mxu0 0.0
    %5665 = vmatpush1.msra.mxu0 %v5610
    %5666 = vmatprep.subr.mxu0 0.0
    %5667 = vmatpush1.msra.mxu0 %v5611
    %5668 = vmatprep.subr.mxu0 0.0
    %5669 = vmatpush1.msra.mxu0 0.0
    %5670 = vmatprep.subr.mxu0 0.0
    %5671 = vmatpush1.msra.mxu0 0.0
    %5672 = vmatprep.subr.mxu0 0.0
    %5673 = vmatpush1.msra.mxu0 0.0
    %5674 = vmatprep.subr.mxu0 0.0
    %5675 = vmatpush1.msra.mxu0 0.0
    %5676 = vmatprep.subr.mxu0 0.0
    %5677 = vmatpush1.msra.mxu0 0.0
    %5678 = vmatprep.subr.mxu0 0.0
    %5679 = vmatpush1.msra.mxu0 0.0
    %5680 = vmatprep.subr.mxu0 0.0
    %5681 = vmatpush1.msra.mxu0 0.0
    %5682 = vmatprep.subr.mxu0 0.0
    %5683 = vmatpush1.msra.mxu0 0.0
    %5684 = vmatprep.subr.mxu0 0.0
    %5685 = vmatpush1.msra.mxu0 0.0
    %5686 = vmatprep.subr.mxu0 0.0
    %5687 = vmatpush1.msra.mxu0 0.0
    %5688 = vmatprep.subr.mxu0 0.0
    %5689 = vmatpush1.msra.mxu0 0.0
    %5690 = vmatprep.subr.mxu0 0.0
    %5691 = vmatpush1.msra.mxu0 0.0
    %5692 = vmatprep.subr.mxu0 0.0
    %5693 = vmatpush1.msra.mxu0 0.0
    %5694 = vmatprep.subr.mxu0 0.0
    %5695 = vmatpush1.msra.mxu0 0.0
    %5696 = vmatprep.subr.mxu0 0.0
    %5697 = vmatpush1.msra.mxu0 0.0
    %5698 = vmatprep.subr.mxu0 0.0
    %5699 = vmatpush1.msra.mxu0 0.0
    %5700 = vmatprep.subr.mxu0 0.0
    %5701 = vmatpush1.msra.mxu0 0.0
    %5702 = vmatprep.subr.mxu0 0.0
    %5703 = vmatpush1.msra.mxu0 0.0
    %5704 = vmatprep.subr.mxu0 0.0
    %5705 = vmatpush1.msra.mxu0 0.0
    %5706 = vmatprep.subr.mxu0 0.0
    %5707 = vmatpush1.msra.mxu0 0.0
    %5708 = vmatprep.subr.mxu0 0.0
    %5709 = vmatpush1.msra.mxu0 0.0
    %5710 = vmatprep.subr.mxu0 0.0
    %5711 = vmatpush1.msra.mxu0 0.0
    %5712 = vmatprep.subr.mxu0 0.0
    %5713 = vmatpush1.msra.mxu0 0.0
    %5714 = vmatprep.subr.mxu0 0.0
    %5715 = vmatpush1.msra.mxu0 0.0
    %5716 = vmatprep.subr.mxu0 0.0
    %5717 = vmatpush1.msra.mxu0 0.0
    %5718 = vmatprep.subr.mxu0 0.0
    %5719 = vmatpush1.msra.mxu0 0.0
    %5720 = vmatprep.subr.mxu0 0.0
    %5721 = vmatpush1.msra.mxu0 0.0
    %5722 = vmatprep.subr.mxu0 0.0
    %5723 = vmatpush1.msra.mxu0 0.0
    %5724 = vmatprep.mubr.f32.mxu0 0.0
    %5725 = vmatmul.mubr.f32.gmra.mrb[0].mxu0 %v5613
    %v5726 = vpop.f32.mrb[0].mxu0
    %v5727 = vadd.f32 0.0, %v5726
    %v5728 = vpop.f32.mrb[0].mxu0
    %5729 = vmatprep.mubr.f32.mxu0 0.0
    %5730 = vmatmul.mubr.f32.gmra.mrb[0].mxu0 %v5616
    %v5731 = vpop.f32.mrb[0].mxu0
    %v5732 = vadd.f32 0.0, %v5731
    %v5733 = vpop.f32.mrb[0].mxu0
    %5734 = vmatprep.mubr.f32.mxu0 0.0
    %5735 = vmatmul.mubr.f32.gmra.mrb[0].mxu0 %v5619
    %v5736 = vpop.f32.mrb[0].mxu0
    %v5737 = vadd.f32 0.0, %v5736
    %v5738 = vpop.f32.mrb[0].mxu0
    %5739 = vmatprep.mubr.f32.mxu0 0.0
    %5740 = vmatmul.mubr.f32.gmra.mrb[0].mxu0 %v5622
    %v5741 = vpop.f32.mrb[0].mxu0
    %v5742 = vadd.f32 0.0, %v5741
    %v5743 = vpop.f32.mrb[0].mxu0
    %5744 = vmatprep.mubr.f32.mxu0 0.0
    %5745 = vmatmul.mubr.f32.gmra.mrb[0].mxu0 %v5625
    %v5746 = vpop.f32.mrb[0].mxu0
    %v5747 = vadd.f32 0.0, %v5746
    %v5748 = vpop.f32.mrb[0].mxu0
    %5749 = vmatprep.mubr.f32.mxu0 0.0
    %5750 = vmatmul.mubr.f32.gmra.mrb[0].mxu0 %v5628
    %v5751 = vpop.f32.mrb[0].mxu0
    %v5752 = vadd.f32 0.0, %v5751
    %v5753 = vpop.f32.mrb[0].mxu0
    %5754 = vmatprep.mubr.f32.mxu0 0.0
    %5755 = vmatmul.mubr.f32.gmra.mrb[0].mxu0 %v5631
    %v5756 = vpop.f32.mrb[0].mxu0
    %v5757 = vadd.f32 0.0, %v5756
    %v5758 = vpop.f32.mrb[0].mxu0
    %5759 = vmatprep.mubr.f32.mxu0 0.0
    %5760 = vmatmul.mubr.f32.gmra.mrb[0].mxu0 %v5634
    %v5761 = vpop.f32.mrb[0].mxu0
    %v5762 = vadd.f32 0.0, %v5761
    %v5763 = vpop.f32.mrb[0].mxu0
    %5764 = vmatprep.mubr.f32.mxu0 0.0
    %5765 = vmatmul.mubr.f32.gmra.mrb[0].mxu0 %v5637
    %v5766 = vpop.f32.mrb[0].mxu0
    %v5767 = vadd.f32 0.0, %v5766
    %v5768 = vpop.f32.mrb[0].mxu0
    %5769 = vmatprep.mubr.f32.mxu0 0.0
    %5770 = vmatmul.mubr.f32.gmra.mrb[0].mxu0 %v5640
    %v5771 = vpop.f32.mrb[0].mxu0
    %v5772 = vadd.f32 0.0, %v5771
    %v5773 = vpop.f32.mrb[0].mxu0
    %5774 = vmatprep.mubr.f32.mxu0 0.0
    %5775 = vmatmul.mubr.f32.gmra.mrb[0].mxu0 %v5643
    %v5776 = vpop.f32.mrb[0].mxu0
    %v5777 = vadd.f32 0.0, %v5776
    %v5778 = vpop.f32.mrb[0].mxu0
    %5779 = vmatprep.mubr.f32.mxu0 0.0
    %5780 = vmatmul.mubr.f32.gmra.mrb[0].mxu0 %v5646
    %v5781 = vpop.f32.mrb[0].mxu0
    %v5782 = vadd.f32 0.0, %v5781
    %v5783 = vpop.f32.mrb[0].mxu0
    %5784 = vmatprep.mubr.f32.mxu0 0.0
    %5785 = vmatmul.mubr.f32.gmra.mrb[0].mxu0 %v5649
    %v5786 = vpop.f32.mrb[0].mxu0
    %v5787 = vadd.f32 0.0, %v5786
    %v5788 = vpop.f32.mrb[0].mxu0
    %5789 = vmatprep.mubr.f32.mxu0 0.0
    %5790 = vmatmul.mubr.f32.gmra.mrb[0].mxu0 %v5652
    %v5791 = vpop.f32.mrb[0].mxu0
    %v5792 = vadd.f32 0.0, %v5791
    %v5793 = vpop.f32.mrb[0].mxu0
    %5794 = vmatprep.mubr.f32.mxu0 0.0
    %5795 = vmatmul.mubr.f32.gmra.mrb[0].mxu0 %v5655
    %v5796 = vpop.f32.mrb[0].mxu0
    %v5797 = vadd.f32 0.0, %v5796
    %v5798 = vpop.f32.mrb[0].mxu0
    %5799 = vmatprep.mubr.f32.mxu0 0.0
    %5800 = vmatmul.mubr.f32.gmra.mrb[0].mxu0 %v5658
    %v5801 = vpop.f32.mrb[0].mxu0
    %v5802 = vadd.f32 0.0, %v5801
    %v5803 = vpop.f32.mrb[0].mxu0
    %5804 = vdwg.mxu0
    %v5805 = vadd.f32 %v5575, %v5727
    %v5806 = vadd.f32 %v5576, %v5732
    %v5807 = vadd.f32 %v5577, %v5737
    %v5808 = vadd.f32 %v5578, %v5742
    %v5809 = vadd.f32 %v5579, %v5747
    %v5810 = vadd.f32 %v5580, %v5752
    %v5811 = vadd.f32 %v5581, %v5757
    %v5812 = vadd.f32 %v5582, %v5762
    %v5813 = vadd.f32 %v5583, %v5767
    %v5814 = vadd.f32 %v5584, %v5772
    %v5815 = vadd.f32 %v5585, %v5777
    %v5816 = vadd.f32 %v5586, %v5782
    %v5817 = vadd.f32 %v5587, %v5787
    %v5818 = vadd.f32 %v5588, %v5792
    %v5819 = vadd.f32 %v5589, %v5797
    %v5820 = vadd.f32 %v5590, %v5802
    %v5821 = vld [vmem:[#allocation2 + $0xc] sm:$0xff]
    %v5822 = vld [vmem:[#allocation2 + $0x14] sm:$0xff]
    %v5823 = vld [vmem:[#allocation2 + $0x1c] sm:$0xff]
    %v5824 = vld [vmem:[#allocation2 + $0x24] sm:$0xff]
    %v5825 = vld [vmem:[#allocation2 + $0x2c] sm:$0xff]
    %v5826 = vld [vmem:[#allocation2 + $0x34] sm:$0xff]
    %v5827 = vld [vmem:[#allocation2 + $0x3c] sm:$0xff]
    %v5828 = vld [vmem:[#allocation2 + $0x44] sm:$0xff]
    %v5829 = vld [vmem:[#allocation2 + $0x5c] sm:$0xff]
    %v5830 = vld [vmem:[#allocation2 + $0x64] sm:$0xff]
    %v5831 = vld [vmem:[#allocation2 + $0x6c] sm:$0xff]
    %v5832 = vld [vmem:[#allocation2 + $0x74] sm:$0xff]
    %v5833 = vld [vmem:[#allocation2 + $0x7c] sm:$0xff]
    %v5834 = vld [vmem:[#allocation2 + $0x84] sm:$0xff]
    %v5835 = vld [vmem:[#allocation2 + $0x8c] sm:$0xff]
    %v5836 = vld [vmem:[#allocation2 + $0x94] sm:$0xff]
    %s5837 = scalar_lea.vmem [#allocation3], 448
    %v5838 = vld [vmem:[%s5837] sm:$0xff]
    %v5839 = vld [vmem:[%s5837 + $0x8] sm:$0xff]
    %v5840 = vld [vmem:[%s5837 + $0x10] sm:$0xff]
    %v5841 = vld [vmem:[%s5837 + $0x18] sm:$0xff]
    %v5843 = vsel %vm45, %v5821, 0
    %v5846 = vsel %vm45, %v5822, 0
    %v5849 = vsel %vm45, %v5823, 0
    %v5852 = vsel %vm45, %v5824, 0
    %v5855 = vsel %vm45, %v5825, 0
    %v5858 = vsel %vm45, %v5826, 0
    %v5861 = vsel %vm45, %v5827, 0
    %v5864 = vsel %vm45, %v5828, 0
    %v5867 = vsel %vm45, %v5829, 0
    %v5870 = vsel %vm45, %v5830, 0
    %v5873 = vsel %vm45, %v5831, 0
    %v5876 = vsel %vm45, %v5832, 0
    %v5879 = vsel %vm45, %v5833, 0
    %v5882 = vsel %vm45, %v5834, 0
    %v5885 = vsel %vm45, %v5835, 0
    %v5888 = vsel %vm45, %v5836, 0
    %5890 = vmatprep.subr.mxu0 0.0
    %5891 = vmatpush1.msra.mxu0 %v5838
    %5892 = vmatprep.subr.mxu0 0.0
    %5893 = vmatpush1.msra.mxu0 %v5839
    %5894 = vmatprep.subr.mxu0 0.0
    %5895 = vmatpush1.msra.mxu0 %v5840
    %5896 = vmatprep.subr.mxu0 0.0
    %5897 = vmatpush1.msra.mxu0 %v5841
    %5898 = vmatprep.subr.mxu0 0.0
    %5899 = vmatpush1.msra.mxu0 0.0
    %5900 = vmatprep.subr.mxu0 0.0
    %5901 = vmatpush1.msra.mxu0 0.0
    %5902 = vmatprep.subr.mxu0 0.0
    %5903 = vmatpush1.msra.mxu0 0.0
    %5904 = vmatprep.subr.mxu0 0.0
    %5905 = vmatpush1.msra.mxu0 0.0
    %5906 = vmatprep.subr.mxu0 0.0
    %5907 = vmatpush1.msra.mxu0 0.0
    %5908 = vmatprep.subr.mxu0 0.0
    %5909 = vmatpush1.msra.mxu0 0.0
    %5910 = vmatprep.subr.mxu0 0.0
    %5911 = vmatpush1.msra.mxu0 0.0
    %5912 = vmatprep.subr.mxu0 0.0
    %5913 = vmatpush1.msra.mxu0 0.0
    %5914 = vmatprep.subr.mxu0 0.0
    %5915 = vmatpush1.msra.mxu0 0.0
    %5916 = vmatprep.subr.mxu0 0.0
    %5917 = vmatpush1.msra.mxu0 0.0
    %5918 = vmatprep.subr.mxu0 0.0
    %5919 = vmatpush1.msra.mxu0 0.0
    %5920 = vmatprep.subr.mxu0 0.0
    %5921 = vmatpush1.msra.mxu0 0.0
    %5922 = vmatprep.subr.mxu0 0.0
    %5923 = vmatpush1.msra.mxu0 0.0
    %5924 = vmatprep.subr.mxu0 0.0
    %5925 = vmatpush1.msra.mxu0 0.0
    %5926 = vmatprep.subr.mxu0 0.0
    %5927 = vmatpush1.msra.mxu0 0.0
    %5928 = vmatprep.subr.mxu0 0.0
    %5929 = vmatpush1.msra.mxu0 0.0
    %5930 = vmatprep.subr.mxu0 0.0
    %5931 = vmatpush1.msra.mxu0 0.0
    %5932 = vmatprep.subr.mxu0 0.0
    %5933 = vmatpush1.msra.mxu0 0.0
    %5934 = vmatprep.subr.mxu0 0.0
    %5935 = vmatpush1.msra.mxu0 0.0
    %5936 = vmatprep.subr.mxu0 0.0
    %5937 = vmatpush1.msra.mxu0 0.0
    %5938 = vmatprep.subr.mxu0 0.0
    %5939 = vmatpush1.msra.mxu0 0.0
    %5940 = vmatprep.subr.mxu0 0.0
    %5941 = vmatpush1.msra.mxu0 0.0
    %5942 = vmatprep.subr.mxu0 0.0
    %5943 = vmatpush1.msra.mxu0 0.0
    %5944 = vmatprep.subr.mxu0 0.0
    %5945 = vmatpush1.msra.mxu0 0.0
    %5946 = vmatprep.subr.mxu0 0.0
    %5947 = vmatpush1.msra.mxu0 0.0
    %5948 = vmatprep.subr.mxu0 0.0
    %5949 = vmatpush1.msra.mxu0 0.0
    %5950 = vmatprep.subr.mxu0 0.0
    %5951 = vmatpush1.msra.mxu0 0.0
    %5952 = vmatprep.subr.mxu0 0.0
    %5953 = vmatpush1.msra.mxu0 0.0
    %5954 = vmatprep.mubr.f32.mxu0 0.0
    %5955 = vmatmul.mubr.f32.gmra.mrb[0].mxu0 %v5843
    %v5956 = vpop.f32.mrb[0].mxu0
    %v5957 = vadd.f32 0.0, %v5956
    %v5958 = vpop.f32.mrb[0].mxu0
    %5959 = vmatprep.mubr.f32.mxu0 0.0
    %5960 = vmatmul.mubr.f32.gmra.mrb[0].mxu0 %v5846
    %v5961 = vpop.f32.mrb[0].mxu0
    %v5962 = vadd.f32 0.0, %v5961
    %v5963 = vpop.f32.mrb[0].mxu0
    %5964 = vmatprep.mubr.f32.mxu0 0.0
    %5965 = vmatmul.mubr.f32.gmra.mrb[0].mxu0 %v5849
    %v5966 = vpop.f32.mrb[0].mxu0
    %v5967 = vadd.f32 0.0, %v5966
    %v5968 = vpop.f32.mrb[0].mxu0
    %5969 = vmatprep.mubr.f32.mxu0 0.0
    %5970 = vmatmul.mubr.f32.gmra.mrb[0].mxu0 %v5852
    %v5971 = vpop.f32.mrb[0].mxu0
    %v5972 = vadd.f32 0.0, %v5971
    %v5973 = vpop.f32.mrb[0].mxu0
    %5974 = vmatprep.mubr.f32.mxu0 0.0
    %5975 = vmatmul.mubr.f32.gmra.mrb[0].mxu0 %v5855
    %v5976 = vpop.f32.mrb[0].mxu0
    %v5977 = vadd.f32 0.0, %v5976
    %v5978 = vpop.f32.mrb[0].mxu0
    %5979 = vmatprep.mubr.f32.mxu0 0.0
    %5980 = vmatmul.mubr.f32.gmra.mrb[0].mxu0 %v5858
    %v5981 = vpop.f32.mrb[0].mxu0
    %v5982 = vadd.f32 0.0, %v5981
    %v5983 = vpop.f32.mrb[0].mxu0
    %5984 = vmatprep.mubr.f32.mxu0 0.0
    %5985 = vmatmul.mubr.f32.gmra.mrb[0].mxu0 %v5861
    %v5986 = vpop.f32.mrb[0].mxu0
    %v5987 = vadd.f32 0.0, %v5986
    %v5988 = vpop.f32.mrb[0].mxu0
    %5989 = vmatprep.mubr.f32.mxu0 0.0
    %5990 = vmatmul.mubr.f32.gmra.mrb[0].mxu0 %v5864
    %v5991 = vpop.f32.mrb[0].mxu0
    %v5992 = vadd.f32 0.0, %v5991
    %v5993 = vpop.f32.mrb[0].mxu0
    %5994 = vmatprep.mubr.f32.mxu0 0.0
    %5995 = vmatmul.mubr.f32.gmra.mrb[0].mxu0 %v5867
    %v5996 = vpop.f32.mrb[0].mxu0
    %v5997 = vadd.f32 0.0, %v5996
    %v5998 = vpop.f32.mrb[0].mxu0
    %5999 = vmatprep.mubr.f32.mxu0 0.0
    %6000 = vmatmul.mubr.f32.gmra.mrb[0].mxu0 %v5870
    %v6001 = vpop.f32.mrb[0].mxu0
    %v6002 = vadd.f32 0.0, %v6001
    %v6003 = vpop.f32.mrb[0].mxu0
    %6004 = vmatprep.mubr.f32.mxu0 0.0
    %6005 = vmatmul.mubr.f32.gmra.mrb[0].mxu0 %v5873
    %v6006 = vpop.f32.mrb[0].mxu0
    %v6007 = vadd.f32 0.0, %v6006
    %v6008 = vpop.f32.mrb[0].mxu0
    %6009 = vmatprep.mubr.f32.mxu0 0.0
    %6010 = vmatmul.mubr.f32.gmra.mrb[0].mxu0 %v5876
    %v6011 = vpop.f32.mrb[0].mxu0
    %v6012 = vadd.f32 0.0, %v6011
    %v6013 = vpop.f32.mrb[0].mxu0
    %6014 = vmatprep.mubr.f32.mxu0 0.0
    %6015 = vmatmul.mubr.f32.gmra.mrb[0].mxu0 %v5879
    %v6016 = vpop.f32.mrb[0].mxu0
    %v6017 = vadd.f32 0.0, %v6016
    %v6018 = vpop.f32.mrb[0].mxu0
    %6019 = vmatprep.mubr.f32.mxu0 0.0
    %6020 = vmatmul.mubr.f32.gmra.mrb[0].mxu0 %v5882
    %v6021 = vpop.f32.mrb[0].mxu0
    %v6022 = vadd.f32 0.0, %v6021
    %v6023 = vpop.f32.mrb[0].mxu0
    %6024 = vmatprep.mubr.f32.mxu0 0.0
    %6025 = vmatmul.mubr.f32.gmra.mrb[0].mxu0 %v5885
    %v6026 = vpop.f32.mrb[0].mxu0
    %v6027 = vadd.f32 0.0, %v6026
    %v6028 = vpop.f32.mrb[0].mxu0
    %6029 = vmatprep.mubr.f32.mxu0 0.0
    %6030 = vmatmul.mubr.f32.gmra.mrb[0].mxu0 %v5888
    %v6031 = vpop.f32.mrb[0].mxu0
    %v6032 = vadd.f32 0.0, %v6031
    %v6033 = vpop.f32.mrb[0].mxu0
    %6034 = vdwg.mxu0
    %v6035 = vadd.f32 %v5805, %v5957
    %v6036 = vadd.f32 %v5806, %v5962
    %v6037 = vadd.f32 %v5807, %v5967
    %v6038 = vadd.f32 %v5808, %v5972
    %v6039 = vadd.f32 %v5809, %v5977
    %v6040 = vadd.f32 %v5810, %v5982
    %v6041 = vadd.f32 %v5811, %v5987
    %v6042 = vadd.f32 %v5812, %v5992
    %v6043 = vadd.f32 %v5813, %v5997
    %v6044 = vadd.f32 %v5814, %v6002
    %v6045 = vadd.f32 %v5815, %v6007
    %v6046 = vadd.f32 %v5816, %v6012
    %v6047 = vadd.f32 %v5817, %v6017
    %v6048 = vadd.f32 %v5818, %v6022
    %v6049 = vadd.f32 %v5819, %v6027
    %v6050 = vadd.f32 %v5820, %v6032
    %v6051 = vlaneseq
    %v6052 = vshrl.u32 %v6051, 7
    %v6053 = vsub.s32 2, %v6052
    %v6054 = vrot.slane %v4860, %v6053
    %v6055 = vadd.f32 %v6035, %v6054
    %v6056 = vadd.f32 %v6036, %v6054
    %v6057 = vadd.f32 %v6037, %v6054
    %v6058 = vadd.f32 %v6038, %v6054
    %v6059 = vadd.f32 %v6039, %v6054
    %v6060 = vadd.f32 %v6040, %v6054
    %v6061 = vadd.f32 %v6041, %v6054
    %v6062 = vadd.f32 %v6042, %v6054
    %v6063 = vadd.f32 %v6043, %v6054
    %v6064 = vadd.f32 %v6044, %v6054
    %v6065 = vadd.f32 %v6045, %v6054
    %v6066 = vadd.f32 %v6046, %v6054
    %v6067 = vadd.f32 %v6047, %v6054
    %v6068 = vadd.f32 %v6048, %v6054
    %v6069 = vadd.f32 %v6049, %v6054
    %v6070 = vadd.f32 %v6050, %v6054
    %v6071 = vmax.f32 %v6055, 0.0
    %v6072 = vmax.f32 %v6056, 0.0
    %v6073 = vmax.f32 %v6057, 0.0
    %v6074 = vmax.f32 %v6058, 0.0
    %v6075 = vmax.f32 %v6059, 0.0
    %v6076 = vmax.f32 %v6060, 0.0
    %v6077 = vmax.f32 %v6061, 0.0
    %v6078 = vmax.f32 %v6062, 0.0
    %v6079 = vmax.f32 %v6063, 0.0
    %v6080 = vmax.f32 %v6064, 0.0
    %v6081 = vmax.f32 %v6065, 0.0
    %v6082 = vmax.f32 %v6066, 0.0
    %v6083 = vmax.f32 %v6067, 0.0
    %v6084 = vmax.f32 %v6068, 0.0
    %v6085 = vmax.f32 %v6069, 0.0
    %v6086 = vmax.f32 %v6070, 0.0
    %6087 = vst.msk [vmem:[#allocation2 + $0x8] sm:$0xff] %vm45, %v6071
    %6088 = vst.msk [vmem:[#allocation2 + $0x10] sm:$0xff] %vm45, %v6072
    %6089 = vst.msk [vmem:[#allocation2 + $0x18] sm:$0xff] %vm45, %v6073
    %6090 = vst.msk [vmem:[#allocation2 + $0x20] sm:$0xff] %vm45, %v6074
    %6091 = vst.msk [vmem:[#allocation2 + $0x28] sm:$0xff] %vm45, %v6075
    %6092 = vst.msk [vmem:[#allocation2 + $0x30] sm:$0xff] %vm45, %v6076
    %6093 = vst.msk [vmem:[#allocation2 + $0x38] sm:$0xff] %vm45, %v6077
    %6094 = vst.msk [vmem:[#allocation2 + $0x40] sm:$0xff] %vm45, %v6078
    %6095 = vst.msk [vmem:[#allocation2 + $0x58] sm:$0xff] %vm45, %v6079
    %6096 = vst.msk [vmem:[#allocation2 + $0x60] sm:$0xff] %vm45, %v6080
    %6097 = vst.msk [vmem:[#allocation2 + $0x68] sm:$0xff] %vm45, %v6081
    %6098 = vst.msk [vmem:[#allocation2 + $0x70] sm:$0xff] %vm45, %v6082
    %6099 = vst.msk [vmem:[#allocation2 + $0x78] sm:$0xff] %vm45, %v6083
    %6100 = vst.msk [vmem:[#allocation2 + $0x80] sm:$0xff] %vm45, %v6084
    %6101 = vst.msk [vmem:[#allocation2 + $0x88] sm:$0xff] %vm45, %v6085
    %6102 = vst.msk [vmem:[#allocation2 + $0x90] sm:$0xff] %vm45, %v6086
    %v6103 = vld [vmem:[#allocation2 + $0x4] sm:$0xff]
    %v6104 = vld [vmem:[#allocation2 + $0xc] sm:$0xff]
    %v6105 = vld [vmem:[#allocation2 + $0x14] sm:$0xff]
    %v6106 = vld [vmem:[#allocation2 + $0x1c] sm:$0xff]
    %v6107 = vld [vmem:[#allocation2 + $0x24] sm:$0xff]
    %v6108 = vld [vmem:[#allocation2 + $0x2c] sm:$0xff]
    %v6109 = vld [vmem:[#allocation2 + $0x34] sm:$0xff]
    %v6110 = vld [vmem:[#allocation2 + $0x3c] sm:$0xff]
    %v6111 = vld [vmem:[#allocation2 + $0x54] sm:$0xff]
    %v6112 = vld [vmem:[#allocation2 + $0x5c] sm:$0xff]
    %v6113 = vld [vmem:[#allocation2 + $0x64] sm:$0xff]
    %v6114 = vld [vmem:[#allocation2 + $0x6c] sm:$0xff]
    %v6115 = vld [vmem:[#allocation2 + $0x74] sm:$0xff]
    %v6116 = vld [vmem:[#allocation2 + $0x7c] sm:$0xff]
    %v6117 = vld [vmem:[#allocation2 + $0x84] sm:$0xff]
    %v6118 = vld [vmem:[#allocation2 + $0x8c] sm:$0xff]
    %s6119 = scalar_lea.vmem [#allocation5], 320
    %v6120 = vld [vmem:[%s6119] sm:$0xff]
    %v6121 = vld [vmem:[%s6119 + $0x8] sm:$0xff]
    %v6122 = vld [vmem:[%s6119 + $0x10] sm:$0xff]
    %v6123 = vld [vmem:[%s6119 + $0x18] sm:$0xff]
    %v6124 = vld [vmem:[#allocation2 + $0x6] sm:$0xff]
    %v6125 = vld [vmem:[#allocation2 + $0xe] sm:$0xff]
    %v6126 = vld [vmem:[#allocation2 + $0x16] sm:$0xff]
    %v6127 = vld [vmem:[#allocation2 + $0x1e] sm:$0xff]
    %v6128 = vld [vmem:[#allocation2 + $0x26] sm:$0xff]
    %v6129 = vld [vmem:[#allocation2 + $0x2e] sm:$0xff]
    %v6130 = vld [vmem:[#allocation2 + $0x36] sm:$0xff]
    %v6131 = vld [vmem:[#allocation2 + $0x3e] sm:$0xff]
    %v6132 = vld [vmem:[#allocation2 + $0x56] sm:$0xff]
    %v6133 = vld [vmem:[#allocation2 + $0x5e] sm:$0xff]
    %v6134 = vld [vmem:[#allocation2 + $0x66] sm:$0xff]
    %v6135 = vld [vmem:[#allocation2 + $0x6e] sm:$0xff]
    %v6136 = vld [vmem:[#allocation2 + $0x76] sm:$0xff]
    %v6137 = vld [vmem:[#allocation2 + $0x7e] sm:$0xff]
    %v6138 = vld [vmem:[#allocation2 + $0x86] sm:$0xff]
    %v6139 = vld [vmem:[#allocation2 + $0x8e] sm:$0xff]
    %s6140 = scalar_lea.vmem [#allocation5], 352
    %v6141 = vld [vmem:[%s6140] sm:$0xff]
    %v6142 = vld [vmem:[%s6140 + $0x8] sm:$0xff]
    %v6143 = vld [vmem:[%s6140 + $0x10] sm:$0xff]
    %v6144 = vld [vmem:[%s6140 + $0x18] sm:$0xff]
    %v6146 = vsel %vm45, %v6124, 0
    %v6149 = vsel %vm45, %v6125, 0
    %v6152 = vsel %vm45, %v6126, 0
    %v6155 = vsel %vm45, %v6127, 0
    %v6158 = vsel %vm45, %v6128, 0
    %v6161 = vsel %vm45, %v6129, 0
    %v6164 = vsel %vm45, %v6130, 0
    %v6167 = vsel %vm45, %v6131, 0
    %v6170 = vsel %vm45, %v6132, 0
    %v6173 = vsel %vm45, %v6133, 0
    %v6176 = vsel %vm45, %v6134, 0
    %v6179 = vsel %vm45, %v6135, 0
    %v6182 = vsel %vm45, %v6136, 0
    %v6185 = vsel %vm45, %v6137, 0
    %v6188 = vsel %vm45, %v6138, 0
    %v6191 = vsel %vm45, %v6139, 0
    %6193 = vmatprep.subr.mxu0 0.0
    %6194 = vmatpush1.msra.mxu0 %v6141
    %6195 = vmatprep.subr.mxu0 0.0
    %6196 = vmatpush1.msra.mxu0 %v6142
    %6197 = vmatprep.subr.mxu0 0.0
    %6198 = vmatpush1.msra.mxu0 %v6143
    %6199 = vmatprep.subr.mxu0 0.0
    %6200 = vmatpush1.msra.mxu0 %v6144
    %6201 = vmatprep.subr.mxu0 0.0
    %6202 = vmatpush1.msra.mxu0 0.0
    %6203 = vmatprep.subr.mxu0 0.0
    %6204 = vmatpush1.msra.mxu0 0.0
    %6205 = vmatprep.subr.mxu0 0.0
    %6206 = vmatpush1.msra.mxu0 0.0
    %6207 = vmatprep.subr.mxu0 0.0
    %6208 = vmatpush1.msra.mxu0 0.0
    %6209 = vmatprep.subr.mxu0 0.0
    %6210 = vmatpush1.msra.mxu0 0.0
    %6211 = vmatprep.subr.mxu0 0.0
    %6212 = vmatpush1.msra.mxu0 0.0
    %6213 = vmatprep.subr.mxu0 0.0
    %6214 = vmatpush1.msra.mxu0 0.0
    %6215 = vmatprep.subr.mxu0 0.0
    %6216 = vmatpush1.msra.mxu0 0.0
    %6217 = vmatprep.subr.mxu0 0.0
    %6218 = vmatpush1.msra.mxu0 0.0
    %6219 = vmatprep.subr.mxu0 0.0
    %6220 = vmatpush1.msra.mxu0 0.0
    %6221 = vmatprep.subr.mxu0 0.0
    %6222 = vmatpush1.msra.mxu0 0.0
    %6223 = vmatprep.subr.mxu0 0.0
    %6224 = vmatpush1.msra.mxu0 0.0
    %6225 = vmatprep.subr.mxu0 0.0
    %6226 = vmatpush1.msra.mxu0 0.0
    %6227 = vmatprep.subr.mxu0 0.0
    %6228 = vmatpush1.msra.mxu0 0.0
    %6229 = vmatprep.subr.mxu0 0.0
    %6230 = vmatpush1.msra.mxu0 0.0
    %6231 = vmatprep.subr.mxu0 0.0
    %6232 = vmatpush1.msra.mxu0 0.0
    %6233 = vmatprep.subr.mxu0 0.0
    %6234 = vmatpush1.msra.mxu0 0.0
    %6235 = vmatprep.subr.mxu0 0.0
    %6236 = vmatpush1.msra.mxu0 0.0
    %6237 = vmatprep.subr.mxu0 0.0
    %6238 = vmatpush1.msra.mxu0 0.0
    %6239 = vmatprep.subr.mxu0 0.0
    %6240 = vmatpush1.msra.mxu0 0.0
    %6241 = vmatprep.subr.mxu0 0.0
    %6242 = vmatpush1.msra.mxu0 0.0
    %6243 = vmatprep.subr.mxu0 0.0
    %6244 = vmatpush1.msra.mxu0 0.0
    %6245 = vmatprep.subr.mxu0 0.0
    %6246 = vmatpush1.msra.mxu0 0.0
    %6247 = vmatprep.subr.mxu0 0.0
    %6248 = vmatpush1.msra.mxu0 0.0
    %6249 = vmatprep.subr.mxu0 0.0
    %6250 = vmatpush1.msra.mxu0 0.0
    %6251 = vmatprep.subr.mxu0 0.0
    %6252 = vmatpush1.msra.mxu0 0.0
    %6253 = vmatprep.subr.mxu0 0.0
    %6254 = vmatpush1.msra.mxu0 0.0
    %6255 = vmatprep.subr.mxu0 0.0
    %6256 = vmatpush1.msra.mxu0 0.0
    %6257 = vmatprep.mubr.f32.mxu0 0.0
    %6258 = vmatmul.mubr.f32.gmra.mrb[0].mxu0 %v6146
    %v6259 = vpop.f32.mrb[0].mxu0
    %v6260 = vadd.f32 0.0, %v6259
    %v6261 = vpop.f32.mrb[0].mxu0
    %6262 = vmatprep.mubr.f32.mxu0 0.0
    %6263 = vmatmul.mubr.f32.gmra.mrb[0].mxu0 %v6149
    %v6264 = vpop.f32.mrb[0].mxu0
    %v6265 = vadd.f32 0.0, %v6264
    %v6266 = vpop.f32.mrb[0].mxu0
    %6267 = vmatprep.mubr.f32.mxu0 0.0
    %6268 = vmatmul.mubr.f32.gmra.mrb[0].mxu0 %v6152
    %v6269 = vpop.f32.mrb[0].mxu0
    %v6270 = vadd.f32 0.0, %v6269
    %v6271 = vpop.f32.mrb[0].mxu0
    %6272 = vmatprep.mubr.f32.mxu0 0.0
    %6273 = vmatmul.mubr.f32.gmra.mrb[0].mxu0 %v6155
    %v6274 = vpop.f32.mrb[0].mxu0
    %v6275 = vadd.f32 0.0, %v6274
    %v6276 = vpop.f32.mrb[0].mxu0
    %6277 = vmatprep.mubr.f32.mxu0 0.0
    %6278 = vmatmul.mubr.f32.gmra.mrb[0].mxu0 %v6158
    %v6279 = vpop.f32.mrb[0].mxu0
    %v6280 = vadd.f32 0.0, %v6279
    %v6281 = vpop.f32.mrb[0].mxu0
    %6282 = vmatprep.mubr.f32.mxu0 0.0
    %6283 = vmatmul.mubr.f32.gmra.mrb[0].mxu0 %v6161
    %v6284 = vpop.f32.mrb[0].mxu0
    %v6285 = vadd.f32 0.0, %v6284
    %v6286 = vpop.f32.mrb[0].mxu0
    %6287 = vmatprep.mubr.f32.mxu0 0.0
    %6288 = vmatmul.mubr.f32.gmra.mrb[0].mxu0 %v6164
    %v6289 = vpop.f32.mrb[0].mxu0
    %v6290 = vadd.f32 0.0, %v6289
    %v6291 = vpop.f32.mrb[0].mxu0
    %6292 = vmatprep.mubr.f32.mxu0 0.0
    %6293 = vmatmul.mubr.f32.gmra.mrb[0].mxu0 %v6167
    %v6294 = vpop.f32.mrb[0].mxu0
    %v6295 = vadd.f32 0.0, %v6294
    %v6296 = vpop.f32.mrb[0].mxu0
    %6297 = vmatprep.mubr.f32.mxu0 0.0
    %6298 = vmatmul.mubr.f32.gmra.mrb[0].mxu0 %v6170
    %v6299 = vpop.f32.mrb[0].mxu0
    %v6300 = vadd.f32 0.0, %v6299
    %v6301 = vpop.f32.mrb[0].mxu0
    %6302 = vmatprep.mubr.f32.mxu0 0.0
    %6303 = vmatmul.mubr.f32.gmra.mrb[0].mxu0 %v6173
    %v6304 = vpop.f32.mrb[0].mxu0
    %v6305 = vadd.f32 0.0, %v6304
    %v6306 = vpop.f32.mrb[0].mxu0
    %6307 = vmatprep.mubr.f32.mxu0 0.0
    %6308 = vmatmul.mubr.f32.gmra.mrb[0].mxu0 %v6176
    %v6309 = vpop.f32.mrb[0].mxu0
    %v6310 = vadd.f32 0.0, %v6309
    %v6311 = vpop.f32.mrb[0].mxu0
    %6312 = vmatprep.mubr.f32.mxu0 0.0
    %6313 = vmatmul.mubr.f32.gmra.mrb[0].mxu0 %v6179
    %v6314 = vpop.f32.mrb[0].mxu0
    %v6315 = vadd.f32 0.0, %v6314
    %v6316 = vpop.f32.mrb[0].mxu0
    %6317 = vmatprep.mubr.f32.mxu0 0.0
    %6318 = vmatmul.mubr.f32.gmra.mrb[0].mxu0 %v6182
    %v6319 = vpop.f32.mrb[0].mxu0
    %v6320 = vadd.f32 0.0, %v6319
    %v6321 = vpop.f32.mrb[0].mxu0
    %6322 = vmatprep.mubr.f32.mxu0 0.0
    %6323 = vmatmul.mubr.f32.gmra.mrb[0].mxu0 %v6185
    %v6324 = vpop.f32.mrb[0].mxu0
    %v6325 = vadd.f32 0.0, %v6324
    %v6326 = vpop.f32.mrb[0].mxu0
    %6327 = vmatprep.mubr.f32.mxu0 0.0
    %6328 = vmatmul.mubr.f32.gmra.mrb[0].mxu0 %v6188
    %v6329 = vpop.f32.mrb[0].mxu0
    %v6330 = vadd.f32 0.0, %v6329
    %v6331 = vpop.f32.mrb[0].mxu0
    %6332 = vmatprep.mubr.f32.mxu0 0.0
    %6333 = vmatmul.mubr.f32.gmra.mrb[0].mxu0 %v6191
    %v6334 = vpop.f32.mrb[0].mxu0
    %v6335 = vadd.f32 0.0, %v6334
    %v6336 = vpop.f32.mrb[0].mxu0
    %6337 = vdwg.mxu0
    %v6339 = vsel %vm45, %v6103, 0
    %v6342 = vsel %vm45, %v6104, 0
    %v6345 = vsel %vm45, %v6105, 0
    %v6348 = vsel %vm45, %v6106, 0
    %v6351 = vsel %vm45, %v6107, 0
    %v6354 = vsel %vm45, %v6108, 0
    %v6357 = vsel %vm45, %v6109, 0
    %v6360 = vsel %vm45, %v6110, 0
    %v6363 = vsel %vm45, %v6111, 0
    %v6366 = vsel %vm45, %v6112, 0
    %v6369 = vsel %vm45, %v6113, 0
    %v6372 = vsel %vm45, %v6114, 0
    %v6375 = vsel %vm45, %v6115, 0
    %v6378 = vsel %vm45, %v6116, 0
    %v6381 = vsel %vm45, %v6117, 0
    %v6384 = vsel %vm45, %v6118, 0
    %6386 = vmatprep.subr.mxu0 0.0
    %6387 = vmatpush1.msra.mxu0 %v6120
    %6388 = vmatprep.subr.mxu0 0.0
    %6389 = vmatpush1.msra.mxu0 %v6121
    %6390 = vmatprep.subr.mxu0 0.0
    %6391 = vmatpush1.msra.mxu0 %v6122
    %6392 = vmatprep.subr.mxu0 0.0
    %6393 = vmatpush1.msra.mxu0 %v6123
    %6394 = vmatprep.subr.mxu0 0.0
    %6395 = vmatpush1.msra.mxu0 0.0
    %6396 = vmatprep.subr.mxu0 0.0
    %6397 = vmatpush1.msra.mxu0 0.0
    %6398 = vmatprep.subr.mxu0 0.0
    %6399 = vmatpush1.msra.mxu0 0.0
    %6400 = vmatprep.subr.mxu0 0.0
    %6401 = vmatpush1.msra.mxu0 0.0
    %6402 = vmatprep.subr.mxu0 0.0
    %6403 = vmatpush1.msra.mxu0 0.0
    %6404 = vmatprep.subr.mxu0 0.0
    %6405 = vmatpush1.msra.mxu0 0.0
    %6406 = vmatprep.subr.mxu0 0.0
    %6407 = vmatpush1.msra.mxu0 0.0
    %6408 = vmatprep.subr.mxu0 0.0
    %6409 = vmatpush1.msra.mxu0 0.0
    %6410 = vmatprep.subr.mxu0 0.0
    %6411 = vmatpush1.msra.mxu0 0.0
    %6412 = vmatprep.subr.mxu0 0.0
    %6413 = vmatpush1.msra.mxu0 0.0
    %6414 = vmatprep.subr.mxu0 0.0
    %6415 = vmatpush1.msra.mxu0 0.0
    %6416 = vmatprep.subr.mxu0 0.0
    %6417 = vmatpush1.msra.mxu0 0.0
    %6418 = vmatprep.subr.mxu0 0.0
    %6419 = vmatpush1.msra.mxu0 0.0
    %6420 = vmatprep.subr.mxu0 0.0
    %6421 = vmatpush1.msra.mxu0 0.0
    %6422 = vmatprep.subr.mxu0 0.0
    %6423 = vmatpush1.msra.mxu0 0.0
    %6424 = vmatprep.subr.mxu0 0.0
    %6425 = vmatpush1.msra.mxu0 0.0
    %6426 = vmatprep.subr.mxu0 0.0
    %6427 = vmatpush1.msra.mxu0 0.0
    %6428 = vmatprep.subr.mxu0 0.0
    %6429 = vmatpush1.msra.mxu0 0.0
    %6430 = vmatprep.subr.mxu0 0.0
    %6431 = vmatpush1.msra.mxu0 0.0
    %6432 = vmatprep.subr.mxu0 0.0
    %6433 = vmatpush1.msra.mxu0 0.0
    %6434 = vmatprep.subr.mxu0 0.0
    %6435 = vmatpush1.msra.mxu0 0.0
    %6436 = vmatprep.subr.mxu0 0.0
    %6437 = vmatpush1.msra.mxu0 0.0
    %6438 = vmatprep.subr.mxu0 0.0
    %6439 = vmatpush1.msra.mxu0 0.0
    %6440 = vmatprep.subr.mxu0 0.0
    %6441 = vmatpush1.msra.mxu0 0.0
    %6442 = vmatprep.subr.mxu0 0.0
    %6443 = vmatpush1.msra.mxu0 0.0
    %6444 = vmatprep.subr.mxu0 0.0
    %6445 = vmatpush1.msra.mxu0 0.0
    %6446 = vmatprep.subr.mxu0 0.0
    %6447 = vmatpush1.msra.mxu0 0.0
    %6448 = vmatprep.subr.mxu0 0.0
    %6449 = vmatpush1.msra.mxu0 0.0
    %6450 = vmatprep.mubr.f32.mxu0 0.0
    %6451 = vmatmul.mubr.f32.gmra.mrb[0].mxu0 %v6339
    %v6452 = vpop.f32.mrb[0].mxu0
    %v6453 = vadd.f32 %v6260, %v6452
    %v6454 = vpop.f32.mrb[0].mxu0
    %6455 = vmatprep.mubr.f32.mxu0 0.0
    %6456 = vmatmul.mubr.f32.gmra.mrb[0].mxu0 %v6342
    %v6457 = vpop.f32.mrb[0].mxu0
    %v6458 = vadd.f32 %v6265, %v6457
    %v6459 = vpop.f32.mrb[0].mxu0
    %6460 = vmatprep.mubr.f32.mxu0 0.0
    %6461 = vmatmul.mubr.f32.gmra.mrb[0].mxu0 %v6345
    %v6462 = vpop.f32.mrb[0].mxu0
    %v6463 = vadd.f32 %v6270, %v6462
    %v6464 = vpop.f32.mrb[0].mxu0
    %6465 = vmatprep.mubr.f32.mxu0 0.0
    %6466 = vmatmul.mubr.f32.gmra.mrb[0].mxu0 %v6348
    %v6467 = vpop.f32.mrb[0].mxu0
    %v6468 = vadd.f32 %v6275, %v6467
    %v6469 = vpop.f32.mrb[0].mxu0
    %6470 = vmatprep.mubr.f32.mxu0 0.0
    %6471 = vmatmul.mubr.f32.gmra.mrb[0].mxu0 %v6351
    %v6472 = vpop.f32.mrb[0].mxu0
    %v6473 = vadd.f32 %v6280, %v6472
    %v6474 = vpop.f32.mrb[0].mxu0
    %6475 = vmatprep.mubr.f32.mxu0 0.0
    %6476 = vmatmul.mubr.f32.gmra.mrb[0].mxu0 %v6354
    %v6477 = vpop.f32.mrb[0].mxu0
    %v6478 = vadd.f32 %v6285, %v6477
    %v6479 = vpop.f32.mrb[0].mxu0
    %6480 = vmatprep.mubr.f32.mxu0 0.0
    %6481 = vmatmul.mubr.f32.gmra.mrb[0].mxu0 %v6357
    %v6482 = vpop.f32.mrb[0].mxu0
    %v6483 = vadd.f32 %v6290, %v6482
    %v6484 = vpop.f32.mrb[0].mxu0
    %6485 = vmatprep.mubr.f32.mxu0 0.0
    %6486 = vmatmul.mubr.f32.gmra.mrb[0].mxu0 %v6360
    %v6487 = vpop.f32.mrb[0].mxu0
    %v6488 = vadd.f32 %v6295, %v6487
    %v6489 = vpop.f32.mrb[0].mxu0
    %6490 = vmatprep.mubr.f32.mxu0 0.0
    %6491 = vmatmul.mubr.f32.gmra.mrb[0].mxu0 %v6363
    %v6492 = vpop.f32.mrb[0].mxu0
    %v6493 = vadd.f32 %v6300, %v6492
    %v6494 = vpop.f32.mrb[0].mxu0
    %6495 = vmatprep.mubr.f32.mxu0 0.0
    %6496 = vmatmul.mubr.f32.gmra.mrb[0].mxu0 %v6366
    %v6497 = vpop.f32.mrb[0].mxu0
    %v6498 = vadd.f32 %v6305, %v6497
    %v6499 = vpop.f32.mrb[0].mxu0
    %6500 = vmatprep.mubr.f32.mxu0 0.0
    %6501 = vmatmul.mubr.f32.gmra.mrb[0].mxu0 %v6369
    %v6502 = vpop.f32.mrb[0].mxu0
    %v6503 = vadd.f32 %v6310, %v6502
    %v6504 = vpop.f32.mrb[0].mxu0
    %6505 = vmatprep.mubr.f32.mxu0 0.0
    %6506 = vmatmul.mubr.f32.gmra.mrb[0].mxu0 %v6372
    %v6507 = vpop.f32.mrb[0].mxu0
    %v6508 = vadd.f32 %v6315, %v6507
    %v6509 = vpop.f32.mrb[0].mxu0
    %6510 = vmatprep.mubr.f32.mxu0 0.0
    %6511 = vmatmul.mubr.f32.gmra.mrb[0].mxu0 %v6375
    %v6512 = vpop.f32.mrb[0].mxu0
    %v6513 = vadd.f32 %v6320, %v6512
    %v6514 = vpop.f32.mrb[0].mxu0
    %6515 = vmatprep.mubr.f32.mxu0 0.0
    %6516 = vmatmul.mubr.f32.gmra.mrb[0].mxu0 %v6378
    %v6517 = vpop.f32.mrb[0].mxu0
    %v6518 = vadd.f32 %v6325, %v6517
    %v6519 = vpop.f32.mrb[0].mxu0
    %6520 = vmatprep.mubr.f32.mxu0 0.0
    %6521 = vmatmul.mubr.f32.gmra.mrb[0].mxu0 %v6381
    %v6522 = vpop.f32.mrb[0].mxu0
    %v6523 = vadd.f32 %v6330, %v6522
    %v6524 = vpop.f32.mrb[0].mxu0
    %6525 = vmatprep.mubr.f32.mxu0 0.0
    %6526 = vmatmul.mubr.f32.gmra.mrb[0].mxu0 %v6384
    %v6527 = vpop.f32.mrb[0].mxu0
    %v6528 = vadd.f32 %v6335, %v6527
    %v6529 = vpop.f32.mrb[0].mxu0
    %6530 = vdwg.mxu0
    %v6531 = vld [vmem:[#allocation2 + $0x8] sm:$0xff]
    %v6532 = vld [vmem:[#allocation2 + $0x10] sm:$0xff]
    %v6533 = vld [vmem:[#allocation2 + $0x18] sm:$0xff]
    %v6534 = vld [vmem:[#allocation2 + $0x20] sm:$0xff]
    %v6535 = vld [vmem:[#allocation2 + $0x28] sm:$0xff]
    %v6536 = vld [vmem:[#allocation2 + $0x30] sm:$0xff]
    %v6537 = vld [vmem:[#allocation2 + $0x38] sm:$0xff]
    %v6538 = vld [vmem:[#allocation2 + $0x40] sm:$0xff]
    %v6539 = vld [vmem:[#allocation2 + $0x58] sm:$0xff]
    %v6540 = vld [vmem:[#allocation2 + $0x60] sm:$0xff]
    %v6541 = vld [vmem:[#allocation2 + $0x68] sm:$0xff]
    %v6542 = vld [vmem:[#allocation2 + $0x70] sm:$0xff]
    %v6543 = vld [vmem:[#allocation2 + $0x78] sm:$0xff]
    %v6544 = vld [vmem:[#allocation2 + $0x80] sm:$0xff]
    %v6545 = vld [vmem:[#allocation2 + $0x88] sm:$0xff]
    %v6546 = vld [vmem:[#allocation2 + $0x90] sm:$0xff]
    %s6547 = scalar_lea.vmem [#allocation5], 384
    %v6548 = vld [vmem:[%s6547] sm:$0xff]
    %v6549 = vld [vmem:[%s6547 + $0x8] sm:$0xff]
    %v6550 = vld [vmem:[%s6547 + $0x10] sm:$0xff]
    %v6551 = vld [vmem:[%s6547 + $0x18] sm:$0xff]
    %v6553 = vsel %vm45, %v6531, 0
    %v6556 = vsel %vm45, %v6532, 0
    %v6559 = vsel %vm45, %v6533, 0
    %v6562 = vsel %vm45, %v6534, 0
    %v6565 = vsel %vm45, %v6535, 0
    %v6568 = vsel %vm45, %v6536, 0
    %v6571 = vsel %vm45, %v6537, 0
    %v6574 = vsel %vm45, %v6538, 0
    %v6577 = vsel %vm45, %v6539, 0
    %v6580 = vsel %vm45, %v6540, 0
    %v6583 = vsel %vm45, %v6541, 0
    %v6586 = vsel %vm45, %v6542, 0
    %v6589 = vsel %vm45, %v6543, 0
    %v6592 = vsel %vm45, %v6544, 0
    %v6595 = vsel %vm45, %v6545, 0
    %v6598 = vsel %vm45, %v6546, 0
    %6600 = vmatprep.subr.mxu0 0.0
    %6601 = vmatpush1.msra.mxu0 %v6548
    %6602 = vmatprep.subr.mxu0 0.0
    %6603 = vmatpush1.msra.mxu0 %v6549
    %6604 = vmatprep.subr.mxu0 0.0
    %6605 = vmatpush1.msra.mxu0 %v6550
    %6606 = vmatprep.subr.mxu0 0.0
    %6607 = vmatpush1.msra.mxu0 %v6551
    %6608 = vmatprep.subr.mxu0 0.0
    %6609 = vmatpush1.msra.mxu0 0.0
    %6610 = vmatprep.subr.mxu0 0.0
    %6611 = vmatpush1.msra.mxu0 0.0
    %6612 = vmatprep.subr.mxu0 0.0
    %6613 = vmatpush1.msra.mxu0 0.0
    %6614 = vmatprep.subr.mxu0 0.0
    %6615 = vmatpush1.msra.mxu0 0.0
    %6616 = vmatprep.subr.mxu0 0.0
    %6617 = vmatpush1.msra.mxu0 0.0
    %6618 = vmatprep.subr.mxu0 0.0
    %6619 = vmatpush1.msra.mxu0 0.0
    %6620 = vmatprep.subr.mxu0 0.0
    %6621 = vmatpush1.msra.mxu0 0.0
    %6622 = vmatprep.subr.mxu0 0.0
    %6623 = vmatpush1.msra.mxu0 0.0
    %6624 = vmatprep.subr.mxu0 0.0
    %6625 = vmatpush1.msra.mxu0 0.0
    %6626 = vmatprep.subr.mxu0 0.0
    %6627 = vmatpush1.msra.mxu0 0.0
    %6628 = vmatprep.subr.mxu0 0.0
    %6629 = vmatpush1.msra.mxu0 0.0
    %6630 = vmatprep.subr.mxu0 0.0
    %6631 = vmatpush1.msra.mxu0 0.0
    %6632 = vmatprep.subr.mxu0 0.0
    %6633 = vmatpush1.msra.mxu0 0.0
    %6634 = vmatprep.subr.mxu0 0.0
    %6635 = vmatpush1.msra.mxu0 0.0
    %6636 = vmatprep.subr.mxu0 0.0
    %6637 = vmatpush1.msra.mxu0 0.0
    %6638 = vmatprep.subr.mxu0 0.0
    %6639 = vmatpush1.msra.mxu0 0.0
    %6640 = vmatprep.subr.mxu0 0.0
    %6641 = vmatpush1.msra.mxu0 0.0
    %6642 = vmatprep.subr.mxu0 0.0
    %6643 = vmatpush1.msra.mxu0 0.0
    %6644 = vmatprep.subr.mxu0 0.0
    %6645 = vmatpush1.msra.mxu0 0.0
    %6646 = vmatprep.subr.mxu0 0.0
    %6647 = vmatpush1.msra.mxu0 0.0
    %6648 = vmatprep.subr.mxu0 0.0
    %6649 = vmatpush1.msra.mxu0 0.0
    %6650 = vmatprep.subr.mxu0 0.0
    %6651 = vmatpush1.msra.mxu0 0.0
    %6652 = vmatprep.subr.mxu0 0.0
    %6653 = vmatpush1.msra.mxu0 0.0
    %6654 = vmatprep.subr.mxu0 0.0
    %6655 = vmatpush1.msra.mxu0 0.0
    %6656 = vmatprep.subr.mxu0 0.0
    %6657 = vmatpush1.msra.mxu0 0.0
    %6658 = vmatprep.subr.mxu0 0.0
    %6659 = vmatpush1.msra.mxu0 0.0
    %6660 = vmatprep.subr.mxu0 0.0
    %6661 = vmatpush1.msra.mxu0 0.0
    %6662 = vmatprep.subr.mxu0 0.0
    %6663 = vmatpush1.msra.mxu0 0.0
    %6664 = vmatprep.mubr.f32.mxu0 0.0
    %6665 = vmatmul.mubr.f32.gmra.mrb[0].mxu0 %v6553
    %v6666 = vpop.f32.mrb[0].mxu0
    %v6667 = vadd.f32 0.0, %v6666
    %v6668 = vpop.f32.mrb[0].mxu0
    %6669 = vmatprep.mubr.f32.mxu0 0.0
    %6670 = vmatmul.mubr.f32.gmra.mrb[0].mxu0 %v6556
    %v6671 = vpop.f32.mrb[0].mxu0
    %v6672 = vadd.f32 0.0, %v6671
    %v6673 = vpop.f32.mrb[0].mxu0
    %6674 = vmatprep.mubr.f32.mxu0 0.0
    %6675 = vmatmul.mubr.f32.gmra.mrb[0].mxu0 %v6559
    %v6676 = vpop.f32.mrb[0].mxu0
    %v6677 = vadd.f32 0.0, %v6676
    %v6678 = vpop.f32.mrb[0].mxu0
    %6679 = vmatprep.mubr.f32.mxu0 0.0
    %6680 = vmatmul.mubr.f32.gmra.mrb[0].mxu0 %v6562
    %v6681 = vpop.f32.mrb[0].mxu0
    %v6682 = vadd.f32 0.0, %v6681
    %v6683 = vpop.f32.mrb[0].mxu0
    %6684 = vmatprep.mubr.f32.mxu0 0.0
    %6685 = vmatmul.mubr.f32.gmra.mrb[0].mxu0 %v6565
    %v6686 = vpop.f32.mrb[0].mxu0
    %v6687 = vadd.f32 0.0, %v6686
    %v6688 = vpop.f32.mrb[0].mxu0
    %6689 = vmatprep.mubr.f32.mxu0 0.0
    %6690 = vmatmul.mubr.f32.gmra.mrb[0].mxu0 %v6568
    %v6691 = vpop.f32.mrb[0].mxu0
    %v6692 = vadd.f32 0.0, %v6691
    %v6693 = vpop.f32.mrb[0].mxu0
    %6694 = vmatprep.mubr.f32.mxu0 0.0
    %6695 = vmatmul.mubr.f32.gmra.mrb[0].mxu0 %v6571
    %v6696 = vpop.f32.mrb[0].mxu0
    %v6697 = vadd.f32 0.0, %v6696
    %v6698 = vpop.f32.mrb[0].mxu0
    %6699 = vmatprep.mubr.f32.mxu0 0.0
    %6700 = vmatmul.mubr.f32.gmra.mrb[0].mxu0 %v6574
    %v6701 = vpop.f32.mrb[0].mxu0
    %v6702 = vadd.f32 0.0, %v6701
    %v6703 = vpop.f32.mrb[0].mxu0
    %6704 = vmatprep.mubr.f32.mxu0 0.0
    %6705 = vmatmul.mubr.f32.gmra.mrb[0].mxu0 %v6577
    %v6706 = vpop.f32.mrb[0].mxu0
    %v6707 = vadd.f32 0.0, %v6706
    %v6708 = vpop.f32.mrb[0].mxu0
    %6709 = vmatprep.mubr.f32.mxu0 0.0
    %6710 = vmatmul.mubr.f32.gmra.mrb[0].mxu0 %v6580
    %v6711 = vpop.f32.mrb[0].mxu0
    %v6712 = vadd.f32 0.0, %v6711
    %v6713 = vpop.f32.mrb[0].mxu0
    %6714 = vmatprep.mubr.f32.mxu0 0.0
    %6715 = vmatmul.mubr.f32.gmra.mrb[0].mxu0 %v6583
    %v6716 = vpop.f32.mrb[0].mxu0
    %v6717 = vadd.f32 0.0, %v6716
    %v6718 = vpop.f32.mrb[0].mxu0
    %6719 = vmatprep.mubr.f32.mxu0 0.0
    %6720 = vmatmul.mubr.f32.gmra.mrb[0].mxu0 %v6586
    %v6721 = vpop.f32.mrb[0].mxu0
    %v6722 = vadd.f32 0.0, %v6721
    %v6723 = vpop.f32.mrb[0].mxu0
    %6724 = vmatprep.mubr.f32.mxu0 0.0
    %6725 = vmatmul.mubr.f32.gmra.mrb[0].mxu0 %v6589
    %v6726 = vpop.f32.mrb[0].mxu0
    %v6727 = vadd.f32 0.0, %v6726
    %v6728 = vpop.f32.mrb[0].mxu0
    %6729 = vmatprep.mubr.f32.mxu0 0.0
    %6730 = vmatmul.mubr.f32.gmra.mrb[0].mxu0 %v6592
    %v6731 = vpop.f32.mrb[0].mxu0
    %v6732 = vadd.f32 0.0, %v6731
    %v6733 = vpop.f32.mrb[0].mxu0
    %6734 = vmatprep.mubr.f32.mxu0 0.0
    %6735 = vmatmul.mubr.f32.gmra.mrb[0].mxu0 %v6595
    %v6736 = vpop.f32.mrb[0].mxu0
    %v6737 = vadd.f32 0.0, %v6736
    %v6738 = vpop.f32.mrb[0].mxu0
    %6739 = vmatprep.mubr.f32.mxu0 0.0
    %6740 = vmatmul.mubr.f32.gmra.mrb[0].mxu0 %v6598
    %v6741 = vpop.f32.mrb[0].mxu0
    %v6742 = vadd.f32 0.0, %v6741
    %v6743 = vpop.f32.mrb[0].mxu0
    %6744 = vdwg.mxu0
    %v6745 = vadd.f32 %v6453, %v6667
    %v6746 = vadd.f32 %v6458, %v6672
    %v6747 = vadd.f32 %v6463, %v6677
    %v6748 = vadd.f32 %v6468, %v6682
    %v6749 = vadd.f32 %v6473, %v6687
    %v6750 = vadd.f32 %v6478, %v6692
    %v6751 = vadd.f32 %v6483, %v6697
    %v6752 = vadd.f32 %v6488, %v6702
    %v6753 = vadd.f32 %v6493, %v6707
    %v6754 = vadd.f32 %v6498, %v6712
    %v6755 = vadd.f32 %v6503, %v6717
    %v6756 = vadd.f32 %v6508, %v6722
    %v6757 = vadd.f32 %v6513, %v6727
    %v6758 = vadd.f32 %v6518, %v6732
    %v6759 = vadd.f32 %v6523, %v6737
    %v6760 = vadd.f32 %v6528, %v6742
    %v6761 = vld [vmem:[#allocation2 + $0xa] sm:$0xff]
    %v6762 = vld [vmem:[#allocation2 + $0x12] sm:$0xff]
    %v6763 = vld [vmem:[#allocation2 + $0x1a] sm:$0xff]
    %v6764 = vld [vmem:[#allocation2 + $0x22] sm:$0xff]
    %v6765 = vld [vmem:[#allocation2 + $0x2a] sm:$0xff]
    %v6766 = vld [vmem:[#allocation2 + $0x32] sm:$0xff]
    %v6767 = vld [vmem:[#allocation2 + $0x3a] sm:$0xff]
    %v6768 = vld [vmem:[#allocation2 + $0x42] sm:$0xff]
    %v6769 = vld [vmem:[#allocation2 + $0x5a] sm:$0xff]
    %v6770 = vld [vmem:[#allocation2 + $0x62] sm:$0xff]
    %v6771 = vld [vmem:[#allocation2 + $0x6a] sm:$0xff]
    %v6772 = vld [vmem:[#allocation2 + $0x72] sm:$0xff]
    %v6773 = vld [vmem:[#allocation2 + $0x7a] sm:$0xff]
    %v6774 = vld [vmem:[#allocation2 + $0x82] sm:$0xff]
    %v6775 = vld [vmem:[#allocation2 + $0x8a] sm:$0xff]
    %v6776 = vld [vmem:[#allocation2 + $0x92] sm:$0xff]
    %s6777 = scalar_lea.vmem [#allocation5], 416
    %v6778 = vld [vmem:[%s6777] sm:$0xff]
    %v6779 = vld [vmem:[%s6777 + $0x8] sm:$0xff]
    %v6780 = vld [vmem:[%s6777 + $0x10] sm:$0xff]
    %v6781 = vld [vmem:[%s6777 + $0x18] sm:$0xff]
    %v6783 = vsel %vm45, %v6761, 0
    %v6786 = vsel %vm45, %v6762, 0
    %v6789 = vsel %vm45, %v6763, 0
    %v6792 = vsel %vm45, %v6764, 0
    %v6795 = vsel %vm45, %v6765, 0
    %v6798 = vsel %vm45, %v6766, 0
    %v6801 = vsel %vm45, %v6767, 0
    %v6804 = vsel %vm45, %v6768, 0
    %v6807 = vsel %vm45, %v6769, 0
    %v6810 = vsel %vm45, %v6770, 0
    %v6813 = vsel %vm45, %v6771, 0
    %v6816 = vsel %vm45, %v6772, 0
    %v6819 = vsel %vm45, %v6773, 0
    %v6822 = vsel %vm45, %v6774, 0
    %v6825 = vsel %vm45, %v6775, 0
    %v6828 = vsel %vm45, %v6776, 0
    %6830 = vmatprep.subr.mxu0 0.0
    %6831 = vmatpush1.msra.mxu0 %v6778
    %6832 = vmatprep.subr.mxu0 0.0
    %6833 = vmatpush1.msra.mxu0 %v6779
    %6834 = vmatprep.subr.mxu0 0.0
    %6835 = vmatpush1.msra.mxu0 %v6780
    %6836 = vmatprep.subr.mxu0 0.0
    %6837 = vmatpush1.msra.mxu0 %v6781
    %6838 = vmatprep.subr.mxu0 0.0
    %6839 = vmatpush1.msra.mxu0 0.0
    %6840 = vmatprep.subr.mxu0 0.0
    %6841 = vmatpush1.msra.mxu0 0.0
    %6842 = vmatprep.subr.mxu0 0.0
    %6843 = vmatpush1.msra.mxu0 0.0
    %6844 = vmatprep.subr.mxu0 0.0
    %6845 = vmatpush1.msra.mxu0 0.0
    %6846 = vmatprep.subr.mxu0 0.0
    %6847 = vmatpush1.msra.mxu0 0.0
    %6848 = vmatprep.subr.mxu0 0.0
    %6849 = vmatpush1.msra.mxu0 0.0
    %6850 = vmatprep.subr.mxu0 0.0
    %6851 = vmatpush1.msra.mxu0 0.0
    %6852 = vmatprep.subr.mxu0 0.0
    %6853 = vmatpush1.msra.mxu0 0.0
    %6854 = vmatprep.subr.mxu0 0.0
    %6855 = vmatpush1.msra.mxu0 0.0
    %6856 = vmatprep.subr.mxu0 0.0
    %6857 = vmatpush1.msra.mxu0 0.0
    %6858 = vmatprep.subr.mxu0 0.0
    %6859 = vmatpush1.msra.mxu0 0.0
    %6860 = vmatprep.subr.mxu0 0.0
    %6861 = vmatpush1.msra.mxu0 0.0
    %6862 = vmatprep.subr.mxu0 0.0
    %6863 = vmatpush1.msra.mxu0 0.0
    %6864 = vmatprep.subr.mxu0 0.0
    %6865 = vmatpush1.msra.mxu0 0.0
    %6866 = vmatprep.subr.mxu0 0.0
    %6867 = vmatpush1.msra.mxu0 0.0
    %6868 = vmatprep.subr.mxu0 0.0
    %6869 = vmatpush1.msra.mxu0 0.0
    %6870 = vmatprep.subr.mxu0 0.0
    %6871 = vmatpush1.msra.mxu0 0.0
    %6872 = vmatprep.subr.mxu0 0.0
    %6873 = vmatpush1.msra.mxu0 0.0
    %6874 = vmatprep.subr.mxu0 0.0
    %6875 = vmatpush1.msra.mxu0 0.0
    %6876 = vmatprep.subr.mxu0 0.0
    %6877 = vmatpush1.msra.mxu0 0.0
    %6878 = vmatprep.subr.mxu0 0.0
    %6879 = vmatpush1.msra.mxu0 0.0
    %6880 = vmatprep.subr.mxu0 0.0
    %6881 = vmatpush1.msra.mxu0 0.0
    %6882 = vmatprep.subr.mxu0 0.0
    %6883 = vmatpush1.msra.mxu0 0.0
    %6884 = vmatprep.subr.mxu0 0.0
    %6885 = vmatpush1.msra.mxu0 0.0
    %6886 = vmatprep.subr.mxu0 0.0
    %6887 = vmatpush1.msra.mxu0 0.0
    %6888 = vmatprep.subr.mxu0 0.0
    %6889 = vmatpush1.msra.mxu0 0.0
    %6890 = vmatprep.subr.mxu0 0.0
    %6891 = vmatpush1.msra.mxu0 0.0
    %6892 = vmatprep.subr.mxu0 0.0
    %6893 = vmatpush1.msra.mxu0 0.0
    %6894 = vmatprep.mubr.f32.mxu0 0.0
    %6895 = vmatmul.mubr.f32.gmra.mrb[0].mxu0 %v6783
    %v6896 = vpop.f32.mrb[0].mxu0
    %v6897 = vadd.f32 0.0, %v6896
    %v6898 = vpop.f32.mrb[0].mxu0
    %6899 = vmatprep.mubr.f32.mxu0 0.0
    %6900 = vmatmul.mubr.f32.gmra.mrb[0].mxu0 %v6786
    %v6901 = vpop.f32.mrb[0].mxu0
    %v6902 = vadd.f32 0.0, %v6901
    %v6903 = vpop.f32.mrb[0].mxu0
    %6904 = vmatprep.mubr.f32.mxu0 0.0
    %6905 = vmatmul.mubr.f32.gmra.mrb[0].mxu0 %v6789
    %v6906 = vpop.f32.mrb[0].mxu0
    %v6907 = vadd.f32 0.0, %v6906
    %v6908 = vpop.f32.mrb[0].mxu0
    %6909 = vmatprep.mubr.f32.mxu0 0.0
    %6910 = vmatmul.mubr.f32.gmra.mrb[0].mxu0 %v6792
    %v6911 = vpop.f32.mrb[0].mxu0
    %v6912 = vadd.f32 0.0, %v6911
    %v6913 = vpop.f32.mrb[0].mxu0
    %6914 = vmatprep.mubr.f32.mxu0 0.0
    %6915 = vmatmul.mubr.f32.gmra.mrb[0].mxu0 %v6795
    %v6916 = vpop.f32.mrb[0].mxu0
    %v6917 = vadd.f32 0.0, %v6916
    %v6918 = vpop.f32.mrb[0].mxu0
    %6919 = vmatprep.mubr.f32.mxu0 0.0
    %6920 = vmatmul.mubr.f32.gmra.mrb[0].mxu0 %v6798
    %v6921 = vpop.f32.mrb[0].mxu0
    %v6922 = vadd.f32 0.0, %v6921
    %v6923 = vpop.f32.mrb[0].mxu0
    %6924 = vmatprep.mubr.f32.mxu0 0.0
    %6925 = vmatmul.mubr.f32.gmra.mrb[0].mxu0 %v6801
    %v6926 = vpop.f32.mrb[0].mxu0
    %v6927 = vadd.f32 0.0, %v6926
    %v6928 = vpop.f32.mrb[0].mxu0
    %6929 = vmatprep.mubr.f32.mxu0 0.0
    %6930 = vmatmul.mubr.f32.gmra.mrb[0].mxu0 %v6804
    %v6931 = vpop.f32.mrb[0].mxu0
    %v6932 = vadd.f32 0.0, %v6931
    %v6933 = vpop.f32.mrb[0].mxu0
    %6934 = vmatprep.mubr.f32.mxu0 0.0
    %6935 = vmatmul.mubr.f32.gmra.mrb[0].mxu0 %v6807
    %v6936 = vpop.f32.mrb[0].mxu0
    %v6937 = vadd.f32 0.0, %v6936
    %v6938 = vpop.f32.mrb[0].mxu0
    %6939 = vmatprep.mubr.f32.mxu0 0.0
    %6940 = vmatmul.mubr.f32.gmra.mrb[0].mxu0 %v6810
    %v6941 = vpop.f32.mrb[0].mxu0
    %v6942 = vadd.f32 0.0, %v6941
    %v6943 = vpop.f32.mrb[0].mxu0
    %6944 = vmatprep.mubr.f32.mxu0 0.0
    %6945 = vmatmul.mubr.f32.gmra.mrb[0].mxu0 %v6813
    %v6946 = vpop.f32.mrb[0].mxu0
    %v6947 = vadd.f32 0.0, %v6946
    %v6948 = vpop.f32.mrb[0].mxu0
    %6949 = vmatprep.mubr.f32.mxu0 0.0
    %6950 = vmatmul.mubr.f32.gmra.mrb[0].mxu0 %v6816
    %v6951 = vpop.f32.mrb[0].mxu0
    %v6952 = vadd.f32 0.0, %v6951
    %v6953 = vpop.f32.mrb[0].mxu0
    %6954 = vmatprep.mubr.f32.mxu0 0.0
    %6955 = vmatmul.mubr.f32.gmra.mrb[0].mxu0 %v6819
    %v6956 = vpop.f32.mrb[0].mxu0
    %v6957 = vadd.f32 0.0, %v6956
    %v6958 = vpop.f32.mrb[0].mxu0
    %6959 = vmatprep.mubr.f32.mxu0 0.0
    %6960 = vmatmul.mubr.f32.gmra.mrb[0].mxu0 %v6822
    %v6961 = vpop.f32.mrb[0].mxu0
    %v6962 = vadd.f32 0.0, %v6961
    %v6963 = vpop.f32.mrb[0].mxu0
    %6964 = vmatprep.mubr.f32.mxu0 0.0
    %6965 = vmatmul.mubr.f32.gmra.mrb[0].mxu0 %v6825
    %v6966 = vpop.f32.mrb[0].mxu0
    %v6967 = vadd.f32 0.0, %v6966
    %v6968 = vpop.f32.mrb[0].mxu0
    %6969 = vmatprep.mubr.f32.mxu0 0.0
    %6970 = vmatmul.mubr.f32.gmra.mrb[0].mxu0 %v6828
    %v6971 = vpop.f32.mrb[0].mxu0
    %v6972 = vadd.f32 0.0, %v6971
    %v6973 = vpop.f32.mrb[0].mxu0
    %6974 = vdwg.mxu0
    %v6975 = vadd.f32 %v6745, %v6897
    %v6976 = vadd.f32 %v6746, %v6902
    %v6977 = vadd.f32 %v6747, %v6907
    %v6978 = vadd.f32 %v6748, %v6912
    %v6979 = vadd.f32 %v6749, %v6917
    %v6980 = vadd.f32 %v6750, %v6922
    %v6981 = vadd.f32 %v6751, %v6927
    %v6982 = vadd.f32 %v6752, %v6932
    %v6983 = vadd.f32 %v6753, %v6937
    %v6984 = vadd.f32 %v6754, %v6942
    %v6985 = vadd.f32 %v6755, %v6947
    %v6986 = vadd.f32 %v6756, %v6952
    %v6987 = vadd.f32 %v6757, %v6957
    %v6988 = vadd.f32 %v6758, %v6962
    %v6989 = vadd.f32 %v6759, %v6967
    %v6990 = vadd.f32 %v6760, %v6972
    %v6991 = vld [vmem:[#allocation2 + $0xc] sm:$0xff]
    %v6992 = vld [vmem:[#allocation2 + $0x14] sm:$0xff]
    %v6993 = vld [vmem:[#allocation2 + $0x1c] sm:$0xff]
    %v6994 = vld [vmem:[#allocation2 + $0x24] sm:$0xff]
    %v6995 = vld [vmem:[#allocation2 + $0x2c] sm:$0xff]
    %v6996 = vld [vmem:[#allocation2 + $0x34] sm:$0xff]
    %v6997 = vld [vmem:[#allocation2 + $0x3c] sm:$0xff]
    %v6998 = vld [vmem:[#allocation2 + $0x44] sm:$0xff]
    %v6999 = vld [vmem:[#allocation2 + $0x5c] sm:$0xff]
    %v7000 = vld [vmem:[#allocation2 + $0x64] sm:$0xff]
    %v7001 = vld [vmem:[#allocation2 + $0x6c] sm:$0xff]
    %v7002 = vld [vmem:[#allocation2 + $0x74] sm:$0xff]
    %v7003 = vld [vmem:[#allocation2 + $0x7c] sm:$0xff]
    %v7004 = vld [vmem:[#allocation2 + $0x84] sm:$0xff]
    %v7005 = vld [vmem:[#allocation2 + $0x8c] sm:$0xff]
    %v7006 = vld [vmem:[#allocation2 + $0x94] sm:$0xff]
    %s7007 = scalar_lea.vmem [#allocation5], 448
    %v7008 = vld [vmem:[%s7007] sm:$0xff]
    %v7009 = vld [vmem:[%s7007 + $0x8] sm:$0xff]
    %v7010 = vld [vmem:[%s7007 + $0x10] sm:$0xff]
    %v7011 = vld [vmem:[%s7007 + $0x18] sm:$0xff]
    %v7013 = vsel %vm45, %v6991, 0
    %v7016 = vsel %vm45, %v6992, 0
    %v7019 = vsel %vm45, %v6993, 0
    %v7022 = vsel %vm45, %v6994, 0
    %v7025 = vsel %vm45, %v6995, 0
    %v7028 = vsel %vm45, %v6996, 0
    %v7031 = vsel %vm45, %v6997, 0
    %v7034 = vsel %vm45, %v6998, 0
    %v7037 = vsel %vm45, %v6999, 0
    %v7040 = vsel %vm45, %v7000, 0
    %v7043 = vsel %vm45, %v7001, 0
    %v7046 = vsel %vm45, %v7002, 0
    %v7049 = vsel %vm45, %v7003, 0
    %v7052 = vsel %vm45, %v7004, 0
    %v7055 = vsel %vm45, %v7005, 0
    %v7058 = vsel %vm45, %v7006, 0
    %7060 = vmatprep.subr.mxu0 0.0
    %7061 = vmatpush1.msra.mxu0 %v7008
    %7062 = vmatprep.subr.mxu0 0.0
    %7063 = vmatpush1.msra.mxu0 %v7009
    %7064 = vmatprep.subr.mxu0 0.0
    %7065 = vmatpush1.msra.mxu0 %v7010
    %7066 = vmatprep.subr.mxu0 0.0
    %7067 = vmatpush1.msra.mxu0 %v7011
    %7068 = vmatprep.subr.mxu0 0.0
    %7069 = vmatpush1.msra.mxu0 0.0
    %7070 = vmatprep.subr.mxu0 0.0
    %7071 = vmatpush1.msra.mxu0 0.0
    %7072 = vmatprep.subr.mxu0 0.0
    %7073 = vmatpush1.msra.mxu0 0.0
    %7074 = vmatprep.subr.mxu0 0.0
    %7075 = vmatpush1.msra.mxu0 0.0
    %7076 = vmatprep.subr.mxu0 0.0
    %7077 = vmatpush1.msra.mxu0 0.0
    %7078 = vmatprep.subr.mxu0 0.0
    %7079 = vmatpush1.msra.mxu0 0.0
    %7080 = vmatprep.subr.mxu0 0.0
    %7081 = vmatpush1.msra.mxu0 0.0
    %7082 = vmatprep.subr.mxu0 0.0
    %7083 = vmatpush1.msra.mxu0 0.0
    %7084 = vmatprep.subr.mxu0 0.0
    %7085 = vmatpush1.msra.mxu0 0.0
    %7086 = vmatprep.subr.mxu0 0.0
    %7087 = vmatpush1.msra.mxu0 0.0
    %7088 = vmatprep.subr.mxu0 0.0
    %7089 = vmatpush1.msra.mxu0 0.0
    %7090 = vmatprep.subr.mxu0 0.0
    %7091 = vmatpush1.msra.mxu0 0.0
    %7092 = vmatprep.subr.mxu0 0.0
    %7093 = vmatpush1.msra.mxu0 0.0
    %7094 = vmatprep.subr.mxu0 0.0
    %7095 = vmatpush1.msra.mxu0 0.0
    %7096 = vmatprep.subr.mxu0 0.0
    %7097 = vmatpush1.msra.mxu0 0.0
    %7098 = vmatprep.subr.mxu0 0.0
    %7099 = vmatpush1.msra.mxu0 0.0
    %7100 = vmatprep.subr.mxu0 0.0
    %7101 = vmatpush1.msra.mxu0 0.0
    %7102 = vmatprep.subr.mxu0 0.0
    %7103 = vmatpush1.msra.mxu0 0.0
    %7104 = vmatprep.subr.mxu0 0.0
    %7105 = vmatpush1.msra.mxu0 0.0
    %7106 = vmatprep.subr.mxu0 0.0
    %7107 = vmatpush1.msra.mxu0 0.0
    %7108 = vmatprep.subr.mxu0 0.0
    %7109 = vmatpush1.msra.mxu0 0.0
    %7110 = vmatprep.subr.mxu0 0.0
    %7111 = vmatpush1.msra.mxu0 0.0
    %7112 = vmatprep.subr.mxu0 0.0
    %7113 = vmatpush1.msra.mxu0 0.0
    %7114 = vmatprep.subr.mxu0 0.0
    %7115 = vmatpush1.msra.mxu0 0.0
    %7116 = vmatprep.subr.mxu0 0.0
    %7117 = vmatpush1.msra.mxu0 0.0
    %7118 = vmatprep.subr.mxu0 0.0
    %7119 = vmatpush1.msra.mxu0 0.0
    %7120 = vmatprep.subr.mxu0 0.0
    %7121 = vmatpush1.msra.mxu0 0.0
    %7122 = vmatprep.subr.mxu0 0.0
    %7123 = vmatpush1.msra.mxu0 0.0
    %7124 = vmatprep.mubr.f32.mxu0 0.0
    %7125 = vmatmul.mubr.f32.gmra.mrb[0].mxu0 %v7013
    %v7126 = vpop.f32.mrb[0].mxu0
    %v7127 = vadd.f32 0.0, %v7126
    %v7128 = vpop.f32.mrb[0].mxu0
    %7129 = vmatprep.mubr.f32.mxu0 0.0
    %7130 = vmatmul.mubr.f32.gmra.mrb[0].mxu0 %v7016
    %v7131 = vpop.f32.mrb[0].mxu0
    %v7132 = vadd.f32 0.0, %v7131
    %v7133 = vpop.f32.mrb[0].mxu0
    %7134 = vmatprep.mubr.f32.mxu0 0.0
    %7135 = vmatmul.mubr.f32.gmra.mrb[0].mxu0 %v7019
    %v7136 = vpop.f32.mrb[0].mxu0
    %v7137 = vadd.f32 0.0, %v7136
    %v7138 = vpop.f32.mrb[0].mxu0
    %7139 = vmatprep.mubr.f32.mxu0 0.0
    %7140 = vmatmul.mubr.f32.gmra.mrb[0].mxu0 %v7022
    %v7141 = vpop.f32.mrb[0].mxu0
    %v7142 = vadd.f32 0.0, %v7141
    %v7143 = vpop.f32.mrb[0].mxu0
    %7144 = vmatprep.mubr.f32.mxu0 0.0
    %7145 = vmatmul.mubr.f32.gmra.mrb[0].mxu0 %v7025
    %v7146 = vpop.f32.mrb[0].mxu0
    %v7147 = vadd.f32 0.0, %v7146
    %v7148 = vpop.f32.mrb[0].mxu0
    %7149 = vmatprep.mubr.f32.mxu0 0.0
    %7150 = vmatmul.mubr.f32.gmra.mrb[0].mxu0 %v7028
    %v7151 = vpop.f32.mrb[0].mxu0
    %v7152 = vadd.f32 0.0, %v7151
    %v7153 = vpop.f32.mrb[0].mxu0
    %7154 = vmatprep.mubr.f32.mxu0 0.0
    %7155 = vmatmul.mubr.f32.gmra.mrb[0].mxu0 %v7031
    %v7156 = vpop.f32.mrb[0].mxu0
    %v7157 = vadd.f32 0.0, %v7156
    %v7158 = vpop.f32.mrb[0].mxu0
    %7159 = vmatprep.mubr.f32.mxu0 0.0
    %7160 = vmatmul.mubr.f32.gmra.mrb[0].mxu0 %v7034
    %v7161 = vpop.f32.mrb[0].mxu0
    %v7162 = vadd.f32 0.0, %v7161
    %v7163 = vpop.f32.mrb[0].mxu0
    %7164 = vmatprep.mubr.f32.mxu0 0.0
    %7165 = vmatmul.mubr.f32.gmra.mrb[0].mxu0 %v7037
    %v7166 = vpop.f32.mrb[0].mxu0
    %v7167 = vadd.f32 0.0, %v7166
    %v7168 = vpop.f32.mrb[0].mxu0
    %7169 = vmatprep.mubr.f32.mxu0 0.0
    %7170 = vmatmul.mubr.f32.gmra.mrb[0].mxu0 %v7040
    %v7171 = vpop.f32.mrb[0].mxu0
    %v7172 = vadd.f32 0.0, %v7171
    %v7173 = vpop.f32.mrb[0].mxu0
    %7174 = vmatprep.mubr.f32.mxu0 0.0
    %7175 = vmatmul.mubr.f32.gmra.mrb[0].mxu0 %v7043
    %v7176 = vpop.f32.mrb[0].mxu0
    %v7177 = vadd.f32 0.0, %v7176
    %v7178 = vpop.f32.mrb[0].mxu0
    %7179 = vmatprep.mubr.f32.mxu0 0.0
    %7180 = vmatmul.mubr.f32.gmra.mrb[0].mxu0 %v7046
    %v7181 = vpop.f32.mrb[0].mxu0
    %v7182 = vadd.f32 0.0, %v7181
    %v7183 = vpop.f32.mrb[0].mxu0
    %7184 = vmatprep.mubr.f32.mxu0 0.0
    %7185 = vmatmul.mubr.f32.gmra.mrb[0].mxu0 %v7049
    %v7186 = vpop.f32.mrb[0].mxu0
    %v7187 = vadd.f32 0.0, %v7186
    %v7188 = vpop.f32.mrb[0].mxu0
    %7189 = vmatprep.mubr.f32.mxu0 0.0
    %7190 = vmatmul.mubr.f32.gmra.mrb[0].mxu0 %v7052
    %v7191 = vpop.f32.mrb[0].mxu0
    %v7192 = vadd.f32 0.0, %v7191
    %v7193 = vpop.f32.mrb[0].mxu0
    %7194 = vmatprep.mubr.f32.mxu0 0.0
    %7195 = vmatmul.mubr.f32.gmra.mrb[0].mxu0 %v7055
    %v7196 = vpop.f32.mrb[0].mxu0
    %v7197 = vadd.f32 0.0, %v7196
    %v7198 = vpop.f32.mrb[0].mxu0
    %7199 = vmatprep.mubr.f32.mxu0 0.0
    %7200 = vmatmul.mubr.f32.gmra.mrb[0].mxu0 %v7058
    %v7201 = vpop.f32.mrb[0].mxu0
    %v7202 = vadd.f32 0.0, %v7201
    %v7203 = vpop.f32.mrb[0].mxu0
    %7204 = vdwg.mxu0
    %v7205 = vadd.f32 %v6975, %v7127
    %v7206 = vadd.f32 %v6976, %v7132
    %v7207 = vadd.f32 %v6977, %v7137
    %v7208 = vadd.f32 %v6978, %v7142
    %v7209 = vadd.f32 %v6979, %v7147
    %v7210 = vadd.f32 %v6980, %v7152
    %v7211 = vadd.f32 %v6981, %v7157
    %v7212 = vadd.f32 %v6982, %v7162
    %v7213 = vadd.f32 %v6983, %v7167
    %v7214 = vadd.f32 %v6984, %v7172
    %v7215 = vadd.f32 %v6985, %v7177
    %v7216 = vadd.f32 %v6986, %v7182
    %v7217 = vadd.f32 %v6987, %v7187
    %v7218 = vadd.f32 %v6988, %v7192
    %v7219 = vadd.f32 %v6989, %v7197
    %v7220 = vadd.f32 %v6990, %v7202
    %v7221 = vlaneseq
    %v7222 = vshrl.u32 %v7221, 7
    %v7223 = vsub.s32 3, %v7222
    %v7224 = vrot.slane %v4860, %v7223
    %v7225 = vadd.f32 %v7205, %v7224
    %v7226 = vadd.f32 %v7206, %v7224
    %v7227 = vadd.f32 %v7207, %v7224
    %v7228 = vadd.f32 %v7208, %v7224
    %v7229 = vadd.f32 %v7209, %v7224
    %v7230 = vadd.f32 %v7210, %v7224
    %v7231 = vadd.f32 %v7211, %v7224
    %v7232 = vadd.f32 %v7212, %v7224
    %v7233 = vadd.f32 %v7213, %v7224
    %v7234 = vadd.f32 %v7214, %v7224
    %v7235 = vadd.f32 %v7215, %v7224
    %v7236 = vadd.f32 %v7216, %v7224
    %v7237 = vadd.f32 %v7217, %v7224
    %v7238 = vadd.f32 %v7218, %v7224
    %v7239 = vadd.f32 %v7219, %v7224
    %v7240 = vadd.f32 %v7220, %v7224
    %v7241 = vadd.f32 %v4843, %v7225
    %v7242 = vadd.f32 %v4844, %v7226
    %v7243 = vadd.f32 %v4845, %v7227
    %v7244 = vadd.f32 %v4846, %v7228
    %v7245 = vadd.f32 %v4847, %v7229
    %v7246 = vadd.f32 %v4848, %v7230
    %v7247 = vadd.f32 %v4849, %v7231
    %v7248 = vadd.f32 %v4850, %v7232
    %v7249 = vadd.f32 %v4851, %v7233
    %v7250 = vadd.f32 %v4852, %v7234
    %v7251 = vadd.f32 %v4853, %v7235
    %v7252 = vadd.f32 %v4854, %v7236
    %v7253 = vadd.f32 %v4855, %v7237
    %v7254 = vadd.f32 %v4856, %v7238
    %v7255 = vadd.f32 %v4857, %v7239
    %v7256 = vadd.f32 %v4858, %v7240
    %s7257 = scalar_lea.vmem %s1, 12
    %v7258 = vld [vmem:[%s7257] sm:$0xf]
    %v7259 = vlaneseq
    %v7260 = vshrl.u32 %v7259, 7
    %v7261 = vsub.s32 0, %v7260
    %v7262 = vrot.slane %v7258, %v7261
    %v7263 = vmul.f32 %v7241, %v7262
    %v7264 = vmul.f32 %v7242, %v7262
    %v7265 = vmul.f32 %v7243, %v7262
    %v7266 = vmul.f32 %v7244, %v7262
    %v7267 = vmul.f32 %v7245, %v7262
    %v7268 = vmul.f32 %v7246, %v7262
    %v7269 = vmul.f32 %v7247, %v7262
    %v7270 = vmul.f32 %v7248, %v7262
    %v7271 = vmul.f32 %v7249, %v7262
    %v7272 = vmul.f32 %v7250, %v7262
    %v7273 = vmul.f32 %v7251, %v7262
    %v7274 = vmul.f32 %v7252, %v7262
    %v7275 = vmul.f32 %v7253, %v7262
    %v7276 = vmul.f32 %v7254, %v7262
    %v7277 = vmul.f32 %v7255, %v7262
    %v7278 = vmul.f32 %v7256, %v7262
    %v7279 = vlaneseq
    %v7280 = vshrl.u32 %v7279, 7
    %v7281 = vsub.s32 1, %v7280
    %v7282 = vrot.slane %v7258, %v7281
    %v7283 = vadd.f32 %v7263, %v7282
    %v7284 = vadd.f32 %v7264, %v7282
    %v7285 = vadd.f32 %v7265, %v7282
    %v7286 = vadd.f32 %v7266, %v7282
    %v7287 = vadd.f32 %v7267, %v7282
    %v7288 = vadd.f32 %v7268, %v7282
    %v7289 = vadd.f32 %v7269, %v7282
    %v7290 = vadd.f32 %v7270, %v7282
    %v7291 = vadd.f32 %v7271, %v7282
    %v7292 = vadd.f32 %v7272, %v7282
    %v7293 = vadd.f32 %v7273, %v7282
    %v7294 = vadd.f32 %v7274, %v7282
    %v7295 = vadd.f32 %v7275, %v7282
    %v7296 = vadd.f32 %v7276, %v7282
    %v7297 = vadd.f32 %v7277, %v7282
    %v7298 = vadd.f32 %v7278, %v7282
    %v7299 = vmax.f32 %v7283, 0.0
    %v7300 = vmax.f32 %v7284, 0.0
    %v7301 = vmax.f32 %v7285, 0.0
    %v7302 = vmax.f32 %v7286, 0.0
    %v7303 = vmax.f32 %v7287, 0.0
    %v7304 = vmax.f32 %v7288, 0.0
    %v7305 = vmax.f32 %v7289, 0.0
    %v7306 = vmax.f32 %v7290, 0.0
    %v7307 = vmax.f32 %v7291, 0.0
    %v7308 = vmax.f32 %v7292, 0.0
    %v7309 = vmax.f32 %v7293, 0.0
    %v7310 = vmax.f32 %v7294, 0.0
    %v7311 = vmax.f32 %v7295, 0.0
    %v7312 = vmax.f32 %v7296, 0.0
    %v7313 = vmax.f32 %v7297, 0.0
    %v7314 = vmax.f32 %v7298, 0.0
    %7315 = vst.msk [vmem:[#allocation2 + $0x8] sm:$0xff] %vm45, %v7299
    %7316 = vst.msk [vmem:[#allocation2 + $0x10] sm:$0xff] %vm45, %v7300
    %7317 = vst.msk [vmem:[#allocation2 + $0x18] sm:$0xff] %vm45, %v7301
    %7318 = vst.msk [vmem:[#allocation2 + $0x20] sm:$0xff] %vm45, %v7302
    %7319 = vst.msk [vmem:[#allocation2 + $0x28] sm:$0xff] %vm45, %v7303
    %7320 = vst.msk [vmem:[#allocation2 + $0x30] sm:$0xff] %vm45, %v7304
    %7321 = vst.msk [vmem:[#allocation2 + $0x38] sm:$0xff] %vm45, %v7305
    %7322 = vst.msk [vmem:[#allocation2 + $0x40] sm:$0xff] %vm45, %v7306
    %7323 = vst.msk [vmem:[#allocation2 + $0x58] sm:$0xff] %vm45, %v7307
    %7324 = vst.msk [vmem:[#allocation2 + $0x60] sm:$0xff] %vm45, %v7308
    %7325 = vst.msk [vmem:[#allocation2 + $0x68] sm:$0xff] %vm45, %v7309
    %7326 = vst.msk [vmem:[#allocation2 + $0x70] sm:$0xff] %vm45, %v7310
    %7327 = vst.msk [vmem:[#allocation2 + $0x78] sm:$0xff] %vm45, %v7311
    %7328 = vst.msk [vmem:[#allocation2 + $0x80] sm:$0xff] %vm45, %v7312
    %7329 = vst.msk [vmem:[#allocation2 + $0x88] sm:$0xff] %vm45, %v7313
    %7330 = vst.msk [vmem:[#allocation2 + $0x90] sm:$0xff] %vm45, %v7314
    %v7331 = vld [vmem:[#allocation2 + $0x4] sm:$0xff]
    %v7332 = vld [vmem:[#allocation2 + $0xc] sm:$0xff]
    %v7333 = vld [vmem:[#allocation2 + $0x14] sm:$0xff]
    %v7334 = vld [vmem:[#allocation2 + $0x1c] sm:$0xff]
    %v7335 = vld [vmem:[#allocation2 + $0x24] sm:$0xff]
    %v7336 = vld [vmem:[#allocation2 + $0x2c] sm:$0xff]
    %v7337 = vld [vmem:[#allocation2 + $0x34] sm:$0xff]
    %v7338 = vld [vmem:[#allocation2 + $0x3c] sm:$0xff]
    %v7339 = vld [vmem:[#allocation2 + $0x54] sm:$0xff]
    %v7340 = vld [vmem:[#allocation2 + $0x5c] sm:$0xff]
    %v7341 = vld [vmem:[#allocation2 + $0x64] sm:$0xff]
    %v7342 = vld [vmem:[#allocation2 + $0x6c] sm:$0xff]
    %v7343 = vld [vmem:[#allocation2 + $0x74] sm:$0xff]
    %v7344 = vld [vmem:[#allocation2 + $0x7c] sm:$0xff]
    %v7345 = vld [vmem:[#allocation2 + $0x84] sm:$0xff]
    %v7346 = vld [vmem:[#allocation2 + $0x8c] sm:$0xff]
    %s7347 = scalar_lea.vmem [#allocation3], 480
    %v7348 = vld [vmem:[%s7347] sm:$0xff]
    %v7349 = vld [vmem:[%s7347 + $0x8] sm:$0xff]
    %v7350 = vld [vmem:[%s7347 + $0x10] sm:$0xff]
    %v7351 = vld [vmem:[%s7347 + $0x18] sm:$0xff]
    %v7352 = vld [vmem:[#allocation2 + $0x6] sm:$0xff]
    %v7353 = vld [vmem:[#allocation2 + $0xe] sm:$0xff]
    %v7354 = vld [vmem:[#allocation2 + $0x16] sm:$0xff]
    %v7355 = vld [vmem:[#allocation2 + $0x1e] sm:$0xff]
    %v7356 = vld [vmem:[#allocation2 + $0x26] sm:$0xff]
    %v7357 = vld [vmem:[#allocation2 + $0x2e] sm:$0xff]
    %v7358 = vld [vmem:[#allocation2 + $0x36] sm:$0xff]
    %v7359 = vld [vmem:[#allocation2 + $0x3e] sm:$0xff]
    %v7360 = vld [vmem:[#allocation2 + $0x56] sm:$0xff]
    %v7361 = vld [vmem:[#allocation2 + $0x5e] sm:$0xff]
    %v7362 = vld [vmem:[#allocation2 + $0x66] sm:$0xff]
    %v7363 = vld [vmem:[#allocation2 + $0x6e] sm:$0xff]
    %v7364 = vld [vmem:[#allocation2 + $0x76] sm:$0xff]
    %v7365 = vld [vmem:[#allocation2 + $0x7e] sm:$0xff]
    %v7366 = vld [vmem:[#allocation2 + $0x86] sm:$0xff]
    %v7367 = vld [vmem:[#allocation2 + $0x8e] sm:$0xff]
    %s7368 = scalar_lea.vmem [#allocation3], 512
    %v7369 = vld [vmem:[%s7368] sm:$0xff]
    %v7370 = vld [vmem:[%s7368 + $0x8] sm:$0xff]
    %v7371 = vld [vmem:[%s7368 + $0x10] sm:$0xff]
    %v7372 = vld [vmem:[%s7368 + $0x18] sm:$0xff]
    %v7374 = vsel %vm45, %v7352, 0
    %v7377 = vsel %vm45, %v7353, 0
    %v7380 = vsel %vm45, %v7354, 0
    %v7383 = vsel %vm45, %v7355, 0
    %v7386 = vsel %vm45, %v7356, 0
    %v7389 = vsel %vm45, %v7357, 0
    %v7392 = vsel %vm45, %v7358, 0
    %v7395 = vsel %vm45, %v7359, 0
    %v7398 = vsel %vm45, %v7360, 0
    %v7401 = vsel %vm45, %v7361, 0
    %v7404 = vsel %vm45, %v7362, 0
    %v7407 = vsel %vm45, %v7363, 0
    %v7410 = vsel %vm45, %v7364, 0
    %v7413 = vsel %vm45, %v7365, 0
    %v7416 = vsel %vm45, %v7366, 0
    %v7419 = vsel %vm45, %v7367, 0
    %7421 = vmatprep.subr.mxu0 0.0
    %7422 = vmatpush1.msra.mxu0 %v7369
    %7423 = vmatprep.subr.mxu0 0.0
    %7424 = vmatpush1.msra.mxu0 %v7370
    %7425 = vmatprep.subr.mxu0 0.0
    %7426 = vmatpush1.msra.mxu0 %v7371
    %7427 = vmatprep.subr.mxu0 0.0
    %7428 = vmatpush1.msra.mxu0 %v7372
    %7429 = vmatprep.subr.mxu0 0.0
    %7430 = vmatpush1.msra.mxu0 0.0
    %7431 = vmatprep.subr.mxu0 0.0
    %7432 = vmatpush1.msra.mxu0 0.0
    %7433 = vmatprep.subr.mxu0 0.0
    %7434 = vmatpush1.msra.mxu0 0.0
    %7435 = vmatprep.subr.mxu0 0.0
    %7436 = vmatpush1.msra.mxu0 0.0
    %7437 = vmatprep.subr.mxu0 0.0
    %7438 = vmatpush1.msra.mxu0 0.0
    %7439 = vmatprep.subr.mxu0 0.0
    %7440 = vmatpush1.msra.mxu0 0.0
    %7441 = vmatprep.subr.mxu0 0.0
    %7442 = vmatpush1.msra.mxu0 0.0
    %7443 = vmatprep.subr.mxu0 0.0
    %7444 = vmatpush1.msra.mxu0 0.0
    %7445 = vmatprep.subr.mxu0 0.0
    %7446 = vmatpush1.msra.mxu0 0.0
    %7447 = vmatprep.subr.mxu0 0.0
    %7448 = vmatpush1.msra.mxu0 0.0
    %7449 = vmatprep.subr.mxu0 0.0
    %7450 = vmatpush1.msra.mxu0 0.0
    %7451 = vmatprep.subr.mxu0 0.0
    %7452 = vmatpush1.msra.mxu0 0.0
    %7453 = vmatprep.subr.mxu0 0.0
    %7454 = vmatpush1.msra.mxu0 0.0
    %7455 = vmatprep.subr.mxu0 0.0
    %7456 = vmatpush1.msra.mxu0 0.0
    %7457 = vmatprep.subr.mxu0 0.0
    %7458 = vmatpush1.msra.mxu0 0.0
    %7459 = vmatprep.subr.mxu0 0.0
    %7460 = vmatpush1.msra.mxu0 0.0
    %7461 = vmatprep.subr.mxu0 0.0
    %7462 = vmatpush1.msra.mxu0 0.0
    %7463 = vmatprep.subr.mxu0 0.0
    %7464 = vmatpush1.msra.mxu0 0.0
    %7465 = vmatprep.subr.mxu0 0.0
    %7466 = vmatpush1.msra.mxu0 0.0
    %7467 = vmatprep.subr.mxu0 0.0
    %7468 = vmatpush1.msra.mxu0 0.0
    %7469 = vmatprep.subr.mxu0 0.0
    %7470 = vmatpush1.msra.mxu0 0.0
    %7471 = vmatprep.subr.mxu0 0.0
    %7472 = vmatpush1.msra.mxu0 0.0
    %7473 = vmatprep.subr.mxu0 0.0
    %7474 = vmatpush1.msra.mxu0 0.0
    %7475 = vmatprep.subr.mxu0 0.0
    %7476 = vmatpush1.msra.mxu0 0.0
    %7477 = vmatprep.subr.mxu0 0.0
    %7478 = vmatpush1.msra.mxu0 0.0
    %7479 = vmatprep.subr.mxu0 0.0
    %7480 = vmatpush1.msra.mxu0 0.0
    %7481 = vmatprep.subr.mxu0 0.0
    %7482 = vmatpush1.msra.mxu0 0.0
    %7483 = vmatprep.subr.mxu0 0.0
    %7484 = vmatpush1.msra.mxu0 0.0
    %7485 = vmatprep.mubr.f32.mxu0 0.0
    %7486 = vmatmul.mubr.f32.gmra.mrb[0].mxu0 %v7374
    %v7487 = vpop.f32.mrb[0].mxu0
    %v7488 = vadd.f32 0.0, %v7487
    %v7489 = vpop.f32.mrb[0].mxu0
    %7490 = vmatprep.mubr.f32.mxu0 0.0
    %7491 = vmatmul.mubr.f32.gmra.mrb[0].mxu0 %v7377
    %v7492 = vpop.f32.mrb[0].mxu0
    %v7493 = vadd.f32 0.0, %v7492
    %v7494 = vpop.f32.mrb[0].mxu0
    %7495 = vmatprep.mubr.f32.mxu0 0.0
    %7496 = vmatmul.mubr.f32.gmra.mrb[0].mxu0 %v7380
    %v7497 = vpop.f32.mrb[0].mxu0
    %v7498 = vadd.f32 0.0, %v7497
    %v7499 = vpop.f32.mrb[0].mxu0
    %7500 = vmatprep.mubr.f32.mxu0 0.0
    %7501 = vmatmul.mubr.f32.gmra.mrb[0].mxu0 %v7383
    %v7502 = vpop.f32.mrb[0].mxu0
    %v7503 = vadd.f32 0.0, %v7502
    %v7504 = vpop.f32.mrb[0].mxu0
    %7505 = vmatprep.mubr.f32.mxu0 0.0
    %7506 = vmatmul.mubr.f32.gmra.mrb[0].mxu0 %v7386
    %v7507 = vpop.f32.mrb[0].mxu0
    %v7508 = vadd.f32 0.0, %v7507
    %v7509 = vpop.f32.mrb[0].mxu0
    %7510 = vmatprep.mubr.f32.mxu0 0.0
    %7511 = vmatmul.mubr.f32.gmra.mrb[0].mxu0 %v7389
    %v7512 = vpop.f32.mrb[0].mxu0
    %v7513 = vadd.f32 0.0, %v7512
    %v7514 = vpop.f32.mrb[0].mxu0
    %7515 = vmatprep.mubr.f32.mxu0 0.0
    %7516 = vmatmul.mubr.f32.gmra.mrb[0].mxu0 %v7392
    %v7517 = vpop.f32.mrb[0].mxu0
    %v7518 = vadd.f32 0.0, %v7517
    %v7519 = vpop.f32.mrb[0].mxu0
    %7520 = vmatprep.mubr.f32.mxu0 0.0
    %7521 = vmatmul.mubr.f32.gmra.mrb[0].mxu0 %v7395
    %v7522 = vpop.f32.mrb[0].mxu0
    %v7523 = vadd.f32 0.0, %v7522
    %v7524 = vpop.f32.mrb[0].mxu0
    %7525 = vmatprep.mubr.f32.mxu0 0.0
    %7526 = vmatmul.mubr.f32.gmra.mrb[0].mxu0 %v7398
    %v7527 = vpop.f32.mrb[0].mxu0
    %v7528 = vadd.f32 0.0, %v7527
    %v7529 = vpop.f32.mrb[0].mxu0
    %7530 = vmatprep.mubr.f32.mxu0 0.0
    %7531 = vmatmul.mubr.f32.gmra.mrb[0].mxu0 %v7401
    %v7532 = vpop.f32.mrb[0].mxu0
    %v7533 = vadd.f32 0.0, %v7532
    %v7534 = vpop.f32.mrb[0].mxu0
    %7535 = vmatprep.mubr.f32.mxu0 0.0
    %7536 = vmatmul.mubr.f32.gmra.mrb[0].mxu0 %v7404
    %v7537 = vpop.f32.mrb[0].mxu0
    %v7538 = vadd.f32 0.0, %v7537
    %v7539 = vpop.f32.mrb[0].mxu0
    %7540 = vmatprep.mubr.f32.mxu0 0.0
    %7541 = vmatmul.mubr.f32.gmra.mrb[0].mxu0 %v7407
    %v7542 = vpop.f32.mrb[0].mxu0
    %v7543 = vadd.f32 0.0, %v7542
    %v7544 = vpop.f32.mrb[0].mxu0
    %7545 = vmatprep.mubr.f32.mxu0 0.0
    %7546 = vmatmul.mubr.f32.gmra.mrb[0].mxu0 %v7410
    %v7547 = vpop.f32.mrb[0].mxu0
    %v7548 = vadd.f32 0.0, %v7547
    %v7549 = vpop.f32.mrb[0].mxu0
    %7550 = vmatprep.mubr.f32.mxu0 0.0
    %7551 = vmatmul.mubr.f32.gmra.mrb[0].mxu0 %v7413
    %v7552 = vpop.f32.mrb[0].mxu0
    %v7553 = vadd.f32 0.0, %v7552
    %v7554 = vpop.f32.mrb[0].mxu0
    %7555 = vmatprep.mubr.f32.mxu0 0.0
    %7556 = vmatmul.mubr.f32.gmra.mrb[0].mxu0 %v7416
    %v7557 = vpop.f32.mrb[0].mxu0
    %v7558 = vadd.f32 0.0, %v7557
    %v7559 = vpop.f32.mrb[0].mxu0
    %7560 = vmatprep.mubr.f32.mxu0 0.0
    %7561 = vmatmul.mubr.f32.gmra.mrb[0].mxu0 %v7419
    %v7562 = vpop.f32.mrb[0].mxu0
    %v7563 = vadd.f32 0.0, %v7562
    %v7564 = vpop.f32.mrb[0].mxu0
    %7565 = vdwg.mxu0
    %v7567 = vsel %vm45, %v7331, 0
    %v7570 = vsel %vm45, %v7332, 0
    %v7573 = vsel %vm45, %v7333, 0
    %v7576 = vsel %vm45, %v7334, 0
    %v7579 = vsel %vm45, %v7335, 0
    %v7582 = vsel %vm45, %v7336, 0
    %v7585 = vsel %vm45, %v7337, 0
    %v7588 = vsel %vm45, %v7338, 0
    %v7591 = vsel %vm45, %v7339, 0
    %v7594 = vsel %vm45, %v7340, 0
    %v7597 = vsel %vm45, %v7341, 0
    %v7600 = vsel %vm45, %v7342, 0
    %v7603 = vsel %vm45, %v7343, 0
    %v7606 = vsel %vm45, %v7344, 0
    %v7609 = vsel %vm45, %v7345, 0
    %v7612 = vsel %vm45, %v7346, 0
    %7614 = vmatprep.subr.mxu0 0.0
    %7615 = vmatpush1.msra.mxu0 %v7348
    %7616 = vmatprep.subr.mxu0 0.0
    %7617 = vmatpush1.msra.mxu0 %v7349
    %7618 = vmatprep.subr.mxu0 0.0
    %7619 = vmatpush1.msra.mxu0 %v7350
    %7620 = vmatprep.subr.mxu0 0.0
    %7621 = vmatpush1.msra.mxu0 %v7351
    %7622 = vmatprep.subr.mxu0 0.0
    %7623 = vmatpush1.msra.mxu0 0.0
    %7624 = vmatprep.subr.mxu0 0.0
    %7625 = vmatpush1.msra.mxu0 0.0
    %7626 = vmatprep.subr.mxu0 0.0
    %7627 = vmatpush1.msra.mxu0 0.0
    %7628 = vmatprep.subr.mxu0 0.0
    %7629 = vmatpush1.msra.mxu0 0.0
    %7630 = vmatprep.subr.mxu0 0.0
    %7631 = vmatpush1.msra.mxu0 0.0
    %7632 = vmatprep.subr.mxu0 0.0
    %7633 = vmatpush1.msra.mxu0 0.0
    %7634 = vmatprep.subr.mxu0 0.0
    %7635 = vmatpush1.msra.mxu0 0.0
    %7636 = vmatprep.subr.mxu0 0.0
    %7637 = vmatpush1.msra.mxu0 0.0
    %7638 = vmatprep.subr.mxu0 0.0
    %7639 = vmatpush1.msra.mxu0 0.0
    %7640 = vmatprep.subr.mxu0 0.0
    %7641 = vmatpush1.msra.mxu0 0.0
    %7642 = vmatprep.subr.mxu0 0.0
    %7643 = vmatpush1.msra.mxu0 0.0
    %7644 = vmatprep.subr.mxu0 0.0
    %7645 = vmatpush1.msra.mxu0 0.0
    %7646 = vmatprep.subr.mxu0 0.0
    %7647 = vmatpush1.msra.mxu0 0.0
    %7648 = vmatprep.subr.mxu0 0.0
    %7649 = vmatpush1.msra.mxu0 0.0
    %7650 = vmatprep.subr.mxu0 0.0
    %7651 = vmatpush1.msra.mxu0 0.0
    %7652 = vmatprep.subr.mxu0 0.0
    %7653 = vmatpush1.msra.mxu0 0.0
    %7654 = vmatprep.subr.mxu0 0.0
    %7655 = vmatpush1.msra.mxu0 0.0
    %7656 = vmatprep.subr.mxu0 0.0
    %7657 = vmatpush1.msra.mxu0 0.0
    %7658 = vmatprep.subr.mxu0 0.0
    %7659 = vmatpush1.msra.mxu0 0.0
    %7660 = vmatprep.subr.mxu0 0.0
    %7661 = vmatpush1.msra.mxu0 0.0
    %7662 = vmatprep.subr.mxu0 0.0
    %7663 = vmatpush1.msra.mxu0 0.0
    %7664 = vmatprep.subr.mxu0 0.0
    %7665 = vmatpush1.msra.mxu0 0.0
    %7666 = vmatprep.subr.mxu0 0.0
    %7667 = vmatpush1.msra.mxu0 0.0
    %7668 = vmatprep.subr.mxu0 0.0
    %7669 = vmatpush1.msra.mxu0 0.0
    %7670 = vmatprep.subr.mxu0 0.0
    %7671 = vmatpush1.msra.mxu0 0.0
    %7672 = vmatprep.subr.mxu0 0.0
    %7673 = vmatpush1.msra.mxu0 0.0
    %7674 = vmatprep.subr.mxu0 0.0
    %7675 = vmatpush1.msra.mxu0 0.0
    %7676 = vmatprep.subr.mxu0 0.0
    %7677 = vmatpush1.msra.mxu0 0.0
    %7678 = vmatprep.mubr.f32.mxu0 0.0
    %7679 = vmatmul.mubr.f32.gmra.mrb[0].mxu0 %v7567
    %v7680 = vpop.f32.mrb[0].mxu0
    %v7681 = vadd.f32 %v7488, %v7680
    %v7682 = vpop.f32.mrb[0].mxu0
    %7683 = vmatprep.mubr.f32.mxu0 0.0
    %7684 = vmatmul.mubr.f32.gmra.mrb[0].mxu0 %v7570
    %v7685 = vpop.f32.mrb[0].mxu0
    %v7686 = vadd.f32 %v7493, %v7685
    %v7687 = vpop.f32.mrb[0].mxu0
    %7688 = vmatprep.mubr.f32.mxu0 0.0
    %7689 = vmatmul.mubr.f32.gmra.mrb[0].mxu0 %v7573
    %v7690 = vpop.f32.mrb[0].mxu0
    %v7691 = vadd.f32 %v7498, %v7690
    %v7692 = vpop.f32.mrb[0].mxu0
    %7693 = vmatprep.mubr.f32.mxu0 0.0
    %7694 = vmatmul.mubr.f32.gmra.mrb[0].mxu0 %v7576
    %v7695 = vpop.f32.mrb[0].mxu0
    %v7696 = vadd.f32 %v7503, %v7695
    %v7697 = vpop.f32.mrb[0].mxu0
    %7698 = vmatprep.mubr.f32.mxu0 0.0
    %7699 = vmatmul.mubr.f32.gmra.mrb[0].mxu0 %v7579
    %v7700 = vpop.f32.mrb[0].mxu0
    %v7701 = vadd.f32 %v7508, %v7700
    %v7702 = vpop.f32.mrb[0].mxu0
    %7703 = vmatprep.mubr.f32.mxu0 0.0
    %7704 = vmatmul.mubr.f32.gmra.mrb[0].mxu0 %v7582
    %v7705 = vpop.f32.mrb[0].mxu0
    %v7706 = vadd.f32 %v7513, %v7705
    %v7707 = vpop.f32.mrb[0].mxu0
    %7708 = vmatprep.mubr.f32.mxu0 0.0
    %7709 = vmatmul.mubr.f32.gmra.mrb[0].mxu0 %v7585
    %v7710 = vpop.f32.mrb[0].mxu0
    %v7711 = vadd.f32 %v7518, %v7710
    %v7712 = vpop.f32.mrb[0].mxu0
    %7713 = vmatprep.mubr.f32.mxu0 0.0
    %7714 = vmatmul.mubr.f32.gmra.mrb[0].mxu0 %v7588
    %v7715 = vpop.f32.mrb[0].mxu0
    %v7716 = vadd.f32 %v7523, %v7715
    %v7717 = vpop.f32.mrb[0].mxu0
    %7718 = vmatprep.mubr.f32.mxu0 0.0
    %7719 = vmatmul.mubr.f32.gmra.mrb[0].mxu0 %v7591
    %v7720 = vpop.f32.mrb[0].mxu0
    %v7721 = vadd.f32 %v7528, %v7720
    %v7722 = vpop.f32.mrb[0].mxu0
    %7723 = vmatprep.mubr.f32.mxu0 0.0
    %7724 = vmatmul.mubr.f32.gmra.mrb[0].mxu0 %v7594
    %v7725 = vpop.f32.mrb[0].mxu0
    %v7726 = vadd.f32 %v7533, %v7725
    %v7727 = vpop.f32.mrb[0].mxu0
    %7728 = vmatprep.mubr.f32.mxu0 0.0
    %7729 = vmatmul.mubr.f32.gmra.mrb[0].mxu0 %v7597
    %v7730 = vpop.f32.mrb[0].mxu0
    %v7731 = vadd.f32 %v7538, %v7730
    %v7732 = vpop.f32.mrb[0].mxu0
    %7733 = vmatprep.mubr.f32.mxu0 0.0
    %7734 = vmatmul.mubr.f32.gmra.mrb[0].mxu0 %v7600
    %v7735 = vpop.f32.mrb[0].mxu0
    %v7736 = vadd.f32 %v7543, %v7735
    %v7737 = vpop.f32.mrb[0].mxu0
    %7738 = vmatprep.mubr.f32.mxu0 0.0
    %7739 = vmatmul.mubr.f32.gmra.mrb[0].mxu0 %v7603
    %v7740 = vpop.f32.mrb[0].mxu0
    %v7741 = vadd.f32 %v7548, %v7740
    %v7742 = vpop.f32.mrb[0].mxu0
    %7743 = vmatprep.mubr.f32.mxu0 0.0
    %7744 = vmatmul.mubr.f32.gmra.mrb[0].mxu0 %v7606
    %v7745 = vpop.f32.mrb[0].mxu0
    %v7746 = vadd.f32 %v7553, %v7745
    %v7747 = vpop.f32.mrb[0].mxu0
    %7748 = vmatprep.mubr.f32.mxu0 0.0
    %7749 = vmatmul.mubr.f32.gmra.mrb[0].mxu0 %v7609
    %v7750 = vpop.f32.mrb[0].mxu0
    %v7751 = vadd.f32 %v7558, %v7750
    %v7752 = vpop.f32.mrb[0].mxu0
    %7753 = vmatprep.mubr.f32.mxu0 0.0
    %7754 = vmatmul.mubr.f32.gmra.mrb[0].mxu0 %v7612
    %v7755 = vpop.f32.mrb[0].mxu0
    %v7756 = vadd.f32 %v7563, %v7755
    %v7757 = vpop.f32.mrb[0].mxu0
    %7758 = vdwg.mxu0
    %v7759 = vld [vmem:[#allocation2 + $0x8] sm:$0xff]
    %v7760 = vld [vmem:[#allocation2 + $0x10] sm:$0xff]
    %v7761 = vld [vmem:[#allocation2 + $0x18] sm:$0xff]
    %v7762 = vld [vmem:[#allocation2 + $0x20] sm:$0xff]
    %v7763 = vld [vmem:[#allocation2 + $0x28] sm:$0xff]
    %v7764 = vld [vmem:[#allocation2 + $0x30] sm:$0xff]
    %v7765 = vld [vmem:[#allocation2 + $0x38] sm:$0xff]
    %v7766 = vld [vmem:[#allocation2 + $0x40] sm:$0xff]
    %v7767 = vld [vmem:[#allocation2 + $0x58] sm:$0xff]
    %v7768 = vld [vmem:[#allocation2 + $0x60] sm:$0xff]
    %v7769 = vld [vmem:[#allocation2 + $0x68] sm:$0xff]
    %v7770 = vld [vmem:[#allocation2 + $0x70] sm:$0xff]
    %v7771 = vld [vmem:[#allocation2 + $0x78] sm:$0xff]
    %v7772 = vld [vmem:[#allocation2 + $0x80] sm:$0xff]
    %v7773 = vld [vmem:[#allocation2 + $0x88] sm:$0xff]
    %v7774 = vld [vmem:[#allocation2 + $0x90] sm:$0xff]
    %s7775 = scalar_lea.vmem [#allocation3], 544
    %v7776 = vld [vmem:[%s7775] sm:$0xff]
    %v7777 = vld [vmem:[%s7775 + $0x8] sm:$0xff]
    %v7778 = vld [vmem:[%s7775 + $0x10] sm:$0xff]
    %v7779 = vld [vmem:[%s7775 + $0x18] sm:$0xff]
    %v7781 = vsel %vm45, %v7759, 0
    %v7784 = vsel %vm45, %v7760, 0
    %v7787 = vsel %vm45, %v7761, 0
    %v7790 = vsel %vm45, %v7762, 0
    %v7793 = vsel %vm45, %v7763, 0
    %v7796 = vsel %vm45, %v7764, 0
    %v7799 = vsel %vm45, %v7765, 0
    %v7802 = vsel %vm45, %v7766, 0
    %v7805 = vsel %vm45, %v7767, 0
    %v7808 = vsel %vm45, %v7768, 0
    %v7811 = vsel %vm45, %v7769, 0
    %v7814 = vsel %vm45, %v7770, 0
    %v7817 = vsel %vm45, %v7771, 0
    %v7820 = vsel %vm45, %v7772, 0
    %v7823 = vsel %vm45, %v7773, 0
    %v7826 = vsel %vm45, %v7774, 0
    %7828 = vmatprep.subr.mxu0 0.0
    %7829 = vmatpush1.msra.mxu0 %v7776
    %7830 = vmatprep.subr.mxu0 0.0
    %7831 = vmatpush1.msra.mxu0 %v7777
    %7832 = vmatprep.subr.mxu0 0.0
    %7833 = vmatpush1.msra.mxu0 %v7778
    %7834 = vmatprep.subr.mxu0 0.0
    %7835 = vmatpush1.msra.mxu0 %v7779
    %7836 = vmatprep.subr.mxu0 0.0
    %7837 = vmatpush1.msra.mxu0 0.0
    %7838 = vmatprep.subr.mxu0 0.0
    %7839 = vmatpush1.msra.mxu0 0.0
    %7840 = vmatprep.subr.mxu0 0.0
    %7841 = vmatpush1.msra.mxu0 0.0
    %7842 = vmatprep.subr.mxu0 0.0
    %7843 = vmatpush1.msra.mxu0 0.0
    %7844 = vmatprep.subr.mxu0 0.0
    %7845 = vmatpush1.msra.mxu0 0.0
    %7846 = vmatprep.subr.mxu0 0.0
    %7847 = vmatpush1.msra.mxu0 0.0
    %7848 = vmatprep.subr.mxu0 0.0
    %7849 = vmatpush1.msra.mxu0 0.0
    %7850 = vmatprep.subr.mxu0 0.0
    %7851 = vmatpush1.msra.mxu0 0.0
    %7852 = vmatprep.subr.mxu0 0.0
    %7853 = vmatpush1.msra.mxu0 0.0
    %7854 = vmatprep.subr.mxu0 0.0
    %7855 = vmatpush1.msra.mxu0 0.0
    %7856 = vmatprep.subr.mxu0 0.0
    %7857 = vmatpush1.msra.mxu0 0.0
    %7858 = vmatprep.subr.mxu0 0.0
    %7859 = vmatpush1.msra.mxu0 0.0
    %7860 = vmatprep.subr.mxu0 0.0
    %7861 = vmatpush1.msra.mxu0 0.0
    %7862 = vmatprep.subr.mxu0 0.0
    %7863 = vmatpush1.msra.mxu0 0.0
    %7864 = vmatprep.subr.mxu0 0.0
    %7865 = vmatpush1.msra.mxu0 0.0
    %7866 = vmatprep.subr.mxu0 0.0
    %7867 = vmatpush1.msra.mxu0 0.0
    %7868 = vmatprep.subr.mxu0 0.0
    %7869 = vmatpush1.msra.mxu0 0.0
    %7870 = vmatprep.subr.mxu0 0.0
    %7871 = vmatpush1.msra.mxu0 0.0
    %7872 = vmatprep.subr.mxu0 0.0
    %7873 = vmatpush1.msra.mxu0 0.0
    %7874 = vmatprep.subr.mxu0 0.0
    %7875 = vmatpush1.msra.mxu0 0.0
    %7876 = vmatprep.subr.mxu0 0.0
    %7877 = vmatpush1.msra.mxu0 0.0
    %7878 = vmatprep.subr.mxu0 0.0
    %7879 = vmatpush1.msra.mxu0 0.0
    %7880 = vmatprep.subr.mxu0 0.0
    %7881 = vmatpush1.msra.mxu0 0.0
    %7882 = vmatprep.subr.mxu0 0.0
    %7883 = vmatpush1.msra.mxu0 0.0
    %7884 = vmatprep.subr.mxu0 0.0
    %7885 = vmatpush1.msra.mxu0 0.0
    %7886 = vmatprep.subr.mxu0 0.0
    %7887 = vmatpush1.msra.mxu0 0.0
    %7888 = vmatprep.subr.mxu0 0.0
    %7889 = vmatpush1.msra.mxu0 0.0
    %7890 = vmatprep.subr.mxu0 0.0
    %7891 = vmatpush1.msra.mxu0 0.0
    %7892 = vmatprep.mubr.f32.mxu0 0.0
    %7893 = vmatmul.mubr.f32.gmra.mrb[0].mxu0 %v7781
    %v7894 = vpop.f32.mrb[0].mxu0
    %v7895 = vadd.f32 0.0, %v7894
    %v7896 = vpop.f32.mrb[0].mxu0
    %7897 = vmatprep.mubr.f32.mxu0 0.0
    %7898 = vmatmul.mubr.f32.gmra.mrb[0].mxu0 %v7784
    %v7899 = vpop.f32.mrb[0].mxu0
    %v7900 = vadd.f32 0.0, %v7899
    %v7901 = vpop.f32.mrb[0].mxu0
    %7902 = vmatprep.mubr.f32.mxu0 0.0
    %7903 = vmatmul.mubr.f32.gmra.mrb[0].mxu0 %v7787
    %v7904 = vpop.f32.mrb[0].mxu0
    %v7905 = vadd.f32 0.0, %v7904
    %v7906 = vpop.f32.mrb[0].mxu0
    %7907 = vmatprep.mubr.f32.mxu0 0.0
    %7908 = vmatmul.mubr.f32.gmra.mrb[0].mxu0 %v7790
    %v7909 = vpop.f32.mrb[0].mxu0
    %v7910 = vadd.f32 0.0, %v7909
    %v7911 = vpop.f32.mrb[0].mxu0
    %7912 = vmatprep.mubr.f32.mxu0 0.0
    %7913 = vmatmul.mubr.f32.gmra.mrb[0].mxu0 %v7793
    %v7914 = vpop.f32.mrb[0].mxu0
    %v7915 = vadd.f32 0.0, %v7914
    %v7916 = vpop.f32.mrb[0].mxu0
    %7917 = vmatprep.mubr.f32.mxu0 0.0
    %7918 = vmatmul.mubr.f32.gmra.mrb[0].mxu0 %v7796
    %v7919 = vpop.f32.mrb[0].mxu0
    %v7920 = vadd.f32 0.0, %v7919
    %v7921 = vpop.f32.mrb[0].mxu0
    %7922 = vmatprep.mubr.f32.mxu0 0.0
    %7923 = vmatmul.mubr.f32.gmra.mrb[0].mxu0 %v7799
    %v7924 = vpop.f32.mrb[0].mxu0
    %v7925 = vadd.f32 0.0, %v7924
    %v7926 = vpop.f32.mrb[0].mxu0
    %7927 = vmatprep.mubr.f32.mxu0 0.0
    %7928 = vmatmul.mubr.f32.gmra.mrb[0].mxu0 %v7802
    %v7929 = vpop.f32.mrb[0].mxu0
    %v7930 = vadd.f32 0.0, %v7929
    %v7931 = vpop.f32.mrb[0].mxu0
    %7932 = vmatprep.mubr.f32.mxu0 0.0
    %7933 = vmatmul.mubr.f32.gmra.mrb[0].mxu0 %v7805
    %v7934 = vpop.f32.mrb[0].mxu0
    %v7935 = vadd.f32 0.0, %v7934
    %v7936 = vpop.f32.mrb[0].mxu0
    %7937 = vmatprep.mubr.f32.mxu0 0.0
    %7938 = vmatmul.mubr.f32.gmra.mrb[0].mxu0 %v7808
    %v7939 = vpop.f32.mrb[0].mxu0
    %v7940 = vadd.f32 0.0, %v7939
    %v7941 = vpop.f32.mrb[0].mxu0
    %7942 = vmatprep.mubr.f32.mxu0 0.0
    %7943 = vmatmul.mubr.f32.gmra.mrb[0].mxu0 %v7811
    %v7944 = vpop.f32.mrb[0].mxu0
    %v7945 = vadd.f32 0.0, %v7944
    %v7946 = vpop.f32.mrb[0].mxu0
    %7947 = vmatprep.mubr.f32.mxu0 0.0
    %7948 = vmatmul.mubr.f32.gmra.mrb[0].mxu0 %v7814
    %v7949 = vpop.f32.mrb[0].mxu0
    %v7950 = vadd.f32 0.0, %v7949
    %v7951 = vpop.f32.mrb[0].mxu0
    %7952 = vmatprep.mubr.f32.mxu0 0.0
    %7953 = vmatmul.mubr.f32.gmra.mrb[0].mxu0 %v7817
    %v7954 = vpop.f32.mrb[0].mxu0
    %v7955 = vadd.f32 0.0, %v7954
    %v7956 = vpop.f32.mrb[0].mxu0
    %7957 = vmatprep.mubr.f32.mxu0 0.0
    %7958 = vmatmul.mubr.f32.gmra.mrb[0].mxu0 %v7820
    %v7959 = vpop.f32.mrb[0].mxu0
    %v7960 = vadd.f32 0.0, %v7959
    %v7961 = vpop.f32.mrb[0].mxu0
    %7962 = vmatprep.mubr.f32.mxu0 0.0
    %7963 = vmatmul.mubr.f32.gmra.mrb[0].mxu0 %v7823
    %v7964 = vpop.f32.mrb[0].mxu0
    %v7965 = vadd.f32 0.0, %v7964
    %v7966 = vpop.f32.mrb[0].mxu0
    %7967 = vmatprep.mubr.f32.mxu0 0.0
    %7968 = vmatmul.mubr.f32.gmra.mrb[0].mxu0 %v7826
    %v7969 = vpop.f32.mrb[0].mxu0
    %v7970 = vadd.f32 0.0, %v7969
    %v7971 = vpop.f32.mrb[0].mxu0
    %7972 = vdwg.mxu0
    %v7973 = vadd.f32 %v7681, %v7895
    %v7974 = vadd.f32 %v7686, %v7900
    %v7975 = vadd.f32 %v7691, %v7905
    %v7976 = vadd.f32 %v7696, %v7910
    %v7977 = vadd.f32 %v7701, %v7915
    %v7978 = vadd.f32 %v7706, %v7920
    %v7979 = vadd.f32 %v7711, %v7925
    %v7980 = vadd.f32 %v7716, %v7930
    %v7981 = vadd.f32 %v7721, %v7935
    %v7982 = vadd.f32 %v7726, %v7940
    %v7983 = vadd.f32 %v7731, %v7945
    %v7984 = vadd.f32 %v7736, %v7950
    %v7985 = vadd.f32 %v7741, %v7955
    %v7986 = vadd.f32 %v7746, %v7960
    %v7987 = vadd.f32 %v7751, %v7965
    %v7988 = vadd.f32 %v7756, %v7970
    %v7989 = vld [vmem:[#allocation2 + $0xa] sm:$0xff]
    %v7990 = vld [vmem:[#allocation2 + $0x12] sm:$0xff]
    %v7991 = vld [vmem:[#allocation2 + $0x1a] sm:$0xff]
    %v7992 = vld [vmem:[#allocation2 + $0x22] sm:$0xff]
    %v7993 = vld [vmem:[#allocation2 + $0x2a] sm:$0xff]
    %v7994 = vld [vmem:[#allocation2 + $0x32] sm:$0xff]
    %v7995 = vld [vmem:[#allocation2 + $0x3a] sm:$0xff]
    %v7996 = vld [vmem:[#allocation2 + $0x42] sm:$0xff]
    %v7997 = vld [vmem:[#allocation2 + $0x5a] sm:$0xff]
    %v7998 = vld [vmem:[#allocation2 + $0x62] sm:$0xff]
    %v7999 = vld [vmem:[#allocation2 + $0x6a] sm:$0xff]
    %v8000 = vld [vmem:[#allocation2 + $0x72] sm:$0xff]
    %v8001 = vld [vmem:[#allocation2 + $0x7a] sm:$0xff]
    %v8002 = vld [vmem:[#allocation2 + $0x82] sm:$0xff]
    %v8003 = vld [vmem:[#allocation2 + $0x8a] sm:$0xff]
    %v8004 = vld [vmem:[#allocation2 + $0x92] sm:$0xff]
    %s8005 = scalar_lea.vmem [#allocation3], 576
    %v8006 = vld [vmem:[%s8005] sm:$0xff]
    %v8007 = vld [vmem:[%s8005 + $0x8] sm:$0xff]
    %v8008 = vld [vmem:[%s8005 + $0x10] sm:$0xff]
    %v8009 = vld [vmem:[%s8005 + $0x18] sm:$0xff]
    %v8011 = vsel %vm45, %v7989, 0
    %v8014 = vsel %vm45, %v7990, 0
    %v8017 = vsel %vm45, %v7991, 0
    %v8020 = vsel %vm45, %v7992, 0
    %v8023 = vsel %vm45, %v7993, 0
    %v8026 = vsel %vm45, %v7994, 0
    %v8029 = vsel %vm45, %v7995, 0
    %v8032 = vsel %vm45, %v7996, 0
    %v8035 = vsel %vm45, %v7997, 0
    %v8038 = vsel %vm45, %v7998, 0
    %v8041 = vsel %vm45, %v7999, 0
    %v8044 = vsel %vm45, %v8000, 0
    %v8047 = vsel %vm45, %v8001, 0
    %v8050 = vsel %vm45, %v8002, 0
    %v8053 = vsel %vm45, %v8003, 0
    %v8056 = vsel %vm45, %v8004, 0
    %8058 = vmatprep.subr.mxu0 0.0
    %8059 = vmatpush1.msra.mxu0 %v8006
    %8060 = vmatprep.subr.mxu0 0.0
    %8061 = vmatpush1.msra.mxu0 %v8007
    %8062 = vmatprep.subr.mxu0 0.0
    %8063 = vmatpush1.msra.mxu0 %v8008
    %8064 = vmatprep.subr.mxu0 0.0
    %8065 = vmatpush1.msra.mxu0 %v8009
    %8066 = vmatprep.subr.mxu0 0.0
    %8067 = vmatpush1.msra.mxu0 0.0
    %8068 = vmatprep.subr.mxu0 0.0
    %8069 = vmatpush1.msra.mxu0 0.0
    %8070 = vmatprep.subr.mxu0 0.0
    %8071 = vmatpush1.msra.mxu0 0.0
    %8072 = vmatprep.subr.mxu0 0.0
    %8073 = vmatpush1.msra.mxu0 0.0
    %8074 = vmatprep.subr.mxu0 0.0
    %8075 = vmatpush1.msra.mxu0 0.0
    %8076 = vmatprep.subr.mxu0 0.0
    %8077 = vmatpush1.msra.mxu0 0.0
    %8078 = vmatprep.subr.mxu0 0.0
    %8079 = vmatpush1.msra.mxu0 0.0
    %8080 = vmatprep.subr.mxu0 0.0
    %8081 = vmatpush1.msra.mxu0 0.0
    %8082 = vmatprep.subr.mxu0 0.0
    %8083 = vmatpush1.msra.mxu0 0.0
    %8084 = vmatprep.subr.mxu0 0.0
    %8085 = vmatpush1.msra.mxu0 0.0
    %8086 = vmatprep.subr.mxu0 0.0
    %8087 = vmatpush1.msra.mxu0 0.0
    %8088 = vmatprep.subr.mxu0 0.0
    %8089 = vmatpush1.msra.mxu0 0.0
    %8090 = vmatprep.subr.mxu0 0.0
    %8091 = vmatpush1.msra.mxu0 0.0
    %8092 = vmatprep.subr.mxu0 0.0
    %8093 = vmatpush1.msra.mxu0 0.0
    %8094 = vmatprep.subr.mxu0 0.0
    %8095 = vmatpush1.msra.mxu0 0.0
    %8096 = vmatprep.subr.mxu0 0.0
    %8097 = vmatpush1.msra.mxu0 0.0
    %8098 = vmatprep.subr.mxu0 0.0
    %8099 = vmatpush1.msra.mxu0 0.0
    %8100 = vmatprep.subr.mxu0 0.0
    %8101 = vmatpush1.msra.mxu0 0.0
    %8102 = vmatprep.subr.mxu0 0.0
    %8103 = vmatpush1.msra.mxu0 0.0
    %8104 = vmatprep.subr.mxu0 0.0
    %8105 = vmatpush1.msra.mxu0 0.0
    %8106 = vmatprep.subr.mxu0 0.0
    %8107 = vmatpush1.msra.mxu0 0.0
    %8108 = vmatprep.subr.mxu0 0.0
    %8109 = vmatpush1.msra.mxu0 0.0
    %8110 = vmatprep.subr.mxu0 0.0
    %8111 = vmatpush1.msra.mxu0 0.0
    %8112 = vmatprep.subr.mxu0 0.0
    %8113 = vmatpush1.msra.mxu0 0.0
    %8114 = vmatprep.subr.mxu0 0.0
    %8115 = vmatpush1.msra.mxu0 0.0
    %8116 = vmatprep.subr.mxu0 0.0
    %8117 = vmatpush1.msra.mxu0 0.0
    %8118 = vmatprep.subr.mxu0 0.0
    %8119 = vmatpush1.msra.mxu0 0.0
    %8120 = vmatprep.subr.mxu0 0.0
    %8121 = vmatpush1.msra.mxu0 0.0
    %8122 = vmatprep.mubr.f32.mxu0 0.0
    %8123 = vmatmul.mubr.f32.gmra.mrb[0].mxu0 %v8011
    %v8124 = vpop.f32.mrb[0].mxu0
    %v8125 = vadd.f32 0.0, %v8124
    %v8126 = vpop.f32.mrb[0].mxu0
    %8127 = vmatprep.mubr.f32.mxu0 0.0
    %8128 = vmatmul.mubr.f32.gmra.mrb[0].mxu0 %v8014
    %v8129 = vpop.f32.mrb[0].mxu0
    %v8130 = vadd.f32 0.0, %v8129
    %v8131 = vpop.f32.mrb[0].mxu0
    %8132 = vmatprep.mubr.f32.mxu0 0.0
    %8133 = vmatmul.mubr.f32.gmra.mrb[0].mxu0 %v8017
    %v8134 = vpop.f32.mrb[0].mxu0
    %v8135 = vadd.f32 0.0, %v8134
    %v8136 = vpop.f32.mrb[0].mxu0
    %8137 = vmatprep.mubr.f32.mxu0 0.0
    %8138 = vmatmul.mubr.f32.gmra.mrb[0].mxu0 %v8020
    %v8139 = vpop.f32.mrb[0].mxu0
    %v8140 = vadd.f32 0.0, %v8139
    %v8141 = vpop.f32.mrb[0].mxu0
    %8142 = vmatprep.mubr.f32.mxu0 0.0
    %8143 = vmatmul.mubr.f32.gmra.mrb[0].mxu0 %v8023
    %v8144 = vpop.f32.mrb[0].mxu0
    %v8145 = vadd.f32 0.0, %v8144
    %v8146 = vpop.f32.mrb[0].mxu0
    %8147 = vmatprep.mubr.f32.mxu0 0.0
    %8148 = vmatmul.mubr.f32.gmra.mrb[0].mxu0 %v8026
    %v8149 = vpop.f32.mrb[0].mxu0
    %v8150 = vadd.f32 0.0, %v8149
    %v8151 = vpop.f32.mrb[0].mxu0
    %8152 = vmatprep.mubr.f32.mxu0 0.0
    %8153 = vmatmul.mubr.f32.gmra.mrb[0].mxu0 %v8029
    %v8154 = vpop.f32.mrb[0].mxu0
    %v8155 = vadd.f32 0.0, %v8154
    %v8156 = vpop.f32.mrb[0].mxu0
    %8157 = vmatprep.mubr.f32.mxu0 0.0
    %8158 = vmatmul.mubr.f32.gmra.mrb[0].mxu0 %v8032
    %v8159 = vpop.f32.mrb[0].mxu0
    %v8160 = vadd.f32 0.0, %v8159
    %v8161 = vpop.f32.mrb[0].mxu0
    %8162 = vmatprep.mubr.f32.mxu0 0.0
    %8163 = vmatmul.mubr.f32.gmra.mrb[0].mxu0 %v8035
    %v8164 = vpop.f32.mrb[0].mxu0
    %v8165 = vadd.f32 0.0, %v8164
    %v8166 = vpop.f32.mrb[0].mxu0
    %8167 = vmatprep.mubr.f32.mxu0 0.0
    %8168 = vmatmul.mubr.f32.gmra.mrb[0].mxu0 %v8038
    %v8169 = vpop.f32.mrb[0].mxu0
    %v8170 = vadd.f32 0.0, %v8169
    %v8171 = vpop.f32.mrb[0].mxu0
    %8172 = vmatprep.mubr.f32.mxu0 0.0
    %8173 = vmatmul.mubr.f32.gmra.mrb[0].mxu0 %v8041
    %v8174 = vpop.f32.mrb[0].mxu0
    %v8175 = vadd.f32 0.0, %v8174
    %v8176 = vpop.f32.mrb[0].mxu0
    %8177 = vmatprep.mubr.f32.mxu0 0.0
    %8178 = vmatmul.mubr.f32.gmra.mrb[0].mxu0 %v8044
    %v8179 = vpop.f32.mrb[0].mxu0
    %v8180 = vadd.f32 0.0, %v8179
    %v8181 = vpop.f32.mrb[0].mxu0
    %8182 = vmatprep.mubr.f32.mxu0 0.0
    %8183 = vmatmul.mubr.f32.gmra.mrb[0].mxu0 %v8047
    %v8184 = vpop.f32.mrb[0].mxu0
    %v8185 = vadd.f32 0.0, %v8184
    %v8186 = vpop.f32.mrb[0].mxu0
    %8187 = vmatprep.mubr.f32.mxu0 0.0
    %8188 = vmatmul.mubr.f32.gmra.mrb[0].mxu0 %v8050
    %v8189 = vpop.f32.mrb[0].mxu0
    %v8190 = vadd.f32 0.0, %v8189
    %v8191 = vpop.f32.mrb[0].mxu0
    %8192 = vmatprep.mubr.f32.mxu0 0.0
    %8193 = vmatmul.mubr.f32.gmra.mrb[0].mxu0 %v8053
    %v8194 = vpop.f32.mrb[0].mxu0
    %v8195 = vadd.f32 0.0, %v8194
    %v8196 = vpop.f32.mrb[0].mxu0
    %8197 = vmatprep.mubr.f32.mxu0 0.0
    %8198 = vmatmul.mubr.f32.gmra.mrb[0].mxu0 %v8056
    %v8199 = vpop.f32.mrb[0].mxu0
    %v8200 = vadd.f32 0.0, %v8199
    %v8201 = vpop.f32.mrb[0].mxu0
    %8202 = vdwg.mxu0
    %v8203 = vadd.f32 %v7973, %v8125
    %v8204 = vadd.f32 %v7974, %v8130
    %v8205 = vadd.f32 %v7975, %v8135
    %v8206 = vadd.f32 %v7976, %v8140
    %v8207 = vadd.f32 %v7977, %v8145
    %v8208 = vadd.f32 %v7978, %v8150
    %v8209 = vadd.f32 %v7979, %v8155
    %v8210 = vadd.f32 %v7980, %v8160
    %v8211 = vadd.f32 %v7981, %v8165
    %v8212 = vadd.f32 %v7982, %v8170
    %v8213 = vadd.f32 %v7983, %v8175
    %v8214 = vadd.f32 %v7984, %v8180
    %v8215 = vadd.f32 %v7985, %v8185
    %v8216 = vadd.f32 %v7986, %v8190
    %v8217 = vadd.f32 %v7987, %v8195
    %v8218 = vadd.f32 %v7988, %v8200
    %v8219 = vld [vmem:[#allocation2 + $0xc] sm:$0xff]
    %v8220 = vld [vmem:[#allocation2 + $0x14] sm:$0xff]
    %v8221 = vld [vmem:[#allocation2 + $0x1c] sm:$0xff]
    %v8222 = vld [vmem:[#allocation2 + $0x24] sm:$0xff]
    %v8223 = vld [vmem:[#allocation2 + $0x2c] sm:$0xff]
    %v8224 = vld [vmem:[#allocation2 + $0x34] sm:$0xff]
    %v8225 = vld [vmem:[#allocation2 + $0x3c] sm:$0xff]
    %v8226 = vld [vmem:[#allocation2 + $0x44] sm:$0xff]
    %v8227 = vld [vmem:[#allocation2 + $0x5c] sm:$0xff]
    %v8228 = vld [vmem:[#allocation2 + $0x64] sm:$0xff]
    %v8229 = vld [vmem:[#allocation2 + $0x6c] sm:$0xff]
    %v8230 = vld [vmem:[#allocation2 + $0x74] sm:$0xff]
    %v8231 = vld [vmem:[#allocation2 + $0x7c] sm:$0xff]
    %v8232 = vld [vmem:[#allocation2 + $0x84] sm:$0xff]
    %v8233 = vld [vmem:[#allocation2 + $0x8c] sm:$0xff]
    %v8234 = vld [vmem:[#allocation2 + $0x94] sm:$0xff]
    %s8235 = scalar_lea.vmem [#allocation3], 608
    %v8236 = vld [vmem:[%s8235] sm:$0xff]
    %v8237 = vld [vmem:[%s8235 + $0x8] sm:$0xff]
    %v8238 = vld [vmem:[%s8235 + $0x10] sm:$0xff]
    %v8239 = vld [vmem:[%s8235 + $0x18] sm:$0xff]
    %v8241 = vsel %vm45, %v8219, 0
    %v8244 = vsel %vm45, %v8220, 0
    %v8247 = vsel %vm45, %v8221, 0
    %v8250 = vsel %vm45, %v8222, 0
    %v8253 = vsel %vm45, %v8223, 0
    %v8256 = vsel %vm45, %v8224, 0
    %v8259 = vsel %vm45, %v8225, 0
    %v8262 = vsel %vm45, %v8226, 0
    %v8265 = vsel %vm45, %v8227, 0
    %v8268 = vsel %vm45, %v8228, 0
    %v8271 = vsel %vm45, %v8229, 0
    %v8274 = vsel %vm45, %v8230, 0
    %v8277 = vsel %vm45, %v8231, 0
    %v8280 = vsel %vm45, %v8232, 0
    %v8283 = vsel %vm45, %v8233, 0
    %v8286 = vsel %vm45, %v8234, 0
    %8288 = vmatprep.subr.mxu0 0.0
    %8289 = vmatpush1.msra.mxu0 %v8236
    %8290 = vmatprep.subr.mxu0 0.0
    %8291 = vmatpush1.msra.mxu0 %v8237
    %8292 = vmatprep.subr.mxu0 0.0
    %8293 = vmatpush1.msra.mxu0 %v8238
    %8294 = vmatprep.subr.mxu0 0.0
    %8295 = vmatpush1.msra.mxu0 %v8239
    %8296 = vmatprep.subr.mxu0 0.0
    %8297 = vmatpush1.msra.mxu0 0.0
    %8298 = vmatprep.subr.mxu0 0.0
    %8299 = vmatpush1.msra.mxu0 0.0
    %8300 = vmatprep.subr.mxu0 0.0
    %8301 = vmatpush1.msra.mxu0 0.0
    %8302 = vmatprep.subr.mxu0 0.0
    %8303 = vmatpush1.msra.mxu0 0.0
    %8304 = vmatprep.subr.mxu0 0.0
    %8305 = vmatpush1.msra.mxu0 0.0
    %8306 = vmatprep.subr.mxu0 0.0
    %8307 = vmatpush1.msra.mxu0 0.0
    %8308 = vmatprep.subr.mxu0 0.0
    %8309 = vmatpush1.msra.mxu0 0.0
    %8310 = vmatprep.subr.mxu0 0.0
    %8311 = vmatpush1.msra.mxu0 0.0
    %8312 = vmatprep.subr.mxu0 0.0
    %8313 = vmatpush1.msra.mxu0 0.0
    %8314 = vmatprep.subr.mxu0 0.0
    %8315 = vmatpush1.msra.mxu0 0.0
    %8316 = vmatprep.subr.mxu0 0.0
    %8317 = vmatpush1.msra.mxu0 0.0
    %8318 = vmatprep.subr.mxu0 0.0
    %8319 = vmatpush1.msra.mxu0 0.0
    %8320 = vmatprep.subr.mxu0 0.0
    %8321 = vmatpush1.msra.mxu0 0.0
    %8322 = vmatprep.subr.mxu0 0.0
    %8323 = vmatpush1.msra.mxu0 0.0
    %8324 = vmatprep.subr.mxu0 0.0
    %8325 = vmatpush1.msra.mxu0 0.0
    %8326 = vmatprep.subr.mxu0 0.0
    %8327 = vmatpush1.msra.mxu0 0.0
    %8328 = vmatprep.subr.mxu0 0.0
    %8329 = vmatpush1.msra.mxu0 0.0
    %8330 = vmatprep.subr.mxu0 0.0
    %8331 = vmatpush1.msra.mxu0 0.0
    %8332 = vmatprep.subr.mxu0 0.0
    %8333 = vmatpush1.msra.mxu0 0.0
    %8334 = vmatprep.subr.mxu0 0.0
    %8335 = vmatpush1.msra.mxu0 0.0
    %8336 = vmatprep.subr.mxu0 0.0
    %8337 = vmatpush1.msra.mxu0 0.0
    %8338 = vmatprep.subr.mxu0 0.0
    %8339 = vmatpush1.msra.mxu0 0.0
    %8340 = vmatprep.subr.mxu0 0.0
    %8341 = vmatpush1.msra.mxu0 0.0
    %8342 = vmatprep.subr.mxu0 0.0
    %8343 = vmatpush1.msra.mxu0 0.0
    %8344 = vmatprep.subr.mxu0 0.0
    %8345 = vmatpush1.msra.mxu0 0.0
    %8346 = vmatprep.subr.mxu0 0.0
    %8347 = vmatpush1.msra.mxu0 0.0
    %8348 = vmatprep.subr.mxu0 0.0
    %8349 = vmatpush1.msra.mxu0 0.0
    %8350 = vmatprep.subr.mxu0 0.0
    %8351 = vmatpush1.msra.mxu0 0.0
    %8352 = vmatprep.mubr.f32.mxu0 0.0
    %8353 = vmatmul.mubr.f32.gmra.mrb[0].mxu0 %v8241
    %v8354 = vpop.f32.mrb[0].mxu0
    %v8355 = vadd.f32 0.0, %v8354
    %v8356 = vpop.f32.mrb[0].mxu0
    %8357 = vmatprep.mubr.f32.mxu0 0.0
    %8358 = vmatmul.mubr.f32.gmra.mrb[0].mxu0 %v8244
    %v8359 = vpop.f32.mrb[0].mxu0
    %v8360 = vadd.f32 0.0, %v8359
    %v8361 = vpop.f32.mrb[0].mxu0
    %8362 = vmatprep.mubr.f32.mxu0 0.0
    %8363 = vmatmul.mubr.f32.gmra.mrb[0].mxu0 %v8247
    %v8364 = vpop.f32.mrb[0].mxu0
    %v8365 = vadd.f32 0.0, %v8364
    %v8366 = vpop.f32.mrb[0].mxu0
    %8367 = vmatprep.mubr.f32.mxu0 0.0
    %8368 = vmatmul.mubr.f32.gmra.mrb[0].mxu0 %v8250
    %v8369 = vpop.f32.mrb[0].mxu0
    %v8370 = vadd.f32 0.0, %v8369
    %v8371 = vpop.f32.mrb[0].mxu0
    %8372 = vmatprep.mubr.f32.mxu0 0.0
    %8373 = vmatmul.mubr.f32.gmra.mrb[0].mxu0 %v8253
    %v8374 = vpop.f32.mrb[0].mxu0
    %v8375 = vadd.f32 0.0, %v8374
    %v8376 = vpop.f32.mrb[0].mxu0
    %8377 = vmatprep.mubr.f32.mxu0 0.0
    %8378 = vmatmul.mubr.f32.gmra.mrb[0].mxu0 %v8256
    %v8379 = vpop.f32.mrb[0].mxu0
    %v8380 = vadd.f32 0.0, %v8379
    %v8381 = vpop.f32.mrb[0].mxu0
    %8382 = vmatprep.mubr.f32.mxu0 0.0
    %8383 = vmatmul.mubr.f32.gmra.mrb[0].mxu0 %v8259
    %v8384 = vpop.f32.mrb[0].mxu0
    %v8385 = vadd.f32 0.0, %v8384
    %v8386 = vpop.f32.mrb[0].mxu0
    %8387 = vmatprep.mubr.f32.mxu0 0.0
    %8388 = vmatmul.mubr.f32.gmra.mrb[0].mxu0 %v8262
    %v8389 = vpop.f32.mrb[0].mxu0
    %v8390 = vadd.f32 0.0, %v8389
    %v8391 = vpop.f32.mrb[0].mxu0
    %8392 = vmatprep.mubr.f32.mxu0 0.0
    %8393 = vmatmul.mubr.f32.gmra.mrb[0].mxu0 %v8265
    %v8394 = vpop.f32.mrb[0].mxu0
    %v8395 = vadd.f32 0.0, %v8394
    %v8396 = vpop.f32.mrb[0].mxu0
    %8397 = vmatprep.mubr.f32.mxu0 0.0
    %8398 = vmatmul.mubr.f32.gmra.mrb[0].mxu0 %v8268
    %v8399 = vpop.f32.mrb[0].mxu0
    %v8400 = vadd.f32 0.0, %v8399
    %v8401 = vpop.f32.mrb[0].mxu0
    %8402 = vmatprep.mubr.f32.mxu0 0.0
    %8403 = vmatmul.mubr.f32.gmra.mrb[0].mxu0 %v8271
    %v8404 = vpop.f32.mrb[0].mxu0
    %v8405 = vadd.f32 0.0, %v8404
    %v8406 = vpop.f32.mrb[0].mxu0
    %8407 = vmatprep.mubr.f32.mxu0 0.0
    %8408 = vmatmul.mubr.f32.gmra.mrb[0].mxu0 %v8274
    %v8409 = vpop.f32.mrb[0].mxu0
    %v8410 = vadd.f32 0.0, %v8409
    %v8411 = vpop.f32.mrb[0].mxu0
    %8412 = vmatprep.mubr.f32.mxu0 0.0
    %8413 = vmatmul.mubr.f32.gmra.mrb[0].mxu0 %v8277
    %v8414 = vpop.f32.mrb[0].mxu0
    %v8415 = vadd.f32 0.0, %v8414
    %v8416 = vpop.f32.mrb[0].mxu0
    %8417 = vmatprep.mubr.f32.mxu0 0.0
    %8418 = vmatmul.mubr.f32.gmra.mrb[0].mxu0 %v8280
    %v8419 = vpop.f32.mrb[0].mxu0
    %v8420 = vadd.f32 0.0, %v8419
    %v8421 = vpop.f32.mrb[0].mxu0
    %8422 = vmatprep.mubr.f32.mxu0 0.0
    %8423 = vmatmul.mubr.f32.gmra.mrb[0].mxu0 %v8283
    %v8424 = vpop.f32.mrb[0].mxu0
    %v8425 = vadd.f32 0.0, %v8424
    %v8426 = vpop.f32.mrb[0].mxu0
    %8427 = vmatprep.mubr.f32.mxu0 0.0
    %8428 = vmatmul.mubr.f32.gmra.mrb[0].mxu0 %v8286
    %v8429 = vpop.f32.mrb[0].mxu0
    %v8430 = vadd.f32 0.0, %v8429
    %v8431 = vpop.f32.mrb[0].mxu0
    %8432 = vdwg.mxu0
    %v8433 = vadd.f32 %v8203, %v8355
    %v8434 = vadd.f32 %v8204, %v8360
    %v8435 = vadd.f32 %v8205, %v8365
    %v8436 = vadd.f32 %v8206, %v8370
    %v8437 = vadd.f32 %v8207, %v8375
    %v8438 = vadd.f32 %v8208, %v8380
    %v8439 = vadd.f32 %v8209, %v8385
    %v8440 = vadd.f32 %v8210, %v8390
    %v8441 = vadd.f32 %v8211, %v8395
    %v8442 = vadd.f32 %v8212, %v8400
    %v8443 = vadd.f32 %v8213, %v8405
    %v8444 = vadd.f32 %v8214, %v8410
    %v8445 = vadd.f32 %v8215, %v8415
    %v8446 = vadd.f32 %v8216, %v8420
    %v8447 = vadd.f32 %v8217, %v8425
    %v8448 = vadd.f32 %v8218, %v8430
    %v8449 = vlaneseq
    %v8450 = vshrl.u32 %v8449, 7
    %v8451 = vsub.s32 2, %v8450
    %v8452 = vrot.slane %v7258, %v8451
    %v8453 = vadd.f32 %v8433, %v8452
    %v8454 = vadd.f32 %v8434, %v8452
    %v8455 = vadd.f32 %v8435, %v8452
    %v8456 = vadd.f32 %v8436, %v8452
    %v8457 = vadd.f32 %v8437, %v8452
    %v8458 = vadd.f32 %v8438, %v8452
    %v8459 = vadd.f32 %v8439, %v8452
    %v8460 = vadd.f32 %v8440, %v8452
    %v8461 = vadd.f32 %v8441, %v8452
    %v8462 = vadd.f32 %v8442, %v8452
    %v8463 = vadd.f32 %v8443, %v8452
    %v8464 = vadd.f32 %v8444, %v8452
    %v8465 = vadd.f32 %v8445, %v8452
    %v8466 = vadd.f32 %v8446, %v8452
    %v8467 = vadd.f32 %v8447, %v8452
    %v8468 = vadd.f32 %v8448, %v8452
    %v8469 = vmax.f32 %v8453, 0.0
    %v8470 = vmax.f32 %v8454, 0.0
    %v8471 = vmax.f32 %v8455, 0.0
    %v8472 = vmax.f32 %v8456, 0.0
    %v8473 = vmax.f32 %v8457, 0.0
    %v8474 = vmax.f32 %v8458, 0.0
    %v8475 = vmax.f32 %v8459, 0.0
    %v8476 = vmax.f32 %v8460, 0.0
    %v8477 = vmax.f32 %v8461, 0.0
    %v8478 = vmax.f32 %v8462, 0.0
    %v8479 = vmax.f32 %v8463, 0.0
    %v8480 = vmax.f32 %v8464, 0.0
    %v8481 = vmax.f32 %v8465, 0.0
    %v8482 = vmax.f32 %v8466, 0.0
    %v8483 = vmax.f32 %v8467, 0.0
    %v8484 = vmax.f32 %v8468, 0.0
    %8485 = vst.msk [vmem:[#allocation2 + $0x8] sm:$0xff] %vm45, %v8469
    %8486 = vst.msk [vmem:[#allocation2 + $0x10] sm:$0xff] %vm45, %v8470
    %8487 = vst.msk [vmem:[#allocation2 + $0x18] sm:$0xff] %vm45, %v8471
    %8488 = vst.msk [vmem:[#allocation2 + $0x20] sm:$0xff] %vm45, %v8472
    %8489 = vst.msk [vmem:[#allocation2 + $0x28] sm:$0xff] %vm45, %v8473
    %8490 = vst.msk [vmem:[#allocation2 + $0x30] sm:$0xff] %vm45, %v8474
    %8491 = vst.msk [vmem:[#allocation2 + $0x38] sm:$0xff] %vm45, %v8475
    %8492 = vst.msk [vmem:[#allocation2 + $0x40] sm:$0xff] %vm45, %v8476
    %8493 = vst.msk [vmem:[#allocation2 + $0x58] sm:$0xff] %vm45, %v8477
    %8494 = vst.msk [vmem:[#allocation2 + $0x60] sm:$0xff] %vm45, %v8478
    %8495 = vst.msk [vmem:[#allocation2 + $0x68] sm:$0xff] %vm45, %v8479
    %8496 = vst.msk [vmem:[#allocation2 + $0x70] sm:$0xff] %vm45, %v8480
    %8497 = vst.msk [vmem:[#allocation2 + $0x78] sm:$0xff] %vm45, %v8481
    %8498 = vst.msk [vmem:[#allocation2 + $0x80] sm:$0xff] %vm45, %v8482
    %8499 = vst.msk [vmem:[#allocation2 + $0x88] sm:$0xff] %vm45, %v8483
    %8500 = vst.msk [vmem:[#allocation2 + $0x90] sm:$0xff] %vm45, %v8484
    %v8501 = vld [vmem:[#allocation2 + $0x4] sm:$0xff]
    %v8502 = vld [vmem:[#allocation2 + $0xc] sm:$0xff]
    %v8503 = vld [vmem:[#allocation2 + $0x14] sm:$0xff]
    %v8504 = vld [vmem:[#allocation2 + $0x1c] sm:$0xff]
    %v8505 = vld [vmem:[#allocation2 + $0x24] sm:$0xff]
    %v8506 = vld [vmem:[#allocation2 + $0x2c] sm:$0xff]
    %v8507 = vld [vmem:[#allocation2 + $0x34] sm:$0xff]
    %v8508 = vld [vmem:[#allocation2 + $0x3c] sm:$0xff]
    %v8509 = vld [vmem:[#allocation2 + $0x54] sm:$0xff]
    %v8510 = vld [vmem:[#allocation2 + $0x5c] sm:$0xff]
    %v8511 = vld [vmem:[#allocation2 + $0x64] sm:$0xff]
    %v8512 = vld [vmem:[#allocation2 + $0x6c] sm:$0xff]
    %v8513 = vld [vmem:[#allocation2 + $0x74] sm:$0xff]
    %v8514 = vld [vmem:[#allocation2 + $0x7c] sm:$0xff]
    %v8515 = vld [vmem:[#allocation2 + $0x84] sm:$0xff]
    %v8516 = vld [vmem:[#allocation2 + $0x8c] sm:$0xff]
    %s8517 = scalar_lea.vmem [#allocation5], 480
    %v8518 = vld [vmem:[%s8517] sm:$0xff]
    %v8519 = vld [vmem:[%s8517 + $0x8] sm:$0xff]
    %v8520 = vld [vmem:[%s8517 + $0x10] sm:$0xff]
    %v8521 = vld [vmem:[%s8517 + $0x18] sm:$0xff]
    %v8522 = vld [vmem:[#allocation2 + $0x6] sm:$0xff]
    %v8523 = vld [vmem:[#allocation2 + $0xe] sm:$0xff]
    %v8524 = vld [vmem:[#allocation2 + $0x16] sm:$0xff]
    %v8525 = vld [vmem:[#allocation2 + $0x1e] sm:$0xff]
    %v8526 = vld [vmem:[#allocation2 + $0x26] sm:$0xff]
    %v8527 = vld [vmem:[#allocation2 + $0x2e] sm:$0xff]
    %v8528 = vld [vmem:[#allocation2 + $0x36] sm:$0xff]
    %v8529 = vld [vmem:[#allocation2 + $0x3e] sm:$0xff]
    %v8530 = vld [vmem:[#allocation2 + $0x56] sm:$0xff]
    %v8531 = vld [vmem:[#allocation2 + $0x5e] sm:$0xff]
    %v8532 = vld [vmem:[#allocation2 + $0x66] sm:$0xff]
    %v8533 = vld [vmem:[#allocation2 + $0x6e] sm:$0xff]
    %v8534 = vld [vmem:[#allocation2 + $0x76] sm:$0xff]
    %v8535 = vld [vmem:[#allocation2 + $0x7e] sm:$0xff]
    %v8536 = vld [vmem:[#allocation2 + $0x86] sm:$0xff]
    %v8537 = vld [vmem:[#allocation2 + $0x8e] sm:$0xff]
    %s8538 = scalar_lea.vmem [#allocation5], 512
    %v8539 = vld [vmem:[%s8538] sm:$0xff]
    %v8540 = vld [vmem:[%s8538 + $0x8] sm:$0xff]
    %v8541 = vld [vmem:[%s8538 + $0x10] sm:$0xff]
    %v8542 = vld [vmem:[%s8538 + $0x18] sm:$0xff]
    %v8544 = vsel %vm45, %v8522, 0
    %v8547 = vsel %vm45, %v8523, 0
    %v8550 = vsel %vm45, %v8524, 0
    %v8553 = vsel %vm45, %v8525, 0
    %v8556 = vsel %vm45, %v8526, 0
    %v8559 = vsel %vm45, %v8527, 0
    %v8562 = vsel %vm45, %v8528, 0
    %v8565 = vsel %vm45, %v8529, 0
    %v8568 = vsel %vm45, %v8530, 0
    %v8571 = vsel %vm45, %v8531, 0
    %v8574 = vsel %vm45, %v8532, 0
    %v8577 = vsel %vm45, %v8533, 0
    %v8580 = vsel %vm45, %v8534, 0
    %v8583 = vsel %vm45, %v8535, 0
    %v8586 = vsel %vm45, %v8536, 0
    %v8589 = vsel %vm45, %v8537, 0
    %8591 = vmatprep.subr.mxu0 0.0
    %8592 = vmatpush1.msra.mxu0 %v8539
    %8593 = vmatprep.subr.mxu0 0.0
    %8594 = vmatpush1.msra.mxu0 %v8540
    %8595 = vmatprep.subr.mxu0 0.0
    %8596 = vmatpush1.msra.mxu0 %v8541
    %8597 = vmatprep.subr.mxu0 0.0
    %8598 = vmatpush1.msra.mxu0 %v8542
    %8599 = vmatprep.subr.mxu0 0.0
    %8600 = vmatpush1.msra.mxu0 0.0
    %8601 = vmatprep.subr.mxu0 0.0
    %8602 = vmatpush1.msra.mxu0 0.0
    %8603 = vmatprep.subr.mxu0 0.0
    %8604 = vmatpush1.msra.mxu0 0.0
    %8605 = vmatprep.subr.mxu0 0.0
    %8606 = vmatpush1.msra.mxu0 0.0
    %8607 = vmatprep.subr.mxu0 0.0
    %8608 = vmatpush1.msra.mxu0 0.0
    %8609 = vmatprep.subr.mxu0 0.0
    %8610 = vmatpush1.msra.mxu0 0.0
    %8611 = vmatprep.subr.mxu0 0.0
    %8612 = vmatpush1.msra.mxu0 0.0
    %8613 = vmatprep.subr.mxu0 0.0
    %8614 = vmatpush1.msra.mxu0 0.0
    %8615 = vmatprep.subr.mxu0 0.0
    %8616 = vmatpush1.msra.mxu0 0.0
    %8617 = vmatprep.subr.mxu0 0.0
    %8618 = vmatpush1.msra.mxu0 0.0
    %8619 = vmatprep.subr.mxu0 0.0
    %8620 = vmatpush1.msra.mxu0 0.0
    %8621 = vmatprep.subr.mxu0 0.0
    %8622 = vmatpush1.msra.mxu0 0.0
    %8623 = vmatprep.subr.mxu0 0.0
    %8624 = vmatpush1.msra.mxu0 0.0
    %8625 = vmatprep.subr.mxu0 0.0
    %8626 = vmatpush1.msra.mxu0 0.0
    %8627 = vmatprep.subr.mxu0 0.0
    %8628 = vmatpush1.msra.mxu0 0.0
    %8629 = vmatprep.subr.mxu0 0.0
    %8630 = vmatpush1.msra.mxu0 0.0
    %8631 = vmatprep.subr.mxu0 0.0
    %8632 = vmatpush1.msra.mxu0 0.0
    %8633 = vmatprep.subr.mxu0 0.0
    %8634 = vmatpush1.msra.mxu0 0.0
    %8635 = vmatprep.subr.mxu0 0.0
    %8636 = vmatpush1.msra.mxu0 0.0
    %8637 = vmatprep.subr.mxu0 0.0
    %8638 = vmatpush1.msra.mxu0 0.0
    %8639 = vmatprep.subr.mxu0 0.0
    %8640 = vmatpush1.msra.mxu0 0.0
    %8641 = vmatprep.subr.mxu0 0.0
    %8642 = vmatpush1.msra.mxu0 0.0
    %8643 = vmatprep.subr.mxu0 0.0
    %8644 = vmatpush1.msra.mxu0 0.0
    %8645 = vmatprep.subr.mxu0 0.0
    %8646 = vmatpush1.msra.mxu0 0.0
    %8647 = vmatprep.subr.mxu0 0.0
    %8648 = vmatpush1.msra.mxu0 0.0
    %8649 = vmatprep.subr.mxu0 0.0
    %8650 = vmatpush1.msra.mxu0 0.0
    %8651 = vmatprep.subr.mxu0 0.0
    %8652 = vmatpush1.msra.mxu0 0.0
    %8653 = vmatprep.subr.mxu0 0.0
    %8654 = vmatpush1.msra.mxu0 0.0
    %8655 = vmatprep.mubr.f32.mxu0 0.0
    %8656 = vmatmul.mubr.f32.gmra.mrb[0].mxu0 %v8544
    %v8657 = vpop.f32.mrb[0].mxu0
    %v8658 = vadd.f32 0.0, %v8657
    %v8659 = vpop.f32.mrb[0].mxu0
    %8660 = vmatprep.mubr.f32.mxu0 0.0
    %8661 = vmatmul.mubr.f32.gmra.mrb[0].mxu0 %v8547
    %v8662 = vpop.f32.mrb[0].mxu0
    %v8663 = vadd.f32 0.0, %v8662
    %v8664 = vpop.f32.mrb[0].mxu0
    %8665 = vmatprep.mubr.f32.mxu0 0.0
    %8666 = vmatmul.mubr.f32.gmra.mrb[0].mxu0 %v8550
    %v8667 = vpop.f32.mrb[0].mxu0
    %v8668 = vadd.f32 0.0, %v8667
    %v8669 = vpop.f32.mrb[0].mxu0
    %8670 = vmatprep.mubr.f32.mxu0 0.0
    %8671 = vmatmul.mubr.f32.gmra.mrb[0].mxu0 %v8553
    %v8672 = vpop.f32.mrb[0].mxu0
    %v8673 = vadd.f32 0.0, %v8672
    %v8674 = vpop.f32.mrb[0].mxu0
    %8675 = vmatprep.mubr.f32.mxu0 0.0
    %8676 = vmatmul.mubr.f32.gmra.mrb[0].mxu0 %v8556
    %v8677 = vpop.f32.mrb[0].mxu0
    %v8678 = vadd.f32 0.0, %v8677
    %v8679 = vpop.f32.mrb[0].mxu0
    %8680 = vmatprep.mubr.f32.mxu0 0.0
    %8681 = vmatmul.mubr.f32.gmra.mrb[0].mxu0 %v8559
    %v8682 = vpop.f32.mrb[0].mxu0
    %v8683 = vadd.f32 0.0, %v8682
    %v8684 = vpop.f32.mrb[0].mxu0
    %8685 = vmatprep.mubr.f32.mxu0 0.0
    %8686 = vmatmul.mubr.f32.gmra.mrb[0].mxu0 %v8562
    %v8687 = vpop.f32.mrb[0].mxu0
    %v8688 = vadd.f32 0.0, %v8687
    %v8689 = vpop.f32.mrb[0].mxu0
    %8690 = vmatprep.mubr.f32.mxu0 0.0
    %8691 = vmatmul.mubr.f32.gmra.mrb[0].mxu0 %v8565
    %v8692 = vpop.f32.mrb[0].mxu0
    %v8693 = vadd.f32 0.0, %v8692
    %v8694 = vpop.f32.mrb[0].mxu0
    %8695 = vmatprep.mubr.f32.mxu0 0.0
    %8696 = vmatmul.mubr.f32.gmra.mrb[0].mxu0 %v8568
    %v8697 = vpop.f32.mrb[0].mxu0
    %v8698 = vadd.f32 0.0, %v8697
    %v8699 = vpop.f32.mrb[0].mxu0
    %8700 = vmatprep.mubr.f32.mxu0 0.0
    %8701 = vmatmul.mubr.f32.gmra.mrb[0].mxu0 %v8571
    %v8702 = vpop.f32.mrb[0].mxu0
    %v8703 = vadd.f32 0.0, %v8702
    %v8704 = vpop.f32.mrb[0].mxu0
    %8705 = vmatprep.mubr.f32.mxu0 0.0
    %8706 = vmatmul.mubr.f32.gmra.mrb[0].mxu0 %v8574
    %v8707 = vpop.f32.mrb[0].mxu0
    %v8708 = vadd.f32 0.0, %v8707
    %v8709 = vpop.f32.mrb[0].mxu0
    %8710 = vmatprep.mubr.f32.mxu0 0.0
    %8711 = vmatmul.mubr.f32.gmra.mrb[0].mxu0 %v8577
    %v8712 = vpop.f32.mrb[0].mxu0
    %v8713 = vadd.f32 0.0, %v8712
    %v8714 = vpop.f32.mrb[0].mxu0
    %8715 = vmatprep.mubr.f32.mxu0 0.0
    %8716 = vmatmul.mubr.f32.gmra.mrb[0].mxu0 %v8580
    %v8717 = vpop.f32.mrb[0].mxu0
    %v8718 = vadd.f32 0.0, %v8717
    %v8719 = vpop.f32.mrb[0].mxu0
    %8720 = vmatprep.mubr.f32.mxu0 0.0
    %8721 = vmatmul.mubr.f32.gmra.mrb[0].mxu0 %v8583
    %v8722 = vpop.f32.mrb[0].mxu0
    %v8723 = vadd.f32 0.0, %v8722
    %v8724 = vpop.f32.mrb[0].mxu0
    %8725 = vmatprep.mubr.f32.mxu0 0.0
    %8726 = vmatmul.mubr.f32.gmra.mrb[0].mxu0 %v8586
    %v8727 = vpop.f32.mrb[0].mxu0
    %v8728 = vadd.f32 0.0, %v8727
    %v8729 = vpop.f32.mrb[0].mxu0
    %8730 = vmatprep.mubr.f32.mxu0 0.0
    %8731 = vmatmul.mubr.f32.gmra.mrb[0].mxu0 %v8589
    %v8732 = vpop.f32.mrb[0].mxu0
    %v8733 = vadd.f32 0.0, %v8732
    %v8734 = vpop.f32.mrb[0].mxu0
    %8735 = vdwg.mxu0
    %v8737 = vsel %vm45, %v8501, 0
    %v8740 = vsel %vm45, %v8502, 0
    %v8743 = vsel %vm45, %v8503, 0
    %v8746 = vsel %vm45, %v8504, 0
    %v8749 = vsel %vm45, %v8505, 0
    %v8752 = vsel %vm45, %v8506, 0
    %v8755 = vsel %vm45, %v8507, 0
    %v8758 = vsel %vm45, %v8508, 0
    %v8761 = vsel %vm45, %v8509, 0
    %v8764 = vsel %vm45, %v8510, 0
    %v8767 = vsel %vm45, %v8511, 0
    %v8770 = vsel %vm45, %v8512, 0
    %v8773 = vsel %vm45, %v8513, 0
    %v8776 = vsel %vm45, %v8514, 0
    %v8779 = vsel %vm45, %v8515, 0
    %v8782 = vsel %vm45, %v8516, 0
    %8784 = vmatprep.subr.mxu0 0.0
    %8785 = vmatpush1.msra.mxu0 %v8518
    %8786 = vmatprep.subr.mxu0 0.0
    %8787 = vmatpush1.msra.mxu0 %v8519
    %8788 = vmatprep.subr.mxu0 0.0
    %8789 = vmatpush1.msra.mxu0 %v8520
    %8790 = vmatprep.subr.mxu0 0.0
    %8791 = vmatpush1.msra.mxu0 %v8521
    %8792 = vmatprep.subr.mxu0 0.0
    %8793 = vmatpush1.msra.mxu0 0.0
    %8794 = vmatprep.subr.mxu0 0.0
    %8795 = vmatpush1.msra.mxu0 0.0
    %8796 = vmatprep.subr.mxu0 0.0
    %8797 = vmatpush1.msra.mxu0 0.0
    %8798 = vmatprep.subr.mxu0 0.0
    %8799 = vmatpush1.msra.mxu0 0.0
    %8800 = vmatprep.subr.mxu0 0.0
    %8801 = vmatpush1.msra.mxu0 0.0
    %8802 = vmatprep.subr.mxu0 0.0
    %8803 = vmatpush1.msra.mxu0 0.0
    %8804 = vmatprep.subr.mxu0 0.0
    %8805 = vmatpush1.msra.mxu0 0.0
    %8806 = vmatprep.subr.mxu0 0.0
    %8807 = vmatpush1.msra.mxu0 0.0
    %8808 = vmatprep.subr.mxu0 0.0
    %8809 = vmatpush1.msra.mxu0 0.0
    %8810 = vmatprep.subr.mxu0 0.0
    %8811 = vmatpush1.msra.mxu0 0.0
    %8812 = vmatprep.subr.mxu0 0.0
    %8813 = vmatpush1.msra.mxu0 0.0
    %8814 = vmatprep.subr.mxu0 0.0
    %8815 = vmatpush1.msra.mxu0 0.0
    %8816 = vmatprep.subr.mxu0 0.0
    %8817 = vmatpush1.msra.mxu0 0.0
    %8818 = vmatprep.subr.mxu0 0.0
    %8819 = vmatpush1.msra.mxu0 0.0
    %8820 = vmatprep.subr.mxu0 0.0
    %8821 = vmatpush1.msra.mxu0 0.0
    %8822 = vmatprep.subr.mxu0 0.0
    %8823 = vmatpush1.msra.mxu0 0.0
    %8824 = vmatprep.subr.mxu0 0.0
    %8825 = vmatpush1.msra.mxu0 0.0
    %8826 = vmatprep.subr.mxu0 0.0
    %8827 = vmatpush1.msra.mxu0 0.0
    %8828 = vmatprep.subr.mxu0 0.0
    %8829 = vmatpush1.msra.mxu0 0.0
    %8830 = vmatprep.subr.mxu0 0.0
    %8831 = vmatpush1.msra.mxu0 0.0
    %8832 = vmatprep.subr.mxu0 0.0
    %8833 = vmatpush1.msra.mxu0 0.0
    %8834 = vmatprep.subr.mxu0 0.0
    %8835 = vmatpush1.msra.mxu0 0.0
    %8836 = vmatprep.subr.mxu0 0.0
    %8837 = vmatpush1.msra.mxu0 0.0
    %8838 = vmatprep.subr.mxu0 0.0
    %8839 = vmatpush1.msra.mxu0 0.0
    %8840 = vmatprep.subr.mxu0 0.0
    %8841 = vmatpush1.msra.mxu0 0.0
    %8842 = vmatprep.subr.mxu0 0.0
    %8843 = vmatpush1.msra.mxu0 0.0
    %8844 = vmatprep.subr.mxu0 0.0
    %8845 = vmatpush1.msra.mxu0 0.0
    %8846 = vmatprep.subr.mxu0 0.0
    %8847 = vmatpush1.msra.mxu0 0.0
    %8848 = vmatprep.mubr.f32.mxu0 0.0
    %8849 = vmatmul.mubr.f32.gmra.mrb[0].mxu0 %v8737
    %v8850 = vpop.f32.mrb[0].mxu0
    %v8851 = vadd.f32 %v8658, %v8850
    %v8852 = vpop.f32.mrb[0].mxu0
    %8853 = vmatprep.mubr.f32.mxu0 0.0
    %8854 = vmatmul.mubr.f32.gmra.mrb[0].mxu0 %v8740
    %v8855 = vpop.f32.mrb[0].mxu0
    %v8856 = vadd.f32 %v8663, %v8855
    %v8857 = vpop.f32.mrb[0].mxu0
    %8858 = vmatprep.mubr.f32.mxu0 0.0
    %8859 = vmatmul.mubr.f32.gmra.mrb[0].mxu0 %v8743
    %v8860 = vpop.f32.mrb[0].mxu0
    %v8861 = vadd.f32 %v8668, %v8860
    %v8862 = vpop.f32.mrb[0].mxu0
    %8863 = vmatprep.mubr.f32.mxu0 0.0
    %8864 = vmatmul.mubr.f32.gmra.mrb[0].mxu0 %v8746
    %v8865 = vpop.f32.mrb[0].mxu0
    %v8866 = vadd.f32 %v8673, %v8865
    %v8867 = vpop.f32.mrb[0].mxu0
    %8868 = vmatprep.mubr.f32.mxu0 0.0
    %8869 = vmatmul.mubr.f32.gmra.mrb[0].mxu0 %v8749
    %v8870 = vpop.f32.mrb[0].mxu0
    %v8871 = vadd.f32 %v8678, %v8870
    %v8872 = vpop.f32.mrb[0].mxu0
    %8873 = vmatprep.mubr.f32.mxu0 0.0
    %8874 = vmatmul.mubr.f32.gmra.mrb[0].mxu0 %v8752
    %v8875 = vpop.f32.mrb[0].mxu0
    %v8876 = vadd.f32 %v8683, %v8875
    %v8877 = vpop.f32.mrb[0].mxu0
    %8878 = vmatprep.mubr.f32.mxu0 0.0
    %8879 = vmatmul.mubr.f32.gmra.mrb[0].mxu0 %v8755
    %v8880 = vpop.f32.mrb[0].mxu0
    %v8881 = vadd.f32 %v8688, %v8880
    %v8882 = vpop.f32.mrb[0].mxu0
    %8883 = vmatprep.mubr.f32.mxu0 0.0
    %8884 = vmatmul.mubr.f32.gmra.mrb[0].mxu0 %v8758
    %v8885 = vpop.f32.mrb[0].mxu0
    %v8886 = vadd.f32 %v8693, %v8885
    %v8887 = vpop.f32.mrb[0].mxu0
    %8888 = vmatprep.mubr.f32.mxu0 0.0
    %8889 = vmatmul.mubr.f32.gmra.mrb[0].mxu0 %v8761
    %v8890 = vpop.f32.mrb[0].mxu0
    %v8891 = vadd.f32 %v8698, %v8890
    %v8892 = vpop.f32.mrb[0].mxu0
    %8893 = vmatprep.mubr.f32.mxu0 0.0
    %8894 = vmatmul.mubr.f32.gmra.mrb[0].mxu0 %v8764
    %v8895 = vpop.f32.mrb[0].mxu0
    %v8896 = vadd.f32 %v8703, %v8895
    %v8897 = vpop.f32.mrb[0].mxu0
    %8898 = vmatprep.mubr.f32.mxu0 0.0
    %8899 = vmatmul.mubr.f32.gmra.mrb[0].mxu0 %v8767
    %v8900 = vpop.f32.mrb[0].mxu0
    %v8901 = vadd.f32 %v8708, %v8900
    %v8902 = vpop.f32.mrb[0].mxu0
    %8903 = vmatprep.mubr.f32.mxu0 0.0
    %8904 = vmatmul.mubr.f32.gmra.mrb[0].mxu0 %v8770
    %v8905 = vpop.f32.mrb[0].mxu0
    %v8906 = vadd.f32 %v8713, %v8905
    %v8907 = vpop.f32.mrb[0].mxu0
    %8908 = vmatprep.mubr.f32.mxu0 0.0
    %8909 = vmatmul.mubr.f32.gmra.mrb[0].mxu0 %v8773
    %v8910 = vpop.f32.mrb[0].mxu0
    %v8911 = vadd.f32 %v8718, %v8910
    %v8912 = vpop.f32.mrb[0].mxu0
    %8913 = vmatprep.mubr.f32.mxu0 0.0
    %8914 = vmatmul.mubr.f32.gmra.mrb[0].mxu0 %v8776
    %v8915 = vpop.f32.mrb[0].mxu0
    %v8916 = vadd.f32 %v8723, %v8915
    %v8917 = vpop.f32.mrb[0].mxu0
    %8918 = vmatprep.mubr.f32.mxu0 0.0
    %8919 = vmatmul.mubr.f32.gmra.mrb[0].mxu0 %v8779
    %v8920 = vpop.f32.mrb[0].mxu0
    %v8921 = vadd.f32 %v8728, %v8920
    %v8922 = vpop.f32.mrb[0].mxu0
    %8923 = vmatprep.mubr.f32.mxu0 0.0
    %8924 = vmatmul.mubr.f32.gmra.mrb[0].mxu0 %v8782
    %v8925 = vpop.f32.mrb[0].mxu0
    %v8926 = vadd.f32 %v8733, %v8925
    %v8927 = vpop.f32.mrb[0].mxu0
    %8928 = vdwg.mxu0
    %v8929 = vld [vmem:[#allocation2 + $0x8] sm:$0xff]
    %v8930 = vld [vmem:[#allocation2 + $0x10] sm:$0xff]
    %v8931 = vld [vmem:[#allocation2 + $0x18] sm:$0xff]
    %v8932 = vld [vmem:[#allocation2 + $0x20] sm:$0xff]
    %v8933 = vld [vmem:[#allocation2 + $0x28] sm:$0xff]
    %v8934 = vld [vmem:[#allocation2 + $0x30] sm:$0xff]
    %v8935 = vld [vmem:[#allocation2 + $0x38] sm:$0xff]
    %v8936 = vld [vmem:[#allocation2 + $0x40] sm:$0xff]
    %v8937 = vld [vmem:[#allocation2 + $0x58] sm:$0xff]
    %v8938 = vld [vmem:[#allocation2 + $0x60] sm:$0xff]
    %v8939 = vld [vmem:[#allocation2 + $0x68] sm:$0xff]
    %v8940 = vld [vmem:[#allocation2 + $0x70] sm:$0xff]
    %v8941 = vld [vmem:[#allocation2 + $0x78] sm:$0xff]
    %v8942 = vld [vmem:[#allocation2 + $0x80] sm:$0xff]
    %v8943 = vld [vmem:[#allocation2 + $0x88] sm:$0xff]
    %v8944 = vld [vmem:[#allocation2 + $0x90] sm:$0xff]
    %s8945 = scalar_lea.vmem [#allocation5], 544
    %v8946 = vld [vmem:[%s8945] sm:$0xff]
    %v8947 = vld [vmem:[%s8945 + $0x8] sm:$0xff]
    %v8948 = vld [vmem:[%s8945 + $0x10] sm:$0xff]
    %v8949 = vld [vmem:[%s8945 + $0x18] sm:$0xff]
    %v8951 = vsel %vm45, %v8929, 0
    %v8954 = vsel %vm45, %v8930, 0
    %v8957 = vsel %vm45, %v8931, 0
    %v8960 = vsel %vm45, %v8932, 0
    %v8963 = vsel %vm45, %v8933, 0
    %v8966 = vsel %vm45, %v8934, 0
    %v8969 = vsel %vm45, %v8935, 0
    %v8972 = vsel %vm45, %v8936, 0
    %v8975 = vsel %vm45, %v8937, 0
    %v8978 = vsel %vm45, %v8938, 0
    %v8981 = vsel %vm45, %v8939, 0
    %v8984 = vsel %vm45, %v8940, 0
    %v8987 = vsel %vm45, %v8941, 0
    %v8990 = vsel %vm45, %v8942, 0
    %v8993 = vsel %vm45, %v8943, 0
    %v8996 = vsel %vm45, %v8944, 0
    %8998 = vmatprep.subr.mxu0 0.0
    %8999 = vmatpush1.msra.mxu0 %v8946
    %9000 = vmatprep.subr.mxu0 0.0
    %9001 = vmatpush1.msra.mxu0 %v8947
    %9002 = vmatprep.subr.mxu0 0.0
    %9003 = vmatpush1.msra.mxu0 %v8948
    %9004 = vmatprep.subr.mxu0 0.0
    %9005 = vmatpush1.msra.mxu0 %v8949
    %9006 = vmatprep.subr.mxu0 0.0
    %9007 = vmatpush1.msra.mxu0 0.0
    %9008 = vmatprep.subr.mxu0 0.0
    %9009 = vmatpush1.msra.mxu0 0.0
    %9010 = vmatprep.subr.mxu0 0.0
    %9011 = vmatpush1.msra.mxu0 0.0
    %9012 = vmatprep.subr.mxu0 0.0
    %9013 = vmatpush1.msra.mxu0 0.0
    %9014 = vmatprep.subr.mxu0 0.0
    %9015 = vmatpush1.msra.mxu0 0.0
    %9016 = vmatprep.subr.mxu0 0.0
    %9017 = vmatpush1.msra.mxu0 0.0
    %9018 = vmatprep.subr.mxu0 0.0
    %9019 = vmatpush1.msra.mxu0 0.0
    %9020 = vmatprep.subr.mxu0 0.0
    %9021 = vmatpush1.msra.mxu0 0.0
    %9022 = vmatprep.subr.mxu0 0.0
    %9023 = vmatpush1.msra.mxu0 0.0
    %9024 = vmatprep.subr.mxu0 0.0
    %9025 = vmatpush1.msra.mxu0 0.0
    %9026 = vmatprep.subr.mxu0 0.0
    %9027 = vmatpush1.msra.mxu0 0.0
    %9028 = vmatprep.subr.mxu0 0.0
    %9029 = vmatpush1.msra.mxu0 0.0
    %9030 = vmatprep.subr.mxu0 0.0
    %9031 = vmatpush1.msra.mxu0 0.0
    %9032 = vmatprep.subr.mxu0 0.0
    %9033 = vmatpush1.msra.mxu0 0.0
    %9034 = vmatprep.subr.mxu0 0.0
    %9035 = vmatpush1.msra.mxu0 0.0
    %9036 = vmatprep.subr.mxu0 0.0
    %9037 = vmatpush1.msra.mxu0 0.0
    %9038 = vmatprep.subr.mxu0 0.0
    %9039 = vmatpush1.msra.mxu0 0.0
    %9040 = vmatprep.subr.mxu0 0.0
    %9041 = vmatpush1.msra.mxu0 0.0
    %9042 = vmatprep.subr.mxu0 0.0
    %9043 = vmatpush1.msra.mxu0 0.0
    %9044 = vmatprep.subr.mxu0 0.0
    %9045 = vmatpush1.msra.mxu0 0.0
    %9046 = vmatprep.subr.mxu0 0.0
    %9047 = vmatpush1.msra.mxu0 0.0
    %9048 = vmatprep.subr.mxu0 0.0
    %9049 = vmatpush1.msra.mxu0 0.0
    %9050 = vmatprep.subr.mxu0 0.0
    %9051 = vmatpush1.msra.mxu0 0.0
    %9052 = vmatprep.subr.mxu0 0.0
    %9053 = vmatpush1.msra.mxu0 0.0
    %9054 = vmatprep.subr.mxu0 0.0
    %9055 = vmatpush1.msra.mxu0 0.0
    %9056 = vmatprep.subr.mxu0 0.0
    %9057 = vmatpush1.msra.mxu0 0.0
    %9058 = vmatprep.subr.mxu0 0.0
    %9059 = vmatpush1.msra.mxu0 0.0
    %9060 = vmatprep.subr.mxu0 0.0
    %9061 = vmatpush1.msra.mxu0 0.0
    %9062 = vmatprep.mubr.f32.mxu0 0.0
    %9063 = vmatmul.mubr.f32.gmra.mrb[0].mxu0 %v8951
    %v9064 = vpop.f32.mrb[0].mxu0
    %v9065 = vadd.f32 0.0, %v9064
    %v9066 = vpop.f32.mrb[0].mxu0
    %9067 = vmatprep.mubr.f32.mxu0 0.0
    %9068 = vmatmul.mubr.f32.gmra.mrb[0].mxu0 %v8954
    %v9069 = vpop.f32.mrb[0].mxu0
    %v9070 = vadd.f32 0.0, %v9069
    %v9071 = vpop.f32.mrb[0].mxu0
    %9072 = vmatprep.mubr.f32.mxu0 0.0
    %9073 = vmatmul.mubr.f32.gmra.mrb[0].mxu0 %v8957
    %v9074 = vpop.f32.mrb[0].mxu0
    %v9075 = vadd.f32 0.0, %v9074
    %v9076 = vpop.f32.mrb[0].mxu0
    %9077 = vmatprep.mubr.f32.mxu0 0.0
    %9078 = vmatmul.mubr.f32.gmra.mrb[0].mxu0 %v8960
    %v9079 = vpop.f32.mrb[0].mxu0
    %v9080 = vadd.f32 0.0, %v9079
    %v9081 = vpop.f32.mrb[0].mxu0
    %9082 = vmatprep.mubr.f32.mxu0 0.0
    %9083 = vmatmul.mubr.f32.gmra.mrb[0].mxu0 %v8963
    %v9084 = vpop.f32.mrb[0].mxu0
    %v9085 = vadd.f32 0.0, %v9084
    %v9086 = vpop.f32.mrb[0].mxu0
    %9087 = vmatprep.mubr.f32.mxu0 0.0
    %9088 = vmatmul.mubr.f32.gmra.mrb[0].mxu0 %v8966
    %v9089 = vpop.f32.mrb[0].mxu0
    %v9090 = vadd.f32 0.0, %v9089
    %v9091 = vpop.f32.mrb[0].mxu0
    %9092 = vmatprep.mubr.f32.mxu0 0.0
    %9093 = vmatmul.mubr.f32.gmra.mrb[0].mxu0 %v8969
    %v9094 = vpop.f32.mrb[0].mxu0
    %v9095 = vadd.f32 0.0, %v9094
    %v9096 = vpop.f32.mrb[0].mxu0
    %9097 = vmatprep.mubr.f32.mxu0 0.0
    %9098 = vmatmul.mubr.f32.gmra.mrb[0].mxu0 %v8972
    %v9099 = vpop.f32.mrb[0].mxu0
    %v9100 = vadd.f32 0.0, %v9099
    %v9101 = vpop.f32.mrb[0].mxu0
    %9102 = vmatprep.mubr.f32.mxu0 0.0
    %9103 = vmatmul.mubr.f32.gmra.mrb[0].mxu0 %v8975
    %v9104 = vpop.f32.mrb[0].mxu0
    %v9105 = vadd.f32 0.0, %v9104
    %v9106 = vpop.f32.mrb[0].mxu0
    %9107 = vmatprep.mubr.f32.mxu0 0.0
    %9108 = vmatmul.mubr.f32.gmra.mrb[0].mxu0 %v8978
    %v9109 = vpop.f32.mrb[0].mxu0
    %v9110 = vadd.f32 0.0, %v9109
    %v9111 = vpop.f32.mrb[0].mxu0
    %9112 = vmatprep.mubr.f32.mxu0 0.0
    %9113 = vmatmul.mubr.f32.gmra.mrb[0].mxu0 %v8981
    %v9114 = vpop.f32.mrb[0].mxu0
    %v9115 = vadd.f32 0.0, %v9114
    %v9116 = vpop.f32.mrb[0].mxu0
    %9117 = vmatprep.mubr.f32.mxu0 0.0
    %9118 = vmatmul.mubr.f32.gmra.mrb[0].mxu0 %v8984
    %v9119 = vpop.f32.mrb[0].mxu0
    %v9120 = vadd.f32 0.0, %v9119
    %v9121 = vpop.f32.mrb[0].mxu0
    %9122 = vmatprep.mubr.f32.mxu0 0.0
    %9123 = vmatmul.mubr.f32.gmra.mrb[0].mxu0 %v8987
    %v9124 = vpop.f32.mrb[0].mxu0
    %v9125 = vadd.f32 0.0, %v9124
    %v9126 = vpop.f32.mrb[0].mxu0
    %9127 = vmatprep.mubr.f32.mxu0 0.0
    %9128 = vmatmul.mubr.f32.gmra.mrb[0].mxu0 %v8990
    %v9129 = vpop.f32.mrb[0].mxu0
    %v9130 = vadd.f32 0.0, %v9129
    %v9131 = vpop.f32.mrb[0].mxu0
    %9132 = vmatprep.mubr.f32.mxu0 0.0
    %9133 = vmatmul.mubr.f32.gmra.mrb[0].mxu0 %v8993
    %v9134 = vpop.f32.mrb[0].mxu0
    %v9135 = vadd.f32 0.0, %v9134
    %v9136 = vpop.f32.mrb[0].mxu0
    %9137 = vmatprep.mubr.f32.mxu0 0.0
    %9138 = vmatmul.mubr.f32.gmra.mrb[0].mxu0 %v8996
    %v9139 = vpop.f32.mrb[0].mxu0
    %v9140 = vadd.f32 0.0, %v9139
    %v9141 = vpop.f32.mrb[0].mxu0
    %9142 = vdwg.mxu0
    %v9143 = vadd.f32 %v8851, %v9065
    %v9144 = vadd.f32 %v8856, %v9070
    %v9145 = vadd.f32 %v8861, %v9075
    %v9146 = vadd.f32 %v8866, %v9080
    %v9147 = vadd.f32 %v8871, %v9085
    %v9148 = vadd.f32 %v8876, %v9090
    %v9149 = vadd.f32 %v8881, %v9095
    %v9150 = vadd.f32 %v8886, %v9100
    %v9151 = vadd.f32 %v8891, %v9105
    %v9152 = vadd.f32 %v8896, %v9110
    %v9153 = vadd.f32 %v8901, %v9115
    %v9154 = vadd.f32 %v8906, %v9120
    %v9155 = vadd.f32 %v8911, %v9125
    %v9156 = vadd.f32 %v8916, %v9130
    %v9157 = vadd.f32 %v8921, %v9135
    %v9158 = vadd.f32 %v8926, %v9140
    %v9159 = vld [vmem:[#allocation2 + $0xa] sm:$0xff]
    %v9160 = vld [vmem:[#allocation2 + $0x12] sm:$0xff]
    %v9161 = vld [vmem:[#allocation2 + $0x1a] sm:$0xff]
    %v9162 = vld [vmem:[#allocation2 + $0x22] sm:$0xff]
    %v9163 = vld [vmem:[#allocation2 + $0x2a] sm:$0xff]
    %v9164 = vld [vmem:[#allocation2 + $0x32] sm:$0xff]
    %v9165 = vld [vmem:[#allocation2 + $0x3a] sm:$0xff]
    %v9166 = vld [vmem:[#allocation2 + $0x42] sm:$0xff]
    %v9167 = vld [vmem:[#allocation2 + $0x5a] sm:$0xff]
    %v9168 = vld [vmem:[#allocation2 + $0x62] sm:$0xff]
    %v9169 = vld [vmem:[#allocation2 + $0x6a] sm:$0xff]
    %v9170 = vld [vmem:[#allocation2 + $0x72] sm:$0xff]
    %v9171 = vld [vmem:[#allocation2 + $0x7a] sm:$0xff]
    %v9172 = vld [vmem:[#allocation2 + $0x82] sm:$0xff]
    %v9173 = vld [vmem:[#allocation2 + $0x8a] sm:$0xff]
    %v9174 = vld [vmem:[#allocation2 + $0x92] sm:$0xff]
    %s9175 = scalar_lea.vmem [#allocation5], 576
    %v9176 = vld [vmem:[%s9175] sm:$0xff]
    %v9177 = vld [vmem:[%s9175 + $0x8] sm:$0xff]
    %v9178 = vld [vmem:[%s9175 + $0x10] sm:$0xff]
    %v9179 = vld [vmem:[%s9175 + $0x18] sm:$0xff]
    %v9181 = vsel %vm45, %v9159, 0
    %v9184 = vsel %vm45, %v9160, 0
    %v9187 = vsel %vm45, %v9161, 0
    %v9190 = vsel %vm45, %v9162, 0
    %v9193 = vsel %vm45, %v9163, 0
    %v9196 = vsel %vm45, %v9164, 0
    %v9199 = vsel %vm45, %v9165, 0
    %v9202 = vsel %vm45, %v9166, 0
    %v9205 = vsel %vm45, %v9167, 0
    %v9208 = vsel %vm45, %v9168, 0
    %v9211 = vsel %vm45, %v9169, 0
    %v9214 = vsel %vm45, %v9170, 0
    %v9217 = vsel %vm45, %v9171, 0
    %v9220 = vsel %vm45, %v9172, 0
    %v9223 = vsel %vm45, %v9173, 0
    %v9226 = vsel %vm45, %v9174, 0
    %9228 = vmatprep.subr.mxu0 0.0
    %9229 = vmatpush1.msra.mxu0 %v9176
    %9230 = vmatprep.subr.mxu0 0.0
    %9231 = vmatpush1.msra.mxu0 %v9177
    %9232 = vmatprep.subr.mxu0 0.0
    %9233 = vmatpush1.msra.mxu0 %v9178
    %9234 = vmatprep.subr.mxu0 0.0
    %9235 = vmatpush1.msra.mxu0 %v9179
    %9236 = vmatprep.subr.mxu0 0.0
    %9237 = vmatpush1.msra.mxu0 0.0
    %9238 = vmatprep.subr.mxu0 0.0
    %9239 = vmatpush1.msra.mxu0 0.0
    %9240 = vmatprep.subr.mxu0 0.0
    %9241 = vmatpush1.msra.mxu0 0.0
    %9242 = vmatprep.subr.mxu0 0.0
    %9243 = vmatpush1.msra.mxu0 0.0
    %9244 = vmatprep.subr.mxu0 0.0
    %9245 = vmatpush1.msra.mxu0 0.0
    %9246 = vmatprep.subr.mxu0 0.0
    %9247 = vmatpush1.msra.mxu0 0.0
    %9248 = vmatprep.subr.mxu0 0.0
    %9249 = vmatpush1.msra.mxu0 0.0
    %9250 = vmatprep.subr.mxu0 0.0
    %9251 = vmatpush1.msra.mxu0 0.0
    %9252 = vmatprep.subr.mxu0 0.0
    %9253 = vmatpush1.msra.mxu0 0.0
    %9254 = vmatprep.subr.mxu0 0.0
    %9255 = vmatpush1.msra.mxu0 0.0
    %9256 = vmatprep.subr.mxu0 0.0
    %9257 = vmatpush1.msra.mxu0 0.0
    %9258 = vmatprep.subr.mxu0 0.0
    %9259 = vmatpush1.msra.mxu0 0.0
    %9260 = vmatprep.subr.mxu0 0.0
    %9261 = vmatpush1.msra.mxu0 0.0
    %9262 = vmatprep.subr.mxu0 0.0
    %9263 = vmatpush1.msra.mxu0 0.0
    %9264 = vmatprep.subr.mxu0 0.0
    %9265 = vmatpush1.msra.mxu0 0.0
    %9266 = vmatprep.subr.mxu0 0.0
    %9267 = vmatpush1.msra.mxu0 0.0
    %9268 = vmatprep.subr.mxu0 0.0
    %9269 = vmatpush1.msra.mxu0 0.0
    %9270 = vmatprep.subr.mxu0 0.0
    %9271 = vmatpush1.msra.mxu0 0.0
    %9272 = vmatprep.subr.mxu0 0.0
    %9273 = vmatpush1.msra.mxu0 0.0
    %9274 = vmatprep.subr.mxu0 0.0
    %9275 = vmatpush1.msra.mxu0 0.0
    %9276 = vmatprep.subr.mxu0 0.0
    %9277 = vmatpush1.msra.mxu0 0.0
    %9278 = vmatprep.subr.mxu0 0.0
    %9279 = vmatpush1.msra.mxu0 0.0
    %9280 = vmatprep.subr.mxu0 0.0
    %9281 = vmatpush1.msra.mxu0 0.0
    %9282 = vmatprep.subr.mxu0 0.0
    %9283 = vmatpush1.msra.mxu0 0.0
    %9284 = vmatprep.subr.mxu0 0.0
    %9285 = vmatpush1.msra.mxu0 0.0
    %9286 = vmatprep.subr.mxu0 0.0
    %9287 = vmatpush1.msra.mxu0 0.0
    %9288 = vmatprep.subr.mxu0 0.0
    %9289 = vmatpush1.msra.mxu0 0.0
    %9290 = vmatprep.subr.mxu0 0.0
    %9291 = vmatpush1.msra.mxu0 0.0
    %9292 = vmatprep.mubr.f32.mxu0 0.0
    %9293 = vmatmul.mubr.f32.gmra.mrb[0].mxu0 %v9181
    %v9294 = vpop.f32.mrb[0].mxu0
    %v9295 = vadd.f32 0.0, %v9294
    %v9296 = vpop.f32.mrb[0].mxu0
    %9297 = vmatprep.mubr.f32.mxu0 0.0
    %9298 = vmatmul.mubr.f32.gmra.mrb[0].mxu0 %v9184
    %v9299 = vpop.f32.mrb[0].mxu0
    %v9300 = vadd.f32 0.0, %v9299
    %v9301 = vpop.f32.mrb[0].mxu0
    %9302 = vmatprep.mubr.f32.mxu0 0.0
    %9303 = vmatmul.mubr.f32.gmra.mrb[0].mxu0 %v9187
    %v9304 = vpop.f32.mrb[0].mxu0
    %v9305 = vadd.f32 0.0, %v9304
    %v9306 = vpop.f32.mrb[0].mxu0
    %9307 = vmatprep.mubr.f32.mxu0 0.0
    %9308 = vmatmul.mubr.f32.gmra.mrb[0].mxu0 %v9190
    %v9309 = vpop.f32.mrb[0].mxu0
    %v9310 = vadd.f32 0.0, %v9309
    %v9311 = vpop.f32.mrb[0].mxu0
    %9312 = vmatprep.mubr.f32.mxu0 0.0
    %9313 = vmatmul.mubr.f32.gmra.mrb[0].mxu0 %v9193
    %v9314 = vpop.f32.mrb[0].mxu0
    %v9315 = vadd.f32 0.0, %v9314
    %v9316 = vpop.f32.mrb[0].mxu0
    %9317 = vmatprep.mubr.f32.mxu0 0.0
    %9318 = vmatmul.mubr.f32.gmra.mrb[0].mxu0 %v9196
    %v9319 = vpop.f32.mrb[0].mxu0
    %v9320 = vadd.f32 0.0, %v9319
    %v9321 = vpop.f32.mrb[0].mxu0
    %9322 = vmatprep.mubr.f32.mxu0 0.0
    %9323 = vmatmul.mubr.f32.gmra.mrb[0].mxu0 %v9199
    %v9324 = vpop.f32.mrb[0].mxu0
    %v9325 = vadd.f32 0.0, %v9324
    %v9326 = vpop.f32.mrb[0].mxu0
    %9327 = vmatprep.mubr.f32.mxu0 0.0
    %9328 = vmatmul.mubr.f32.gmra.mrb[0].mxu0 %v9202
    %v9329 = vpop.f32.mrb[0].mxu0
    %v9330 = vadd.f32 0.0, %v9329
    %v9331 = vpop.f32.mrb[0].mxu0
    %9332 = vmatprep.mubr.f32.mxu0 0.0
    %9333 = vmatmul.mubr.f32.gmra.mrb[0].mxu0 %v9205
    %v9334 = vpop.f32.mrb[0].mxu0
    %v9335 = vadd.f32 0.0, %v9334
    %v9336 = vpop.f32.mrb[0].mxu0
    %9337 = vmatprep.mubr.f32.mxu0 0.0
    %9338 = vmatmul.mubr.f32.gmra.mrb[0].mxu0 %v9208
    %v9339 = vpop.f32.mrb[0].mxu0
    %v9340 = vadd.f32 0.0, %v9339
    %v9341 = vpop.f32.mrb[0].mxu0
    %9342 = vmatprep.mubr.f32.mxu0 0.0
    %9343 = vmatmul.mubr.f32.gmra.mrb[0].mxu0 %v9211
    %v9344 = vpop.f32.mrb[0].mxu0
    %v9345 = vadd.f32 0.0, %v9344
    %v9346 = vpop.f32.mrb[0].mxu0
    %9347 = vmatprep.mubr.f32.mxu0 0.0
    %9348 = vmatmul.mubr.f32.gmra.mrb[0].mxu0 %v9214
    %v9349 = vpop.f32.mrb[0].mxu0
    %v9350 = vadd.f32 0.0, %v9349
    %v9351 = vpop.f32.mrb[0].mxu0
    %9352 = vmatprep.mubr.f32.mxu0 0.0
    %9353 = vmatmul.mubr.f32.gmra.mrb[0].mxu0 %v9217
    %v9354 = vpop.f32.mrb[0].mxu0
    %v9355 = vadd.f32 0.0, %v9354
    %v9356 = vpop.f32.mrb[0].mxu0
    %9357 = vmatprep.mubr.f32.mxu0 0.0
    %9358 = vmatmul.mubr.f32.gmra.mrb[0].mxu0 %v9220
    %v9359 = vpop.f32.mrb[0].mxu0
    %v9360 = vadd.f32 0.0, %v9359
    %v9361 = vpop.f32.mrb[0].mxu0
    %9362 = vmatprep.mubr.f32.mxu0 0.0
    %9363 = vmatmul.mubr.f32.gmra.mrb[0].mxu0 %v9223
    %v9364 = vpop.f32.mrb[0].mxu0
    %v9365 = vadd.f32 0.0, %v9364
    %v9366 = vpop.f32.mrb[0].mxu0
    %9367 = vmatprep.mubr.f32.mxu0 0.0
    %9368 = vmatmul.mubr.f32.gmra.mrb[0].mxu0 %v9226
    %v9369 = vpop.f32.mrb[0].mxu0
    %v9370 = vadd.f32 0.0, %v9369
    %v9371 = vpop.f32.mrb[0].mxu0
    %9372 = vdwg.mxu0
    %v9373 = vadd.f32 %v9143, %v9295
    %v9374 = vadd.f32 %v9144, %v9300
    %v9375 = vadd.f32 %v9145, %v9305
    %v9376 = vadd.f32 %v9146, %v9310
    %v9377 = vadd.f32 %v9147, %v9315
    %v9378 = vadd.f32 %v9148, %v9320
    %v9379 = vadd.f32 %v9149, %v9325
    %v9380 = vadd.f32 %v9150, %v9330
    %v9381 = vadd.f32 %v9151, %v9335
    %v9382 = vadd.f32 %v9152, %v9340
    %v9383 = vadd.f32 %v9153, %v9345
    %v9384 = vadd.f32 %v9154, %v9350
    %v9385 = vadd.f32 %v9155, %v9355
    %v9386 = vadd.f32 %v9156, %v9360
    %v9387 = vadd.f32 %v9157, %v9365
    %v9388 = vadd.f32 %v9158, %v9370
    %v9389 = vld [vmem:[#allocation2 + $0xc] sm:$0xff]
    %v9390 = vld [vmem:[#allocation2 + $0x14] sm:$0xff]
    %v9391 = vld [vmem:[#allocation2 + $0x1c] sm:$0xff]
    %v9392 = vld [vmem:[#allocation2 + $0x24] sm:$0xff]
    %v9393 = vld [vmem:[#allocation2 + $0x2c] sm:$0xff]
    %v9394 = vld [vmem:[#allocation2 + $0x34] sm:$0xff]
    %v9395 = vld [vmem:[#allocation2 + $0x3c] sm:$0xff]
    %v9396 = vld [vmem:[#allocation2 + $0x44] sm:$0xff]
    %v9397 = vld [vmem:[#allocation2 + $0x5c] sm:$0xff]
    %v9398 = vld [vmem:[#allocation2 + $0x64] sm:$0xff]
    %v9399 = vld [vmem:[#allocation2 + $0x6c] sm:$0xff]
    %v9400 = vld [vmem:[#allocation2 + $0x74] sm:$0xff]
    %v9401 = vld [vmem:[#allocation2 + $0x7c] sm:$0xff]
    %v9402 = vld [vmem:[#allocation2 + $0x84] sm:$0xff]
    %v9403 = vld [vmem:[#allocation2 + $0x8c] sm:$0xff]
    %v9404 = vld [vmem:[#allocation2 + $0x94] sm:$0xff]
    %s9405 = scalar_lea.vmem [#allocation5], 608
    %v9406 = vld [vmem:[%s9405] sm:$0xff]
    %v9407 = vld [vmem:[%s9405 + $0x8] sm:$0xff]
    %v9408 = vld [vmem:[%s9405 + $0x10] sm:$0xff]
    %v9409 = vld [vmem:[%s9405 + $0x18] sm:$0xff]
    %v9411 = vsel %vm45, %v9389, 0
    %v9414 = vsel %vm45, %v9390, 0
    %v9417 = vsel %vm45, %v9391, 0
    %v9420 = vsel %vm45, %v9392, 0
    %v9423 = vsel %vm45, %v9393, 0
    %v9426 = vsel %vm45, %v9394, 0
    %v9429 = vsel %vm45, %v9395, 0
    %v9432 = vsel %vm45, %v9396, 0
    %v9435 = vsel %vm45, %v9397, 0
    %v9438 = vsel %vm45, %v9398, 0
    %v9441 = vsel %vm45, %v9399, 0
    %v9444 = vsel %vm45, %v9400, 0
    %v9447 = vsel %vm45, %v9401, 0
    %v9450 = vsel %vm45, %v9402, 0
    %v9453 = vsel %vm45, %v9403, 0
    %v9456 = vsel %vm45, %v9404, 0
    %9458 = vmatprep.subr.mxu0 0.0
    %9459 = vmatpush1.msra.mxu0 %v9406
    %9460 = vmatprep.subr.mxu0 0.0
    %9461 = vmatpush1.msra.mxu0 %v9407
    %9462 = vmatprep.subr.mxu0 0.0
    %9463 = vmatpush1.msra.mxu0 %v9408
    %9464 = vmatprep.subr.mxu0 0.0
    %9465 = vmatpush1.msra.mxu0 %v9409
    %9466 = vmatprep.subr.mxu0 0.0
    %9467 = vmatpush1.msra.mxu0 0.0
    %9468 = vmatprep.subr.mxu0 0.0
    %9469 = vmatpush1.msra.mxu0 0.0
    %9470 = vmatprep.subr.mxu0 0.0
    %9471 = vmatpush1.msra.mxu0 0.0
    %9472 = vmatprep.subr.mxu0 0.0
    %9473 = vmatpush1.msra.mxu0 0.0
    %9474 = vmatprep.subr.mxu0 0.0
    %9475 = vmatpush1.msra.mxu0 0.0
    %9476 = vmatprep.subr.mxu0 0.0
    %9477 = vmatpush1.msra.mxu0 0.0
    %9478 = vmatprep.subr.mxu0 0.0
    %9479 = vmatpush1.msra.mxu0 0.0
    %9480 = vmatprep.subr.mxu0 0.0
    %9481 = vmatpush1.msra.mxu0 0.0
    %9482 = vmatprep.subr.mxu0 0.0
    %9483 = vmatpush1.msra.mxu0 0.0
    %9484 = vmatprep.subr.mxu0 0.0
    %9485 = vmatpush1.msra.mxu0 0.0
    %9486 = vmatprep.subr.mxu0 0.0
    %9487 = vmatpush1.msra.mxu0 0.0
    %9488 = vmatprep.subr.mxu0 0.0
    %9489 = vmatpush1.msra.mxu0 0.0
    %9490 = vmatprep.subr.mxu0 0.0
    %9491 = vmatpush1.msra.mxu0 0.0
    %9492 = vmatprep.subr.mxu0 0.0
    %9493 = vmatpush1.msra.mxu0 0.0
    %9494 = vmatprep.subr.mxu0 0.0
    %9495 = vmatpush1.msra.mxu0 0.0
    %9496 = vmatprep.subr.mxu0 0.0
    %9497 = vmatpush1.msra.mxu0 0.0
    %9498 = vmatprep.subr.mxu0 0.0
    %9499 = vmatpush1.msra.mxu0 0.0
    %9500 = vmatprep.subr.mxu0 0.0
    %9501 = vmatpush1.msra.mxu0 0.0
    %9502 = vmatprep.subr.mxu0 0.0
    %9503 = vmatpush1.msra.mxu0 0.0
    %9504 = vmatprep.subr.mxu0 0.0
    %9505 = vmatpush1.msra.mxu0 0.0
    %9506 = vmatprep.subr.mxu0 0.0
    %9507 = vmatpush1.msra.mxu0 0.0
    %9508 = vmatprep.subr.mxu0 0.0
    %9509 = vmatpush1.msra.mxu0 0.0
    %9510 = vmatprep.subr.mxu0 0.0
    %9511 = vmatpush1.msra.mxu0 0.0
    %9512 = vmatprep.subr.mxu0 0.0
    %9513 = vmatpush1.msra.mxu0 0.0
    %9514 = vmatprep.subr.mxu0 0.0
    %9515 = vmatpush1.msra.mxu0 0.0
    %9516 = vmatprep.subr.mxu0 0.0
    %9517 = vmatpush1.msra.mxu0 0.0
    %9518 = vmatprep.subr.mxu0 0.0
    %9519 = vmatpush1.msra.mxu0 0.0
    %9520 = vmatprep.subr.mxu0 0.0
    %9521 = vmatpush1.msra.mxu0 0.0
    %9522 = vmatprep.mubr.f32.mxu0 0.0
    %9523 = vmatmul.mubr.f32.gmra.mrb[0].mxu0 %v9411
    %v9524 = vpop.f32.mrb[0].mxu0
    %v9525 = vadd.f32 0.0, %v9524
    %v9526 = vpop.f32.mrb[0].mxu0
    %9527 = vmatprep.mubr.f32.mxu0 0.0
    %9528 = vmatmul.mubr.f32.gmra.mrb[0].mxu0 %v9414
    %v9529 = vpop.f32.mrb[0].mxu0
    %v9530 = vadd.f32 0.0, %v9529
    %v9531 = vpop.f32.mrb[0].mxu0
    %9532 = vmatprep.mubr.f32.mxu0 0.0
    %9533 = vmatmul.mubr.f32.gmra.mrb[0].mxu0 %v9417
    %v9534 = vpop.f32.mrb[0].mxu0
    %v9535 = vadd.f32 0.0, %v9534
    %v9536 = vpop.f32.mrb[0].mxu0
    %9537 = vmatprep.mubr.f32.mxu0 0.0
    %9538 = vmatmul.mubr.f32.gmra.mrb[0].mxu0 %v9420
    %v9539 = vpop.f32.mrb[0].mxu0
    %v9540 = vadd.f32 0.0, %v9539
    %v9541 = vpop.f32.mrb[0].mxu0
    %9542 = vmatprep.mubr.f32.mxu0 0.0
    %9543 = vmatmul.mubr.f32.gmra.mrb[0].mxu0 %v9423
    %v9544 = vpop.f32.mrb[0].mxu0
    %v9545 = vadd.f32 0.0, %v9544
    %v9546 = vpop.f32.mrb[0].mxu0
    %9547 = vmatprep.mubr.f32.mxu0 0.0
    %9548 = vmatmul.mubr.f32.gmra.mrb[0].mxu0 %v9426
    %v9549 = vpop.f32.mrb[0].mxu0
    %v9550 = vadd.f32 0.0, %v9549
    %v9551 = vpop.f32.mrb[0].mxu0
    %9552 = vmatprep.mubr.f32.mxu0 0.0
    %9553 = vmatmul.mubr.f32.gmra.mrb[0].mxu0 %v9429
    %v9554 = vpop.f32.mrb[0].mxu0
    %v9555 = vadd.f32 0.0, %v9554
    %v9556 = vpop.f32.mrb[0].mxu0
    %9557 = vmatprep.mubr.f32.mxu0 0.0
    %9558 = vmatmul.mubr.f32.gmra.mrb[0].mxu0 %v9432
    %v9559 = vpop.f32.mrb[0].mxu0
    %v9560 = vadd.f32 0.0, %v9559
    %v9561 = vpop.f32.mrb[0].mxu0
    %9562 = vmatprep.mubr.f32.mxu0 0.0
    %9563 = vmatmul.mubr.f32.gmra.mrb[0].mxu0 %v9435
    %v9564 = vpop.f32.mrb[0].mxu0
    %v9565 = vadd.f32 0.0, %v9564
    %v9566 = vpop.f32.mrb[0].mxu0
    %9567 = vmatprep.mubr.f32.mxu0 0.0
    %9568 = vmatmul.mubr.f32.gmra.mrb[0].mxu0 %v9438
    %v9569 = vpop.f32.mrb[0].mxu0
    %v9570 = vadd.f32 0.0, %v9569
    %v9571 = vpop.f32.mrb[0].mxu0
    %9572 = vmatprep.mubr.f32.mxu0 0.0
    %9573 = vmatmul.mubr.f32.gmra.mrb[0].mxu0 %v9441
    %v9574 = vpop.f32.mrb[0].mxu0
    %v9575 = vadd.f32 0.0, %v9574
    %v9576 = vpop.f32.mrb[0].mxu0
    %9577 = vmatprep.mubr.f32.mxu0 0.0
    %9578 = vmatmul.mubr.f32.gmra.mrb[0].mxu0 %v9444
    %v9579 = vpop.f32.mrb[0].mxu0
    %v9580 = vadd.f32 0.0, %v9579
    %v9581 = vpop.f32.mrb[0].mxu0
    %9582 = vmatprep.mubr.f32.mxu0 0.0
    %9583 = vmatmul.mubr.f32.gmra.mrb[0].mxu0 %v9447
    %v9584 = vpop.f32.mrb[0].mxu0
    %v9585 = vadd.f32 0.0, %v9584
    %v9586 = vpop.f32.mrb[0].mxu0
    %9587 = vmatprep.mubr.f32.mxu0 0.0
    %9588 = vmatmul.mubr.f32.gmra.mrb[0].mxu0 %v9450
    %v9589 = vpop.f32.mrb[0].mxu0
    %v9590 = vadd.f32 0.0, %v9589
    %v9591 = vpop.f32.mrb[0].mxu0
    %9592 = vmatprep.mubr.f32.mxu0 0.0
    %9593 = vmatmul.mubr.f32.gmra.mrb[0].mxu0 %v9453
    %v9594 = vpop.f32.mrb[0].mxu0
    %v9595 = vadd.f32 0.0, %v9594
    %v9596 = vpop.f32.mrb[0].mxu0
    %9597 = vmatprep.mubr.f32.mxu0 0.0
    %9598 = vmatmul.mubr.f32.gmra.mrb[0].mxu0 %v9456
    %v9599 = vpop.f32.mrb[0].mxu0
    %v9600 = vadd.f32 0.0, %v9599
    %v9601 = vpop.f32.mrb[0].mxu0
    %9602 = vdwg.mxu0
    %v9603 = vadd.f32 %v9373, %v9525
    %v9604 = vadd.f32 %v9374, %v9530
    %v9605 = vadd.f32 %v9375, %v9535
    %v9606 = vadd.f32 %v9376, %v9540
    %v9607 = vadd.f32 %v9377, %v9545
    %v9608 = vadd.f32 %v9378, %v9550
    %v9609 = vadd.f32 %v9379, %v9555
    %v9610 = vadd.f32 %v9380, %v9560
    %v9611 = vadd.f32 %v9381, %v9565
    %v9612 = vadd.f32 %v9382, %v9570
    %v9613 = vadd.f32 %v9383, %v9575
    %v9614 = vadd.f32 %v9384, %v9580
    %v9615 = vadd.f32 %v9385, %v9585
    %v9616 = vadd.f32 %v9386, %v9590
    %v9617 = vadd.f32 %v9387, %v9595
    %v9618 = vadd.f32 %v9388, %v9600
    %v9619 = vlaneseq
    %v9620 = vshrl.u32 %v9619, 7
    %v9621 = vsub.s32 3, %v9620
    %v9622 = vrot.slane %v7258, %v9621
    %v9623 = vadd.f32 %v9603, %v9622
    %v9624 = vadd.f32 %v9604, %v9622
    %v9625 = vadd.f32 %v9605, %v9622
    %v9626 = vadd.f32 %v9606, %v9622
    %v9627 = vadd.f32 %v9607, %v9622
    %v9628 = vadd.f32 %v9608, %v9622
    %v9629 = vadd.f32 %v9609, %v9622
    %v9630 = vadd.f32 %v9610, %v9622
    %v9631 = vadd.f32 %v9611, %v9622
    %v9632 = vadd.f32 %v9612, %v9622
    %v9633 = vadd.f32 %v9613, %v9622
    %v9634 = vadd.f32 %v9614, %v9622
    %v9635 = vadd.f32 %v9615, %v9622
    %v9636 = vadd.f32 %v9616, %v9622
    %v9637 = vadd.f32 %v9617, %v9622
    %v9638 = vadd.f32 %v9618, %v9622
    %v9639 = vadd.f32 %v7241, %v9623
    %v9640 = vadd.f32 %v7242, %v9624
    %v9641 = vadd.f32 %v7243, %v9625
    %v9642 = vadd.f32 %v7244, %v9626
    %v9643 = vadd.f32 %v7245, %v9627
    %v9644 = vadd.f32 %v7246, %v9628
    %v9645 = vadd.f32 %v7247, %v9629
    %v9646 = vadd.f32 %v7248, %v9630
    %v9647 = vadd.f32 %v7249, %v9631
    %v9648 = vadd.f32 %v7250, %v9632
    %v9649 = vadd.f32 %v7251, %v9633
    %v9650 = vadd.f32 %v7252, %v9634
    %v9651 = vadd.f32 %v7253, %v9635
    %v9652 = vadd.f32 %v7254, %v9636
    %v9653 = vadd.f32 %v7255, %v9637
    %v9654 = vadd.f32 %v7256, %v9638
    %9655 = vst.msk [vmem:[%s4] sm:$0xff] %vm45, %v9639
    %9656 = vst.msk [vmem:[%s4 + $0x8] sm:$0xff] %vm45, %v9640
    %9657 = vst.msk [vmem:[%s4 + $0x10] sm:$0xff] %vm45, %v9641
    %9658 = vst.msk [vmem:[%s4 + $0x18] sm:$0xff] %vm45, %v9642
    %9659 = vst.msk [vmem:[%s4 + $0x20] sm:$0xff] %vm45, %v9643
    %9660 = vst.msk [vmem:[%s4 + $0x28] sm:$0xff] %vm45, %v9644
    %9661 = vst.msk [vmem:[%s4 + $0x30] sm:$0xff] %vm45, %v9645
    %9662 = vst.msk [vmem:[%s4 + $0x38] sm:$0xff] %vm45, %v9646
    %9663 = vst.msk [vmem:[%s4 + $0x40] sm:$0xff] %vm45, %v9647
    %9664 = vst.msk [vmem:[%s4 + $0x48] sm:$0xff] %vm45, %v9648
    %9665 = vst.msk [vmem:[%s4 + $0x50] sm:$0xff] %vm45, %v9649
    %9666 = vst.msk [vmem:[%s4 + $0x58] sm:$0xff] %vm45, %v9650
    %9667 = vst.msk [vmem:[%s4 + $0x60] sm:$0xff] %vm45, %v9651
    %9668 = vst.msk [vmem:[%s4 + $0x68] sm:$0xff] %vm45, %v9652
    %9669 = vst.msk [vmem:[%s4 + $0x70] sm:$0xff] %vm45, %v9653
    %9670 = vst.msk [vmem:[%s4 + $0x78] sm:$0xff] %vm45, %v9654
    // Predicated region
    $region26: #{tpu_custom_call.1} parent=1 // pred_check
      _
    $region27: #{tpu_custom_call.1} parent=1 // pred_check_branch
      %9672 = sbr.rel (0) target = $region29
    $region28: #{tpu_custom_call.1} parent=1 // pred_region
      _
    $region29: #{tpu_custom_call.1} parent=1 // pred_fallthru
      _
    // Predicated region
    $region30: #{tpu_custom_call.1} parent=1 // pred_check
      _
    $region31: #{tpu_custom_call.1} parent=1 // pred_check_branch
      %9674 = sbr.rel (0) target = $region33
    $region32: #{tpu_custom_call.1} parent=1 // pred_region
      _
    $region33: #{tpu_custom_call.1} parent=1 // pred_fallthru
      _
    %9675 = vsyncpa [#allocation4], 1
    %9676 = vsyncpa [#allocation6], 1

</llo_original>
